<compile_context>
chip_gen: v7x
topology: tpu7x:2x2x1
jax: 0.10.0
libtpu: 0.0.40
codegen_flags: <defaults>
</compile_context>

<pallas_src>
import functools

import jax
import jax.numpy as jnp
import numpy as np
from jax.experimental import pallas as pl
from jax.experimental.pallas import tpu as pltpu

IN_COLS = 8  # merged raw-input columns per sample: [x0,x1,x2, t0,t1, 0,0,0]


# ----------------------------------------------------------------------------
# Sinusoid encoder (VanillaNeRFEncoder): order-L encoding -> dim * 2L features.
# TODO(synk): VanillaNeRFEncoder source not provided; using the standard NeRF
# convention gamma(p) = [sin(2^i * pi * p), cos(2^i * pi * p)] for i in [0, L).
# ----------------------------------------------------------------------------
def sinusoid_encode(x, order):
    feats = []
    for i in range(order):
        f = (2.0 ** i) * jnp.pi * x
        feats.append(jnp.sin(f))
        feats.append(jnp.cos(f))
    return jnp.concatenate(feats, axis=-1)


# ----------------------------------------------------------------------------
# Pallas kernel: encoding + full MLP, one (packed) batch tile per grid step.
# ----------------------------------------------------------------------------
def nerf_mlp_kernel(n_b1, n_b2, n_b3, h_width, mm_dtype,
                    xin_ref, scale_ref, phase_ref, *refs):
    it = iter(refs)
    take = lambda k: [next(it) for _ in range(k)]

    W1_0, b1_0 = next(it), next(it)
    b1_W, b1_b = take(n_b1), take(n_b1)
    W2h, W2x, b2_0 = next(it), next(it), next(it)
    b2_W, b2_b = take(n_b2), take(n_b2)
    W3e, W3d, b3_0 = next(it), next(it), next(it)
    b3_W, b3_b = take(n_b3), take(n_b3)
    out_ref = next(it)
    assert next(it, None) is None  # trace-time sanity check

    def mm(h, w_ref):
        # bf16 MXU operands, f32 accumulation.
        return jnp.dot(h.astype(mm_dtype), w_ref[...],
                       preferred_element_type=jnp.float32)

    # --- relayout-free sinusoid encoding (f32 VPU/EUP) -----------------------
    # enc[:, j] = sin(scale[j] * xin[:, j mod width] + phase[j]); cos columns
    # use phase = pi/2.  Unused / padded columns have zero weight rows.
    xin = xin_ref[...]                                     # (T, P*8) f32
    reps = scale_ref.shape[-1] // xin.shape[-1]
    angles = jnp.tile(xin, (1, reps)) * scale_ref[...] + phase_ref[...]
    enc = jnp.sin(angles)                                  # (T, ENC) f32

    # --- block_1: N x [Linear + ReLU] ----------------------------------------
    h = jnp.maximum(mm(enc, W1_0) + b1_0[...], 0.0)
    for i in range(n_b1):
        h = jnp.maximum(mm(h, b1_W[i]) + b1_b[i][...], 0.0)

    # --- block_2: skip connection via split matmul (no concat) ---------------
    h = jnp.maximum(mm(h, W2h) + mm(enc, W2x) + b2_0[...], 0.0)
    for j in range(n_b2):
        h = mm(h, b2_W[j]) + b2_b[j][...]
        if j != n_b2 - 1:                                  # last layer: no ReLU
            h = jnp.maximum(h, 0.0)
    emb = h                                                # (T, P*D_1)

    # --- block_3 first layer fused with density head (split matmul) ----------
    # columns [0 : P*D_2]        -> block_3 first layer (Linear + ReLU)
    # columns [P*D_2 : P*D_2+P]  -> density heads        (Linear + ReLU)
    g = jnp.maximum(mm(emb, W3e) + mm(enc, W3d) + b3_0[...], 0.0)
    h = g[:, :h_width]
    density = g[:, h_width:]                               # (T, P)

    for j in range(n_b3):
        h = mm(h, b3_W[j]) + b3_b[j][...]
        if j != n_b3 - 1:                                  # last layer: no ReLU
            h = jnp.maximum(h, 0.0)
    rgb = jax.nn.sigmoid(h)                                # (T, 3P) f32

    # --- lane-dense combined output: (4P, T) ----------------------------------
    combined = jnp.concatenate([density, rgb], axis=-1)    # (T, 4P)
    out_ref[...] = combined.T.astype(out_ref.dtype)


# ----------------------------------------------------------------------------
# Host-side weight preprocessing: split / fuse / block-diagonal-pack, once.
# ----------------------------------------------------------------------------
def prepare_params(params, cfg, pack, mm_dtype):
    N, N_1, N_2 = cfg["N"], cfg["N_1"], cfg["N_2"]
    D, D_1, D_2 = cfg["D"], cfg["D_1"], cfg["D_2"]
    Lx, Lt = cfg["X_Encoding_N"], cfg["theta_Encoding_N"]
    P = pack
    Lmax = max(Lx, Lt)
    ENC = 2 * Lmax * P * IN_COLS

    Ws = [np.asarray(w, np.float32) for w in params["W"]]
    bs = [np.asarray(b, np.float32).reshape(1, -1) for b in params["b"]]

    eye = np.eye(P, dtype=np.float32)
    kron = lambda W: np.kron(eye, W)           # block-diagonal replication x P
    tileb = lambda b: np.tile(b, (1, P))
    cast = lambda a: jnp.asarray(a, mm_dtype)
    f32 = lambda a: jnp.asarray(a, jnp.float32)

    # Encoding column j: repeat r = j // (P*8), packed col c = j % (P*8),
    # block p = c // 8, raw dim d = c % 8, order i = r // 2, func = r % 2.
    scale = np.zeros((1, ENC), np.float32)
    phase = np.zeros((1, ENC), np.float32)
    for j in range(ENC):
        r = j // (P * IN_COLS)
        scale[0, j] = (2.0 ** (r // 2)) * np.pi
        phase[0, j] = 0.0 if (r % 2 == 0) else np.pi / 2.0

    def scatter_enc(W_sub, out_cols, dims, order, col_of):
        """Permute a weight that consumes a compact sinusoid encoding so it
        consumes the padded in-kernel encoding layout (per packed block)."""
        out = np.zeros((ENC, P * out_cols), np.float32)
        for j in range(ENC):
            r, c = divmod(j, P * IN_COLS)
            p, d = divmod(c, IN_COLS)
            i, func = divmod(r, 2)
            if d in dims and i < order:
                out[j, p * out_cols:(p + 1) * out_cols] = W_sub[col_of(i, func, d)]
        return out

    scat_x = lambda W_sub, oc: scatter_enc(
        W_sub, oc, (0, 1, 2), Lx, lambda i, f, d: i * 6 + f * 3 + d)
    scat_t = lambda W_sub, oc: scatter_enc(
        W_sub, oc, (3, 4), Lt, lambda i, f, d: i * 4 + f * 2 + (d - 3))

    li = 0
    # block_1
    W1_0 = scat_x(Ws[li], D); b1_0 = tileb(bs[li]); li += 1
    b1_W, b1_b = [], []
    for _ in range(N - 1):
        b1_W.append(kron(Ws[li])); b1_b.append(tileb(bs[li])); li += 1

    # block_2 first layer: concat([h, x_enc]) @ W  ->  split matmuls
    W2_0, b2_first = Ws[li], bs[li]; li += 1
    W2h = kron(W2_0[:D])
    W2x = scat_x(W2_0[D:], D_1)
    b2_0 = tileb(b2_first)
    b2_W, b2_b = [], []
    for _ in range(N_1 - 1):
        b2_W.append(kron(Ws[li])); b2_b.append(tileb(bs[li])); li += 1

    # density head (fused below into block_3 first layer)
    Wd, bd = Ws[li], bs[li]; li += 1

    # block_3 first layer; fused output columns: [P*D_2 block cols | P density]
    W3_0, b3_first = Ws[li], bs[li]; li += 1
    W3e = np.concatenate([kron(W3_0[:D_1]), kron(Wd)], axis=1)
    W3d = np.concatenate([scat_t(W3_0[D_1:], D_2),
                          np.zeros((ENC, P), np.float32)], axis=1)
    b3_0 = np.concatenate([tileb(b3_first), tileb(bd)], axis=1)

    b3_W, b3_b = [], []
    for _ in range(N_2 - 1):
        b3_W.append(kron(Ws[li])); b3_b.append(tileb(bs[li])); li += 1
    assert li == len(Ws)

    return ([f32(scale), f32(phase), cast(W1_0), f32(b1_0)]
            + [cast(w) for w in b1_W] + [f32(b) for b in b1_b]
            + [cast(W2h), cast(W2x), f32(b2_0)]
            + [cast(w) for w in b2_W] + [f32(b) for b in b2_b]
            + [cast(W3e), cast(W3d), f32(b3_0)]
            + [cast(w) for w in b3_W] + [f32(b) for b in b3_b])


def _pick_tile_rows(rows, tile_rows):
    if tile_rows is None:
        # Big tiles to amortize ~0.35us/grid-step overhead, but keep >= 2 grid
        # steps when possible so both v7x TensorCores get work.
        tile_rows = max(256, min(2048, pl.next_power_of_2(max(1, rows // 2))))
    return max(128, ((int(tile_rows) + 127) // 128) * 128)


# ----------------------------------------------------------------------------
# Forward wrapper
# ----------------------------------------------------------------------------
def vanilla_nerf_mlp_forward(X, theta, params, cfg, *, pack=2, tile_rows=None,
                             mm_dtype=jnp.bfloat16):
    """X: (B, 3), theta: (B, 2). Returns (density (B, 1), color (B, 3))."""
    N, N_1, N_2 = cfg["N"], cfg["N_1"], cfg["N_2"]
    D_2 = cfg["D_2"]

    X = jnp.asarray(X, jnp.float32)
    theta = jnp.asarray(theta, jnp.float32)
    B = X.shape[0]

    # Merge x / theta into one (B, 8) stream (cols 5..7 are zero padding).
    xin = jnp.concatenate(
        [X, theta, jnp.zeros((B, IN_COLS - 5), jnp.float32)], axis=-1)

    rows_needed = pl.cdiv(B, pack)
    tile_rows = _pick_tile_rows(rows_needed, tile_rows)
    rows_pad = pl.cdiv(rows_needed, tile_rows) * tile_rows
    B_pad = rows_pad * pack
    if B_pad != B:
        xin = jnp.pad(xin, ((0, B_pad - B), (0, 0)))
    xin = xin.reshape(rows_pad, pack * IN_COLS)     # packed row r <- rows r*P..r*P+P-1

    flat_params = prepare_params(params, cfg, pack, mm_dtype)

    in_specs = [pl.BlockSpec((tile_rows, pack * IN_COLS), lambda i: (i, 0))]
    # weights / biases / encoding constants: VMEM-resident (constant index map)
    for p in flat_params:
        in_specs.append(pl.BlockSpec(p.shape, lambda i: (0, 0)))

    out_specs = pl.BlockSpec((4 * pack, tile_rows), lambda i: (0, i))
    out_shape = jax.ShapeDtypeStruct((4 * pack, rows_pad), jnp.float32)

    kernel = functools.partial(nerf_mlp_kernel, N - 1, N_1 - 1, N_2 - 1,
                               pack * D_2, mm_dtype)

    out = pl.pallas_call(
        kernel,
        out_shape=out_shape,
        grid_spec=pltpu.PrefetchScalarGridSpec(
            num_scalar_prefetch=0,
            grid=(rows_pad // tile_rows,),
            in_specs=in_specs,
            out_specs=out_specs,
        ),
        compiler_params=pltpu.CompilerParams(
            dimension_semantics=("parallel",)),
    )(xin, *flat_params)

    # rows [0:P] = per-block densities, rows [P:4P] = per-block rgb triples
    density = out[:pack].T.reshape(B_pad, 1)[:B]
    color = out[pack:].T.reshape(B_pad, 3)[:B]
    return density, color


# ----------------------------------------------------------------------------
# Pure-JAX reference (original concat-based math); mm_dtype emulates the
# kernel's bf16 MXU operands with f32 accumulation.
# ----------------------------------------------------------------------------
def vanilla_nerf_mlp_reference(X, theta, params, cfg, mm_dtype=jnp.float32):
    N, N_1, N_2 = cfg["N"], cfg["N_1"], cfg["N_2"]
    Ws, bs = params["W"], params["b"]

    def mm(h, W):
        return jnp.dot(h.astype(mm_dtype), W.astype(mm_dtype),
                       preferred_element_type=jnp.float32)

    x_enc = sinusoid_encode(X, cfg["X_Encoding_N"])
    th_enc = sinusoid_encode(theta, cfg["theta_Encoding_N"])

    li = 0
    h = x_enc
    for _ in range(N):
        h = jnp.maximum(mm(h, Ws[li]) + bs[li], 0.0)
        li += 1
    h = jnp.concatenate([h, x_enc], axis=-1)
    for j in range(N_1):
        h = mm(h, Ws[li]) + bs[li]
        li += 1
        if j != N_1 - 1:
            h = jnp.maximum(h, 0.0)
    embedding = h
    density = jnp.maximum(mm(embedding, Ws[li]) + bs[li], 0.0)
    li += 1
    h = jnp.concatenate([embedding, th_enc], axis=-1)
    for j in range(N_2):
        h = mm(h, Ws[li]) + bs[li]
        li += 1
        if j != N_2 - 1:
            h = jnp.maximum(h, 0.0)
    color = jax.nn.sigmoid(h)
    return density, color


# ----------------------------------------------------------------------------
# Deterministic parameter init (mimics nn.Linear uniform(-1/sqrt(fan_in), ..))
# ----------------------------------------------------------------------------
def init_params(key, cfg):
    N, D = cfg["N"], cfg["D"]
    N_1, D_1 = cfg["N_1"], cfg["D_1"]
    N_2, D_2 = cfg["N_2"], cfg["D_2"]
    x_enc_size = 3 * (2 * cfg["X_Encoding_N"])
    th_enc_size = 2 * (2 * cfg["theta_Encoding_N"])

    dims = []
    dims.append((x_enc_size, D))                       # block_1 first
    for _ in range(N - 1):
        dims.append((D, D))                            # block_1 rest
    dims.append((D + x_enc_size, D_1))                 # block_2 first
    for _ in range(N_1 - 2):
        dims.append((D_1, D_1))                        # block_2 middle
    dims.append((D_1, D_1))                            # block_2 last (no ReLU)
    dims.append((D_1, 1))                              # density layer
    dims.append((D_1 + th_enc_size, D_2))              # block_3 first
    for _ in range(N_2 - 2):
        dims.append((D_2, D_2))                        # block_3 middle
    dims.append((D_2, 3))                              # block_3 last (sigmoid)

    Ws, bs = [], []
    for (fan_in, fan_out) in dims:
        key, kw, kb = jax.random.split(key, 3)
        bound = 1.0 / np.sqrt(fan_in)
        Ws.append(jax.random.uniform(kw, (fan_in, fan_out), jnp.float32,
                                     -bound, bound))
        bs.append(jax.random.uniform(kb, (1, fan_out), jnp.float32,
                                     -bound, bound))
    return {"W": Ws, "b": bs}


if __name__ == "__main__":
    cfg = dict(N=2, D=64, N_1=2, D_1=64,
               X_Encoding_N=4, theta_Encoding_N=2,
               N_2=2, D_2=32)

    key = jax.random.PRNGKey(0)
    key, kx, kt = jax.random.split(key, 3)
    B = 1024
    X = jax.random.uniform(kx, (B, 3), jnp.float32, -1.0, 1.0)      # positions
    theta = jax.random.uniform(kt, (B, 2), jnp.float32, -1.0, 1.0)  # view dirs

    params = init_params(key, cfg)

    density, color = vanilla_nerf_mlp_forward(X, theta, params, cfg,
                                              pack=2, tile_rows=None,
                                              mm_dtype=jnp.bfloat16)
    density = jax.block_until_ready(density)
    color = jax.block_until_ready(color)

    # Reference emulating bf16 MXU operands (f32 accumulation), same math.
    ref_density, ref_color = vanilla_nerf_mlp_reference(
        X, theta, params, cfg, mm_dtype=jnp.bfloat16)
    np.testing.assert_allclose(np.asarray(density), np.asarray(ref_density),
                               rtol=2e-2, atol=2e-2)
    np.testing.assert_allclose(np.asarray(color), np.asarray(ref_color),
                               rtol=2e-2, atol=2e-2)

    assert density.shape == (B, 1) and color.shape == (B, 3)
    print("KERNEL_OK")
</pallas_src>

<mosaic_0001>
module attributes {stable_mosaic.version = 11 : i64} {
  func.func @nerf_mlp_kernel(%arg0: i32, %arg1: memref<256x16xf32, #tpu.memory_space<vmem>>, %arg2: memref<1x128xf32, #tpu.memory_space<vmem>>, %arg3: memref<1x128xf32, #tpu.memory_space<vmem>>, %arg4: memref<128x128xbf16, #tpu.memory_space<vmem>>, %arg5: memref<1x128xf32, #tpu.memory_space<vmem>>, %arg6: memref<128x128xbf16, #tpu.memory_space<vmem>>, %arg7: memref<1x128xf32, #tpu.memory_space<vmem>>, %arg8: memref<128x128xbf16, #tpu.memory_space<vmem>>, %arg9: memref<128x128xbf16, #tpu.memory_space<vmem>>, %arg10: memref<1x128xf32, #tpu.memory_space<vmem>>, %arg11: memref<128x128xbf16, #tpu.memory_space<vmem>>, %arg12: memref<1x128xf32, #tpu.memory_space<vmem>>, %arg13: memref<128x66xbf16, #tpu.memory_space<vmem>>, %arg14: memref<128x66xbf16, #tpu.memory_space<vmem>>, %arg15: memref<1x66xf32, #tpu.memory_space<vmem>>, %arg16: memref<64x6xbf16, #tpu.memory_space<vmem>>, %arg17: memref<1x6xf32, #tpu.memory_space<vmem>>, %arg18: memref<8x256xf32, #tpu.memory_space<vmem>>) attributes {dimension_semantics = [#tpu.dimension_semantics<parallel>], iteration_bounds = array<i64: 2>, scalar_prefetch = 0 : i64, scratch_operands = 0 : i64, tpu.core_type = #tpu.core_type<tc>, window_params = [{transform_indices = @transform_0, window_bounds = array<i64: 256, 16>}, {pipeline_mode = #tpu.pipeline_mode<synchronous>, transform_indices = @transform_1, window_bounds = array<i64: 1, 128>}, {pipeline_mode = #tpu.pipeline_mode<synchronous>, transform_indices = @transform_2, window_bounds = array<i64: 1, 128>}, {pipeline_mode = #tpu.pipeline_mode<synchronous>, transform_indices = @transform_3, window_bounds = array<i64: 128, 128>}, {pipeline_mode = #tpu.pipeline_mode<synchronous>, transform_indices = @transform_4, window_bounds = array<i64: 1, 128>}, {pipeline_mode = #tpu.pipeline_mode<synchronous>, transform_indices = @transform_5, window_bounds = array<i64: 128, 128>}, {pipeline_mode = #tpu.pipeline_mode<synchronous>, transform_indices = @transform_6, window_bounds = array<i64: 1, 128>}, {pipeline_mode = #tpu.pipeline_mode<synchronous>, transform_indices = @transform_7, window_bounds = array<i64: 128, 128>}, {pipeline_mode = #tpu.pipeline_mode<synchronous>, transform_indices = @transform_8, window_bounds = array<i64: 128, 128>}, {pipeline_mode = #tpu.pipeline_mode<synchronous>, transform_indices = @transform_9, window_bounds = array<i64: 1, 128>}, {pipeline_mode = #tpu.pipeline_mode<synchronous>, transform_indices = @transform_10, window_bounds = array<i64: 128, 128>}, {pipeline_mode = #tpu.pipeline_mode<synchronous>, transform_indices = @transform_11, window_bounds = array<i64: 1, 128>}, {pipeline_mode = #tpu.pipeline_mode<synchronous>, transform_indices = @transform_12, window_bounds = array<i64: 128, 66>}, {pipeline_mode = #tpu.pipeline_mode<synchronous>, transform_indices = @transform_13, window_bounds = array<i64: 128, 66>}, {pipeline_mode = #tpu.pipeline_mode<synchronous>, transform_indices = @transform_14, window_bounds = array<i64: 1, 66>}, {pipeline_mode = #tpu.pipeline_mode<synchronous>, transform_indices = @transform_15, window_bounds = array<i64: 64, 6>}, {pipeline_mode = #tpu.pipeline_mode<synchronous>, transform_indices = @transform_16, window_bounds = array<i64: 1, 6>}, {transform_indices = @transform_17, window_bounds = array<i64: 8, 256>}]} {
    %c0 = arith.constant 0 : index
    %c0_0 = arith.constant 0 : index
    %0 = vector.load %arg1[%c0, %c0_0] : memref<256x16xf32, #tpu.memory_space<vmem>>, vector<256x16xf32>
    %1 = tpu.concatenate %0, %0, %0, %0, %0, %0, %0, %0 in 1 : vector<256x16xf32>, vector<256x16xf32>, vector<256x16xf32>, vector<256x16xf32>, vector<256x16xf32>, vector<256x16xf32>, vector<256x16xf32>, vector<256x16xf32> -> vector<256x128xf32>
    %c0_1 = arith.constant 0 : index
    %c0_2 = arith.constant 0 : index
    %2 = vector.load %arg2[%c0_1, %c0_2] : memref<1x128xf32, #tpu.memory_space<vmem>>, vector<1x128xf32>
    %3 = vector.broadcast %2 : vector<1x128xf32> to vector<256x128xf32>
    %4 = arith.mulf %1, %3 : vector<256x128xf32>
    %c0_3 = arith.constant 0 : index
    %c0_4 = arith.constant 0 : index
    %5 = vector.load %arg3[%c0_3, %c0_4] : memref<1x128xf32, #tpu.memory_space<vmem>>, vector<1x128xf32>
    %6 = vector.broadcast %5 : vector<1x128xf32> to vector<256x128xf32>
    %7 = arith.addf %4, %6 : vector<256x128xf32>
    %8 = math.sin %7 : vector<256x128xf32>
    %9 = arith.truncf %8 : vector<256x128xf32> to vector<256x128xbf16>
    %c0_5 = arith.constant 0 : index
    %c0_6 = arith.constant 0 : index
    %10 = vector.load %arg4[%c0_5, %c0_6] : memref<128x128xbf16, #tpu.memory_space<vmem>>, vector<128x128xbf16>
    %cst = arith.constant dense<0.000000e+00> : vector<256x128xf32>
    %11 = tpu.matmul %9, %10, %cst {dimension_numbers = #tpu.dot_dimension_numbers<[1], [0], [0], [1], [0, 0, 1, 1], [], []>} : vector<256x128xbf16>, vector<128x128xbf16>, vector<256x128xf32> -> vector<256x128xf32>
    %c0_7 = arith.constant 0 : index
    %c0_8 = arith.constant 0 : index
    %12 = vector.load %arg5[%c0_7, %c0_8] : memref<1x128xf32, #tpu.memory_space<vmem>>, vector<1x128xf32>
    %13 = vector.broadcast %12 : vector<1x128xf32> to vector<256x128xf32>
    %14 = arith.addf %11, %13 : vector<256x128xf32>
    %cst_9 = arith.constant 0.000000e+00 : f32
    %15 = vector.broadcast %cst_9 : f32 to vector<256x128xf32>
    %16 = arith.maximumf %14, %15 : vector<256x128xf32>
    %17 = arith.truncf %16 : vector<256x128xf32> to vector<256x128xbf16>
    %c0_10 = arith.constant 0 : index
    %c0_11 = arith.constant 0 : index
    %18 = vector.load %arg6[%c0_10, %c0_11] : memref<128x128xbf16, #tpu.memory_space<vmem>>, vector<128x128xbf16>
    %cst_12 = arith.constant dense<0.000000e+00> : vector<256x128xf32>
    %19 = tpu.matmul %17, %18, %cst_12 {dimension_numbers = #tpu.dot_dimension_numbers<[1], [0], [0], [1], [0, 0, 1, 1], [], []>} : vector<256x128xbf16>, vector<128x128xbf16>, vector<256x128xf32> -> vector<256x128xf32>
    %c0_13 = arith.constant 0 : index
    %c0_14 = arith.constant 0 : index
    %20 = vector.load %arg7[%c0_13, %c0_14] : memref<1x128xf32, #tpu.memory_space<vmem>>, vector<1x128xf32>
    %21 = vector.broadcast %20 : vector<1x128xf32> to vector<256x128xf32>
    %22 = arith.addf %19, %21 : vector<256x128xf32>
    %cst_15 = arith.constant 0.000000e+00 : f32
    %23 = vector.broadcast %cst_15 : f32 to vector<256x128xf32>
    %24 = arith.maximumf %22, %23 : vector<256x128xf32>
    %25 = arith.truncf %24 : vector<256x128xf32> to vector<256x128xbf16>
    %c0_16 = arith.constant 0 : index
    %c0_17 = arith.constant 0 : index
    %26 = vector.load %arg8[%c0_16, %c0_17] : memref<128x128xbf16, #tpu.memory_space<vmem>>, vector<128x128xbf16>
    %cst_18 = arith.constant dense<0.000000e+00> : vector<256x128xf32>
    %27 = tpu.matmul %25, %26, %cst_18 {dimension_numbers = #tpu.dot_dimension_numbers<[1], [0], [0], [1], [0, 0, 1, 1], [], []>} : vector<256x128xbf16>, vector<128x128xbf16>, vector<256x128xf32> -> vector<256x128xf32>
    %28 = arith.truncf %8 : vector<256x128xf32> to vector<256x128xbf16>
    %c0_19 = arith.constant 0 : index
    %c0_20 = arith.constant 0 : index
    %29 = vector.load %arg9[%c0_19, %c0_20] : memref<128x128xbf16, #tpu.memory_space<vmem>>, vector<128x128xbf16>
    %cst_21 = arith.constant dense<0.000000e+00> : vector<256x128xf32>
    %30 = tpu.matmul %28, %29, %cst_21 {dimension_numbers = #tpu.dot_dimension_numbers<[1], [0], [0], [1], [0, 0, 1, 1], [], []>} : vector<256x128xbf16>, vector<128x128xbf16>, vector<256x128xf32> -> vector<256x128xf32>
    %31 = arith.addf %27, %30 : vector<256x128xf32>
    %c0_22 = arith.constant 0 : index
    %c0_23 = arith.constant 0 : index
    %32 = vector.load %arg10[%c0_22, %c0_23] : memref<1x128xf32, #tpu.memory_space<vmem>>, vector<1x128xf32>
    %33 = vector.broadcast %32 : vector<1x128xf32> to vector<256x128xf32>
    %34 = arith.addf %31, %33 : vector<256x128xf32>
    %cst_24 = arith.constant 0.000000e+00 : f32
    %35 = vector.broadcast %cst_24 : f32 to vector<256x128xf32>
    %36 = arith.maximumf %34, %35 : vector<256x128xf32>
    %37 = arith.truncf %36 : vector<256x128xf32> to vector<256x128xbf16>
    %c0_25 = arith.constant 0 : index
    %c0_26 = arith.constant 0 : index
    %38 = vector.load %arg11[%c0_25, %c0_26] : memref<128x128xbf16, #tpu.memory_space<vmem>>, vector<128x128xbf16>
    %cst_27 = arith.constant dense<0.000000e+00> : vector<256x128xf32>
    %39 = tpu.matmul %37, %38, %cst_27 {dimension_numbers = #tpu.dot_dimension_numbers<[1], [0], [0], [1], [0, 0, 1, 1], [], []>} : vector<256x128xbf16>, vector<128x128xbf16>, vector<256x128xf32> -> vector<256x128xf32>
    %c0_28 = arith.constant 0 : index
    %c0_29 = arith.constant 0 : index
    %40 = vector.load %arg12[%c0_28, %c0_29] : memref<1x128xf32, #tpu.memory_space<vmem>>, vector<1x128xf32>
    %41 = vector.broadcast %40 : vector<1x128xf32> to vector<256x128xf32>
    %42 = arith.addf %39, %41 : vector<256x128xf32>
    %43 = arith.truncf %42 : vector<256x128xf32> to vector<256x128xbf16>
    %c0_30 = arith.constant 0 : index
    %c0_31 = arith.constant 0 : index
    %44 = vector.load %arg13[%c0_30, %c0_31] : memref<128x66xbf16, #tpu.memory_space<vmem>>, vector<128x66xbf16>
    %cst_32 = arith.constant dense<0.000000e+00> : vector<256x66xf32>
    %45 = tpu.matmul %43, %44, %cst_32 {dimension_numbers = #tpu.dot_dimension_numbers<[1], [0], [0], [1], [0, 0, 1, 1], [], []>} : vector<256x128xbf16>, vector<128x66xbf16>, vector<256x66xf32> -> vector<256x66xf32>
    %46 = arith.truncf %8 : vector<256x128xf32> to vector<256x128xbf16>
    %c0_33 = arith.constant 0 : index
    %c0_34 = arith.constant 0 : index
    %47 = vector.load %arg14[%c0_33, %c0_34] : memref<128x66xbf16, #tpu.memory_space<vmem>>, vector<128x66xbf16>
    %cst_35 = arith.constant dense<0.000000e+00> : vector<256x66xf32>
    %48 = tpu.matmul %46, %47, %cst_35 {dimension_numbers = #tpu.dot_dimension_numbers<[1], [0], [0], [1], [0, 0, 1, 1], [], []>} : vector<256x128xbf16>, vector<128x66xbf16>, vector<256x66xf32> -> vector<256x66xf32>
    %49 = arith.addf %45, %48 : vector<256x66xf32>
    %c0_36 = arith.constant 0 : index
    %c0_37 = arith.constant 0 : index
    %50 = vector.load %arg15[%c0_36, %c0_37] : memref<1x66xf32, #tpu.memory_space<vmem>>, vector<1x66xf32>
    %51 = vector.broadcast %50 : vector<1x66xf32> to vector<256x66xf32>
    %52 = arith.addf %49, %51 : vector<256x66xf32>
    %cst_38 = arith.constant 0.000000e+00 : f32
    %53 = vector.broadcast %cst_38 : f32 to vector<256x66xf32>
    %54 = arith.maximumf %52, %53 : vector<256x66xf32>
    %55 = vector.extract_strided_slice %54 {offsets = [0, 0], sizes = [256, 64], strides = [1, 1]} : vector<256x66xf32> to vector<256x64xf32>
    %56 = vector.extract_strided_slice %54 {offsets = [0, 64], sizes = [256, 2], strides = [1, 1]} : vector<256x66xf32> to vector<256x2xf32>
    %57 = arith.truncf %55 : vector<256x64xf32> to vector<256x64xbf16>
    %c0_39 = arith.constant 0 : index
    %c0_40 = arith.constant 0 : index
    %58 = vector.load %arg16[%c0_39, %c0_40] : memref<64x6xbf16, #tpu.memory_space<vmem>>, vector<64x6xbf16>
    %cst_41 = arith.constant dense<0.000000e+00> : vector<256x6xf32>
    %59 = tpu.matmul %57, %58, %cst_41 {dimension_numbers = #tpu.dot_dimension_numbers<[1], [0], [0], [1], [0, 0, 1, 1], [], []>} : vector<256x64xbf16>, vector<64x6xbf16>, vector<256x6xf32> -> vector<256x6xf32>
    %c0_42 = arith.constant 0 : index
    %c0_43 = arith.constant 0 : index
    %60 = vector.load %arg17[%c0_42, %c0_43] : memref<1x6xf32, #tpu.memory_space<vmem>>, vector<1x6xf32>
    %61 = vector.broadcast %60 : vector<1x6xf32> to vector<256x6xf32>
    %62 = arith.addf %59, %61 : vector<256x6xf32>
    %63 = arith.negf %62 : vector<256x6xf32>
    %64 = math.exp %63 : vector<256x6xf32>
    %cst_44 = arith.constant 1.000000e+00 : f32
    %65 = vector.broadcast %cst_44 : f32 to vector<256x6xf32>
    %66 = arith.addf %65, %64 : vector<256x6xf32>
    %67 = arith.divf %65, %66 : vector<256x6xf32>
    %68 = tpu.concatenate %56, %67 in 1 : vector<256x2xf32>, vector<256x6xf32> -> vector<256x8xf32>
    %69 = tpu.transpose %68, [1, 0] : vector<256x8xf32> -> vector<8x256xf32>
    %c0_45 = arith.constant 0 : index
    %c0_46 = arith.constant 0 : index
    %70 = vector.load %arg18[%c0_45, %c0_46] : memref<8x256xf32, #tpu.memory_space<vmem>>, vector<8x256xf32>
    tpu.vector_store %arg18[%c0_45, %c0_46], %69 {strides = array<i32>} : memref<8x256xf32, #tpu.memory_space<vmem>>, vector<8x256xf32>,
    return
  }
  func.func @transform_0(%arg0: i32) -> (i32, i32) {
    %c0_i32 = arith.constant 0 : i32
    %c0_i32_0 = arith.constant 0 : i32
    return %arg0, %c0_i32 : i32, i32
  }
  func.func @transform_1(%arg0: i32) -> (i32, i32) {
    %c0_i32 = arith.constant 0 : i32
    %c0_i32_0 = arith.constant 0 : i32
    %c0_i32_1 = arith.constant 0 : i32
    return %c0_i32, %c0_i32_0 : i32, i32
  }
  func.func @transform_2(%arg0: i32) -> (i32, i32) {
    %c0_i32 = arith.constant 0 : i32
    %c0_i32_0 = arith.constant 0 : i32
    %c0_i32_1 = arith.constant 0 : i32
    return %c0_i32, %c0_i32_0 : i32, i32
  }
  func.func @transform_3(%arg0: i32) -> (i32, i32) {
    %c0_i32 = arith.constant 0 : i32
    %c0_i32_0 = arith.constant 0 : i32
    %c0_i32_1 = arith.constant 0 : i32
    return %c0_i32, %c0_i32_0 : i32, i32
  }
  func.func @transform_4(%arg0: i32) -> (i32, i32) {
    %c0_i32 = arith.constant 0 : i32
    %c0_i32_0 = arith.constant 0 : i32
    %c0_i32_1 = arith.constant 0 : i32
    return %c0_i32, %c0_i32_0 : i32, i32
  }
  func.func @transform_5(%arg0: i32) -> (i32, i32) {
    %c0_i32 = arith.constant 0 : i32
    %c0_i32_0 = arith.constant 0 : i32
    %c0_i32_1 = arith.constant 0 : i32
    return %c0_i32, %c0_i32_0 : i32, i32
  }
  func.func @transform_6(%arg0: i32) -> (i32, i32) {
    %c0_i32 = arith.constant 0 : i32
    %c0_i32_0 = arith.constant 0 : i32
    %c0_i32_1 = arith.constant 0 : i32
    return %c0_i32, %c0_i32_0 : i32, i32
  }
  func.func @transform_7(%arg0: i32) -> (i32, i32) {
    %c0_i32 = arith.constant 0 : i32
    %c0_i32_0 = arith.constant 0 : i32
    %c0_i32_1 = arith.constant 0 : i32
    return %c0_i32, %c0_i32_0 : i32, i32
  }
  func.func @transform_8(%arg0: i32) -> (i32, i32) {
    %c0_i32 = arith.constant 0 : i32
    %c0_i32_0 = arith.constant 0 : i32
    %c0_i32_1 = arith.constant 0 : i32
    return %c0_i32, %c0_i32_0 : i32, i32
  }
  func.func @transform_9(%arg0: i32) -> (i32, i32) {
    %c0_i32 = arith.constant 0 : i32
    %c0_i32_0 = arith.constant 0 : i32
    %c0_i32_1 = arith.constant 0 : i32
    return %c0_i32, %c0_i32_0 : i32, i32
  }
  func.func @transform_10(%arg0: i32) -> (i32, i32) {
    %c0_i32 = arith.constant 0 : i32
    %c0_i32_0 = arith.constant 0 : i32
    %c0_i32_1 = arith.constant 0 : i32
    return %c0_i32, %c0_i32_0 : i32, i32
  }
  func.func @transform_11(%arg0: i32) -> (i32, i32) {
    %c0_i32 = arith.constant 0 : i32
    %c0_i32_0 = arith.constant 0 : i32
    %c0_i32_1 = arith.constant 0 : i32
    return %c0_i32, %c0_i32_0 : i32, i32
  }
  func.func @transform_12(%arg0: i32) -> (i32, i32) {
    %c0_i32 = arith.constant 0 : i32
    %c0_i32_0 = arith.constant 0 : i32
    %c0_i32_1 = arith.constant 0 : i32
    return %c0_i32, %c0_i32_0 : i32, i32
  }
  func.func @transform_13(%arg0: i32) -> (i32, i32) {
    %c0_i32 = arith.constant 0 : i32
    %c0_i32_0 = arith.constant 0 : i32
    %c0_i32_1 = arith.constant 0 : i32
    return %c0_i32, %c0_i32_0 : i32, i32
  }
  func.func @transform_14(%arg0: i32) -> (i32, i32) {
    %c0_i32 = arith.constant 0 : i32
    %c0_i32_0 = arith.constant 0 : i32
    %c0_i32_1 = arith.constant 0 : i32
    return %c0_i32, %c0_i32_0 : i32, i32
  }
  func.func @transform_15(%arg0: i32) -> (i32, i32) {
    %c0_i32 = arith.constant 0 : i32
    %c0_i32_0 = arith.constant 0 : i32
    %c0_i32_1 = arith.constant 0 : i32
    return %c0_i32, %c0_i32_0 : i32, i32
  }
  func.func @transform_16(%arg0: i32) -> (i32, i32) {
    %c0_i32 = arith.constant 0 : i32
    %c0_i32_0 = arith.constant 0 : i32
    %c0_i32_1 = arith.constant 0 : i32
    return %c0_i32, %c0_i32_0 : i32, i32
  }
  func.func @transform_17(%arg0: i32) -> (i32, i32) {
    %c0_i32 = arith.constant 0 : i32
    %c0_i32_0 = arith.constant 0 : i32
    return %c0_i32, %arg0 : i32, i32
  }
}

</mosaic_0001>

<llo_original>
// kernel: tpu_custom_call.1
$region0: #{tpu_custom_call.1}
  #allocation0 [shape = 'u32[]', space=smem, size = 0x4, offset = 0x4, fixed_abs, tag = 'smem constant byte address 0x4 - core index']
  #allocation1 [shape = 'u32[144,128]{1,0:T(1,128)}', space=vmem, size = 0x12000, scoped, tag = 'internal scratch']
  %s0 = inlined_call_operand.vmem [shape: f32[512,16], index: 0, kind: input, shape index: {}]
  %s1 = inlined_call_operand.vmem [shape: f32[1,128], index: 1, kind: input, shape index: {}]
  %s2 = inlined_call_operand.vmem [shape: f32[1,128], index: 2, kind: input, shape index: {}]
  %s3 = inlined_call_operand.vmem [shape: bf16[128,128], index: 3, kind: input, shape index: {}]
  %s4 = inlined_call_operand.vmem [shape: f32[1,128], index: 4, kind: input, shape index: {}]
  %s5 = inlined_call_operand.vmem [shape: bf16[128,128], index: 5, kind: input, shape index: {}]
  %s6 = inlined_call_operand.vmem [shape: f32[1,128], index: 6, kind: input, shape index: {}]
  %s7 = inlined_call_operand.vmem [shape: bf16[128,128], index: 7, kind: input, shape index: {}]
  %s8 = inlined_call_operand.vmem [shape: bf16[128,128], index: 8, kind: input, shape index: {}]
  %s9 = inlined_call_operand.vmem [shape: f32[1,128], index: 9, kind: input, shape index: {}]
  %s10 = inlined_call_operand.vmem [shape: bf16[128,128], index: 10, kind: input, shape index: {}]
  %s11 = inlined_call_operand.vmem [shape: f32[1,128], index: 11, kind: input, shape index: {}]
  %s12 = inlined_call_operand.vmem [shape: bf16[128,66], index: 12, kind: input, shape index: {}]
  %s13 = inlined_call_operand.vmem [shape: bf16[128,66], index: 13, kind: input, shape index: {}]
  %s14 = inlined_call_operand.vmem [shape: f32[1,66], index: 14, kind: input, shape index: {}]
  %s15 = inlined_call_operand.vmem [shape: bf16[64,6], index: 15, kind: input, shape index: {}]
  %s16 = inlined_call_operand.vmem [shape: f32[1,6], index: 16, kind: input, shape index: {}]
  %s17 = inlined_call_operand.hbm [shape: f32[8,512], index: 17, kind: output, shape index: {}]
  %s18 = sld [smem:[#allocation0]]
  $region101: #{tpu_custom_call.1} parent=0
    _
  %s20 = ssub.s32 1, %s18
  %s21 = scalar_select 0, %s20, %s18
  $region1: #{tpu_custom_call.1} parent=0
    #allocation2 [shape = 'u8[16384]{0}', space=vmem, size = 0x4000, scoped, tag = 'output window, operand 0']
    #allocation3 [shape = 's32[2]{0}', space=sflag, size = 0x8, scoped, tag = 'scoped memory for tpu_custom_call.1']
    %22 = vsyncpa [#allocation3], 0
    %s23 = scalar_lea.sflag [#allocation3], 1
    %24 = vsyncpa %s23, 0
    loop: start=0, step=1, limit=4
    $region2: #{tpu_custom_call.1} parent=1 // loop_pre_header
      _
    $region3: #{tpu_custom_call.1} parent=1 // loop_header
      %s26 = sphi 0, %s30
      %p27 = scmp.ge.s32.totalorder %s26, 4
      %s36 = sphi 0, %s38
      %s39 = sphi 0, %s36
      %s40 = sphi 0, %s39
      %s56 = sphi 0, %s40
      %s60 = sphi 0, %s60
      %s62 = sphi 0, %s60
      %s63 = sphi 0, %s62
      %s77 = sphi 0, %s63
      %s81 = sphi 0, %s81
      %s83 = sphi 0, %s81
      %s84 = sphi 0, %s83
      %s98 = sphi 0, %s84
      %s102 = sphi 0, %s102
      %s104 = sphi 0, %s102
      %s105 = sphi 0, %s104
      %s119 = sphi 0, %s105
      %s123 = sphi 0, %s123
      %s125 = sphi 0, %s123
      %s126 = sphi 0, %s125
      %s140 = sphi 0, %s126
      %s144 = sphi 0, %s144
      %s146 = sphi 0, %s144
      %s147 = sphi 0, %s146
      %s161 = sphi 0, %s147
      %s165 = sphi 0, %s165
      %s167 = sphi 0, %s165
      %s168 = sphi 0, %s167
      %s182 = sphi 0, %s168
      %s186 = sphi 0, %s186
      %s188 = sphi 0, %s186
      %s189 = sphi 0, %s188
      %s203 = sphi 0, %s189
      %s207 = sphi 0, %s207
      %s209 = sphi 0, %s207
      %s210 = sphi 0, %s209
      %s224 = sphi 0, %s210
      %s228 = sphi 0, %s228
      %s230 = sphi 0, %s228
      %s231 = sphi 0, %s230
      %s245 = sphi 0, %s231
      %s249 = sphi 0, %s249
      %s251 = sphi 0, %s249
      %s252 = sphi 0, %s251
      %s266 = sphi 0, %s252
      %s270 = sphi 0, %s270
      %s272 = sphi 0, %s270
      %s273 = sphi 0, %s272
      %s287 = sphi 0, %s273
      %s291 = sphi 0, %s291
      %s293 = sphi 0, %s291
      %s294 = sphi 0, %s293
      %s308 = sphi 0, %s294
      %s312 = sphi 0, %s312
      %s314 = sphi 0, %s312
      %s315 = sphi 0, %s314
      %s329 = sphi 0, %s315
      %s333 = sphi 0, %s333
      %s335 = sphi 0, %s333
      %s336 = sphi 0, %s335
      %s350 = sphi 0, %s336
      %s354 = sphi 0, %s354
      %s356 = sphi 0, %s354
      %s357 = sphi 0, %s356
      %s371 = sphi 0, %s357
      %s375 = sphi 0, %s375
      %s377 = sphi 0, %s375
      %s378 = sphi 0, %s377
      %s392 = sphi 0, %s378
      %s398 = sphi 0, %s400
      %s401 = sphi 0, %s398
      %s402 = sphi 0, %s401
      %s418 = sphi 0, %s402
    $region4: #{tpu_custom_call.1} parent=1 // loop_header_branch
      %29 = sbr.rel (%p27) target = $region8
    $region5: #{tpu_custom_call.1} parent=1 // loop_body
      %s31 = ssub.s32 %s26, 1
      %s32 = ssub.s32 %s26, 2
      %s33 = sadd.s32 %s26, 1
      %s34 = ssub.s32 %s26, %s33
      %p35 = scmp.eq.s32.totalorder %s34, 0
      %s37 = sadd.s32 %s36, 1
      %s38 = scalar_select %p35, %s36, %s37
      %p41 = pneg %p35
      %p42 = scmp.eq.s32.totalorder %s26, 1
      %p43 = por %p41, %p42
      %p44 = scmp.ne.s32.totalorder %s36, %s39
      %p45 = scmp.eq.s32.totalorder %s26, 0
      %p46 = por %p44, %p45
      %p47 = scmp.ne.s32.totalorder %s36, %s39
      %p48 = scmp.eq.s32.totalorder %s31, 1
      %p49 = por %p47, %p48
      %p50 = scmp.ne.s32.totalorder %s39, %s40
      %p51 = scmp.eq.s32.totalorder %s31, 0
      %p52 = por %p50, %p51
      %p53 = scmp.ne.s32.totalorder %s39, %s40
      %p54 = scmp.eq.s32.totalorder %s32, 1
      %p55 = por %p53, %p54
      %p57 = scmp.ne.s32.totalorder %s40, %s56
      %p58 = scmp.eq.s32.totalorder %s32, 0
      %p59 = por %p57, %p58
      %s61 = sadd.s32 %s60, 1
      %p64 = scmp.eq.s32.totalorder %s26, 1
      %p65 = scmp.ne.s32.totalorder %s60, %s62
      %p66 = scmp.eq.s32.totalorder %s26, 0
      %p67 = por %p65, %p66
      %p68 = scmp.ne.s32.totalorder %s60, %s62
      %p69 = scmp.eq.s32.totalorder %s31, 1
      %p70 = por %p68, %p69
      %p71 = scmp.ne.s32.totalorder %s62, %s63
      %p72 = scmp.eq.s32.totalorder %s31, 0
      %p73 = por %p71, %p72
      %p74 = scmp.ne.s32.totalorder %s62, %s63
      %p75 = scmp.eq.s32.totalorder %s32, 1
      %p76 = por %p74, %p75
      %p78 = scmp.ne.s32.totalorder %s63, %s77
      %p79 = scmp.eq.s32.totalorder %s32, 0
      %p80 = por %p78, %p79
      %s82 = sadd.s32 %s81, 1
      %p85 = scmp.eq.s32.totalorder %s26, 1
      %p86 = scmp.ne.s32.totalorder %s81, %s83
      %p87 = scmp.eq.s32.totalorder %s26, 0
      %p88 = por %p86, %p87
      %p89 = scmp.ne.s32.totalorder %s81, %s83
      %p90 = scmp.eq.s32.totalorder %s31, 1
      %p91 = por %p89, %p90
      %p92 = scmp.ne.s32.totalorder %s83, %s84
      %p93 = scmp.eq.s32.totalorder %s31, 0
      %p94 = por %p92, %p93
      %p95 = scmp.ne.s32.totalorder %s83, %s84
      %p96 = scmp.eq.s32.totalorder %s32, 1
      %p97 = por %p95, %p96
      %p99 = scmp.ne.s32.totalorder %s84, %s98
      %p100 = scmp.eq.s32.totalorder %s32, 0
      %p101 = por %p99, %p100
      %s103 = sadd.s32 %s102, 1
      %p106 = scmp.eq.s32.totalorder %s26, 1
      %p107 = scmp.ne.s32.totalorder %s102, %s104
      %p108 = scmp.eq.s32.totalorder %s26, 0
      %p109 = por %p107, %p108
      %p110 = scmp.ne.s32.totalorder %s102, %s104
      %p111 = scmp.eq.s32.totalorder %s31, 1
      %p112 = por %p110, %p111
      %p113 = scmp.ne.s32.totalorder %s104, %s105
      %p114 = scmp.eq.s32.totalorder %s31, 0
      %p115 = por %p113, %p114
      %p116 = scmp.ne.s32.totalorder %s104, %s105
      %p117 = scmp.eq.s32.totalorder %s32, 1
      %p118 = por %p116, %p117
      %p120 = scmp.ne.s32.totalorder %s105, %s119
      %p121 = scmp.eq.s32.totalorder %s32, 0
      %p122 = por %p120, %p121
      %s124 = sadd.s32 %s123, 1
      %p127 = scmp.eq.s32.totalorder %s26, 1
      %p128 = scmp.ne.s32.totalorder %s123, %s125
      %p129 = scmp.eq.s32.totalorder %s26, 0
      %p130 = por %p128, %p129
      %p131 = scmp.ne.s32.totalorder %s123, %s125
      %p132 = scmp.eq.s32.totalorder %s31, 1
      %p133 = por %p131, %p132
      %p134 = scmp.ne.s32.totalorder %s125, %s126
      %p135 = scmp.eq.s32.totalorder %s31, 0
      %p136 = por %p134, %p135
      %p137 = scmp.ne.s32.totalorder %s125, %s126
      %p138 = scmp.eq.s32.totalorder %s32, 1
      %p139 = por %p137, %p138
      %p141 = scmp.ne.s32.totalorder %s126, %s140
      %p142 = scmp.eq.s32.totalorder %s32, 0
      %p143 = por %p141, %p142
      %s145 = sadd.s32 %s144, 1
      %p148 = scmp.eq.s32.totalorder %s26, 1
      %p149 = scmp.ne.s32.totalorder %s144, %s146
      %p150 = scmp.eq.s32.totalorder %s26, 0
      %p151 = por %p149, %p150
      %p152 = scmp.ne.s32.totalorder %s144, %s146
      %p153 = scmp.eq.s32.totalorder %s31, 1
      %p154 = por %p152, %p153
      %p155 = scmp.ne.s32.totalorder %s146, %s147
      %p156 = scmp.eq.s32.totalorder %s31, 0
      %p157 = por %p155, %p156
      %p158 = scmp.ne.s32.totalorder %s146, %s147
      %p159 = scmp.eq.s32.totalorder %s32, 1
      %p160 = por %p158, %p159
      %p162 = scmp.ne.s32.totalorder %s147, %s161
      %p163 = scmp.eq.s32.totalorder %s32, 0
      %p164 = por %p162, %p163
      %s166 = sadd.s32 %s165, 1
      %p169 = scmp.eq.s32.totalorder %s26, 1
      %p170 = scmp.ne.s32.totalorder %s165, %s167
      %p171 = scmp.eq.s32.totalorder %s26, 0
      %p172 = por %p170, %p171
      %p173 = scmp.ne.s32.totalorder %s165, %s167
      %p174 = scmp.eq.s32.totalorder %s31, 1
      %p175 = por %p173, %p174
      %p176 = scmp.ne.s32.totalorder %s167, %s168
      %p177 = scmp.eq.s32.totalorder %s31, 0
      %p178 = por %p176, %p177
      %p179 = scmp.ne.s32.totalorder %s167, %s168
      %p180 = scmp.eq.s32.totalorder %s32, 1
      %p181 = por %p179, %p180
      %p183 = scmp.ne.s32.totalorder %s168, %s182
      %p184 = scmp.eq.s32.totalorder %s32, 0
      %p185 = por %p183, %p184
      %s187 = sadd.s32 %s186, 1
      %p190 = scmp.eq.s32.totalorder %s26, 1
      %p191 = scmp.ne.s32.totalorder %s186, %s188
      %p192 = scmp.eq.s32.totalorder %s26, 0
      %p193 = por %p191, %p192
      %p194 = scmp.ne.s32.totalorder %s186, %s188
      %p195 = scmp.eq.s32.totalorder %s31, 1
      %p196 = por %p194, %p195
      %p197 = scmp.ne.s32.totalorder %s188, %s189
      %p198 = scmp.eq.s32.totalorder %s31, 0
      %p199 = por %p197, %p198
      %p200 = scmp.ne.s32.totalorder %s188, %s189
      %p201 = scmp.eq.s32.totalorder %s32, 1
      %p202 = por %p200, %p201
      %p204 = scmp.ne.s32.totalorder %s189, %s203
      %p205 = scmp.eq.s32.totalorder %s32, 0
      %p206 = por %p204, %p205
      %s208 = sadd.s32 %s207, 1
      %p211 = scmp.eq.s32.totalorder %s26, 1
      %p212 = scmp.ne.s32.totalorder %s207, %s209
      %p213 = scmp.eq.s32.totalorder %s26, 0
      %p214 = por %p212, %p213
      %p215 = scmp.ne.s32.totalorder %s207, %s209
      %p216 = scmp.eq.s32.totalorder %s31, 1
      %p217 = por %p215, %p216
      %p218 = scmp.ne.s32.totalorder %s209, %s210
      %p219 = scmp.eq.s32.totalorder %s31, 0
      %p220 = por %p218, %p219
      %p221 = scmp.ne.s32.totalorder %s209, %s210
      %p222 = scmp.eq.s32.totalorder %s32, 1
      %p223 = por %p221, %p222
      %p225 = scmp.ne.s32.totalorder %s210, %s224
      %p226 = scmp.eq.s32.totalorder %s32, 0
      %p227 = por %p225, %p226
      %s229 = sadd.s32 %s228, 1
      %p232 = scmp.eq.s32.totalorder %s26, 1
      %p233 = scmp.ne.s32.totalorder %s228, %s230
      %p234 = scmp.eq.s32.totalorder %s26, 0
      %p235 = por %p233, %p234
      %p236 = scmp.ne.s32.totalorder %s228, %s230
      %p237 = scmp.eq.s32.totalorder %s31, 1
      %p238 = por %p236, %p237
      %p239 = scmp.ne.s32.totalorder %s230, %s231
      %p240 = scmp.eq.s32.totalorder %s31, 0
      %p241 = por %p239, %p240
      %p242 = scmp.ne.s32.totalorder %s230, %s231
      %p243 = scmp.eq.s32.totalorder %s32, 1
      %p244 = por %p242, %p243
      %p246 = scmp.ne.s32.totalorder %s231, %s245
      %p247 = scmp.eq.s32.totalorder %s32, 0
      %p248 = por %p246, %p247
      %s250 = sadd.s32 %s249, 1
      %p253 = scmp.eq.s32.totalorder %s26, 1
      %p254 = scmp.ne.s32.totalorder %s249, %s251
      %p255 = scmp.eq.s32.totalorder %s26, 0
      %p256 = por %p254, %p255
      %p257 = scmp.ne.s32.totalorder %s249, %s251
      %p258 = scmp.eq.s32.totalorder %s31, 1
      %p259 = por %p257, %p258
      %p260 = scmp.ne.s32.totalorder %s251, %s252
      %p261 = scmp.eq.s32.totalorder %s31, 0
      %p262 = por %p260, %p261
      %p263 = scmp.ne.s32.totalorder %s251, %s252
      %p264 = scmp.eq.s32.totalorder %s32, 1
      %p265 = por %p263, %p264
      %p267 = scmp.ne.s32.totalorder %s252, %s266
      %p268 = scmp.eq.s32.totalorder %s32, 0
      %p269 = por %p267, %p268
      %s271 = sadd.s32 %s270, 1
      %p274 = scmp.eq.s32.totalorder %s26, 1
      %p275 = scmp.ne.s32.totalorder %s270, %s272
      %p276 = scmp.eq.s32.totalorder %s26, 0
      %p277 = por %p275, %p276
      %p278 = scmp.ne.s32.totalorder %s270, %s272
      %p279 = scmp.eq.s32.totalorder %s31, 1
      %p280 = por %p278, %p279
      %p281 = scmp.ne.s32.totalorder %s272, %s273
      %p282 = scmp.eq.s32.totalorder %s31, 0
      %p283 = por %p281, %p282
      %p284 = scmp.ne.s32.totalorder %s272, %s273
      %p285 = scmp.eq.s32.totalorder %s32, 1
      %p286 = por %p284, %p285
      %p288 = scmp.ne.s32.totalorder %s273, %s287
      %p289 = scmp.eq.s32.totalorder %s32, 0
      %p290 = por %p288, %p289
      %s292 = sadd.s32 %s291, 1
      %p295 = scmp.eq.s32.totalorder %s26, 1
      %p296 = scmp.ne.s32.totalorder %s291, %s293
      %p297 = scmp.eq.s32.totalorder %s26, 0
      %p298 = por %p296, %p297
      %p299 = scmp.ne.s32.totalorder %s291, %s293
      %p300 = scmp.eq.s32.totalorder %s31, 1
      %p301 = por %p299, %p300
      %p302 = scmp.ne.s32.totalorder %s293, %s294
      %p303 = scmp.eq.s32.totalorder %s31, 0
      %p304 = por %p302, %p303
      %p305 = scmp.ne.s32.totalorder %s293, %s294
      %p306 = scmp.eq.s32.totalorder %s32, 1
      %p307 = por %p305, %p306
      %p309 = scmp.ne.s32.totalorder %s294, %s308
      %p310 = scmp.eq.s32.totalorder %s32, 0
      %p311 = por %p309, %p310
      %s313 = sadd.s32 %s312, 1
      %p316 = scmp.eq.s32.totalorder %s26, 1
      %p317 = scmp.ne.s32.totalorder %s312, %s314
      %p318 = scmp.eq.s32.totalorder %s26, 0
      %p319 = por %p317, %p318
      %p320 = scmp.ne.s32.totalorder %s312, %s314
      %p321 = scmp.eq.s32.totalorder %s31, 1
      %p322 = por %p320, %p321
      %p323 = scmp.ne.s32.totalorder %s314, %s315
      %p324 = scmp.eq.s32.totalorder %s31, 0
      %p325 = por %p323, %p324
      %p326 = scmp.ne.s32.totalorder %s314, %s315
      %p327 = scmp.eq.s32.totalorder %s32, 1
      %p328 = por %p326, %p327
      %p330 = scmp.ne.s32.totalorder %s315, %s329
      %p331 = scmp.eq.s32.totalorder %s32, 0
      %p332 = por %p330, %p331
      %s334 = sadd.s32 %s333, 1
      %p337 = scmp.eq.s32.totalorder %s26, 1
      %p338 = scmp.ne.s32.totalorder %s333, %s335
      %p339 = scmp.eq.s32.totalorder %s26, 0
      %p340 = por %p338, %p339
      %p341 = scmp.ne.s32.totalorder %s333, %s335
      %p342 = scmp.eq.s32.totalorder %s31, 1
      %p343 = por %p341, %p342
      %p344 = scmp.ne.s32.totalorder %s335, %s336
      %p345 = scmp.eq.s32.totalorder %s31, 0
      %p346 = por %p344, %p345
      %p347 = scmp.ne.s32.totalorder %s335, %s336
      %p348 = scmp.eq.s32.totalorder %s32, 1
      %p349 = por %p347, %p348
      %p351 = scmp.ne.s32.totalorder %s336, %s350
      %p352 = scmp.eq.s32.totalorder %s32, 0
      %p353 = por %p351, %p352
      %s355 = sadd.s32 %s354, 1
      %p358 = scmp.eq.s32.totalorder %s26, 1
      %p359 = scmp.ne.s32.totalorder %s354, %s356
      %p360 = scmp.eq.s32.totalorder %s26, 0
      %p361 = por %p359, %p360
      %p362 = scmp.ne.s32.totalorder %s354, %s356
      %p363 = scmp.eq.s32.totalorder %s31, 1
      %p364 = por %p362, %p363
      %p365 = scmp.ne.s32.totalorder %s356, %s357
      %p366 = scmp.eq.s32.totalorder %s31, 0
      %p367 = por %p365, %p366
      %p368 = scmp.ne.s32.totalorder %s356, %s357
      %p369 = scmp.eq.s32.totalorder %s32, 1
      %p370 = por %p368, %p369
      %p372 = scmp.ne.s32.totalorder %s357, %s371
      %p373 = scmp.eq.s32.totalorder %s32, 0
      %p374 = por %p372, %p373
      %s376 = sadd.s32 %s375, 1
      %p379 = scmp.eq.s32.totalorder %s26, 1
      %p380 = scmp.ne.s32.totalorder %s375, %s377
      %p381 = scmp.eq.s32.totalorder %s26, 0
      %p382 = por %p380, %p381
      %p383 = scmp.ne.s32.totalorder %s375, %s377
      %p384 = scmp.eq.s32.totalorder %s31, 1
      %p385 = por %p383, %p384
      %p386 = scmp.ne.s32.totalorder %s377, %s378
      %p387 = scmp.eq.s32.totalorder %s31, 0
      %p388 = por %p386, %p387
      %p389 = scmp.ne.s32.totalorder %s377, %s378
      %p390 = scmp.eq.s32.totalorder %s32, 1
      %p391 = por %p389, %p390
      %p393 = scmp.ne.s32.totalorder %s378, %s392
      %p394 = scmp.eq.s32.totalorder %s32, 0
      %p395 = por %p393, %p394
      %s396 = ssub.s32 %s26, %s33
      %p397 = scmp.eq.s32.totalorder %s396, 0
      %s399 = sadd.s32 %s398, 1
      %s400 = scalar_select %p397, %s398, %s399
      %p403 = pneg %p397
      %p404 = scmp.eq.s32.totalorder %s26, 1
      %p405 = por %p403, %p404
      %p406 = scmp.ne.s32.totalorder %s398, %s401
      %p407 = scmp.eq.s32.totalorder %s26, 0
      %p408 = por %p406, %p407
      %p409 = scmp.ne.s32.totalorder %s398, %s401
      %p410 = scmp.eq.s32.totalorder %s31, 1
      %p411 = por %p409, %p410
      %p412 = scmp.ne.s32.totalorder %s401, %s402
      %p413 = scmp.eq.s32.totalorder %s31, 0
      %p414 = por %p412, %p413
      %p415 = scmp.ne.s32.totalorder %s401, %s402
      %p416 = scmp.eq.s32.totalorder %s32, 1
      %p417 = por %p415, %p416
      %p419 = scmp.ne.s32.totalorder %s402, %s418
      %p420 = scmp.eq.s32.totalorder %s32, 0
      %p421 = por %p419, %p420
      %p422 = scmp.le.s32.totalorder 1, %s26
      %p423 = scmp.lt.s32.totalorder %s26, 3
      %p424 = pnand %p422, %p423
      %p425 = pneg %p424
      // Predicated region
      $region9: #{tpu_custom_call.1} parent=5 // pred_check
        _
      $region10: #{tpu_custom_call.1} parent=5 // pred_check_branch
        %427 = sbr.rel (%p424) target = $region12
      $region11: #{tpu_custom_call.1} parent=5 // pred_region
        %s428 = ssub.s32 %s26, 1
        // Predicated region
        $region13: #{tpu_custom_call.1} parent=11 // pred_check
          %p429 = pneg %p73
        $region14: #{tpu_custom_call.1} parent=11 // pred_check_branch
          %431 = sbr.rel (%p429) target = $region16
        $region15: #{tpu_custom_call.1} parent=11 // pred_region
          _
        $region16: #{tpu_custom_call.1} parent=11 // pred_fallthru
          _
        // Predicated region
        $region17: #{tpu_custom_call.1} parent=11 // pred_check
          %p432 = pneg %p94
        $region18: #{tpu_custom_call.1} parent=11 // pred_check_branch
          %434 = sbr.rel (%p432) target = $region20
        $region19: #{tpu_custom_call.1} parent=11 // pred_region
          _
        $region20: #{tpu_custom_call.1} parent=11 // pred_fallthru
          _
        // Predicated region
        $region21: #{tpu_custom_call.1} parent=11 // pred_check
          %p435 = pneg %p115
        $region22: #{tpu_custom_call.1} parent=11 // pred_check_branch
          %437 = sbr.rel (%p435) target = $region24
        $region23: #{tpu_custom_call.1} parent=11 // pred_region
          _
        $region24: #{tpu_custom_call.1} parent=11 // pred_fallthru
          _
        // Predicated region
        $region25: #{tpu_custom_call.1} parent=11 // pred_check
          %p438 = pneg %p136
        $region26: #{tpu_custom_call.1} parent=11 // pred_check_branch
          %440 = sbr.rel (%p438) target = $region28
        $region27: #{tpu_custom_call.1} parent=11 // pred_region
          _
        $region28: #{tpu_custom_call.1} parent=11 // pred_fallthru
          _
        // Predicated region
        $region29: #{tpu_custom_call.1} parent=11 // pred_check
          %p441 = pneg %p157
        $region30: #{tpu_custom_call.1} parent=11 // pred_check_branch
          %443 = sbr.rel (%p441) target = $region32
        $region31: #{tpu_custom_call.1} parent=11 // pred_region
          _
        $region32: #{tpu_custom_call.1} parent=11 // pred_fallthru
          _
        // Predicated region
        $region33: #{tpu_custom_call.1} parent=11 // pred_check
          %p444 = pneg %p178
        $region34: #{tpu_custom_call.1} parent=11 // pred_check_branch
          %446 = sbr.rel (%p444) target = $region36
        $region35: #{tpu_custom_call.1} parent=11 // pred_region
          _
        $region36: #{tpu_custom_call.1} parent=11 // pred_fallthru
          _
        // Predicated region
        $region37: #{tpu_custom_call.1} parent=11 // pred_check
          %p447 = pneg %p199
        $region38: #{tpu_custom_call.1} parent=11 // pred_check_branch
          %449 = sbr.rel (%p447) target = $region40
        $region39: #{tpu_custom_call.1} parent=11 // pred_region
          _
        $region40: #{tpu_custom_call.1} parent=11 // pred_fallthru
          _
        // Predicated region
        $region41: #{tpu_custom_call.1} parent=11 // pred_check
          %p450 = pneg %p220
        $region42: #{tpu_custom_call.1} parent=11 // pred_check_branch
          %452 = sbr.rel (%p450) target = $region44
        $region43: #{tpu_custom_call.1} parent=11 // pred_region
          _
        $region44: #{tpu_custom_call.1} parent=11 // pred_fallthru
          _
        // Predicated region
        $region45: #{tpu_custom_call.1} parent=11 // pred_check
          %p453 = pneg %p241
        $region46: #{tpu_custom_call.1} parent=11 // pred_check_branch
          %455 = sbr.rel (%p453) target = $region48
        $region47: #{tpu_custom_call.1} parent=11 // pred_region
          _
        $region48: #{tpu_custom_call.1} parent=11 // pred_fallthru
          _
        // Predicated region
        $region49: #{tpu_custom_call.1} parent=11 // pred_check
          %p456 = pneg %p262
        $region50: #{tpu_custom_call.1} parent=11 // pred_check_branch
          %458 = sbr.rel (%p456) target = $region52
        $region51: #{tpu_custom_call.1} parent=11 // pred_region
          _
        $region52: #{tpu_custom_call.1} parent=11 // pred_fallthru
          _
        // Predicated region
        $region53: #{tpu_custom_call.1} parent=11 // pred_check
          %p459 = pneg %p283
        $region54: #{tpu_custom_call.1} parent=11 // pred_check_branch
          %461 = sbr.rel (%p459) target = $region56
        $region55: #{tpu_custom_call.1} parent=11 // pred_region
          _
        $region56: #{tpu_custom_call.1} parent=11 // pred_fallthru
          _
        // Predicated region
        $region57: #{tpu_custom_call.1} parent=11 // pred_check
          %p462 = pneg %p304
        $region58: #{tpu_custom_call.1} parent=11 // pred_check_branch
          %464 = sbr.rel (%p462) target = $region60
        $region59: #{tpu_custom_call.1} parent=11 // pred_region
          _
        $region60: #{tpu_custom_call.1} parent=11 // pred_fallthru
          _
        // Predicated region
        $region61: #{tpu_custom_call.1} parent=11 // pred_check
          %p465 = pneg %p325
        $region62: #{tpu_custom_call.1} parent=11 // pred_check_branch
          %467 = sbr.rel (%p465) target = $region64
        $region63: #{tpu_custom_call.1} parent=11 // pred_region
          _
        $region64: #{tpu_custom_call.1} parent=11 // pred_fallthru
          _
        // Predicated region
        $region65: #{tpu_custom_call.1} parent=11 // pred_check
          %p468 = pneg %p346
        $region66: #{tpu_custom_call.1} parent=11 // pred_check_branch
          %470 = sbr.rel (%p468) target = $region68
        $region67: #{tpu_custom_call.1} parent=11 // pred_region
          _
        $region68: #{tpu_custom_call.1} parent=11 // pred_fallthru
          _
        // Predicated region
        $region69: #{tpu_custom_call.1} parent=11 // pred_check
          %p471 = pneg %p367
        $region70: #{tpu_custom_call.1} parent=11 // pred_check_branch
          %473 = sbr.rel (%p471) target = $region72
        $region71: #{tpu_custom_call.1} parent=11 // pred_region
          _
        $region72: #{tpu_custom_call.1} parent=11 // pred_fallthru
          _
        // Predicated region
        $region73: #{tpu_custom_call.1} parent=11 // pred_check
          %p474 = pneg %p388
        $region74: #{tpu_custom_call.1} parent=11 // pred_check_branch
          %476 = sbr.rel (%p474) target = $region76
        $region75: #{tpu_custom_call.1} parent=11 // pred_region
          _
        $region76: #{tpu_custom_call.1} parent=11 // pred_fallthru
          _
      $region12: #{tpu_custom_call.1} parent=5 // pred_fallthru
        _
      %p477 = scmp.lt.s32.totalorder %s26, 2
      // Predicated region
      $region77: #{tpu_custom_call.1} parent=5 // pred_check
        %p478 = pneg %p477
      $region78: #{tpu_custom_call.1} parent=5 // pred_check_branch
        %480 = sbr.rel (%p478) target = $region80
      $region79: #{tpu_custom_call.1} parent=5 // pred_region
        // Predicated region
        $region81: #{tpu_custom_call.1} parent=79 // pred_check
          %p481 = pneg %p46
        $region82: #{tpu_custom_call.1} parent=79 // pred_check_branch
          %483 = sbr.rel (%p481) target = $region84
        $region83: #{tpu_custom_call.1} parent=79 // pred_region
          %s484 = smul.u32 32, %s26
          %p485 = scmp.lt.s32.totalorder %s484, 63
          %s486 = scalar_select %p485, %s484, 63
          %s487 = smul.addr %s486, 8
          %s488 = scalar_lea.vmem %s0, %s487
          %s489 = smul.u32 32, %s26
        $region84: #{tpu_custom_call.1} parent=79 // pred_fallthru
          _
      $region80: #{tpu_custom_call.1} parent=5 // pred_fallthru
        _
      %p490 = scmp.le.s32.totalorder 1, %s26
      %p491 = scmp.lt.s32.totalorder %s26, 3
      %p492 = pnand %p490, %p491
      %p493 = pneg %p492
      // Predicated region
      $region85: #{tpu_custom_call.1} parent=5 // pred_check
        _
      $region86: #{tpu_custom_call.1} parent=5 // pred_check_branch
        %495 = sbr.rel (%p492) target = $region88
      $region87: #{tpu_custom_call.1} parent=5 // pred_region
        %s496 = ssub.s32 %s26, 1
        %s497 = smul.u32 32, %s31
        %p498 = scmp.lt.s32.totalorder %s497, 63
        %s499 = scalar_select %p498, %s497, 63
        %s500 = smul.addr %s499, 8
        %s501 = scalar_lea.vmem %s0, %s500
        %p502 = pneg %p52
        %p503 = pneg %p49
        %p504 = pneg %p73
        %p505 = pneg %p70
        %p506 = pneg %p94
        %p507 = pneg %p91
        %p508 = pneg %p115
        %p509 = pneg %p112
        %p510 = pneg %p136
        %p511 = pneg %p133
        %p512 = pneg %p157
        %p513 = pneg %p154
        %p514 = pneg %p178
        %p515 = pneg %p175
        %p516 = pneg %p199
        %p517 = pneg %p196
        %p518 = pneg %p220
        %p519 = pneg %p217
        %p520 = pneg %p241
        %p521 = pneg %p238
        %p522 = pneg %p262
        %p523 = pneg %p259
        %p524 = pneg %p283
        %p525 = pneg %p280
        %p526 = pneg %p304
        %p527 = pneg %p301
        %p528 = pneg %p325
        %p529 = pneg %p322
        %p530 = pneg %p346
        %p531 = pneg %p343
        %p532 = pneg %p367
        %p533 = pneg %p364
        %p534 = pneg %p388
        %p535 = pneg %p385
        %p536 = pneg %p414
        %p537 = pneg %p411
        %s538 = sand.u32 %s401, 1
        %s539 = scalar_lea.sflag [#allocation3], %s538
        %s540 = sand.u32 %s401, 1
        %s541 = smul.addr %s540, 16
        %s542 = scalar_lea.vmem [#allocation2], %s541
        %s543 = smul.u32 32, %s31
        %p544 = scmp.lt.s32.totalorder %s543, 63
        %s545 = scalar_select %p544, %s543, 63
        %s546 = smul.addr %s545, 8
        %s547 = scalar_lea.vmem %s0, %s546
        %s548 = smul.u32 32, %s31
        %s549 = smul.u32 2, %s31
        %v551 = vld [vmem:[%s547] sm:$0xff]
        %v552 = vld [vmem:[%s547 + $0x8] sm:$0xff]
        %v553 = vld [vmem:[%s547 + $0x10] sm:$0xff]
        %v554 = vld [vmem:[%s547 + $0x18] sm:$0xff]
        %v555 = vld [vmem:[%s547 + $0x20] sm:$0xff]
        %v556 = vld [vmem:[%s547 + $0x28] sm:$0xff]
        %v557 = vld [vmem:[%s547 + $0x30] sm:$0xff]
        %v558 = vld [vmem:[%s547 + $0x38] sm:$0xff]
        %v559 = vld [vmem:[%s547 + $0x40] sm:$0xff]
        %v560 = vld [vmem:[%s547 + $0x48] sm:$0xff]
        %v561 = vld [vmem:[%s547 + $0x50] sm:$0xff]
        %v562 = vld [vmem:[%s547 + $0x58] sm:$0xff]
        %v563 = vld [vmem:[%s547 + $0x60] sm:$0xff]
        %v564 = vld [vmem:[%s547 + $0x68] sm:$0xff]
        %v565 = vld [vmem:[%s547 + $0x70] sm:$0xff]
        %v566 = vld [vmem:[%s547 + $0x78] sm:$0xff]
        %v567 = vld [vmem:[%s547 + $0x80] sm:$0xff]
        %v568 = vld [vmem:[%s547 + $0x88] sm:$0xff]
        %v569 = vld [vmem:[%s547 + $0x90] sm:$0xff]
        %v570 = vld [vmem:[%s547 + $0x98] sm:$0xff]
        %v571 = vld [vmem:[%s547 + $0xa0] sm:$0xff]
        %v572 = vld [vmem:[%s547 + $0xa8] sm:$0xff]
        %v573 = vld [vmem:[%s547 + $0xb0] sm:$0xff]
        %v574 = vld [vmem:[%s547 + $0xb8] sm:$0xff]
        %v575 = vld [vmem:[%s547 + $0xc0] sm:$0xff]
        %v576 = vld [vmem:[%s547 + $0xc8] sm:$0xff]
        %v577 = vld [vmem:[%s547 + $0xd0] sm:$0xff]
        %v578 = vld [vmem:[%s547 + $0xd8] sm:$0xff]
        %v579 = vld [vmem:[%s547 + $0xe0] sm:$0xff]
        %v580 = vld [vmem:[%s547 + $0xe8] sm:$0xff]
        %v581 = vld [vmem:[%s547 + $0xf0] sm:$0xff]
        %v582 = vld [vmem:[%s547 + $0xf8] sm:$0xff]
        %615 = vrot.lane.b32.xlu0 %v551, 16
        %v616 = vpop.permute.xlu0 %615
        %617 = vrot.lane.b32.xlu0 %v552, 16
        %v618 = vpop.permute.xlu0 %617
        %619 = vrot.lane.b32.xlu0 %v553, 16
        %v620 = vpop.permute.xlu0 %619
        %621 = vrot.lane.b32.xlu0 %v554, 16
        %v622 = vpop.permute.xlu0 %621
        %623 = vrot.lane.b32.xlu0 %v555, 16
        %v624 = vpop.permute.xlu0 %623
        %625 = vrot.lane.b32.xlu0 %v556, 16
        %v626 = vpop.permute.xlu0 %625
        %627 = vrot.lane.b32.xlu0 %v557, 16
        %v628 = vpop.permute.xlu0 %627
        %629 = vrot.lane.b32.xlu0 %v558, 16
        %v630 = vpop.permute.xlu0 %629
        %631 = vrot.lane.b32.xlu0 %v559, 16
        %v632 = vpop.permute.xlu0 %631
        %633 = vrot.lane.b32.xlu0 %v560, 16
        %v634 = vpop.permute.xlu0 %633
        %635 = vrot.lane.b32.xlu0 %v561, 16
        %v636 = vpop.permute.xlu0 %635
        %637 = vrot.lane.b32.xlu0 %v562, 16
        %v638 = vpop.permute.xlu0 %637
        %639 = vrot.lane.b32.xlu0 %v563, 16
        %v640 = vpop.permute.xlu0 %639
        %641 = vrot.lane.b32.xlu0 %v564, 16
        %v642 = vpop.permute.xlu0 %641
        %643 = vrot.lane.b32.xlu0 %v565, 16
        %v644 = vpop.permute.xlu0 %643
        %645 = vrot.lane.b32.xlu0 %v566, 16
        %v646 = vpop.permute.xlu0 %645
        %647 = vrot.lane.b32.xlu0 %v567, 16
        %v648 = vpop.permute.xlu0 %647
        %649 = vrot.lane.b32.xlu0 %v568, 16
        %v650 = vpop.permute.xlu0 %649
        %651 = vrot.lane.b32.xlu0 %v569, 16
        %v652 = vpop.permute.xlu0 %651
        %653 = vrot.lane.b32.xlu0 %v570, 16
        %v654 = vpop.permute.xlu0 %653
        %655 = vrot.lane.b32.xlu0 %v571, 16
        %v656 = vpop.permute.xlu0 %655
        %657 = vrot.lane.b32.xlu0 %v572, 16
        %v658 = vpop.permute.xlu0 %657
        %659 = vrot.lane.b32.xlu0 %v573, 16
        %v660 = vpop.permute.xlu0 %659
        %661 = vrot.lane.b32.xlu0 %v574, 16
        %v662 = vpop.permute.xlu0 %661
        %663 = vrot.lane.b32.xlu0 %v575, 16
        %v664 = vpop.permute.xlu0 %663
        %665 = vrot.lane.b32.xlu0 %v576, 16
        %v666 = vpop.permute.xlu0 %665
        %667 = vrot.lane.b32.xlu0 %v577, 16
        %v668 = vpop.permute.xlu0 %667
        %669 = vrot.lane.b32.xlu0 %v578, 16
        %v670 = vpop.permute.xlu0 %669
        %671 = vrot.lane.b32.xlu0 %v579, 16
        %v672 = vpop.permute.xlu0 %671
        %673 = vrot.lane.b32.xlu0 %v580, 16
        %v674 = vpop.permute.xlu0 %673
        %675 = vrot.lane.b32.xlu0 %v581, 16
        %v676 = vpop.permute.xlu0 %675
        %677 = vrot.lane.b32.xlu0 %v582, 16
        %v678 = vpop.permute.xlu0 %677
        %711 = vrot.lane.b32.xlu0 %v551, 32
        %v712 = vpop.permute.xlu0 %711
        %713 = vrot.lane.b32.xlu0 %v552, 32
        %v714 = vpop.permute.xlu0 %713
        %715 = vrot.lane.b32.xlu0 %v553, 32
        %v716 = vpop.permute.xlu0 %715
        %717 = vrot.lane.b32.xlu0 %v554, 32
        %v718 = vpop.permute.xlu0 %717
        %719 = vrot.lane.b32.xlu0 %v555, 32
        %v720 = vpop.permute.xlu0 %719
        %721 = vrot.lane.b32.xlu0 %v556, 32
        %v722 = vpop.permute.xlu0 %721
        %723 = vrot.lane.b32.xlu0 %v557, 32
        %v724 = vpop.permute.xlu0 %723
        %725 = vrot.lane.b32.xlu0 %v558, 32
        %v726 = vpop.permute.xlu0 %725
        %727 = vrot.lane.b32.xlu0 %v559, 32
        %v728 = vpop.permute.xlu0 %727
        %729 = vrot.lane.b32.xlu0 %v560, 32
        %v730 = vpop.permute.xlu0 %729
        %731 = vrot.lane.b32.xlu0 %v561, 32
        %v732 = vpop.permute.xlu0 %731
        %733 = vrot.lane.b32.xlu0 %v562, 32
        %v734 = vpop.permute.xlu0 %733
        %735 = vrot.lane.b32.xlu0 %v563, 32
        %v736 = vpop.permute.xlu0 %735
        %737 = vrot.lane.b32.xlu0 %v564, 32
        %v738 = vpop.permute.xlu0 %737
        %739 = vrot.lane.b32.xlu0 %v565, 32
        %v740 = vpop.permute.xlu0 %739
        %741 = vrot.lane.b32.xlu0 %v566, 32
        %v742 = vpop.permute.xlu0 %741
        %743 = vrot.lane.b32.xlu0 %v567, 32
        %v744 = vpop.permute.xlu0 %743
        %745 = vrot.lane.b32.xlu0 %v568, 32
        %v746 = vpop.permute.xlu0 %745
        %747 = vrot.lane.b32.xlu0 %v569, 32
        %v748 = vpop.permute.xlu0 %747
        %749 = vrot.lane.b32.xlu0 %v570, 32
        %v750 = vpop.permute.xlu0 %749
        %751 = vrot.lane.b32.xlu0 %v571, 32
        %v752 = vpop.permute.xlu0 %751
        %753 = vrot.lane.b32.xlu0 %v572, 32
        %v754 = vpop.permute.xlu0 %753
        %755 = vrot.lane.b32.xlu0 %v573, 32
        %v756 = vpop.permute.xlu0 %755
        %757 = vrot.lane.b32.xlu0 %v574, 32
        %v758 = vpop.permute.xlu0 %757
        %759 = vrot.lane.b32.xlu0 %v575, 32
        %v760 = vpop.permute.xlu0 %759
        %761 = vrot.lane.b32.xlu0 %v576, 32
        %v762 = vpop.permute.xlu0 %761
        %763 = vrot.lane.b32.xlu0 %v577, 32
        %v764 = vpop.permute.xlu0 %763
        %765 = vrot.lane.b32.xlu0 %v578, 32
        %v766 = vpop.permute.xlu0 %765
        %767 = vrot.lane.b32.xlu0 %v579, 32
        %v768 = vpop.permute.xlu0 %767
        %769 = vrot.lane.b32.xlu0 %v580, 32
        %v770 = vpop.permute.xlu0 %769
        %771 = vrot.lane.b32.xlu0 %v581, 32
        %v772 = vpop.permute.xlu0 %771
        %773 = vrot.lane.b32.xlu0 %v582, 32
        %v774 = vpop.permute.xlu0 %773
        %807 = vrot.lane.b32.xlu0 %v551, 48
        %v808 = vpop.permute.xlu0 %807
        %809 = vrot.lane.b32.xlu0 %v552, 48
        %v810 = vpop.permute.xlu0 %809
        %811 = vrot.lane.b32.xlu0 %v553, 48
        %v812 = vpop.permute.xlu0 %811
        %813 = vrot.lane.b32.xlu0 %v554, 48
        %v814 = vpop.permute.xlu0 %813
        %815 = vrot.lane.b32.xlu0 %v555, 48
        %v816 = vpop.permute.xlu0 %815
        %817 = vrot.lane.b32.xlu0 %v556, 48
        %v818 = vpop.permute.xlu0 %817
        %819 = vrot.lane.b32.xlu0 %v557, 48
        %v820 = vpop.permute.xlu0 %819
        %821 = vrot.lane.b32.xlu0 %v558, 48
        %v822 = vpop.permute.xlu0 %821
        %823 = vrot.lane.b32.xlu0 %v559, 48
        %v824 = vpop.permute.xlu0 %823
        %825 = vrot.lane.b32.xlu0 %v560, 48
        %v826 = vpop.permute.xlu0 %825
        %827 = vrot.lane.b32.xlu0 %v561, 48
        %v828 = vpop.permute.xlu0 %827
        %829 = vrot.lane.b32.xlu0 %v562, 48
        %v830 = vpop.permute.xlu0 %829
        %831 = vrot.lane.b32.xlu0 %v563, 48
        %v832 = vpop.permute.xlu0 %831
        %833 = vrot.lane.b32.xlu0 %v564, 48
        %v834 = vpop.permute.xlu0 %833
        %835 = vrot.lane.b32.xlu0 %v565, 48
        %v836 = vpop.permute.xlu0 %835
        %837 = vrot.lane.b32.xlu0 %v566, 48
        %v838 = vpop.permute.xlu0 %837
        %839 = vrot.lane.b32.xlu0 %v567, 48
        %v840 = vpop.permute.xlu0 %839
        %841 = vrot.lane.b32.xlu0 %v568, 48
        %v842 = vpop.permute.xlu0 %841
        %843 = vrot.lane.b32.xlu0 %v569, 48
        %v844 = vpop.permute.xlu0 %843
        %845 = vrot.lane.b32.xlu0 %v570, 48
        %v846 = vpop.permute.xlu0 %845
        %847 = vrot.lane.b32.xlu0 %v571, 48
        %v848 = vpop.permute.xlu0 %847
        %849 = vrot.lane.b32.xlu0 %v572, 48
        %v850 = vpop.permute.xlu0 %849
        %851 = vrot.lane.b32.xlu0 %v573, 48
        %v852 = vpop.permute.xlu0 %851
        %853 = vrot.lane.b32.xlu0 %v574, 48
        %v854 = vpop.permute.xlu0 %853
        %855 = vrot.lane.b32.xlu0 %v575, 48
        %v856 = vpop.permute.xlu0 %855
        %857 = vrot.lane.b32.xlu0 %v576, 48
        %v858 = vpop.permute.xlu0 %857
        %859 = vrot.lane.b32.xlu0 %v577, 48
        %v860 = vpop.permute.xlu0 %859
        %861 = vrot.lane.b32.xlu0 %v578, 48
        %v862 = vpop.permute.xlu0 %861
        %863 = vrot.lane.b32.xlu0 %v579, 48
        %v864 = vpop.permute.xlu0 %863
        %865 = vrot.lane.b32.xlu0 %v580, 48
        %v866 = vpop.permute.xlu0 %865
        %867 = vrot.lane.b32.xlu0 %v581, 48
        %v868 = vpop.permute.xlu0 %867
        %869 = vrot.lane.b32.xlu0 %v582, 48
        %v870 = vpop.permute.xlu0 %869
        %903 = vrot.lane.b32.xlu0 %v551, 64
        %v904 = vpop.permute.xlu0 %903
        %905 = vrot.lane.b32.xlu0 %v552, 64
        %v906 = vpop.permute.xlu0 %905
        %907 = vrot.lane.b32.xlu0 %v553, 64
        %v908 = vpop.permute.xlu0 %907
        %909 = vrot.lane.b32.xlu0 %v554, 64
        %v910 = vpop.permute.xlu0 %909
        %911 = vrot.lane.b32.xlu0 %v555, 64
        %v912 = vpop.permute.xlu0 %911
        %913 = vrot.lane.b32.xlu0 %v556, 64
        %v914 = vpop.permute.xlu0 %913
        %915 = vrot.lane.b32.xlu0 %v557, 64
        %v916 = vpop.permute.xlu0 %915
        %917 = vrot.lane.b32.xlu0 %v558, 64
        %v918 = vpop.permute.xlu0 %917
        %919 = vrot.lane.b32.xlu0 %v559, 64
        %v920 = vpop.permute.xlu0 %919
        %921 = vrot.lane.b32.xlu0 %v560, 64
        %v922 = vpop.permute.xlu0 %921
        %923 = vrot.lane.b32.xlu0 %v561, 64
        %v924 = vpop.permute.xlu0 %923
        %925 = vrot.lane.b32.xlu0 %v562, 64
        %v926 = vpop.permute.xlu0 %925
        %927 = vrot.lane.b32.xlu0 %v563, 64
        %v928 = vpop.permute.xlu0 %927
        %929 = vrot.lane.b32.xlu0 %v564, 64
        %v930 = vpop.permute.xlu0 %929
        %931 = vrot.lane.b32.xlu0 %v565, 64
        %v932 = vpop.permute.xlu0 %931
        %933 = vrot.lane.b32.xlu0 %v566, 64
        %v934 = vpop.permute.xlu0 %933
        %935 = vrot.lane.b32.xlu0 %v567, 64
        %v936 = vpop.permute.xlu0 %935
        %937 = vrot.lane.b32.xlu0 %v568, 64
        %v938 = vpop.permute.xlu0 %937
        %939 = vrot.lane.b32.xlu0 %v569, 64
        %v940 = vpop.permute.xlu0 %939
        %941 = vrot.lane.b32.xlu0 %v570, 64
        %v942 = vpop.permute.xlu0 %941
        %943 = vrot.lane.b32.xlu0 %v571, 64
        %v944 = vpop.permute.xlu0 %943
        %945 = vrot.lane.b32.xlu0 %v572, 64
        %v946 = vpop.permute.xlu0 %945
        %947 = vrot.lane.b32.xlu0 %v573, 64
        %v948 = vpop.permute.xlu0 %947
        %949 = vrot.lane.b32.xlu0 %v574, 64
        %v950 = vpop.permute.xlu0 %949
        %951 = vrot.lane.b32.xlu0 %v575, 64
        %v952 = vpop.permute.xlu0 %951
        %953 = vrot.lane.b32.xlu0 %v576, 64
        %v954 = vpop.permute.xlu0 %953
        %955 = vrot.lane.b32.xlu0 %v577, 64
        %v956 = vpop.permute.xlu0 %955
        %957 = vrot.lane.b32.xlu0 %v578, 64
        %v958 = vpop.permute.xlu0 %957
        %959 = vrot.lane.b32.xlu0 %v579, 64
        %v960 = vpop.permute.xlu0 %959
        %961 = vrot.lane.b32.xlu0 %v580, 64
        %v962 = vpop.permute.xlu0 %961
        %963 = vrot.lane.b32.xlu0 %v581, 64
        %v964 = vpop.permute.xlu0 %963
        %965 = vrot.lane.b32.xlu0 %v582, 64
        %v966 = vpop.permute.xlu0 %965
        %999 = vrot.lane.b32.xlu0 %v551, 80
        %v1000 = vpop.permute.xlu0 %999
        %1001 = vrot.lane.b32.xlu0 %v552, 80
        %v1002 = vpop.permute.xlu0 %1001
        %1003 = vrot.lane.b32.xlu0 %v553, 80
        %v1004 = vpop.permute.xlu0 %1003
        %1005 = vrot.lane.b32.xlu0 %v554, 80
        %v1006 = vpop.permute.xlu0 %1005
        %1007 = vrot.lane.b32.xlu0 %v555, 80
        %v1008 = vpop.permute.xlu0 %1007
        %1009 = vrot.lane.b32.xlu0 %v556, 80
        %v1010 = vpop.permute.xlu0 %1009
        %1011 = vrot.lane.b32.xlu0 %v557, 80
        %v1012 = vpop.permute.xlu0 %1011
        %1013 = vrot.lane.b32.xlu0 %v558, 80
        %v1014 = vpop.permute.xlu0 %1013
        %1015 = vrot.lane.b32.xlu0 %v559, 80
        %v1016 = vpop.permute.xlu0 %1015
        %1017 = vrot.lane.b32.xlu0 %v560, 80
        %v1018 = vpop.permute.xlu0 %1017
        %1019 = vrot.lane.b32.xlu0 %v561, 80
        %v1020 = vpop.permute.xlu0 %1019
        %1021 = vrot.lane.b32.xlu0 %v562, 80
        %v1022 = vpop.permute.xlu0 %1021
        %1023 = vrot.lane.b32.xlu0 %v563, 80
        %v1024 = vpop.permute.xlu0 %1023
        %1025 = vrot.lane.b32.xlu0 %v564, 80
        %v1026 = vpop.permute.xlu0 %1025
        %1027 = vrot.lane.b32.xlu0 %v565, 80
        %v1028 = vpop.permute.xlu0 %1027
        %1029 = vrot.lane.b32.xlu0 %v566, 80
        %v1030 = vpop.permute.xlu0 %1029
        %1031 = vrot.lane.b32.xlu0 %v567, 80
        %v1032 = vpop.permute.xlu0 %1031
        %1033 = vrot.lane.b32.xlu0 %v568, 80
        %v1034 = vpop.permute.xlu0 %1033
        %1035 = vrot.lane.b32.xlu0 %v569, 80
        %v1036 = vpop.permute.xlu0 %1035
        %1037 = vrot.lane.b32.xlu0 %v570, 80
        %v1038 = vpop.permute.xlu0 %1037
        %1039 = vrot.lane.b32.xlu0 %v571, 80
        %v1040 = vpop.permute.xlu0 %1039
        %1041 = vrot.lane.b32.xlu0 %v572, 80
        %v1042 = vpop.permute.xlu0 %1041
        %1043 = vrot.lane.b32.xlu0 %v573, 80
        %v1044 = vpop.permute.xlu0 %1043
        %1045 = vrot.lane.b32.xlu0 %v574, 80
        %v1046 = vpop.permute.xlu0 %1045
        %1047 = vrot.lane.b32.xlu0 %v575, 80
        %v1048 = vpop.permute.xlu0 %1047
        %1049 = vrot.lane.b32.xlu0 %v576, 80
        %v1050 = vpop.permute.xlu0 %1049
        %1051 = vrot.lane.b32.xlu0 %v577, 80
        %v1052 = vpop.permute.xlu0 %1051
        %1053 = vrot.lane.b32.xlu0 %v578, 80
        %v1054 = vpop.permute.xlu0 %1053
        %1055 = vrot.lane.b32.xlu0 %v579, 80
        %v1056 = vpop.permute.xlu0 %1055
        %1057 = vrot.lane.b32.xlu0 %v580, 80
        %v1058 = vpop.permute.xlu0 %1057
        %1059 = vrot.lane.b32.xlu0 %v581, 80
        %v1060 = vpop.permute.xlu0 %1059
        %1061 = vrot.lane.b32.xlu0 %v582, 80
        %v1062 = vpop.permute.xlu0 %1061
        %1095 = vrot.lane.b32.xlu0 %v551, 96
        %v1096 = vpop.permute.xlu0 %1095
        %1097 = vrot.lane.b32.xlu0 %v552, 96
        %v1098 = vpop.permute.xlu0 %1097
        %1099 = vrot.lane.b32.xlu0 %v553, 96
        %v1100 = vpop.permute.xlu0 %1099
        %1101 = vrot.lane.b32.xlu0 %v554, 96
        %v1102 = vpop.permute.xlu0 %1101
        %1103 = vrot.lane.b32.xlu0 %v555, 96
        %v1104 = vpop.permute.xlu0 %1103
        %1105 = vrot.lane.b32.xlu0 %v556, 96
        %v1106 = vpop.permute.xlu0 %1105
        %1107 = vrot.lane.b32.xlu0 %v557, 96
        %v1108 = vpop.permute.xlu0 %1107
        %1109 = vrot.lane.b32.xlu0 %v558, 96
        %v1110 = vpop.permute.xlu0 %1109
        %1111 = vrot.lane.b32.xlu0 %v559, 96
        %v1112 = vpop.permute.xlu0 %1111
        %1113 = vrot.lane.b32.xlu0 %v560, 96
        %v1114 = vpop.permute.xlu0 %1113
        %1115 = vrot.lane.b32.xlu0 %v561, 96
        %v1116 = vpop.permute.xlu0 %1115
        %1117 = vrot.lane.b32.xlu0 %v562, 96
        %v1118 = vpop.permute.xlu0 %1117
        %1119 = vrot.lane.b32.xlu0 %v563, 96
        %v1120 = vpop.permute.xlu0 %1119
        %1121 = vrot.lane.b32.xlu0 %v564, 96
        %v1122 = vpop.permute.xlu0 %1121
        %1123 = vrot.lane.b32.xlu0 %v565, 96
        %v1124 = vpop.permute.xlu0 %1123
        %1125 = vrot.lane.b32.xlu0 %v566, 96
        %v1126 = vpop.permute.xlu0 %1125
        %1127 = vrot.lane.b32.xlu0 %v567, 96
        %v1128 = vpop.permute.xlu0 %1127
        %1129 = vrot.lane.b32.xlu0 %v568, 96
        %v1130 = vpop.permute.xlu0 %1129
        %1131 = vrot.lane.b32.xlu0 %v569, 96
        %v1132 = vpop.permute.xlu0 %1131
        %1133 = vrot.lane.b32.xlu0 %v570, 96
        %v1134 = vpop.permute.xlu0 %1133
        %1135 = vrot.lane.b32.xlu0 %v571, 96
        %v1136 = vpop.permute.xlu0 %1135
        %1137 = vrot.lane.b32.xlu0 %v572, 96
        %v1138 = vpop.permute.xlu0 %1137
        %1139 = vrot.lane.b32.xlu0 %v573, 96
        %v1140 = vpop.permute.xlu0 %1139
        %1141 = vrot.lane.b32.xlu0 %v574, 96
        %v1142 = vpop.permute.xlu0 %1141
        %1143 = vrot.lane.b32.xlu0 %v575, 96
        %v1144 = vpop.permute.xlu0 %1143
        %1145 = vrot.lane.b32.xlu0 %v576, 96
        %v1146 = vpop.permute.xlu0 %1145
        %1147 = vrot.lane.b32.xlu0 %v577, 96
        %v1148 = vpop.permute.xlu0 %1147
        %1149 = vrot.lane.b32.xlu0 %v578, 96
        %v1150 = vpop.permute.xlu0 %1149
        %1151 = vrot.lane.b32.xlu0 %v579, 96
        %v1152 = vpop.permute.xlu0 %1151
        %1153 = vrot.lane.b32.xlu0 %v580, 96
        %v1154 = vpop.permute.xlu0 %1153
        %1155 = vrot.lane.b32.xlu0 %v581, 96
        %v1156 = vpop.permute.xlu0 %1155
        %1157 = vrot.lane.b32.xlu0 %v582, 96
        %v1158 = vpop.permute.xlu0 %1157
        %1191 = vrot.lane.b32.xlu0 %v551, 112
        %v1192 = vpop.permute.xlu0 %1191
        %1193 = vrot.lane.b32.xlu0 %v552, 112
        %v1194 = vpop.permute.xlu0 %1193
        %1195 = vrot.lane.b32.xlu0 %v553, 112
        %v1196 = vpop.permute.xlu0 %1195
        %1197 = vrot.lane.b32.xlu0 %v554, 112
        %v1198 = vpop.permute.xlu0 %1197
        %1199 = vrot.lane.b32.xlu0 %v555, 112
        %v1200 = vpop.permute.xlu0 %1199
        %1201 = vrot.lane.b32.xlu0 %v556, 112
        %v1202 = vpop.permute.xlu0 %1201
        %1203 = vrot.lane.b32.xlu0 %v557, 112
        %v1204 = vpop.permute.xlu0 %1203
        %1205 = vrot.lane.b32.xlu0 %v558, 112
        %v1206 = vpop.permute.xlu0 %1205
        %1207 = vrot.lane.b32.xlu0 %v559, 112
        %v1208 = vpop.permute.xlu0 %1207
        %1209 = vrot.lane.b32.xlu0 %v560, 112
        %v1210 = vpop.permute.xlu0 %1209
        %1211 = vrot.lane.b32.xlu0 %v561, 112
        %v1212 = vpop.permute.xlu0 %1211
        %1213 = vrot.lane.b32.xlu0 %v562, 112
        %v1214 = vpop.permute.xlu0 %1213
        %1215 = vrot.lane.b32.xlu0 %v563, 112
        %v1216 = vpop.permute.xlu0 %1215
        %1217 = vrot.lane.b32.xlu0 %v564, 112
        %v1218 = vpop.permute.xlu0 %1217
        %1219 = vrot.lane.b32.xlu0 %v565, 112
        %v1220 = vpop.permute.xlu0 %1219
        %1221 = vrot.lane.b32.xlu0 %v566, 112
        %v1222 = vpop.permute.xlu0 %1221
        %1223 = vrot.lane.b32.xlu0 %v567, 112
        %v1224 = vpop.permute.xlu0 %1223
        %1225 = vrot.lane.b32.xlu0 %v568, 112
        %v1226 = vpop.permute.xlu0 %1225
        %1227 = vrot.lane.b32.xlu0 %v569, 112
        %v1228 = vpop.permute.xlu0 %1227
        %1229 = vrot.lane.b32.xlu0 %v570, 112
        %v1230 = vpop.permute.xlu0 %1229
        %1231 = vrot.lane.b32.xlu0 %v571, 112
        %v1232 = vpop.permute.xlu0 %1231
        %1233 = vrot.lane.b32.xlu0 %v572, 112
        %v1234 = vpop.permute.xlu0 %1233
        %1235 = vrot.lane.b32.xlu0 %v573, 112
        %v1236 = vpop.permute.xlu0 %1235
        %1237 = vrot.lane.b32.xlu0 %v574, 112
        %v1238 = vpop.permute.xlu0 %1237
        %1239 = vrot.lane.b32.xlu0 %v575, 112
        %v1240 = vpop.permute.xlu0 %1239
        %1241 = vrot.lane.b32.xlu0 %v576, 112
        %v1242 = vpop.permute.xlu0 %1241
        %1243 = vrot.lane.b32.xlu0 %v577, 112
        %v1244 = vpop.permute.xlu0 %1243
        %1245 = vrot.lane.b32.xlu0 %v578, 112
        %v1246 = vpop.permute.xlu0 %1245
        %1247 = vrot.lane.b32.xlu0 %v579, 112
        %v1248 = vpop.permute.xlu0 %1247
        %1249 = vrot.lane.b32.xlu0 %v580, 112
        %v1250 = vpop.permute.xlu0 %1249
        %1251 = vrot.lane.b32.xlu0 %v581, 112
        %v1252 = vpop.permute.xlu0 %1251
        %1253 = vrot.lane.b32.xlu0 %v582, 112
        %v1254 = vpop.permute.xlu0 %1253
        %vm1287 = vcmask 130048
        %v1288 = vsel %vm1287, %v551, %v616
        %v1289 = vsel %vm1287, %v552, %v618
        %v1290 = vsel %vm1287, %v553, %v620
        %v1291 = vsel %vm1287, %v554, %v622
        %v1292 = vsel %vm1287, %v555, %v624
        %v1293 = vsel %vm1287, %v556, %v626
        %v1294 = vsel %vm1287, %v557, %v628
        %v1295 = vsel %vm1287, %v558, %v630
        %v1296 = vsel %vm1287, %v559, %v632
        %v1297 = vsel %vm1287, %v560, %v634
        %v1298 = vsel %vm1287, %v561, %v636
        %v1299 = vsel %vm1287, %v562, %v638
        %v1300 = vsel %vm1287, %v563, %v640
        %v1301 = vsel %vm1287, %v564, %v642
        %v1302 = vsel %vm1287, %v565, %v644
        %v1303 = vsel %vm1287, %v566, %v646
        %v1304 = vsel %vm1287, %v567, %v648
        %v1305 = vsel %vm1287, %v568, %v650
        %v1306 = vsel %vm1287, %v569, %v652
        %v1307 = vsel %vm1287, %v570, %v654
        %v1308 = vsel %vm1287, %v571, %v656
        %v1309 = vsel %vm1287, %v572, %v658
        %v1310 = vsel %vm1287, %v573, %v660
        %v1311 = vsel %vm1287, %v574, %v662
        %v1312 = vsel %vm1287, %v575, %v664
        %v1313 = vsel %vm1287, %v576, %v666
        %v1314 = vsel %vm1287, %v577, %v668
        %v1315 = vsel %vm1287, %v578, %v670
        %v1316 = vsel %vm1287, %v579, %v672
        %v1317 = vsel %vm1287, %v580, %v674
        %v1318 = vsel %vm1287, %v581, %v676
        %v1319 = vsel %vm1287, %v582, %v678
        %vm1320 = vcmask 261120
        %v1321 = vsel %vm1320, %v1288, %v712
        %v1322 = vsel %vm1320, %v1289, %v714
        %v1323 = vsel %vm1320, %v1290, %v716
        %v1324 = vsel %vm1320, %v1291, %v718
        %v1325 = vsel %vm1320, %v1292, %v720
        %v1326 = vsel %vm1320, %v1293, %v722
        %v1327 = vsel %vm1320, %v1294, %v724
        %v1328 = vsel %vm1320, %v1295, %v726
        %v1329 = vsel %vm1320, %v1296, %v728
        %v1330 = vsel %vm1320, %v1297, %v730
        %v1331 = vsel %vm1320, %v1298, %v732
        %v1332 = vsel %vm1320, %v1299, %v734
        %v1333 = vsel %vm1320, %v1300, %v736
        %v1334 = vsel %vm1320, %v1301, %v738
        %v1335 = vsel %vm1320, %v1302, %v740
        %v1336 = vsel %vm1320, %v1303, %v742
        %v1337 = vsel %vm1320, %v1304, %v744
        %v1338 = vsel %vm1320, %v1305, %v746
        %v1339 = vsel %vm1320, %v1306, %v748
        %v1340 = vsel %vm1320, %v1307, %v750
        %v1341 = vsel %vm1320, %v1308, %v752
        %v1342 = vsel %vm1320, %v1309, %v754
        %v1343 = vsel %vm1320, %v1310, %v756
        %v1344 = vsel %vm1320, %v1311, %v758
        %v1345 = vsel %vm1320, %v1312, %v760
        %v1346 = vsel %vm1320, %v1313, %v762
        %v1347 = vsel %vm1320, %v1314, %v764
        %v1348 = vsel %vm1320, %v1315, %v766
        %v1349 = vsel %vm1320, %v1316, %v768
        %v1350 = vsel %vm1320, %v1317, %v770
        %v1351 = vsel %vm1320, %v1318, %v772
        %v1352 = vsel %vm1320, %v1319, %v774
        %vm1353 = vcmask 392192
        %v1354 = vsel %vm1353, %v1321, %v808
        %v1355 = vsel %vm1353, %v1322, %v810
        %v1356 = vsel %vm1353, %v1323, %v812
        %v1357 = vsel %vm1353, %v1324, %v814
        %v1358 = vsel %vm1353, %v1325, %v816
        %v1359 = vsel %vm1353, %v1326, %v818
        %v1360 = vsel %vm1353, %v1327, %v820
        %v1361 = vsel %vm1353, %v1328, %v822
        %v1362 = vsel %vm1353, %v1329, %v824
        %v1363 = vsel %vm1353, %v1330, %v826
        %v1364 = vsel %vm1353, %v1331, %v828
        %v1365 = vsel %vm1353, %v1332, %v830
        %v1366 = vsel %vm1353, %v1333, %v832
        %v1367 = vsel %vm1353, %v1334, %v834
        %v1368 = vsel %vm1353, %v1335, %v836
        %v1369 = vsel %vm1353, %v1336, %v838
        %v1370 = vsel %vm1353, %v1337, %v840
        %v1371 = vsel %vm1353, %v1338, %v842
        %v1372 = vsel %vm1353, %v1339, %v844
        %v1373 = vsel %vm1353, %v1340, %v846
        %v1374 = vsel %vm1353, %v1341, %v848
        %v1375 = vsel %vm1353, %v1342, %v850
        %v1376 = vsel %vm1353, %v1343, %v852
        %v1377 = vsel %vm1353, %v1344, %v854
        %v1378 = vsel %vm1353, %v1345, %v856
        %v1379 = vsel %vm1353, %v1346, %v858
        %v1380 = vsel %vm1353, %v1347, %v860
        %v1381 = vsel %vm1353, %v1348, %v862
        %v1382 = vsel %vm1353, %v1349, %v864
        %v1383 = vsel %vm1353, %v1350, %v866
        %v1384 = vsel %vm1353, %v1351, %v868
        %v1385 = vsel %vm1353, %v1352, %v870
        %vm1386 = vcmask 523264
        %v1387 = vsel %vm1386, %v1354, %v904
        %v1388 = vsel %vm1386, %v1355, %v906
        %v1389 = vsel %vm1386, %v1356, %v908
        %v1390 = vsel %vm1386, %v1357, %v910
        %v1391 = vsel %vm1386, %v1358, %v912
        %v1392 = vsel %vm1386, %v1359, %v914
        %v1393 = vsel %vm1386, %v1360, %v916
        %v1394 = vsel %vm1386, %v1361, %v918
        %v1395 = vsel %vm1386, %v1362, %v920
        %v1396 = vsel %vm1386, %v1363, %v922
        %v1397 = vsel %vm1386, %v1364, %v924
        %v1398 = vsel %vm1386, %v1365, %v926
        %v1399 = vsel %vm1386, %v1366, %v928
        %v1400 = vsel %vm1386, %v1367, %v930
        %v1401 = vsel %vm1386, %v1368, %v932
        %v1402 = vsel %vm1386, %v1369, %v934
        %v1403 = vsel %vm1386, %v1370, %v936
        %v1404 = vsel %vm1386, %v1371, %v938
        %v1405 = vsel %vm1386, %v1372, %v940
        %v1406 = vsel %vm1386, %v1373, %v942
        %v1407 = vsel %vm1386, %v1374, %v944
        %v1408 = vsel %vm1386, %v1375, %v946
        %v1409 = vsel %vm1386, %v1376, %v948
        %v1410 = vsel %vm1386, %v1377, %v950
        %v1411 = vsel %vm1386, %v1378, %v952
        %v1412 = vsel %vm1386, %v1379, %v954
        %v1413 = vsel %vm1386, %v1380, %v956
        %v1414 = vsel %vm1386, %v1381, %v958
        %v1415 = vsel %vm1386, %v1382, %v960
        %v1416 = vsel %vm1386, %v1383, %v962
        %v1417 = vsel %vm1386, %v1384, %v964
        %v1418 = vsel %vm1386, %v1385, %v966
        %vm1419 = vcmask 654336
        %v1420 = vsel %vm1419, %v1387, %v1000
        %v1421 = vsel %vm1419, %v1388, %v1002
        %v1422 = vsel %vm1419, %v1389, %v1004
        %v1423 = vsel %vm1419, %v1390, %v1006
        %v1424 = vsel %vm1419, %v1391, %v1008
        %v1425 = vsel %vm1419, %v1392, %v1010
        %v1426 = vsel %vm1419, %v1393, %v1012
        %v1427 = vsel %vm1419, %v1394, %v1014
        %v1428 = vsel %vm1419, %v1395, %v1016
        %v1429 = vsel %vm1419, %v1396, %v1018
        %v1430 = vsel %vm1419, %v1397, %v1020
        %v1431 = vsel %vm1419, %v1398, %v1022
        %v1432 = vsel %vm1419, %v1399, %v1024
        %v1433 = vsel %vm1419, %v1400, %v1026
        %v1434 = vsel %vm1419, %v1401, %v1028
        %v1435 = vsel %vm1419, %v1402, %v1030
        %v1436 = vsel %vm1419, %v1403, %v1032
        %v1437 = vsel %vm1419, %v1404, %v1034
        %v1438 = vsel %vm1419, %v1405, %v1036
        %v1439 = vsel %vm1419, %v1406, %v1038
        %v1440 = vsel %vm1419, %v1407, %v1040
        %v1441 = vsel %vm1419, %v1408, %v1042
        %v1442 = vsel %vm1419, %v1409, %v1044
        %v1443 = vsel %vm1419, %v1410, %v1046
        %v1444 = vsel %vm1419, %v1411, %v1048
        %v1445 = vsel %vm1419, %v1412, %v1050
        %v1446 = vsel %vm1419, %v1413, %v1052
        %v1447 = vsel %vm1419, %v1414, %v1054
        %v1448 = vsel %vm1419, %v1415, %v1056
        %v1449 = vsel %vm1419, %v1416, %v1058
        %v1450 = vsel %vm1419, %v1417, %v1060
        %v1451 = vsel %vm1419, %v1418, %v1062
        %vm1452 = vcmask 785408
        %v1453 = vsel %vm1452, %v1420, %v1096
        %v1454 = vsel %vm1452, %v1421, %v1098
        %v1455 = vsel %vm1452, %v1422, %v1100
        %v1456 = vsel %vm1452, %v1423, %v1102
        %v1457 = vsel %vm1452, %v1424, %v1104
        %v1458 = vsel %vm1452, %v1425, %v1106
        %v1459 = vsel %vm1452, %v1426, %v1108
        %v1460 = vsel %vm1452, %v1427, %v1110
        %v1461 = vsel %vm1452, %v1428, %v1112
        %v1462 = vsel %vm1452, %v1429, %v1114
        %v1463 = vsel %vm1452, %v1430, %v1116
        %v1464 = vsel %vm1452, %v1431, %v1118
        %v1465 = vsel %vm1452, %v1432, %v1120
        %v1466 = vsel %vm1452, %v1433, %v1122
        %v1467 = vsel %vm1452, %v1434, %v1124
        %v1468 = vsel %vm1452, %v1435, %v1126
        %v1469 = vsel %vm1452, %v1436, %v1128
        %v1470 = vsel %vm1452, %v1437, %v1130
        %v1471 = vsel %vm1452, %v1438, %v1132
        %v1472 = vsel %vm1452, %v1439, %v1134
        %v1473 = vsel %vm1452, %v1440, %v1136
        %v1474 = vsel %vm1452, %v1441, %v1138
        %v1475 = vsel %vm1452, %v1442, %v1140
        %v1476 = vsel %vm1452, %v1443, %v1142
        %v1477 = vsel %vm1452, %v1444, %v1144
        %v1478 = vsel %vm1452, %v1445, %v1146
        %v1479 = vsel %vm1452, %v1446, %v1148
        %v1480 = vsel %vm1452, %v1447, %v1150
        %v1481 = vsel %vm1452, %v1448, %v1152
        %v1482 = vsel %vm1452, %v1449, %v1154
        %v1483 = vsel %vm1452, %v1450, %v1156
        %v1484 = vsel %vm1452, %v1451, %v1158
        %vm1485 = vcmask 916480
        %v1486 = vsel %vm1485, %v1453, %v1192
        %v1487 = vsel %vm1485, %v1454, %v1194
        %v1488 = vsel %vm1485, %v1455, %v1196
        %v1489 = vsel %vm1485, %v1456, %v1198
        %v1490 = vsel %vm1485, %v1457, %v1200
        %v1491 = vsel %vm1485, %v1458, %v1202
        %v1492 = vsel %vm1485, %v1459, %v1204
        %v1493 = vsel %vm1485, %v1460, %v1206
        %v1494 = vsel %vm1485, %v1461, %v1208
        %v1495 = vsel %vm1485, %v1462, %v1210
        %v1496 = vsel %vm1485, %v1463, %v1212
        %v1497 = vsel %vm1485, %v1464, %v1214
        %v1498 = vsel %vm1485, %v1465, %v1216
        %v1499 = vsel %vm1485, %v1466, %v1218
        %v1500 = vsel %vm1485, %v1467, %v1220
        %v1501 = vsel %vm1485, %v1468, %v1222
        %v1502 = vsel %vm1485, %v1469, %v1224
        %v1503 = vsel %vm1485, %v1470, %v1226
        %v1504 = vsel %vm1485, %v1471, %v1228
        %v1505 = vsel %vm1485, %v1472, %v1230
        %v1506 = vsel %vm1485, %v1473, %v1232
        %v1507 = vsel %vm1485, %v1474, %v1234
        %v1508 = vsel %vm1485, %v1475, %v1236
        %v1509 = vsel %vm1485, %v1476, %v1238
        %v1510 = vsel %vm1485, %v1477, %v1240
        %v1511 = vsel %vm1485, %v1478, %v1242
        %v1512 = vsel %vm1485, %v1479, %v1244
        %v1513 = vsel %vm1485, %v1480, %v1246
        %v1514 = vsel %vm1485, %v1481, %v1248
        %v1515 = vsel %vm1485, %v1482, %v1250
        %v1516 = vsel %vm1485, %v1483, %v1252
        %v1517 = vsel %vm1485, %v1484, %v1254
        %v1518 = vld [vmem:[%s1] sm:$0x1]
        %v1520 = vlaneseq
        %v1521 = vshrl.u32 %v1520, 7
        %v1522 = vsub.s32 0, %v1521
        %v1523 = vrot.slane %v1518, %v1522
        %v1525 = vmul.f32 %v1486, %v1523
        %v1526 = vmul.f32 %v1487, %v1523
        %v1527 = vmul.f32 %v1488, %v1523
        %v1528 = vmul.f32 %v1489, %v1523
        %v1529 = vmul.f32 %v1490, %v1523
        %v1530 = vmul.f32 %v1491, %v1523
        %v1531 = vmul.f32 %v1492, %v1523
        %v1532 = vmul.f32 %v1493, %v1523
        %v1533 = vmul.f32 %v1494, %v1523
        %v1534 = vmul.f32 %v1495, %v1523
        %v1535 = vmul.f32 %v1496, %v1523
        %v1536 = vmul.f32 %v1497, %v1523
        %v1537 = vmul.f32 %v1498, %v1523
        %v1538 = vmul.f32 %v1499, %v1523
        %v1539 = vmul.f32 %v1500, %v1523
        %v1540 = vmul.f32 %v1501, %v1523
        %v1541 = vmul.f32 %v1502, %v1523
        %v1542 = vmul.f32 %v1503, %v1523
        %v1543 = vmul.f32 %v1504, %v1523
        %v1544 = vmul.f32 %v1505, %v1523
        %v1545 = vmul.f32 %v1506, %v1523
        %v1546 = vmul.f32 %v1507, %v1523
        %v1547 = vmul.f32 %v1508, %v1523
        %v1548 = vmul.f32 %v1509, %v1523
        %v1549 = vmul.f32 %v1510, %v1523
        %v1550 = vmul.f32 %v1511, %v1523
        %v1551 = vmul.f32 %v1512, %v1523
        %v1552 = vmul.f32 %v1513, %v1523
        %v1553 = vmul.f32 %v1514, %v1523
        %v1554 = vmul.f32 %v1515, %v1523
        %v1555 = vmul.f32 %v1516, %v1523
        %v1556 = vmul.f32 %v1517, %v1523
        %v1557 = vld [vmem:[%s2] sm:$0x1]
        %v1559 = vlaneseq
        %v1560 = vshrl.u32 %v1559, 7
        %v1561 = vsub.s32 0, %v1560
        %v1562 = vrot.slane %v1557, %v1561
        %v1564 = vadd.f32 %v1525, %v1562
        %v1565 = vadd.f32 %v1526, %v1562
        %v1566 = vadd.f32 %v1527, %v1562
        %v1567 = vadd.f32 %v1528, %v1562
        %v1568 = vadd.f32 %v1529, %v1562
        %v1569 = vadd.f32 %v1530, %v1562
        %v1570 = vadd.f32 %v1531, %v1562
        %v1571 = vadd.f32 %v1532, %v1562
        %v1572 = vadd.f32 %v1533, %v1562
        %v1573 = vadd.f32 %v1534, %v1562
        %v1574 = vadd.f32 %v1535, %v1562
        %v1575 = vadd.f32 %v1536, %v1562
        %v1576 = vadd.f32 %v1537, %v1562
        %v1577 = vadd.f32 %v1538, %v1562
        %v1578 = vadd.f32 %v1539, %v1562
        %v1579 = vadd.f32 %v1540, %v1562
        %v1580 = vadd.f32 %v1541, %v1562
        %v1581 = vadd.f32 %v1542, %v1562
        %v1582 = vadd.f32 %v1543, %v1562
        %v1583 = vadd.f32 %v1544, %v1562
        %v1584 = vadd.f32 %v1545, %v1562
        %v1585 = vadd.f32 %v1546, %v1562
        %v1586 = vadd.f32 %v1547, %v1562
        %v1587 = vadd.f32 %v1548, %v1562
        %v1588 = vadd.f32 %v1549, %v1562
        %v1589 = vadd.f32 %v1550, %v1562
        %v1590 = vadd.f32 %v1551, %v1562
        %v1591 = vadd.f32 %v1552, %v1562
        %v1592 = vadd.f32 %v1553, %v1562
        %v1593 = vadd.f32 %v1554, %v1562
        %v1594 = vadd.f32 %v1555, %v1562
        %v1595 = vadd.f32 %v1556, %v1562
        %v1596 = vand.u32 2147483647, %v1564
        %vm1597 = vcmp.le.f32.partialorder %v1596, 0.7853982
        %vm1598 = vcmp.lt.s32.totalorder %v1564, 0
        %v1599 = vand.u32 %v1564, 2139095040
        %v1600 = vshrl.u32 %v1599, 23
        %v1601 = vsub.s32 %v1600, 127
        %v1602 = vand.u32 2147483647, %v1564
        %v1603 = vand.u32 %v1602, 8388607
        %v1604 = vor.u32 %v1603, 8388608
        %v1605 = vsub.s32 0, %v1604
        %v1606 = vadd.s32 %v1601, 1
        %vm1607 = vcmp.gt.s32.totalorder %v1606, 0
        %v1608 = vsel %vm1607, %v1606, 0
        %v1609 = vshrl.u32 %v1608, 5
        %v1610 = vand.u32 %v1608, 31
        %v1611 = vsub.s32 32, %v1610
        %v1612 = vshrl.u32 683565275, %v1611
        %v1613 = vshll.u32 683565275, %v1610
        %v1614 = vshrl.u32 2475754826, %v1611
        %v1615 = vor.u32 %v1613, %v1614
        %v1616 = vshll.u32 2475754826, %v1610
        %v1617 = vshrl.u32 2131351028, %v1611
        %v1618 = vor.u32 %v1616, %v1617
        %v1619 = vshll.u32 2131351028, %v1610
        %v1620 = vshrl.u32 2102212464, %v1611
        %v1621 = vor.u32 %v1619, %v1620
        %v1622 = vshll.u32 2102212464, %v1610
        %v1623 = vshrl.u32 920167782, %v1611
        %v1624 = vor.u32 %v1622, %v1623
        %v1625 = vshll.u32 920167782, %v1610
        %v1626 = vshrl.u32 1326507024, %v1611
        %v1627 = vor.u32 %v1625, %v1626
        %vm1628 = vcmp.lt.s32.totalorder %v1609, 1
        %vm1629 = vcmp.lt.s32.totalorder %v1609, 2
        %vm1630 = vcmp.lt.s32.totalorder %v1609, 3
        %vm1631 = vcmp.lt.s32.totalorder %v1609, 4
        %v1632 = vsel %vm1628, %v1612, %v1615
        %v1633 = vsel %vm1631, %v1621, 2102212464
        %v1634 = vsel %vm1630, %v1618, %v1633
        %v1635 = vsel %vm1629, %v1632, %v1634
        %v1636 = vsel %vm1628, %v1615, %v1618
        %v1637 = vsel %vm1631, %v1624, 920167782
        %v1638 = vsel %vm1630, %v1621, %v1637
        %v1639 = vsel %vm1629, %v1636, %v1638
        %v1640 = vsel %vm1628, %v1618, %v1621
        %v1641 = vsel %vm1631, %v1627, 1326507024
        %v1642 = vsel %vm1630, %v1624, %v1641
        %v1643 = vsel %vm1629, %v1640, %v1642
        %v1644 = vshll.u32 %v1604, 8
        %v1645 = vmul.u32.u64.compose %v1644, %v1643
        %v1646 = vextract.low.u32 %v1645
        %v1647 = vextract.high.u32 %v1645
        %v1648 = vmul.u32.u64.compose %v1644, %v1639
        %v1649 = vextract.low.u32 %v1648
        %v1650 = vextract.high.u32 %v1648
        %v1651 = vmul.u32 %v1644, %v1635
        %v1652 = vadd.s32 %v1647, %v1649
        %vm1653 = vc.u32 %v1647, %v1649
        %v1654 = vadd.s32 %v1650, 1
        %v1655 = vsel %vm1653, %v1654, %v1650
        %v1656 = vadd.s32 %v1651, %v1655
        %v1657 = vadd.s32 %v1656, 536870912
        %v1658 = vshrl.u32 %v1657, 30
        %v1659 = vshll.u32 %v1658, 30
        %v1660 = vsub.s32 %v1656, %v1659
        %vm1661 = vcmp.lt.s32.totalorder %v1660, 0
        %v1662 = vsub.s32 0, %v1660
        %v1663 = vsel %vm1661, %v1662, %v1660
        %v1664 = vclz %v1663
        %v1665 = vsub.s32 %v1664, 2
        %vm1666 = vcmp.gt.s32.totalorder 0, %v1665
        %v1667 = vsel %vm1666, 0, %v1665
        %v1668 = vsub.s32 32, %v1667
        %v1669 = vshll.u32 %v1660, %v1667
        %v1670 = vshrl.u32 %v1652, %v1668
        %v1671 = vor.u32 %v1669, %v1670
        %v1672 = vsub.s32 4294967266, %v1667
        %v1673 = vadd.s32 %v1672, 127
        %v1674 = vshll.u32 %v1673, 23
        %v1675 = vor.u32 4788187, %v1674
        %v1676 = vand.u32 2147483647, %v1675
        %v1678 = vcvt.s32.f32 %v1671
        %v1679 = vmul.f32 %v1678, %v1676
        %v1680 = vxor.u32 %v1679, 2147483648
        %v1681 = vsel %vm1598, %v1680, %v1679
        %v1682 = vsub.s32 4, %v1658
        %v1683 = vsel %vm1598, %v1682, %v1658
        %v1684 = vsel %vm1597, %v1564, %v1681
        %v1685 = vsel %vm1597, 0, %v1683
        %v1686 = vcosq.f32.pop %v1684
        %v1687 = vsinq.f32.pop %v1684
        %vm1688 = vweird.f32 %v1564
        %v1689 = vadd.s32 %v1685, 3
        %v1690 = vand.u32 %v1689, 3
        %vm1691 = vcmp.lt.s32.totalorder %v1690, 2
        %vm1692 = vcmp.eq.s32.totalorder %v1690, 0
        %v1693 = vxor.u32 %v1687, 2147483648
        %v1694 = vsel %vm1692, %v1686, %v1693
        %vm1695 = vcmp.eq.s32.totalorder %v1690, 2
        %v1696 = vxor.u32 %v1686, 2147483648
        %v1697 = vsel %vm1695, %v1696, %v1687
        %v1698 = vsel %vm1691, %v1694, %v1697
        %v1699 = vsel %vm1688, nan, %v1698
        %v1700 = vand.u32 2147483647, %v1565
        %vm1701 = vcmp.le.f32.partialorder %v1700, 0.7853982
        %vm1702 = vcmp.lt.s32.totalorder %v1565, 0
        %v1703 = vand.u32 %v1565, 2139095040
        %v1704 = vshrl.u32 %v1703, 23
        %v1705 = vsub.s32 %v1704, 127
        %v1706 = vand.u32 2147483647, %v1565
        %v1707 = vand.u32 %v1706, 8388607
        %v1708 = vor.u32 %v1707, 8388608
        %v1709 = vsub.s32 0, %v1708
        %v1710 = vadd.s32 %v1705, 1
        %vm1711 = vcmp.gt.s32.totalorder %v1710, 0
        %v1712 = vsel %vm1711, %v1710, 0
        %v1713 = vshrl.u32 %v1712, 5
        %v1714 = vand.u32 %v1712, 31
        %v1715 = vsub.s32 32, %v1714
        %v1716 = vshrl.u32 683565275, %v1715
        %v1717 = vshll.u32 683565275, %v1714
        %v1718 = vshrl.u32 2475754826, %v1715
        %v1719 = vor.u32 %v1717, %v1718
        %v1720 = vshll.u32 2475754826, %v1714
        %v1721 = vshrl.u32 2131351028, %v1715
        %v1722 = vor.u32 %v1720, %v1721
        %v1723 = vshll.u32 2131351028, %v1714
        %v1724 = vshrl.u32 2102212464, %v1715
        %v1725 = vor.u32 %v1723, %v1724
        %v1726 = vshll.u32 2102212464, %v1714
        %v1727 = vshrl.u32 920167782, %v1715
        %v1728 = vor.u32 %v1726, %v1727
        %v1729 = vshll.u32 920167782, %v1714
        %v1730 = vshrl.u32 1326507024, %v1715
        %v1731 = vor.u32 %v1729, %v1730
        %vm1732 = vcmp.lt.s32.totalorder %v1713, 1
        %vm1733 = vcmp.lt.s32.totalorder %v1713, 2
        %vm1734 = vcmp.lt.s32.totalorder %v1713, 3
        %vm1735 = vcmp.lt.s32.totalorder %v1713, 4
        %v1736 = vsel %vm1732, %v1716, %v1719
        %v1737 = vsel %vm1735, %v1725, 2102212464
        %v1738 = vsel %vm1734, %v1722, %v1737
        %v1739 = vsel %vm1733, %v1736, %v1738
        %v1740 = vsel %vm1732, %v1719, %v1722
        %v1741 = vsel %vm1735, %v1728, 920167782
        %v1742 = vsel %vm1734, %v1725, %v1741
        %v1743 = vsel %vm1733, %v1740, %v1742
        %v1744 = vsel %vm1732, %v1722, %v1725
        %v1745 = vsel %vm1735, %v1731, 1326507024
        %v1746 = vsel %vm1734, %v1728, %v1745
        %v1747 = vsel %vm1733, %v1744, %v1746
        %v1748 = vshll.u32 %v1708, 8
        %v1749 = vmul.u32.u64.compose %v1748, %v1747
        %v1750 = vextract.low.u32 %v1749
        %v1751 = vextract.high.u32 %v1749
        %v1752 = vmul.u32.u64.compose %v1748, %v1743
        %v1753 = vextract.low.u32 %v1752
        %v1754 = vextract.high.u32 %v1752
        %v1755 = vmul.u32 %v1748, %v1739
        %v1756 = vadd.s32 %v1751, %v1753
        %vm1757 = vc.u32 %v1751, %v1753
        %v1758 = vadd.s32 %v1754, 1
        %v1759 = vsel %vm1757, %v1758, %v1754
        %v1760 = vadd.s32 %v1755, %v1759
        %v1761 = vadd.s32 %v1760, 536870912
        %v1762 = vshrl.u32 %v1761, 30
        %v1763 = vshll.u32 %v1762, 30
        %v1764 = vsub.s32 %v1760, %v1763
        %vm1765 = vcmp.lt.s32.totalorder %v1764, 0
        %v1766 = vsub.s32 0, %v1764
        %v1767 = vsel %vm1765, %v1766, %v1764
        %v1768 = vclz %v1767
        %v1769 = vsub.s32 %v1768, 2
        %vm1770 = vcmp.gt.s32.totalorder 0, %v1769
        %v1771 = vsel %vm1770, 0, %v1769
        %v1772 = vsub.s32 32, %v1771
        %v1773 = vshll.u32 %v1764, %v1771
        %v1774 = vshrl.u32 %v1756, %v1772
        %v1775 = vor.u32 %v1773, %v1774
        %v1776 = vsub.s32 4294967266, %v1771
        %v1777 = vadd.s32 %v1776, 127
        %v1778 = vshll.u32 %v1777, 23
        %v1779 = vor.u32 4788187, %v1778
        %v1780 = vand.u32 2147483647, %v1779
        %v1782 = vcvt.s32.f32 %v1775
        %v1783 = vmul.f32 %v1782, %v1780
        %v1784 = vxor.u32 %v1783, 2147483648
        %v1785 = vsel %vm1702, %v1784, %v1783
        %v1786 = vsub.s32 4, %v1762
        %v1787 = vsel %vm1702, %v1786, %v1762
        %v1788 = vsel %vm1701, %v1565, %v1785
        %v1789 = vsel %vm1701, 0, %v1787
        %v1790 = vcosq.f32.pop %v1788
        %v1791 = vsinq.f32.pop %v1788
        %vm1792 = vweird.f32 %v1565
        %v1793 = vadd.s32 %v1789, 3
        %v1794 = vand.u32 %v1793, 3
        %vm1795 = vcmp.lt.s32.totalorder %v1794, 2
        %vm1796 = vcmp.eq.s32.totalorder %v1794, 0
        %v1797 = vxor.u32 %v1791, 2147483648
        %v1798 = vsel %vm1796, %v1790, %v1797
        %vm1799 = vcmp.eq.s32.totalorder %v1794, 2
        %v1800 = vxor.u32 %v1790, 2147483648
        %v1801 = vsel %vm1799, %v1800, %v1791
        %v1802 = vsel %vm1795, %v1798, %v1801
        %v1803 = vsel %vm1792, nan, %v1802
        %v1804 = vand.u32 2147483647, %v1566
        %vm1805 = vcmp.le.f32.partialorder %v1804, 0.7853982
        %vm1806 = vcmp.lt.s32.totalorder %v1566, 0
        %v1807 = vand.u32 %v1566, 2139095040
        %v1808 = vshrl.u32 %v1807, 23
        %v1809 = vsub.s32 %v1808, 127
        %v1810 = vand.u32 2147483647, %v1566
        %v1811 = vand.u32 %v1810, 8388607
        %v1812 = vor.u32 %v1811, 8388608
        %v1813 = vsub.s32 0, %v1812
        %v1814 = vadd.s32 %v1809, 1
        %vm1815 = vcmp.gt.s32.totalorder %v1814, 0
        %v1816 = vsel %vm1815, %v1814, 0
        %v1817 = vshrl.u32 %v1816, 5
        %v1818 = vand.u32 %v1816, 31
        %v1819 = vsub.s32 32, %v1818
        %v1820 = vshrl.u32 683565275, %v1819
        %v1821 = vshll.u32 683565275, %v1818
        %v1822 = vshrl.u32 2475754826, %v1819
        %v1823 = vor.u32 %v1821, %v1822
        %v1824 = vshll.u32 2475754826, %v1818
        %v1825 = vshrl.u32 2131351028, %v1819
        %v1826 = vor.u32 %v1824, %v1825
        %v1827 = vshll.u32 2131351028, %v1818
        %v1828 = vshrl.u32 2102212464, %v1819
        %v1829 = vor.u32 %v1827, %v1828
        %v1830 = vshll.u32 2102212464, %v1818
        %v1831 = vshrl.u32 920167782, %v1819
        %v1832 = vor.u32 %v1830, %v1831
        %v1833 = vshll.u32 920167782, %v1818
        %v1834 = vshrl.u32 1326507024, %v1819
        %v1835 = vor.u32 %v1833, %v1834
        %vm1836 = vcmp.lt.s32.totalorder %v1817, 1
        %vm1837 = vcmp.lt.s32.totalorder %v1817, 2
        %vm1838 = vcmp.lt.s32.totalorder %v1817, 3
        %vm1839 = vcmp.lt.s32.totalorder %v1817, 4
        %v1840 = vsel %vm1836, %v1820, %v1823
        %v1841 = vsel %vm1839, %v1829, 2102212464
        %v1842 = vsel %vm1838, %v1826, %v1841
        %v1843 = vsel %vm1837, %v1840, %v1842
        %v1844 = vsel %vm1836, %v1823, %v1826
        %v1845 = vsel %vm1839, %v1832, 920167782
        %v1846 = vsel %vm1838, %v1829, %v1845
        %v1847 = vsel %vm1837, %v1844, %v1846
        %v1848 = vsel %vm1836, %v1826, %v1829
        %v1849 = vsel %vm1839, %v1835, 1326507024
        %v1850 = vsel %vm1838, %v1832, %v1849
        %v1851 = vsel %vm1837, %v1848, %v1850
        %v1852 = vshll.u32 %v1812, 8
        %v1853 = vmul.u32.u64.compose %v1852, %v1851
        %v1854 = vextract.low.u32 %v1853
        %v1855 = vextract.high.u32 %v1853
        %v1856 = vmul.u32.u64.compose %v1852, %v1847
        %v1857 = vextract.low.u32 %v1856
        %v1858 = vextract.high.u32 %v1856
        %v1859 = vmul.u32 %v1852, %v1843
        %v1860 = vadd.s32 %v1855, %v1857
        %vm1861 = vc.u32 %v1855, %v1857
        %v1862 = vadd.s32 %v1858, 1
        %v1863 = vsel %vm1861, %v1862, %v1858
        %v1864 = vadd.s32 %v1859, %v1863
        %v1865 = vadd.s32 %v1864, 536870912
        %v1866 = vshrl.u32 %v1865, 30
        %v1867 = vshll.u32 %v1866, 30
        %v1868 = vsub.s32 %v1864, %v1867
        %vm1869 = vcmp.lt.s32.totalorder %v1868, 0
        %v1870 = vsub.s32 0, %v1868
        %v1871 = vsel %vm1869, %v1870, %v1868
        %v1872 = vclz %v1871
        %v1873 = vsub.s32 %v1872, 2
        %vm1874 = vcmp.gt.s32.totalorder 0, %v1873
        %v1875 = vsel %vm1874, 0, %v1873
        %v1876 = vsub.s32 32, %v1875
        %v1877 = vshll.u32 %v1868, %v1875
        %v1878 = vshrl.u32 %v1860, %v1876
        %v1879 = vor.u32 %v1877, %v1878
        %v1880 = vsub.s32 4294967266, %v1875
        %v1881 = vadd.s32 %v1880, 127
        %v1882 = vshll.u32 %v1881, 23
        %v1883 = vor.u32 4788187, %v1882
        %v1884 = vand.u32 2147483647, %v1883
        %v1886 = vcvt.s32.f32 %v1879
        %v1887 = vmul.f32 %v1886, %v1884
        %v1888 = vxor.u32 %v1887, 2147483648
        %v1889 = vsel %vm1806, %v1888, %v1887
        %v1890 = vsub.s32 4, %v1866
        %v1891 = vsel %vm1806, %v1890, %v1866
        %v1892 = vsel %vm1805, %v1566, %v1889
        %v1893 = vsel %vm1805, 0, %v1891
        %v1894 = vcosq.f32.pop %v1892
        %v1895 = vsinq.f32.pop %v1892
        %vm1896 = vweird.f32 %v1566
        %v1897 = vadd.s32 %v1893, 3
        %v1898 = vand.u32 %v1897, 3
        %vm1899 = vcmp.lt.s32.totalorder %v1898, 2
        %vm1900 = vcmp.eq.s32.totalorder %v1898, 0
        %v1901 = vxor.u32 %v1895, 2147483648
        %v1902 = vsel %vm1900, %v1894, %v1901
        %vm1903 = vcmp.eq.s32.totalorder %v1898, 2
        %v1904 = vxor.u32 %v1894, 2147483648
        %v1905 = vsel %vm1903, %v1904, %v1895
        %v1906 = vsel %vm1899, %v1902, %v1905
        %v1907 = vsel %vm1896, nan, %v1906
        %v1908 = vand.u32 2147483647, %v1567
        %vm1909 = vcmp.le.f32.partialorder %v1908, 0.7853982
        %vm1910 = vcmp.lt.s32.totalorder %v1567, 0
        %v1911 = vand.u32 %v1567, 2139095040
        %v1912 = vshrl.u32 %v1911, 23
        %v1913 = vsub.s32 %v1912, 127
        %v1914 = vand.u32 2147483647, %v1567
        %v1915 = vand.u32 %v1914, 8388607
        %v1916 = vor.u32 %v1915, 8388608
        %v1917 = vsub.s32 0, %v1916
        %v1918 = vadd.s32 %v1913, 1
        %vm1919 = vcmp.gt.s32.totalorder %v1918, 0
        %v1920 = vsel %vm1919, %v1918, 0
        %v1921 = vshrl.u32 %v1920, 5
        %v1922 = vand.u32 %v1920, 31
        %v1923 = vsub.s32 32, %v1922
        %v1924 = vshrl.u32 683565275, %v1923
        %v1925 = vshll.u32 683565275, %v1922
        %v1926 = vshrl.u32 2475754826, %v1923
        %v1927 = vor.u32 %v1925, %v1926
        %v1928 = vshll.u32 2475754826, %v1922
        %v1929 = vshrl.u32 2131351028, %v1923
        %v1930 = vor.u32 %v1928, %v1929
        %v1931 = vshll.u32 2131351028, %v1922
        %v1932 = vshrl.u32 2102212464, %v1923
        %v1933 = vor.u32 %v1931, %v1932
        %v1934 = vshll.u32 2102212464, %v1922
        %v1935 = vshrl.u32 920167782, %v1923
        %v1936 = vor.u32 %v1934, %v1935
        %v1937 = vshll.u32 920167782, %v1922
        %v1938 = vshrl.u32 1326507024, %v1923
        %v1939 = vor.u32 %v1937, %v1938
        %vm1940 = vcmp.lt.s32.totalorder %v1921, 1
        %vm1941 = vcmp.lt.s32.totalorder %v1921, 2
        %vm1942 = vcmp.lt.s32.totalorder %v1921, 3
        %vm1943 = vcmp.lt.s32.totalorder %v1921, 4
        %v1944 = vsel %vm1940, %v1924, %v1927
        %v1945 = vsel %vm1943, %v1933, 2102212464
        %v1946 = vsel %vm1942, %v1930, %v1945
        %v1947 = vsel %vm1941, %v1944, %v1946
        %v1948 = vsel %vm1940, %v1927, %v1930
        %v1949 = vsel %vm1943, %v1936, 920167782
        %v1950 = vsel %vm1942, %v1933, %v1949
        %v1951 = vsel %vm1941, %v1948, %v1950
        %v1952 = vsel %vm1940, %v1930, %v1933
        %v1953 = vsel %vm1943, %v1939, 1326507024
        %v1954 = vsel %vm1942, %v1936, %v1953
        %v1955 = vsel %vm1941, %v1952, %v1954
        %v1956 = vshll.u32 %v1916, 8
        %v1957 = vmul.u32.u64.compose %v1956, %v1955
        %v1958 = vextract.low.u32 %v1957
        %v1959 = vextract.high.u32 %v1957
        %v1960 = vmul.u32.u64.compose %v1956, %v1951
        %v1961 = vextract.low.u32 %v1960
        %v1962 = vextract.high.u32 %v1960
        %v1963 = vmul.u32 %v1956, %v1947
        %v1964 = vadd.s32 %v1959, %v1961
        %vm1965 = vc.u32 %v1959, %v1961
        %v1966 = vadd.s32 %v1962, 1
        %v1967 = vsel %vm1965, %v1966, %v1962
        %v1968 = vadd.s32 %v1963, %v1967
        %v1969 = vadd.s32 %v1968, 536870912
        %v1970 = vshrl.u32 %v1969, 30
        %v1971 = vshll.u32 %v1970, 30
        %v1972 = vsub.s32 %v1968, %v1971
        %vm1973 = vcmp.lt.s32.totalorder %v1972, 0
        %v1974 = vsub.s32 0, %v1972
        %v1975 = vsel %vm1973, %v1974, %v1972
        %v1976 = vclz %v1975
        %v1977 = vsub.s32 %v1976, 2
        %vm1978 = vcmp.gt.s32.totalorder 0, %v1977
        %v1979 = vsel %vm1978, 0, %v1977
        %v1980 = vsub.s32 32, %v1979
        %v1981 = vshll.u32 %v1972, %v1979
        %v1982 = vshrl.u32 %v1964, %v1980
        %v1983 = vor.u32 %v1981, %v1982
        %v1984 = vsub.s32 4294967266, %v1979
        %v1985 = vadd.s32 %v1984, 127
        %v1986 = vshll.u32 %v1985, 23
        %v1987 = vor.u32 4788187, %v1986
        %v1988 = vand.u32 2147483647, %v1987
        %v1990 = vcvt.s32.f32 %v1983
        %v1991 = vmul.f32 %v1990, %v1988
        %v1992 = vxor.u32 %v1991, 2147483648
        %v1993 = vsel %vm1910, %v1992, %v1991
        %v1994 = vsub.s32 4, %v1970
        %v1995 = vsel %vm1910, %v1994, %v1970
        %v1996 = vsel %vm1909, %v1567, %v1993
        %v1997 = vsel %vm1909, 0, %v1995
        %v1998 = vcosq.f32.pop %v1996
        %v1999 = vsinq.f32.pop %v1996
        %vm2000 = vweird.f32 %v1567
        %v2001 = vadd.s32 %v1997, 3
        %v2002 = vand.u32 %v2001, 3
        %vm2003 = vcmp.lt.s32.totalorder %v2002, 2
        %vm2004 = vcmp.eq.s32.totalorder %v2002, 0
        %v2005 = vxor.u32 %v1999, 2147483648
        %v2006 = vsel %vm2004, %v1998, %v2005
        %vm2007 = vcmp.eq.s32.totalorder %v2002, 2
        %v2008 = vxor.u32 %v1998, 2147483648
        %v2009 = vsel %vm2007, %v2008, %v1999
        %v2010 = vsel %vm2003, %v2006, %v2009
        %v2011 = vsel %vm2000, nan, %v2010
        %v2012 = vand.u32 2147483647, %v1568
        %vm2013 = vcmp.le.f32.partialorder %v2012, 0.7853982
        %vm2014 = vcmp.lt.s32.totalorder %v1568, 0
        %v2015 = vand.u32 %v1568, 2139095040
        %v2016 = vshrl.u32 %v2015, 23
        %v2017 = vsub.s32 %v2016, 127
        %v2018 = vand.u32 2147483647, %v1568
        %v2019 = vand.u32 %v2018, 8388607
        %v2020 = vor.u32 %v2019, 8388608
        %v2021 = vsub.s32 0, %v2020
        %v2022 = vadd.s32 %v2017, 1
        %vm2023 = vcmp.gt.s32.totalorder %v2022, 0
        %v2024 = vsel %vm2023, %v2022, 0
        %v2025 = vshrl.u32 %v2024, 5
        %v2026 = vand.u32 %v2024, 31
        %v2027 = vsub.s32 32, %v2026
        %v2028 = vshrl.u32 683565275, %v2027
        %v2029 = vshll.u32 683565275, %v2026
        %v2030 = vshrl.u32 2475754826, %v2027
        %v2031 = vor.u32 %v2029, %v2030
        %v2032 = vshll.u32 2475754826, %v2026
        %v2033 = vshrl.u32 2131351028, %v2027
        %v2034 = vor.u32 %v2032, %v2033
        %v2035 = vshll.u32 2131351028, %v2026
        %v2036 = vshrl.u32 2102212464, %v2027
        %v2037 = vor.u32 %v2035, %v2036
        %v2038 = vshll.u32 2102212464, %v2026
        %v2039 = vshrl.u32 920167782, %v2027
        %v2040 = vor.u32 %v2038, %v2039
        %v2041 = vshll.u32 920167782, %v2026
        %v2042 = vshrl.u32 1326507024, %v2027
        %v2043 = vor.u32 %v2041, %v2042
        %vm2044 = vcmp.lt.s32.totalorder %v2025, 1
        %vm2045 = vcmp.lt.s32.totalorder %v2025, 2
        %vm2046 = vcmp.lt.s32.totalorder %v2025, 3
        %vm2047 = vcmp.lt.s32.totalorder %v2025, 4
        %v2048 = vsel %vm2044, %v2028, %v2031
        %v2049 = vsel %vm2047, %v2037, 2102212464
        %v2050 = vsel %vm2046, %v2034, %v2049
        %v2051 = vsel %vm2045, %v2048, %v2050
        %v2052 = vsel %vm2044, %v2031, %v2034
        %v2053 = vsel %vm2047, %v2040, 920167782
        %v2054 = vsel %vm2046, %v2037, %v2053
        %v2055 = vsel %vm2045, %v2052, %v2054
        %v2056 = vsel %vm2044, %v2034, %v2037
        %v2057 = vsel %vm2047, %v2043, 1326507024
        %v2058 = vsel %vm2046, %v2040, %v2057
        %v2059 = vsel %vm2045, %v2056, %v2058
        %v2060 = vshll.u32 %v2020, 8
        %v2061 = vmul.u32.u64.compose %v2060, %v2059
        %v2062 = vextract.low.u32 %v2061
        %v2063 = vextract.high.u32 %v2061
        %v2064 = vmul.u32.u64.compose %v2060, %v2055
        %v2065 = vextract.low.u32 %v2064
        %v2066 = vextract.high.u32 %v2064
        %v2067 = vmul.u32 %v2060, %v2051
        %v2068 = vadd.s32 %v2063, %v2065
        %vm2069 = vc.u32 %v2063, %v2065
        %v2070 = vadd.s32 %v2066, 1
        %v2071 = vsel %vm2069, %v2070, %v2066
        %v2072 = vadd.s32 %v2067, %v2071
        %v2073 = vadd.s32 %v2072, 536870912
        %v2074 = vshrl.u32 %v2073, 30
        %v2075 = vshll.u32 %v2074, 30
        %v2076 = vsub.s32 %v2072, %v2075
        %vm2077 = vcmp.lt.s32.totalorder %v2076, 0
        %v2078 = vsub.s32 0, %v2076
        %v2079 = vsel %vm2077, %v2078, %v2076
        %v2080 = vclz %v2079
        %v2081 = vsub.s32 %v2080, 2
        %vm2082 = vcmp.gt.s32.totalorder 0, %v2081
        %v2083 = vsel %vm2082, 0, %v2081
        %v2084 = vsub.s32 32, %v2083
        %v2085 = vshll.u32 %v2076, %v2083
        %v2086 = vshrl.u32 %v2068, %v2084
        %v2087 = vor.u32 %v2085, %v2086
        %v2088 = vsub.s32 4294967266, %v2083
        %v2089 = vadd.s32 %v2088, 127
        %v2090 = vshll.u32 %v2089, 23
        %v2091 = vor.u32 4788187, %v2090
        %v2092 = vand.u32 2147483647, %v2091
        %v2094 = vcvt.s32.f32 %v2087
        %v2095 = vmul.f32 %v2094, %v2092
        %v2096 = vxor.u32 %v2095, 2147483648
        %v2097 = vsel %vm2014, %v2096, %v2095
        %v2098 = vsub.s32 4, %v2074
        %v2099 = vsel %vm2014, %v2098, %v2074
        %v2100 = vsel %vm2013, %v1568, %v2097
        %v2101 = vsel %vm2013, 0, %v2099
        %v2102 = vcosq.f32.pop %v2100
        %v2103 = vsinq.f32.pop %v2100
        %vm2104 = vweird.f32 %v1568
        %v2105 = vadd.s32 %v2101, 3
        %v2106 = vand.u32 %v2105, 3
        %vm2107 = vcmp.lt.s32.totalorder %v2106, 2
        %vm2108 = vcmp.eq.s32.totalorder %v2106, 0
        %v2109 = vxor.u32 %v2103, 2147483648
        %v2110 = vsel %vm2108, %v2102, %v2109
        %vm2111 = vcmp.eq.s32.totalorder %v2106, 2
        %v2112 = vxor.u32 %v2102, 2147483648
        %v2113 = vsel %vm2111, %v2112, %v2103
        %v2114 = vsel %vm2107, %v2110, %v2113
        %v2115 = vsel %vm2104, nan, %v2114
        %v2116 = vand.u32 2147483647, %v1569
        %vm2117 = vcmp.le.f32.partialorder %v2116, 0.7853982
        %vm2118 = vcmp.lt.s32.totalorder %v1569, 0
        %v2119 = vand.u32 %v1569, 2139095040
        %v2120 = vshrl.u32 %v2119, 23
        %v2121 = vsub.s32 %v2120, 127
        %v2122 = vand.u32 2147483647, %v1569
        %v2123 = vand.u32 %v2122, 8388607
        %v2124 = vor.u32 %v2123, 8388608
        %v2125 = vsub.s32 0, %v2124
        %v2126 = vadd.s32 %v2121, 1
        %vm2127 = vcmp.gt.s32.totalorder %v2126, 0
        %v2128 = vsel %vm2127, %v2126, 0
        %v2129 = vshrl.u32 %v2128, 5
        %v2130 = vand.u32 %v2128, 31
        %v2131 = vsub.s32 32, %v2130
        %v2132 = vshrl.u32 683565275, %v2131
        %v2133 = vshll.u32 683565275, %v2130
        %v2134 = vshrl.u32 2475754826, %v2131
        %v2135 = vor.u32 %v2133, %v2134
        %v2136 = vshll.u32 2475754826, %v2130
        %v2137 = vshrl.u32 2131351028, %v2131
        %v2138 = vor.u32 %v2136, %v2137
        %v2139 = vshll.u32 2131351028, %v2130
        %v2140 = vshrl.u32 2102212464, %v2131
        %v2141 = vor.u32 %v2139, %v2140
        %v2142 = vshll.u32 2102212464, %v2130
        %v2143 = vshrl.u32 920167782, %v2131
        %v2144 = vor.u32 %v2142, %v2143
        %v2145 = vshll.u32 920167782, %v2130
        %v2146 = vshrl.u32 1326507024, %v2131
        %v2147 = vor.u32 %v2145, %v2146
        %vm2148 = vcmp.lt.s32.totalorder %v2129, 1
        %vm2149 = vcmp.lt.s32.totalorder %v2129, 2
        %vm2150 = vcmp.lt.s32.totalorder %v2129, 3
        %vm2151 = vcmp.lt.s32.totalorder %v2129, 4
        %v2152 = vsel %vm2148, %v2132, %v2135
        %v2153 = vsel %vm2151, %v2141, 2102212464
        %v2154 = vsel %vm2150, %v2138, %v2153
        %v2155 = vsel %vm2149, %v2152, %v2154
        %v2156 = vsel %vm2148, %v2135, %v2138
        %v2157 = vsel %vm2151, %v2144, 920167782
        %v2158 = vsel %vm2150, %v2141, %v2157
        %v2159 = vsel %vm2149, %v2156, %v2158
        %v2160 = vsel %vm2148, %v2138, %v2141
        %v2161 = vsel %vm2151, %v2147, 1326507024
        %v2162 = vsel %vm2150, %v2144, %v2161
        %v2163 = vsel %vm2149, %v2160, %v2162
        %v2164 = vshll.u32 %v2124, 8
        %v2165 = vmul.u32.u64.compose %v2164, %v2163
        %v2166 = vextract.low.u32 %v2165
        %v2167 = vextract.high.u32 %v2165
        %v2168 = vmul.u32.u64.compose %v2164, %v2159
        %v2169 = vextract.low.u32 %v2168
        %v2170 = vextract.high.u32 %v2168
        %v2171 = vmul.u32 %v2164, %v2155
        %v2172 = vadd.s32 %v2167, %v2169
        %vm2173 = vc.u32 %v2167, %v2169
        %v2174 = vadd.s32 %v2170, 1
        %v2175 = vsel %vm2173, %v2174, %v2170
        %v2176 = vadd.s32 %v2171, %v2175
        %v2177 = vadd.s32 %v2176, 536870912
        %v2178 = vshrl.u32 %v2177, 30
        %v2179 = vshll.u32 %v2178, 30
        %v2180 = vsub.s32 %v2176, %v2179
        %vm2181 = vcmp.lt.s32.totalorder %v2180, 0
        %v2182 = vsub.s32 0, %v2180
        %v2183 = vsel %vm2181, %v2182, %v2180
        %v2184 = vclz %v2183
        %v2185 = vsub.s32 %v2184, 2
        %vm2186 = vcmp.gt.s32.totalorder 0, %v2185
        %v2187 = vsel %vm2186, 0, %v2185
        %v2188 = vsub.s32 32, %v2187
        %v2189 = vshll.u32 %v2180, %v2187
        %v2190 = vshrl.u32 %v2172, %v2188
        %v2191 = vor.u32 %v2189, %v2190
        %v2192 = vsub.s32 4294967266, %v2187
        %v2193 = vadd.s32 %v2192, 127
        %v2194 = vshll.u32 %v2193, 23
        %v2195 = vor.u32 4788187, %v2194
        %v2196 = vand.u32 2147483647, %v2195
        %v2198 = vcvt.s32.f32 %v2191
        %v2199 = vmul.f32 %v2198, %v2196
        %v2200 = vxor.u32 %v2199, 2147483648
        %v2201 = vsel %vm2118, %v2200, %v2199
        %v2202 = vsub.s32 4, %v2178
        %v2203 = vsel %vm2118, %v2202, %v2178
        %v2204 = vsel %vm2117, %v1569, %v2201
        %v2205 = vsel %vm2117, 0, %v2203
        %v2206 = vcosq.f32.pop %v2204
        %v2207 = vsinq.f32.pop %v2204
        %vm2208 = vweird.f32 %v1569
        %v2209 = vadd.s32 %v2205, 3
        %v2210 = vand.u32 %v2209, 3
        %vm2211 = vcmp.lt.s32.totalorder %v2210, 2
        %vm2212 = vcmp.eq.s32.totalorder %v2210, 0
        %v2213 = vxor.u32 %v2207, 2147483648
        %v2214 = vsel %vm2212, %v2206, %v2213
        %vm2215 = vcmp.eq.s32.totalorder %v2210, 2
        %v2216 = vxor.u32 %v2206, 2147483648
        %v2217 = vsel %vm2215, %v2216, %v2207
        %v2218 = vsel %vm2211, %v2214, %v2217
        %v2219 = vsel %vm2208, nan, %v2218
        %v2220 = vand.u32 2147483647, %v1570
        %vm2221 = vcmp.le.f32.partialorder %v2220, 0.7853982
        %vm2222 = vcmp.lt.s32.totalorder %v1570, 0
        %v2223 = vand.u32 %v1570, 2139095040
        %v2224 = vshrl.u32 %v2223, 23
        %v2225 = vsub.s32 %v2224, 127
        %v2226 = vand.u32 2147483647, %v1570
        %v2227 = vand.u32 %v2226, 8388607
        %v2228 = vor.u32 %v2227, 8388608
        %v2229 = vsub.s32 0, %v2228
        %v2230 = vadd.s32 %v2225, 1
        %vm2231 = vcmp.gt.s32.totalorder %v2230, 0
        %v2232 = vsel %vm2231, %v2230, 0
        %v2233 = vshrl.u32 %v2232, 5
        %v2234 = vand.u32 %v2232, 31
        %v2235 = vsub.s32 32, %v2234
        %v2236 = vshrl.u32 683565275, %v2235
        %v2237 = vshll.u32 683565275, %v2234
        %v2238 = vshrl.u32 2475754826, %v2235
        %v2239 = vor.u32 %v2237, %v2238
        %v2240 = vshll.u32 2475754826, %v2234
        %v2241 = vshrl.u32 2131351028, %v2235
        %v2242 = vor.u32 %v2240, %v2241
        %v2243 = vshll.u32 2131351028, %v2234
        %v2244 = vshrl.u32 2102212464, %v2235
        %v2245 = vor.u32 %v2243, %v2244
        %v2246 = vshll.u32 2102212464, %v2234
        %v2247 = vshrl.u32 920167782, %v2235
        %v2248 = vor.u32 %v2246, %v2247
        %v2249 = vshll.u32 920167782, %v2234
        %v2250 = vshrl.u32 1326507024, %v2235
        %v2251 = vor.u32 %v2249, %v2250
        %vm2252 = vcmp.lt.s32.totalorder %v2233, 1
        %vm2253 = vcmp.lt.s32.totalorder %v2233, 2
        %vm2254 = vcmp.lt.s32.totalorder %v2233, 3
        %vm2255 = vcmp.lt.s32.totalorder %v2233, 4
        %v2256 = vsel %vm2252, %v2236, %v2239
        %v2257 = vsel %vm2255, %v2245, 2102212464
        %v2258 = vsel %vm2254, %v2242, %v2257
        %v2259 = vsel %vm2253, %v2256, %v2258
        %v2260 = vsel %vm2252, %v2239, %v2242
        %v2261 = vsel %vm2255, %v2248, 920167782
        %v2262 = vsel %vm2254, %v2245, %v2261
        %v2263 = vsel %vm2253, %v2260, %v2262
        %v2264 = vsel %vm2252, %v2242, %v2245
        %v2265 = vsel %vm2255, %v2251, 1326507024
        %v2266 = vsel %vm2254, %v2248, %v2265
        %v2267 = vsel %vm2253, %v2264, %v2266
        %v2268 = vshll.u32 %v2228, 8
        %v2269 = vmul.u32.u64.compose %v2268, %v2267
        %v2270 = vextract.low.u32 %v2269
        %v2271 = vextract.high.u32 %v2269
        %v2272 = vmul.u32.u64.compose %v2268, %v2263
        %v2273 = vextract.low.u32 %v2272
        %v2274 = vextract.high.u32 %v2272
        %v2275 = vmul.u32 %v2268, %v2259
        %v2276 = vadd.s32 %v2271, %v2273
        %vm2277 = vc.u32 %v2271, %v2273
        %v2278 = vadd.s32 %v2274, 1
        %v2279 = vsel %vm2277, %v2278, %v2274
        %v2280 = vadd.s32 %v2275, %v2279
        %v2281 = vadd.s32 %v2280, 536870912
        %v2282 = vshrl.u32 %v2281, 30
        %v2283 = vshll.u32 %v2282, 30
        %v2284 = vsub.s32 %v2280, %v2283
        %vm2285 = vcmp.lt.s32.totalorder %v2284, 0
        %v2286 = vsub.s32 0, %v2284
        %v2287 = vsel %vm2285, %v2286, %v2284
        %v2288 = vclz %v2287
        %v2289 = vsub.s32 %v2288, 2
        %vm2290 = vcmp.gt.s32.totalorder 0, %v2289
        %v2291 = vsel %vm2290, 0, %v2289
        %v2292 = vsub.s32 32, %v2291
        %v2293 = vshll.u32 %v2284, %v2291
        %v2294 = vshrl.u32 %v2276, %v2292
        %v2295 = vor.u32 %v2293, %v2294
        %v2296 = vsub.s32 4294967266, %v2291
        %v2297 = vadd.s32 %v2296, 127
        %v2298 = vshll.u32 %v2297, 23
        %v2299 = vor.u32 4788187, %v2298
        %v2300 = vand.u32 2147483647, %v2299
        %v2302 = vcvt.s32.f32 %v2295
        %v2303 = vmul.f32 %v2302, %v2300
        %v2304 = vxor.u32 %v2303, 2147483648
        %v2305 = vsel %vm2222, %v2304, %v2303
        %v2306 = vsub.s32 4, %v2282
        %v2307 = vsel %vm2222, %v2306, %v2282
        %v2308 = vsel %vm2221, %v1570, %v2305
        %v2309 = vsel %vm2221, 0, %v2307
        %v2310 = vcosq.f32.pop %v2308
        %v2311 = vsinq.f32.pop %v2308
        %vm2312 = vweird.f32 %v1570
        %v2313 = vadd.s32 %v2309, 3
        %v2314 = vand.u32 %v2313, 3
        %vm2315 = vcmp.lt.s32.totalorder %v2314, 2
        %vm2316 = vcmp.eq.s32.totalorder %v2314, 0
        %v2317 = vxor.u32 %v2311, 2147483648
        %v2318 = vsel %vm2316, %v2310, %v2317
        %vm2319 = vcmp.eq.s32.totalorder %v2314, 2
        %v2320 = vxor.u32 %v2310, 2147483648
        %v2321 = vsel %vm2319, %v2320, %v2311
        %v2322 = vsel %vm2315, %v2318, %v2321
        %v2323 = vsel %vm2312, nan, %v2322
        %v2324 = vand.u32 2147483647, %v1571
        %vm2325 = vcmp.le.f32.partialorder %v2324, 0.7853982
        %vm2326 = vcmp.lt.s32.totalorder %v1571, 0
        %v2327 = vand.u32 %v1571, 2139095040
        %v2328 = vshrl.u32 %v2327, 23
        %v2329 = vsub.s32 %v2328, 127
        %v2330 = vand.u32 2147483647, %v1571
        %v2331 = vand.u32 %v2330, 8388607
        %v2332 = vor.u32 %v2331, 8388608
        %v2333 = vsub.s32 0, %v2332
        %v2334 = vadd.s32 %v2329, 1
        %vm2335 = vcmp.gt.s32.totalorder %v2334, 0
        %v2336 = vsel %vm2335, %v2334, 0
        %v2337 = vshrl.u32 %v2336, 5
        %v2338 = vand.u32 %v2336, 31
        %v2339 = vsub.s32 32, %v2338
        %v2340 = vshrl.u32 683565275, %v2339
        %v2341 = vshll.u32 683565275, %v2338
        %v2342 = vshrl.u32 2475754826, %v2339
        %v2343 = vor.u32 %v2341, %v2342
        %v2344 = vshll.u32 2475754826, %v2338
        %v2345 = vshrl.u32 2131351028, %v2339
        %v2346 = vor.u32 %v2344, %v2345
        %v2347 = vshll.u32 2131351028, %v2338
        %v2348 = vshrl.u32 2102212464, %v2339
        %v2349 = vor.u32 %v2347, %v2348
        %v2350 = vshll.u32 2102212464, %v2338
        %v2351 = vshrl.u32 920167782, %v2339
        %v2352 = vor.u32 %v2350, %v2351
        %v2353 = vshll.u32 920167782, %v2338
        %v2354 = vshrl.u32 1326507024, %v2339
        %v2355 = vor.u32 %v2353, %v2354
        %vm2356 = vcmp.lt.s32.totalorder %v2337, 1
        %vm2357 = vcmp.lt.s32.totalorder %v2337, 2
        %vm2358 = vcmp.lt.s32.totalorder %v2337, 3
        %vm2359 = vcmp.lt.s32.totalorder %v2337, 4
        %v2360 = vsel %vm2356, %v2340, %v2343
        %v2361 = vsel %vm2359, %v2349, 2102212464
        %v2362 = vsel %vm2358, %v2346, %v2361
        %v2363 = vsel %vm2357, %v2360, %v2362
        %v2364 = vsel %vm2356, %v2343, %v2346
        %v2365 = vsel %vm2359, %v2352, 920167782
        %v2366 = vsel %vm2358, %v2349, %v2365
        %v2367 = vsel %vm2357, %v2364, %v2366
        %v2368 = vsel %vm2356, %v2346, %v2349
        %v2369 = vsel %vm2359, %v2355, 1326507024
        %v2370 = vsel %vm2358, %v2352, %v2369
        %v2371 = vsel %vm2357, %v2368, %v2370
        %v2372 = vshll.u32 %v2332, 8
        %v2373 = vmul.u32.u64.compose %v2372, %v2371
        %v2374 = vextract.low.u32 %v2373
        %v2375 = vextract.high.u32 %v2373
        %v2376 = vmul.u32.u64.compose %v2372, %v2367
        %v2377 = vextract.low.u32 %v2376
        %v2378 = vextract.high.u32 %v2376
        %v2379 = vmul.u32 %v2372, %v2363
        %v2380 = vadd.s32 %v2375, %v2377
        %vm2381 = vc.u32 %v2375, %v2377
        %v2382 = vadd.s32 %v2378, 1
        %v2383 = vsel %vm2381, %v2382, %v2378
        %v2384 = vadd.s32 %v2379, %v2383
        %v2385 = vadd.s32 %v2384, 536870912
        %v2386 = vshrl.u32 %v2385, 30
        %v2387 = vshll.u32 %v2386, 30
        %v2388 = vsub.s32 %v2384, %v2387
        %vm2389 = vcmp.lt.s32.totalorder %v2388, 0
        %v2390 = vsub.s32 0, %v2388
        %v2391 = vsel %vm2389, %v2390, %v2388
        %v2392 = vclz %v2391
        %v2393 = vsub.s32 %v2392, 2
        %vm2394 = vcmp.gt.s32.totalorder 0, %v2393
        %v2395 = vsel %vm2394, 0, %v2393
        %v2396 = vsub.s32 32, %v2395
        %v2397 = vshll.u32 %v2388, %v2395
        %v2398 = vshrl.u32 %v2380, %v2396
        %v2399 = vor.u32 %v2397, %v2398
        %v2400 = vsub.s32 4294967266, %v2395
        %v2401 = vadd.s32 %v2400, 127
        %v2402 = vshll.u32 %v2401, 23
        %v2403 = vor.u32 4788187, %v2402
        %v2404 = vand.u32 2147483647, %v2403
        %v2406 = vcvt.s32.f32 %v2399
        %v2407 = vmul.f32 %v2406, %v2404
        %v2408 = vxor.u32 %v2407, 2147483648
        %v2409 = vsel %vm2326, %v2408, %v2407
        %v2410 = vsub.s32 4, %v2386
        %v2411 = vsel %vm2326, %v2410, %v2386
        %v2412 = vsel %vm2325, %v1571, %v2409
        %v2413 = vsel %vm2325, 0, %v2411
        %v2414 = vcosq.f32.pop %v2412
        %v2415 = vsinq.f32.pop %v2412
        %vm2416 = vweird.f32 %v1571
        %v2417 = vadd.s32 %v2413, 3
        %v2418 = vand.u32 %v2417, 3
        %vm2419 = vcmp.lt.s32.totalorder %v2418, 2
        %vm2420 = vcmp.eq.s32.totalorder %v2418, 0
        %v2421 = vxor.u32 %v2415, 2147483648
        %v2422 = vsel %vm2420, %v2414, %v2421
        %vm2423 = vcmp.eq.s32.totalorder %v2418, 2
        %v2424 = vxor.u32 %v2414, 2147483648
        %v2425 = vsel %vm2423, %v2424, %v2415
        %v2426 = vsel %vm2419, %v2422, %v2425
        %v2427 = vsel %vm2416, nan, %v2426
        %v2428 = vand.u32 2147483647, %v1572
        %vm2429 = vcmp.le.f32.partialorder %v2428, 0.7853982
        %vm2430 = vcmp.lt.s32.totalorder %v1572, 0
        %v2431 = vand.u32 %v1572, 2139095040
        %v2432 = vshrl.u32 %v2431, 23
        %v2433 = vsub.s32 %v2432, 127
        %v2434 = vand.u32 2147483647, %v1572
        %v2435 = vand.u32 %v2434, 8388607
        %v2436 = vor.u32 %v2435, 8388608
        %v2437 = vsub.s32 0, %v2436
        %v2438 = vadd.s32 %v2433, 1
        %vm2439 = vcmp.gt.s32.totalorder %v2438, 0
        %v2440 = vsel %vm2439, %v2438, 0
        %v2441 = vshrl.u32 %v2440, 5
        %v2442 = vand.u32 %v2440, 31
        %v2443 = vsub.s32 32, %v2442
        %v2444 = vshrl.u32 683565275, %v2443
        %v2445 = vshll.u32 683565275, %v2442
        %v2446 = vshrl.u32 2475754826, %v2443
        %v2447 = vor.u32 %v2445, %v2446
        %v2448 = vshll.u32 2475754826, %v2442
        %v2449 = vshrl.u32 2131351028, %v2443
        %v2450 = vor.u32 %v2448, %v2449
        %v2451 = vshll.u32 2131351028, %v2442
        %v2452 = vshrl.u32 2102212464, %v2443
        %v2453 = vor.u32 %v2451, %v2452
        %v2454 = vshll.u32 2102212464, %v2442
        %v2455 = vshrl.u32 920167782, %v2443
        %v2456 = vor.u32 %v2454, %v2455
        %v2457 = vshll.u32 920167782, %v2442
        %v2458 = vshrl.u32 1326507024, %v2443
        %v2459 = vor.u32 %v2457, %v2458
        %vm2460 = vcmp.lt.s32.totalorder %v2441, 1
        %vm2461 = vcmp.lt.s32.totalorder %v2441, 2
        %vm2462 = vcmp.lt.s32.totalorder %v2441, 3
        %vm2463 = vcmp.lt.s32.totalorder %v2441, 4
        %v2464 = vsel %vm2460, %v2444, %v2447
        %v2465 = vsel %vm2463, %v2453, 2102212464
        %v2466 = vsel %vm2462, %v2450, %v2465
        %v2467 = vsel %vm2461, %v2464, %v2466
        %v2468 = vsel %vm2460, %v2447, %v2450
        %v2469 = vsel %vm2463, %v2456, 920167782
        %v2470 = vsel %vm2462, %v2453, %v2469
        %v2471 = vsel %vm2461, %v2468, %v2470
        %v2472 = vsel %vm2460, %v2450, %v2453
        %v2473 = vsel %vm2463, %v2459, 1326507024
        %v2474 = vsel %vm2462, %v2456, %v2473
        %v2475 = vsel %vm2461, %v2472, %v2474
        %v2476 = vshll.u32 %v2436, 8
        %v2477 = vmul.u32.u64.compose %v2476, %v2475
        %v2478 = vextract.low.u32 %v2477
        %v2479 = vextract.high.u32 %v2477
        %v2480 = vmul.u32.u64.compose %v2476, %v2471
        %v2481 = vextract.low.u32 %v2480
        %v2482 = vextract.high.u32 %v2480
        %v2483 = vmul.u32 %v2476, %v2467
        %v2484 = vadd.s32 %v2479, %v2481
        %vm2485 = vc.u32 %v2479, %v2481
        %v2486 = vadd.s32 %v2482, 1
        %v2487 = vsel %vm2485, %v2486, %v2482
        %v2488 = vadd.s32 %v2483, %v2487
        %v2489 = vadd.s32 %v2488, 536870912
        %v2490 = vshrl.u32 %v2489, 30
        %v2491 = vshll.u32 %v2490, 30
        %v2492 = vsub.s32 %v2488, %v2491
        %vm2493 = vcmp.lt.s32.totalorder %v2492, 0
        %v2494 = vsub.s32 0, %v2492
        %v2495 = vsel %vm2493, %v2494, %v2492
        %v2496 = vclz %v2495
        %v2497 = vsub.s32 %v2496, 2
        %vm2498 = vcmp.gt.s32.totalorder 0, %v2497
        %v2499 = vsel %vm2498, 0, %v2497
        %v2500 = vsub.s32 32, %v2499
        %v2501 = vshll.u32 %v2492, %v2499
        %v2502 = vshrl.u32 %v2484, %v2500
        %v2503 = vor.u32 %v2501, %v2502
        %v2504 = vsub.s32 4294967266, %v2499
        %v2505 = vadd.s32 %v2504, 127
        %v2506 = vshll.u32 %v2505, 23
        %v2507 = vor.u32 4788187, %v2506
        %v2508 = vand.u32 2147483647, %v2507
        %v2510 = vcvt.s32.f32 %v2503
        %v2511 = vmul.f32 %v2510, %v2508
        %v2512 = vxor.u32 %v2511, 2147483648
        %v2513 = vsel %vm2430, %v2512, %v2511
        %v2514 = vsub.s32 4, %v2490
        %v2515 = vsel %vm2430, %v2514, %v2490
        %v2516 = vsel %vm2429, %v1572, %v2513
        %v2517 = vsel %vm2429, 0, %v2515
        %v2518 = vcosq.f32.pop %v2516
        %v2519 = vsinq.f32.pop %v2516
        %vm2520 = vweird.f32 %v1572
        %v2521 = vadd.s32 %v2517, 3
        %v2522 = vand.u32 %v2521, 3
        %vm2523 = vcmp.lt.s32.totalorder %v2522, 2
        %vm2524 = vcmp.eq.s32.totalorder %v2522, 0
        %v2525 = vxor.u32 %v2519, 2147483648
        %v2526 = vsel %vm2524, %v2518, %v2525
        %vm2527 = vcmp.eq.s32.totalorder %v2522, 2
        %v2528 = vxor.u32 %v2518, 2147483648
        %v2529 = vsel %vm2527, %v2528, %v2519
        %v2530 = vsel %vm2523, %v2526, %v2529
        %v2531 = vsel %vm2520, nan, %v2530
        %v2532 = vand.u32 2147483647, %v1573
        %vm2533 = vcmp.le.f32.partialorder %v2532, 0.7853982
        %vm2534 = vcmp.lt.s32.totalorder %v1573, 0
        %v2535 = vand.u32 %v1573, 2139095040
        %v2536 = vshrl.u32 %v2535, 23
        %v2537 = vsub.s32 %v2536, 127
        %v2538 = vand.u32 2147483647, %v1573
        %v2539 = vand.u32 %v2538, 8388607
        %v2540 = vor.u32 %v2539, 8388608
        %v2541 = vsub.s32 0, %v2540
        %v2542 = vadd.s32 %v2537, 1
        %vm2543 = vcmp.gt.s32.totalorder %v2542, 0
        %v2544 = vsel %vm2543, %v2542, 0
        %v2545 = vshrl.u32 %v2544, 5
        %v2546 = vand.u32 %v2544, 31
        %v2547 = vsub.s32 32, %v2546
        %v2548 = vshrl.u32 683565275, %v2547
        %v2549 = vshll.u32 683565275, %v2546
        %v2550 = vshrl.u32 2475754826, %v2547
        %v2551 = vor.u32 %v2549, %v2550
        %v2552 = vshll.u32 2475754826, %v2546
        %v2553 = vshrl.u32 2131351028, %v2547
        %v2554 = vor.u32 %v2552, %v2553
        %v2555 = vshll.u32 2131351028, %v2546
        %v2556 = vshrl.u32 2102212464, %v2547
        %v2557 = vor.u32 %v2555, %v2556
        %v2558 = vshll.u32 2102212464, %v2546
        %v2559 = vshrl.u32 920167782, %v2547
        %v2560 = vor.u32 %v2558, %v2559
        %v2561 = vshll.u32 920167782, %v2546
        %v2562 = vshrl.u32 1326507024, %v2547
        %v2563 = vor.u32 %v2561, %v2562
        %vm2564 = vcmp.lt.s32.totalorder %v2545, 1
        %vm2565 = vcmp.lt.s32.totalorder %v2545, 2
        %vm2566 = vcmp.lt.s32.totalorder %v2545, 3
        %vm2567 = vcmp.lt.s32.totalorder %v2545, 4
        %v2568 = vsel %vm2564, %v2548, %v2551
        %v2569 = vsel %vm2567, %v2557, 2102212464
        %v2570 = vsel %vm2566, %v2554, %v2569
        %v2571 = vsel %vm2565, %v2568, %v2570
        %v2572 = vsel %vm2564, %v2551, %v2554
        %v2573 = vsel %vm2567, %v2560, 920167782
        %v2574 = vsel %vm2566, %v2557, %v2573
        %v2575 = vsel %vm2565, %v2572, %v2574
        %v2576 = vsel %vm2564, %v2554, %v2557
        %v2577 = vsel %vm2567, %v2563, 1326507024
        %v2578 = vsel %vm2566, %v2560, %v2577
        %v2579 = vsel %vm2565, %v2576, %v2578
        %v2580 = vshll.u32 %v2540, 8
        %v2581 = vmul.u32.u64.compose %v2580, %v2579
        %v2582 = vextract.low.u32 %v2581
        %v2583 = vextract.high.u32 %v2581
        %v2584 = vmul.u32.u64.compose %v2580, %v2575
        %v2585 = vextract.low.u32 %v2584
        %v2586 = vextract.high.u32 %v2584
        %v2587 = vmul.u32 %v2580, %v2571
        %v2588 = vadd.s32 %v2583, %v2585
        %vm2589 = vc.u32 %v2583, %v2585
        %v2590 = vadd.s32 %v2586, 1
        %v2591 = vsel %vm2589, %v2590, %v2586
        %v2592 = vadd.s32 %v2587, %v2591
        %v2593 = vadd.s32 %v2592, 536870912
        %v2594 = vshrl.u32 %v2593, 30
        %v2595 = vshll.u32 %v2594, 30
        %v2596 = vsub.s32 %v2592, %v2595
        %vm2597 = vcmp.lt.s32.totalorder %v2596, 0
        %v2598 = vsub.s32 0, %v2596
        %v2599 = vsel %vm2597, %v2598, %v2596
        %v2600 = vclz %v2599
        %v2601 = vsub.s32 %v2600, 2
        %vm2602 = vcmp.gt.s32.totalorder 0, %v2601
        %v2603 = vsel %vm2602, 0, %v2601
        %v2604 = vsub.s32 32, %v2603
        %v2605 = vshll.u32 %v2596, %v2603
        %v2606 = vshrl.u32 %v2588, %v2604
        %v2607 = vor.u32 %v2605, %v2606
        %v2608 = vsub.s32 4294967266, %v2603
        %v2609 = vadd.s32 %v2608, 127
        %v2610 = vshll.u32 %v2609, 23
        %v2611 = vor.u32 4788187, %v2610
        %v2612 = vand.u32 2147483647, %v2611
        %v2614 = vcvt.s32.f32 %v2607
        %v2615 = vmul.f32 %v2614, %v2612
        %v2616 = vxor.u32 %v2615, 2147483648
        %v2617 = vsel %vm2534, %v2616, %v2615
        %v2618 = vsub.s32 4, %v2594
        %v2619 = vsel %vm2534, %v2618, %v2594
        %v2620 = vsel %vm2533, %v1573, %v2617
        %v2621 = vsel %vm2533, 0, %v2619
        %v2622 = vcosq.f32.pop %v2620
        %v2623 = vsinq.f32.pop %v2620
        %vm2624 = vweird.f32 %v1573
        %v2625 = vadd.s32 %v2621, 3
        %v2626 = vand.u32 %v2625, 3
        %vm2627 = vcmp.lt.s32.totalorder %v2626, 2
        %vm2628 = vcmp.eq.s32.totalorder %v2626, 0
        %v2629 = vxor.u32 %v2623, 2147483648
        %v2630 = vsel %vm2628, %v2622, %v2629
        %vm2631 = vcmp.eq.s32.totalorder %v2626, 2
        %v2632 = vxor.u32 %v2622, 2147483648
        %v2633 = vsel %vm2631, %v2632, %v2623
        %v2634 = vsel %vm2627, %v2630, %v2633
        %v2635 = vsel %vm2624, nan, %v2634
        %v2636 = vand.u32 2147483647, %v1574
        %vm2637 = vcmp.le.f32.partialorder %v2636, 0.7853982
        %vm2638 = vcmp.lt.s32.totalorder %v1574, 0
        %v2639 = vand.u32 %v1574, 2139095040
        %v2640 = vshrl.u32 %v2639, 23
        %v2641 = vsub.s32 %v2640, 127
        %v2642 = vand.u32 2147483647, %v1574
        %v2643 = vand.u32 %v2642, 8388607
        %v2644 = vor.u32 %v2643, 8388608
        %v2645 = vsub.s32 0, %v2644
        %v2646 = vadd.s32 %v2641, 1
        %vm2647 = vcmp.gt.s32.totalorder %v2646, 0
        %v2648 = vsel %vm2647, %v2646, 0
        %v2649 = vshrl.u32 %v2648, 5
        %v2650 = vand.u32 %v2648, 31
        %v2651 = vsub.s32 32, %v2650
        %v2652 = vshrl.u32 683565275, %v2651
        %v2653 = vshll.u32 683565275, %v2650
        %v2654 = vshrl.u32 2475754826, %v2651
        %v2655 = vor.u32 %v2653, %v2654
        %v2656 = vshll.u32 2475754826, %v2650
        %v2657 = vshrl.u32 2131351028, %v2651
        %v2658 = vor.u32 %v2656, %v2657
        %v2659 = vshll.u32 2131351028, %v2650
        %v2660 = vshrl.u32 2102212464, %v2651
        %v2661 = vor.u32 %v2659, %v2660
        %v2662 = vshll.u32 2102212464, %v2650
        %v2663 = vshrl.u32 920167782, %v2651
        %v2664 = vor.u32 %v2662, %v2663
        %v2665 = vshll.u32 920167782, %v2650
        %v2666 = vshrl.u32 1326507024, %v2651
        %v2667 = vor.u32 %v2665, %v2666
        %vm2668 = vcmp.lt.s32.totalorder %v2649, 1
        %vm2669 = vcmp.lt.s32.totalorder %v2649, 2
        %vm2670 = vcmp.lt.s32.totalorder %v2649, 3
        %vm2671 = vcmp.lt.s32.totalorder %v2649, 4
        %v2672 = vsel %vm2668, %v2652, %v2655
        %v2673 = vsel %vm2671, %v2661, 2102212464
        %v2674 = vsel %vm2670, %v2658, %v2673
        %v2675 = vsel %vm2669, %v2672, %v2674
        %v2676 = vsel %vm2668, %v2655, %v2658
        %v2677 = vsel %vm2671, %v2664, 920167782
        %v2678 = vsel %vm2670, %v2661, %v2677
        %v2679 = vsel %vm2669, %v2676, %v2678
        %v2680 = vsel %vm2668, %v2658, %v2661
        %v2681 = vsel %vm2671, %v2667, 1326507024
        %v2682 = vsel %vm2670, %v2664, %v2681
        %v2683 = vsel %vm2669, %v2680, %v2682
        %v2684 = vshll.u32 %v2644, 8
        %v2685 = vmul.u32.u64.compose %v2684, %v2683
        %v2686 = vextract.low.u32 %v2685
        %v2687 = vextract.high.u32 %v2685
        %v2688 = vmul.u32.u64.compose %v2684, %v2679
        %v2689 = vextract.low.u32 %v2688
        %v2690 = vextract.high.u32 %v2688
        %v2691 = vmul.u32 %v2684, %v2675
        %v2692 = vadd.s32 %v2687, %v2689
        %vm2693 = vc.u32 %v2687, %v2689
        %v2694 = vadd.s32 %v2690, 1
        %v2695 = vsel %vm2693, %v2694, %v2690
        %v2696 = vadd.s32 %v2691, %v2695
        %v2697 = vadd.s32 %v2696, 536870912
        %v2698 = vshrl.u32 %v2697, 30
        %v2699 = vshll.u32 %v2698, 30
        %v2700 = vsub.s32 %v2696, %v2699
        %vm2701 = vcmp.lt.s32.totalorder %v2700, 0
        %v2702 = vsub.s32 0, %v2700
        %v2703 = vsel %vm2701, %v2702, %v2700
        %v2704 = vclz %v2703
        %v2705 = vsub.s32 %v2704, 2
        %vm2706 = vcmp.gt.s32.totalorder 0, %v2705
        %v2707 = vsel %vm2706, 0, %v2705
        %v2708 = vsub.s32 32, %v2707
        %v2709 = vshll.u32 %v2700, %v2707
        %v2710 = vshrl.u32 %v2692, %v2708
        %v2711 = vor.u32 %v2709, %v2710
        %v2712 = vsub.s32 4294967266, %v2707
        %v2713 = vadd.s32 %v2712, 127
        %v2714 = vshll.u32 %v2713, 23
        %v2715 = vor.u32 4788187, %v2714
        %v2716 = vand.u32 2147483647, %v2715
        %v2718 = vcvt.s32.f32 %v2711
        %v2719 = vmul.f32 %v2718, %v2716
        %v2720 = vxor.u32 %v2719, 2147483648
        %v2721 = vsel %vm2638, %v2720, %v2719
        %v2722 = vsub.s32 4, %v2698
        %v2723 = vsel %vm2638, %v2722, %v2698
        %v2724 = vsel %vm2637, %v1574, %v2721
        %v2725 = vsel %vm2637, 0, %v2723
        %v2726 = vcosq.f32.pop %v2724
        %v2727 = vsinq.f32.pop %v2724
        %vm2728 = vweird.f32 %v1574
        %v2729 = vadd.s32 %v2725, 3
        %v2730 = vand.u32 %v2729, 3
        %vm2731 = vcmp.lt.s32.totalorder %v2730, 2
        %vm2732 = vcmp.eq.s32.totalorder %v2730, 0
        %v2733 = vxor.u32 %v2727, 2147483648
        %v2734 = vsel %vm2732, %v2726, %v2733
        %vm2735 = vcmp.eq.s32.totalorder %v2730, 2
        %v2736 = vxor.u32 %v2726, 2147483648
        %v2737 = vsel %vm2735, %v2736, %v2727
        %v2738 = vsel %vm2731, %v2734, %v2737
        %v2739 = vsel %vm2728, nan, %v2738
        %v2740 = vand.u32 2147483647, %v1575
        %vm2741 = vcmp.le.f32.partialorder %v2740, 0.7853982
        %vm2742 = vcmp.lt.s32.totalorder %v1575, 0
        %v2743 = vand.u32 %v1575, 2139095040
        %v2744 = vshrl.u32 %v2743, 23
        %v2745 = vsub.s32 %v2744, 127
        %v2746 = vand.u32 2147483647, %v1575
        %v2747 = vand.u32 %v2746, 8388607
        %v2748 = vor.u32 %v2747, 8388608
        %v2749 = vsub.s32 0, %v2748
        %v2750 = vadd.s32 %v2745, 1
        %vm2751 = vcmp.gt.s32.totalorder %v2750, 0
        %v2752 = vsel %vm2751, %v2750, 0
        %v2753 = vshrl.u32 %v2752, 5
        %v2754 = vand.u32 %v2752, 31
        %v2755 = vsub.s32 32, %v2754
        %v2756 = vshrl.u32 683565275, %v2755
        %v2757 = vshll.u32 683565275, %v2754
        %v2758 = vshrl.u32 2475754826, %v2755
        %v2759 = vor.u32 %v2757, %v2758
        %v2760 = vshll.u32 2475754826, %v2754
        %v2761 = vshrl.u32 2131351028, %v2755
        %v2762 = vor.u32 %v2760, %v2761
        %v2763 = vshll.u32 2131351028, %v2754
        %v2764 = vshrl.u32 2102212464, %v2755
        %v2765 = vor.u32 %v2763, %v2764
        %v2766 = vshll.u32 2102212464, %v2754
        %v2767 = vshrl.u32 920167782, %v2755
        %v2768 = vor.u32 %v2766, %v2767
        %v2769 = vshll.u32 920167782, %v2754
        %v2770 = vshrl.u32 1326507024, %v2755
        %v2771 = vor.u32 %v2769, %v2770
        %vm2772 = vcmp.lt.s32.totalorder %v2753, 1
        %vm2773 = vcmp.lt.s32.totalorder %v2753, 2
        %vm2774 = vcmp.lt.s32.totalorder %v2753, 3
        %vm2775 = vcmp.lt.s32.totalorder %v2753, 4
        %v2776 = vsel %vm2772, %v2756, %v2759
        %v2777 = vsel %vm2775, %v2765, 2102212464
        %v2778 = vsel %vm2774, %v2762, %v2777
        %v2779 = vsel %vm2773, %v2776, %v2778
        %v2780 = vsel %vm2772, %v2759, %v2762
        %v2781 = vsel %vm2775, %v2768, 920167782
        %v2782 = vsel %vm2774, %v2765, %v2781
        %v2783 = vsel %vm2773, %v2780, %v2782
        %v2784 = vsel %vm2772, %v2762, %v2765
        %v2785 = vsel %vm2775, %v2771, 1326507024
        %v2786 = vsel %vm2774, %v2768, %v2785
        %v2787 = vsel %vm2773, %v2784, %v2786
        %v2788 = vshll.u32 %v2748, 8
        %v2789 = vmul.u32.u64.compose %v2788, %v2787
        %v2790 = vextract.low.u32 %v2789
        %v2791 = vextract.high.u32 %v2789
        %v2792 = vmul.u32.u64.compose %v2788, %v2783
        %v2793 = vextract.low.u32 %v2792
        %v2794 = vextract.high.u32 %v2792
        %v2795 = vmul.u32 %v2788, %v2779
        %v2796 = vadd.s32 %v2791, %v2793
        %vm2797 = vc.u32 %v2791, %v2793
        %v2798 = vadd.s32 %v2794, 1
        %v2799 = vsel %vm2797, %v2798, %v2794
        %v2800 = vadd.s32 %v2795, %v2799
        %v2801 = vadd.s32 %v2800, 536870912
        %v2802 = vshrl.u32 %v2801, 30
        %v2803 = vshll.u32 %v2802, 30
        %v2804 = vsub.s32 %v2800, %v2803
        %vm2805 = vcmp.lt.s32.totalorder %v2804, 0
        %v2806 = vsub.s32 0, %v2804
        %v2807 = vsel %vm2805, %v2806, %v2804
        %v2808 = vclz %v2807
        %v2809 = vsub.s32 %v2808, 2
        %vm2810 = vcmp.gt.s32.totalorder 0, %v2809
        %v2811 = vsel %vm2810, 0, %v2809
        %v2812 = vsub.s32 32, %v2811
        %v2813 = vshll.u32 %v2804, %v2811
        %v2814 = vshrl.u32 %v2796, %v2812
        %v2815 = vor.u32 %v2813, %v2814
        %v2816 = vsub.s32 4294967266, %v2811
        %v2817 = vadd.s32 %v2816, 127
        %v2818 = vshll.u32 %v2817, 23
        %v2819 = vor.u32 4788187, %v2818
        %v2820 = vand.u32 2147483647, %v2819
        %v2822 = vcvt.s32.f32 %v2815
        %v2823 = vmul.f32 %v2822, %v2820
        %v2824 = vxor.u32 %v2823, 2147483648
        %v2825 = vsel %vm2742, %v2824, %v2823
        %v2826 = vsub.s32 4, %v2802
        %v2827 = vsel %vm2742, %v2826, %v2802
        %v2828 = vsel %vm2741, %v1575, %v2825
        %v2829 = vsel %vm2741, 0, %v2827
        %v2830 = vcosq.f32.pop %v2828
        %v2831 = vsinq.f32.pop %v2828
        %vm2832 = vweird.f32 %v1575
        %v2833 = vadd.s32 %v2829, 3
        %v2834 = vand.u32 %v2833, 3
        %vm2835 = vcmp.lt.s32.totalorder %v2834, 2
        %vm2836 = vcmp.eq.s32.totalorder %v2834, 0
        %v2837 = vxor.u32 %v2831, 2147483648
        %v2838 = vsel %vm2836, %v2830, %v2837
        %vm2839 = vcmp.eq.s32.totalorder %v2834, 2
        %v2840 = vxor.u32 %v2830, 2147483648
        %v2841 = vsel %vm2839, %v2840, %v2831
        %v2842 = vsel %vm2835, %v2838, %v2841
        %v2843 = vsel %vm2832, nan, %v2842
        %v2844 = vand.u32 2147483647, %v1576
        %vm2845 = vcmp.le.f32.partialorder %v2844, 0.7853982
        %vm2846 = vcmp.lt.s32.totalorder %v1576, 0
        %v2847 = vand.u32 %v1576, 2139095040
        %v2848 = vshrl.u32 %v2847, 23
        %v2849 = vsub.s32 %v2848, 127
        %v2850 = vand.u32 2147483647, %v1576
        %v2851 = vand.u32 %v2850, 8388607
        %v2852 = vor.u32 %v2851, 8388608
        %v2853 = vsub.s32 0, %v2852
        %v2854 = vadd.s32 %v2849, 1
        %vm2855 = vcmp.gt.s32.totalorder %v2854, 0
        %v2856 = vsel %vm2855, %v2854, 0
        %v2857 = vshrl.u32 %v2856, 5
        %v2858 = vand.u32 %v2856, 31
        %v2859 = vsub.s32 32, %v2858
        %v2860 = vshrl.u32 683565275, %v2859
        %v2861 = vshll.u32 683565275, %v2858
        %v2862 = vshrl.u32 2475754826, %v2859
        %v2863 = vor.u32 %v2861, %v2862
        %v2864 = vshll.u32 2475754826, %v2858
        %v2865 = vshrl.u32 2131351028, %v2859
        %v2866 = vor.u32 %v2864, %v2865
        %v2867 = vshll.u32 2131351028, %v2858
        %v2868 = vshrl.u32 2102212464, %v2859
        %v2869 = vor.u32 %v2867, %v2868
        %v2870 = vshll.u32 2102212464, %v2858
        %v2871 = vshrl.u32 920167782, %v2859
        %v2872 = vor.u32 %v2870, %v2871
        %v2873 = vshll.u32 920167782, %v2858
        %v2874 = vshrl.u32 1326507024, %v2859
        %v2875 = vor.u32 %v2873, %v2874
        %vm2876 = vcmp.lt.s32.totalorder %v2857, 1
        %vm2877 = vcmp.lt.s32.totalorder %v2857, 2
        %vm2878 = vcmp.lt.s32.totalorder %v2857, 3
        %vm2879 = vcmp.lt.s32.totalorder %v2857, 4
        %v2880 = vsel %vm2876, %v2860, %v2863
        %v2881 = vsel %vm2879, %v2869, 2102212464
        %v2882 = vsel %vm2878, %v2866, %v2881
        %v2883 = vsel %vm2877, %v2880, %v2882
        %v2884 = vsel %vm2876, %v2863, %v2866
        %v2885 = vsel %vm2879, %v2872, 920167782
        %v2886 = vsel %vm2878, %v2869, %v2885
        %v2887 = vsel %vm2877, %v2884, %v2886
        %v2888 = vsel %vm2876, %v2866, %v2869
        %v2889 = vsel %vm2879, %v2875, 1326507024
        %v2890 = vsel %vm2878, %v2872, %v2889
        %v2891 = vsel %vm2877, %v2888, %v2890
        %v2892 = vshll.u32 %v2852, 8
        %v2893 = vmul.u32.u64.compose %v2892, %v2891
        %v2894 = vextract.low.u32 %v2893
        %v2895 = vextract.high.u32 %v2893
        %v2896 = vmul.u32.u64.compose %v2892, %v2887
        %v2897 = vextract.low.u32 %v2896
        %v2898 = vextract.high.u32 %v2896
        %v2899 = vmul.u32 %v2892, %v2883
        %v2900 = vadd.s32 %v2895, %v2897
        %vm2901 = vc.u32 %v2895, %v2897
        %v2902 = vadd.s32 %v2898, 1
        %v2903 = vsel %vm2901, %v2902, %v2898
        %v2904 = vadd.s32 %v2899, %v2903
        %v2905 = vadd.s32 %v2904, 536870912
        %v2906 = vshrl.u32 %v2905, 30
        %v2907 = vshll.u32 %v2906, 30
        %v2908 = vsub.s32 %v2904, %v2907
        %vm2909 = vcmp.lt.s32.totalorder %v2908, 0
        %v2910 = vsub.s32 0, %v2908
        %v2911 = vsel %vm2909, %v2910, %v2908
        %v2912 = vclz %v2911
        %v2913 = vsub.s32 %v2912, 2
        %vm2914 = vcmp.gt.s32.totalorder 0, %v2913
        %v2915 = vsel %vm2914, 0, %v2913
        %v2916 = vsub.s32 32, %v2915
        %v2917 = vshll.u32 %v2908, %v2915
        %v2918 = vshrl.u32 %v2900, %v2916
        %v2919 = vor.u32 %v2917, %v2918
        %v2920 = vsub.s32 4294967266, %v2915
        %v2921 = vadd.s32 %v2920, 127
        %v2922 = vshll.u32 %v2921, 23
        %v2923 = vor.u32 4788187, %v2922
        %v2924 = vand.u32 2147483647, %v2923
        %v2926 = vcvt.s32.f32 %v2919
        %v2927 = vmul.f32 %v2926, %v2924
        %v2928 = vxor.u32 %v2927, 2147483648
        %v2929 = vsel %vm2846, %v2928, %v2927
        %v2930 = vsub.s32 4, %v2906
        %v2931 = vsel %vm2846, %v2930, %v2906
        %v2932 = vsel %vm2845, %v1576, %v2929
        %v2933 = vsel %vm2845, 0, %v2931
        %v2934 = vcosq.f32.pop %v2932
        %v2935 = vsinq.f32.pop %v2932
        %vm2936 = vweird.f32 %v1576
        %v2937 = vadd.s32 %v2933, 3
        %v2938 = vand.u32 %v2937, 3
        %vm2939 = vcmp.lt.s32.totalorder %v2938, 2
        %vm2940 = vcmp.eq.s32.totalorder %v2938, 0
        %v2941 = vxor.u32 %v2935, 2147483648
        %v2942 = vsel %vm2940, %v2934, %v2941
        %vm2943 = vcmp.eq.s32.totalorder %v2938, 2
        %v2944 = vxor.u32 %v2934, 2147483648
        %v2945 = vsel %vm2943, %v2944, %v2935
        %v2946 = vsel %vm2939, %v2942, %v2945
        %v2947 = vsel %vm2936, nan, %v2946
        %v2948 = vand.u32 2147483647, %v1577
        %vm2949 = vcmp.le.f32.partialorder %v2948, 0.7853982
        %vm2950 = vcmp.lt.s32.totalorder %v1577, 0
        %v2951 = vand.u32 %v1577, 2139095040
        %v2952 = vshrl.u32 %v2951, 23
        %v2953 = vsub.s32 %v2952, 127
        %v2954 = vand.u32 2147483647, %v1577
        %v2955 = vand.u32 %v2954, 8388607
        %v2956 = vor.u32 %v2955, 8388608
        %v2957 = vsub.s32 0, %v2956
        %v2958 = vadd.s32 %v2953, 1
        %vm2959 = vcmp.gt.s32.totalorder %v2958, 0
        %v2960 = vsel %vm2959, %v2958, 0
        %v2961 = vshrl.u32 %v2960, 5
        %v2962 = vand.u32 %v2960, 31
        %v2963 = vsub.s32 32, %v2962
        %v2964 = vshrl.u32 683565275, %v2963
        %v2965 = vshll.u32 683565275, %v2962
        %v2966 = vshrl.u32 2475754826, %v2963
        %v2967 = vor.u32 %v2965, %v2966
        %v2968 = vshll.u32 2475754826, %v2962
        %v2969 = vshrl.u32 2131351028, %v2963
        %v2970 = vor.u32 %v2968, %v2969
        %v2971 = vshll.u32 2131351028, %v2962
        %v2972 = vshrl.u32 2102212464, %v2963
        %v2973 = vor.u32 %v2971, %v2972
        %v2974 = vshll.u32 2102212464, %v2962
        %v2975 = vshrl.u32 920167782, %v2963
        %v2976 = vor.u32 %v2974, %v2975
        %v2977 = vshll.u32 920167782, %v2962
        %v2978 = vshrl.u32 1326507024, %v2963
        %v2979 = vor.u32 %v2977, %v2978
        %vm2980 = vcmp.lt.s32.totalorder %v2961, 1
        %vm2981 = vcmp.lt.s32.totalorder %v2961, 2
        %vm2982 = vcmp.lt.s32.totalorder %v2961, 3
        %vm2983 = vcmp.lt.s32.totalorder %v2961, 4
        %v2984 = vsel %vm2980, %v2964, %v2967
        %v2985 = vsel %vm2983, %v2973, 2102212464
        %v2986 = vsel %vm2982, %v2970, %v2985
        %v2987 = vsel %vm2981, %v2984, %v2986
        %v2988 = vsel %vm2980, %v2967, %v2970
        %v2989 = vsel %vm2983, %v2976, 920167782
        %v2990 = vsel %vm2982, %v2973, %v2989
        %v2991 = vsel %vm2981, %v2988, %v2990
        %v2992 = vsel %vm2980, %v2970, %v2973
        %v2993 = vsel %vm2983, %v2979, 1326507024
        %v2994 = vsel %vm2982, %v2976, %v2993
        %v2995 = vsel %vm2981, %v2992, %v2994
        %v2996 = vshll.u32 %v2956, 8
        %v2997 = vmul.u32.u64.compose %v2996, %v2995
        %v2998 = vextract.low.u32 %v2997
        %v2999 = vextract.high.u32 %v2997
        %v3000 = vmul.u32.u64.compose %v2996, %v2991
        %v3001 = vextract.low.u32 %v3000
        %v3002 = vextract.high.u32 %v3000
        %v3003 = vmul.u32 %v2996, %v2987
        %v3004 = vadd.s32 %v2999, %v3001
        %vm3005 = vc.u32 %v2999, %v3001
        %v3006 = vadd.s32 %v3002, 1
        %v3007 = vsel %vm3005, %v3006, %v3002
        %v3008 = vadd.s32 %v3003, %v3007
        %v3009 = vadd.s32 %v3008, 536870912
        %v3010 = vshrl.u32 %v3009, 30
        %v3011 = vshll.u32 %v3010, 30
        %v3012 = vsub.s32 %v3008, %v3011
        %vm3013 = vcmp.lt.s32.totalorder %v3012, 0
        %v3014 = vsub.s32 0, %v3012
        %v3015 = vsel %vm3013, %v3014, %v3012
        %v3016 = vclz %v3015
        %v3017 = vsub.s32 %v3016, 2
        %vm3018 = vcmp.gt.s32.totalorder 0, %v3017
        %v3019 = vsel %vm3018, 0, %v3017
        %v3020 = vsub.s32 32, %v3019
        %v3021 = vshll.u32 %v3012, %v3019
        %v3022 = vshrl.u32 %v3004, %v3020
        %v3023 = vor.u32 %v3021, %v3022
        %v3024 = vsub.s32 4294967266, %v3019
        %v3025 = vadd.s32 %v3024, 127
        %v3026 = vshll.u32 %v3025, 23
        %v3027 = vor.u32 4788187, %v3026
        %v3028 = vand.u32 2147483647, %v3027
        %v3030 = vcvt.s32.f32 %v3023
        %v3031 = vmul.f32 %v3030, %v3028
        %v3032 = vxor.u32 %v3031, 2147483648
        %v3033 = vsel %vm2950, %v3032, %v3031
        %v3034 = vsub.s32 4, %v3010
        %v3035 = vsel %vm2950, %v3034, %v3010
        %v3036 = vsel %vm2949, %v1577, %v3033
        %v3037 = vsel %vm2949, 0, %v3035
        %v3038 = vcosq.f32.pop %v3036
        %v3039 = vsinq.f32.pop %v3036
        %vm3040 = vweird.f32 %v1577
        %v3041 = vadd.s32 %v3037, 3
        %v3042 = vand.u32 %v3041, 3
        %vm3043 = vcmp.lt.s32.totalorder %v3042, 2
        %vm3044 = vcmp.eq.s32.totalorder %v3042, 0
        %v3045 = vxor.u32 %v3039, 2147483648
        %v3046 = vsel %vm3044, %v3038, %v3045
        %vm3047 = vcmp.eq.s32.totalorder %v3042, 2
        %v3048 = vxor.u32 %v3038, 2147483648
        %v3049 = vsel %vm3047, %v3048, %v3039
        %v3050 = vsel %vm3043, %v3046, %v3049
        %v3051 = vsel %vm3040, nan, %v3050
        %v3052 = vand.u32 2147483647, %v1578
        %vm3053 = vcmp.le.f32.partialorder %v3052, 0.7853982
        %vm3054 = vcmp.lt.s32.totalorder %v1578, 0
        %v3055 = vand.u32 %v1578, 2139095040
        %v3056 = vshrl.u32 %v3055, 23
        %v3057 = vsub.s32 %v3056, 127
        %v3058 = vand.u32 2147483647, %v1578
        %v3059 = vand.u32 %v3058, 8388607
        %v3060 = vor.u32 %v3059, 8388608
        %v3061 = vsub.s32 0, %v3060
        %v3062 = vadd.s32 %v3057, 1
        %vm3063 = vcmp.gt.s32.totalorder %v3062, 0
        %v3064 = vsel %vm3063, %v3062, 0
        %v3065 = vshrl.u32 %v3064, 5
        %v3066 = vand.u32 %v3064, 31
        %v3067 = vsub.s32 32, %v3066
        %v3068 = vshrl.u32 683565275, %v3067
        %v3069 = vshll.u32 683565275, %v3066
        %v3070 = vshrl.u32 2475754826, %v3067
        %v3071 = vor.u32 %v3069, %v3070
        %v3072 = vshll.u32 2475754826, %v3066
        %v3073 = vshrl.u32 2131351028, %v3067
        %v3074 = vor.u32 %v3072, %v3073
        %v3075 = vshll.u32 2131351028, %v3066
        %v3076 = vshrl.u32 2102212464, %v3067
        %v3077 = vor.u32 %v3075, %v3076
        %v3078 = vshll.u32 2102212464, %v3066
        %v3079 = vshrl.u32 920167782, %v3067
        %v3080 = vor.u32 %v3078, %v3079
        %v3081 = vshll.u32 920167782, %v3066
        %v3082 = vshrl.u32 1326507024, %v3067
        %v3083 = vor.u32 %v3081, %v3082
        %vm3084 = vcmp.lt.s32.totalorder %v3065, 1
        %vm3085 = vcmp.lt.s32.totalorder %v3065, 2
        %vm3086 = vcmp.lt.s32.totalorder %v3065, 3
        %vm3087 = vcmp.lt.s32.totalorder %v3065, 4
        %v3088 = vsel %vm3084, %v3068, %v3071
        %v3089 = vsel %vm3087, %v3077, 2102212464
        %v3090 = vsel %vm3086, %v3074, %v3089
        %v3091 = vsel %vm3085, %v3088, %v3090
        %v3092 = vsel %vm3084, %v3071, %v3074
        %v3093 = vsel %vm3087, %v3080, 920167782
        %v3094 = vsel %vm3086, %v3077, %v3093
        %v3095 = vsel %vm3085, %v3092, %v3094
        %v3096 = vsel %vm3084, %v3074, %v3077
        %v3097 = vsel %vm3087, %v3083, 1326507024
        %v3098 = vsel %vm3086, %v3080, %v3097
        %v3099 = vsel %vm3085, %v3096, %v3098
        %v3100 = vshll.u32 %v3060, 8
        %v3101 = vmul.u32.u64.compose %v3100, %v3099
        %v3102 = vextract.low.u32 %v3101
        %v3103 = vextract.high.u32 %v3101
        %v3104 = vmul.u32.u64.compose %v3100, %v3095
        %v3105 = vextract.low.u32 %v3104
        %v3106 = vextract.high.u32 %v3104
        %v3107 = vmul.u32 %v3100, %v3091
        %v3108 = vadd.s32 %v3103, %v3105
        %vm3109 = vc.u32 %v3103, %v3105
        %v3110 = vadd.s32 %v3106, 1
        %v3111 = vsel %vm3109, %v3110, %v3106
        %v3112 = vadd.s32 %v3107, %v3111
        %v3113 = vadd.s32 %v3112, 536870912
        %v3114 = vshrl.u32 %v3113, 30
        %v3115 = vshll.u32 %v3114, 30
        %v3116 = vsub.s32 %v3112, %v3115
        %vm3117 = vcmp.lt.s32.totalorder %v3116, 0
        %v3118 = vsub.s32 0, %v3116
        %v3119 = vsel %vm3117, %v3118, %v3116
        %v3120 = vclz %v3119
        %v3121 = vsub.s32 %v3120, 2
        %vm3122 = vcmp.gt.s32.totalorder 0, %v3121
        %v3123 = vsel %vm3122, 0, %v3121
        %v3124 = vsub.s32 32, %v3123
        %v3125 = vshll.u32 %v3116, %v3123
        %v3126 = vshrl.u32 %v3108, %v3124
        %v3127 = vor.u32 %v3125, %v3126
        %v3128 = vsub.s32 4294967266, %v3123
        %v3129 = vadd.s32 %v3128, 127
        %v3130 = vshll.u32 %v3129, 23
        %v3131 = vor.u32 4788187, %v3130
        %v3132 = vand.u32 2147483647, %v3131
        %v3134 = vcvt.s32.f32 %v3127
        %v3135 = vmul.f32 %v3134, %v3132
        %v3136 = vxor.u32 %v3135, 2147483648
        %v3137 = vsel %vm3054, %v3136, %v3135
        %v3138 = vsub.s32 4, %v3114
        %v3139 = vsel %vm3054, %v3138, %v3114
        %v3140 = vsel %vm3053, %v1578, %v3137
        %v3141 = vsel %vm3053, 0, %v3139
        %v3142 = vcosq.f32.pop %v3140
        %v3143 = vsinq.f32.pop %v3140
        %vm3144 = vweird.f32 %v1578
        %v3145 = vadd.s32 %v3141, 3
        %v3146 = vand.u32 %v3145, 3
        %vm3147 = vcmp.lt.s32.totalorder %v3146, 2
        %vm3148 = vcmp.eq.s32.totalorder %v3146, 0
        %v3149 = vxor.u32 %v3143, 2147483648
        %v3150 = vsel %vm3148, %v3142, %v3149
        %vm3151 = vcmp.eq.s32.totalorder %v3146, 2
        %v3152 = vxor.u32 %v3142, 2147483648
        %v3153 = vsel %vm3151, %v3152, %v3143
        %v3154 = vsel %vm3147, %v3150, %v3153
        %v3155 = vsel %vm3144, nan, %v3154
        %v3156 = vand.u32 2147483647, %v1579
        %vm3157 = vcmp.le.f32.partialorder %v3156, 0.7853982
        %vm3158 = vcmp.lt.s32.totalorder %v1579, 0
        %v3159 = vand.u32 %v1579, 2139095040
        %v3160 = vshrl.u32 %v3159, 23
        %v3161 = vsub.s32 %v3160, 127
        %v3162 = vand.u32 2147483647, %v1579
        %v3163 = vand.u32 %v3162, 8388607
        %v3164 = vor.u32 %v3163, 8388608
        %v3165 = vsub.s32 0, %v3164
        %v3166 = vadd.s32 %v3161, 1
        %vm3167 = vcmp.gt.s32.totalorder %v3166, 0
        %v3168 = vsel %vm3167, %v3166, 0
        %v3169 = vshrl.u32 %v3168, 5
        %v3170 = vand.u32 %v3168, 31
        %v3171 = vsub.s32 32, %v3170
        %v3172 = vshrl.u32 683565275, %v3171
        %v3173 = vshll.u32 683565275, %v3170
        %v3174 = vshrl.u32 2475754826, %v3171
        %v3175 = vor.u32 %v3173, %v3174
        %v3176 = vshll.u32 2475754826, %v3170
        %v3177 = vshrl.u32 2131351028, %v3171
        %v3178 = vor.u32 %v3176, %v3177
        %v3179 = vshll.u32 2131351028, %v3170
        %v3180 = vshrl.u32 2102212464, %v3171
        %v3181 = vor.u32 %v3179, %v3180
        %v3182 = vshll.u32 2102212464, %v3170
        %v3183 = vshrl.u32 920167782, %v3171
        %v3184 = vor.u32 %v3182, %v3183
        %v3185 = vshll.u32 920167782, %v3170
        %v3186 = vshrl.u32 1326507024, %v3171
        %v3187 = vor.u32 %v3185, %v3186
        %vm3188 = vcmp.lt.s32.totalorder %v3169, 1
        %vm3189 = vcmp.lt.s32.totalorder %v3169, 2
        %vm3190 = vcmp.lt.s32.totalorder %v3169, 3
        %vm3191 = vcmp.lt.s32.totalorder %v3169, 4
        %v3192 = vsel %vm3188, %v3172, %v3175
        %v3193 = vsel %vm3191, %v3181, 2102212464
        %v3194 = vsel %vm3190, %v3178, %v3193
        %v3195 = vsel %vm3189, %v3192, %v3194
        %v3196 = vsel %vm3188, %v3175, %v3178
        %v3197 = vsel %vm3191, %v3184, 920167782
        %v3198 = vsel %vm3190, %v3181, %v3197
        %v3199 = vsel %vm3189, %v3196, %v3198
        %v3200 = vsel %vm3188, %v3178, %v3181
        %v3201 = vsel %vm3191, %v3187, 1326507024
        %v3202 = vsel %vm3190, %v3184, %v3201
        %v3203 = vsel %vm3189, %v3200, %v3202
        %v3204 = vshll.u32 %v3164, 8
        %v3205 = vmul.u32.u64.compose %v3204, %v3203
        %v3206 = vextract.low.u32 %v3205
        %v3207 = vextract.high.u32 %v3205
        %v3208 = vmul.u32.u64.compose %v3204, %v3199
        %v3209 = vextract.low.u32 %v3208
        %v3210 = vextract.high.u32 %v3208
        %v3211 = vmul.u32 %v3204, %v3195
        %v3212 = vadd.s32 %v3207, %v3209
        %vm3213 = vc.u32 %v3207, %v3209
        %v3214 = vadd.s32 %v3210, 1
        %v3215 = vsel %vm3213, %v3214, %v3210
        %v3216 = vadd.s32 %v3211, %v3215
        %v3217 = vadd.s32 %v3216, 536870912
        %v3218 = vshrl.u32 %v3217, 30
        %v3219 = vshll.u32 %v3218, 30
        %v3220 = vsub.s32 %v3216, %v3219
        %vm3221 = vcmp.lt.s32.totalorder %v3220, 0
        %v3222 = vsub.s32 0, %v3220
        %v3223 = vsel %vm3221, %v3222, %v3220
        %v3224 = vclz %v3223
        %v3225 = vsub.s32 %v3224, 2
        %vm3226 = vcmp.gt.s32.totalorder 0, %v3225
        %v3227 = vsel %vm3226, 0, %v3225
        %v3228 = vsub.s32 32, %v3227
        %v3229 = vshll.u32 %v3220, %v3227
        %v3230 = vshrl.u32 %v3212, %v3228
        %v3231 = vor.u32 %v3229, %v3230
        %v3232 = vsub.s32 4294967266, %v3227
        %v3233 = vadd.s32 %v3232, 127
        %v3234 = vshll.u32 %v3233, 23
        %v3235 = vor.u32 4788187, %v3234
        %v3236 = vand.u32 2147483647, %v3235
        %v3238 = vcvt.s32.f32 %v3231
        %v3239 = vmul.f32 %v3238, %v3236
        %v3240 = vxor.u32 %v3239, 2147483648
        %v3241 = vsel %vm3158, %v3240, %v3239
        %v3242 = vsub.s32 4, %v3218
        %v3243 = vsel %vm3158, %v3242, %v3218
        %v3244 = vsel %vm3157, %v1579, %v3241
        %v3245 = vsel %vm3157, 0, %v3243
        %v3246 = vcosq.f32.pop %v3244
        %v3247 = vsinq.f32.pop %v3244
        %vm3248 = vweird.f32 %v1579
        %v3249 = vadd.s32 %v3245, 3
        %v3250 = vand.u32 %v3249, 3
        %vm3251 = vcmp.lt.s32.totalorder %v3250, 2
        %vm3252 = vcmp.eq.s32.totalorder %v3250, 0
        %v3253 = vxor.u32 %v3247, 2147483648
        %v3254 = vsel %vm3252, %v3246, %v3253
        %vm3255 = vcmp.eq.s32.totalorder %v3250, 2
        %v3256 = vxor.u32 %v3246, 2147483648
        %v3257 = vsel %vm3255, %v3256, %v3247
        %v3258 = vsel %vm3251, %v3254, %v3257
        %v3259 = vsel %vm3248, nan, %v3258
        %v3260 = vand.u32 2147483647, %v1580
        %vm3261 = vcmp.le.f32.partialorder %v3260, 0.7853982
        %vm3262 = vcmp.lt.s32.totalorder %v1580, 0
        %v3263 = vand.u32 %v1580, 2139095040
        %v3264 = vshrl.u32 %v3263, 23
        %v3265 = vsub.s32 %v3264, 127
        %v3266 = vand.u32 2147483647, %v1580
        %v3267 = vand.u32 %v3266, 8388607
        %v3268 = vor.u32 %v3267, 8388608
        %v3269 = vsub.s32 0, %v3268
        %v3270 = vadd.s32 %v3265, 1
        %vm3271 = vcmp.gt.s32.totalorder %v3270, 0
        %v3272 = vsel %vm3271, %v3270, 0
        %v3273 = vshrl.u32 %v3272, 5
        %v3274 = vand.u32 %v3272, 31
        %v3275 = vsub.s32 32, %v3274
        %v3276 = vshrl.u32 683565275, %v3275
        %v3277 = vshll.u32 683565275, %v3274
        %v3278 = vshrl.u32 2475754826, %v3275
        %v3279 = vor.u32 %v3277, %v3278
        %v3280 = vshll.u32 2475754826, %v3274
        %v3281 = vshrl.u32 2131351028, %v3275
        %v3282 = vor.u32 %v3280, %v3281
        %v3283 = vshll.u32 2131351028, %v3274
        %v3284 = vshrl.u32 2102212464, %v3275
        %v3285 = vor.u32 %v3283, %v3284
        %v3286 = vshll.u32 2102212464, %v3274
        %v3287 = vshrl.u32 920167782, %v3275
        %v3288 = vor.u32 %v3286, %v3287
        %v3289 = vshll.u32 920167782, %v3274
        %v3290 = vshrl.u32 1326507024, %v3275
        %v3291 = vor.u32 %v3289, %v3290
        %vm3292 = vcmp.lt.s32.totalorder %v3273, 1
        %vm3293 = vcmp.lt.s32.totalorder %v3273, 2
        %vm3294 = vcmp.lt.s32.totalorder %v3273, 3
        %vm3295 = vcmp.lt.s32.totalorder %v3273, 4
        %v3296 = vsel %vm3292, %v3276, %v3279
        %v3297 = vsel %vm3295, %v3285, 2102212464
        %v3298 = vsel %vm3294, %v3282, %v3297
        %v3299 = vsel %vm3293, %v3296, %v3298
        %v3300 = vsel %vm3292, %v3279, %v3282
        %v3301 = vsel %vm3295, %v3288, 920167782
        %v3302 = vsel %vm3294, %v3285, %v3301
        %v3303 = vsel %vm3293, %v3300, %v3302
        %v3304 = vsel %vm3292, %v3282, %v3285
        %v3305 = vsel %vm3295, %v3291, 1326507024
        %v3306 = vsel %vm3294, %v3288, %v3305
        %v3307 = vsel %vm3293, %v3304, %v3306
        %v3308 = vshll.u32 %v3268, 8
        %v3309 = vmul.u32.u64.compose %v3308, %v3307
        %v3310 = vextract.low.u32 %v3309
        %v3311 = vextract.high.u32 %v3309
        %v3312 = vmul.u32.u64.compose %v3308, %v3303
        %v3313 = vextract.low.u32 %v3312
        %v3314 = vextract.high.u32 %v3312
        %v3315 = vmul.u32 %v3308, %v3299
        %v3316 = vadd.s32 %v3311, %v3313
        %vm3317 = vc.u32 %v3311, %v3313
        %v3318 = vadd.s32 %v3314, 1
        %v3319 = vsel %vm3317, %v3318, %v3314
        %v3320 = vadd.s32 %v3315, %v3319
        %v3321 = vadd.s32 %v3320, 536870912
        %v3322 = vshrl.u32 %v3321, 30
        %v3323 = vshll.u32 %v3322, 30
        %v3324 = vsub.s32 %v3320, %v3323
        %vm3325 = vcmp.lt.s32.totalorder %v3324, 0
        %v3326 = vsub.s32 0, %v3324
        %v3327 = vsel %vm3325, %v3326, %v3324
        %v3328 = vclz %v3327
        %v3329 = vsub.s32 %v3328, 2
        %vm3330 = vcmp.gt.s32.totalorder 0, %v3329
        %v3331 = vsel %vm3330, 0, %v3329
        %v3332 = vsub.s32 32, %v3331
        %v3333 = vshll.u32 %v3324, %v3331
        %v3334 = vshrl.u32 %v3316, %v3332
        %v3335 = vor.u32 %v3333, %v3334
        %v3336 = vsub.s32 4294967266, %v3331
        %v3337 = vadd.s32 %v3336, 127
        %v3338 = vshll.u32 %v3337, 23
        %v3339 = vor.u32 4788187, %v3338
        %v3340 = vand.u32 2147483647, %v3339
        %v3342 = vcvt.s32.f32 %v3335
        %v3343 = vmul.f32 %v3342, %v3340
        %v3344 = vxor.u32 %v3343, 2147483648
        %v3345 = vsel %vm3262, %v3344, %v3343
        %v3346 = vsub.s32 4, %v3322
        %v3347 = vsel %vm3262, %v3346, %v3322
        %v3348 = vsel %vm3261, %v1580, %v3345
        %v3349 = vsel %vm3261, 0, %v3347
        %v3350 = vcosq.f32.pop %v3348
        %v3351 = vsinq.f32.pop %v3348
        %vm3352 = vweird.f32 %v1580
        %v3353 = vadd.s32 %v3349, 3
        %v3354 = vand.u32 %v3353, 3
        %vm3355 = vcmp.lt.s32.totalorder %v3354, 2
        %vm3356 = vcmp.eq.s32.totalorder %v3354, 0
        %v3357 = vxor.u32 %v3351, 2147483648
        %v3358 = vsel %vm3356, %v3350, %v3357
        %vm3359 = vcmp.eq.s32.totalorder %v3354, 2
        %v3360 = vxor.u32 %v3350, 2147483648
        %v3361 = vsel %vm3359, %v3360, %v3351
        %v3362 = vsel %vm3355, %v3358, %v3361
        %v3363 = vsel %vm3352, nan, %v3362
        %v3364 = vand.u32 2147483647, %v1581
        %vm3365 = vcmp.le.f32.partialorder %v3364, 0.7853982
        %vm3366 = vcmp.lt.s32.totalorder %v1581, 0
        %v3367 = vand.u32 %v1581, 2139095040
        %v3368 = vshrl.u32 %v3367, 23
        %v3369 = vsub.s32 %v3368, 127
        %v3370 = vand.u32 2147483647, %v1581
        %v3371 = vand.u32 %v3370, 8388607
        %v3372 = vor.u32 %v3371, 8388608
        %v3373 = vsub.s32 0, %v3372
        %v3374 = vadd.s32 %v3369, 1
        %vm3375 = vcmp.gt.s32.totalorder %v3374, 0
        %v3376 = vsel %vm3375, %v3374, 0
        %v3377 = vshrl.u32 %v3376, 5
        %v3378 = vand.u32 %v3376, 31
        %v3379 = vsub.s32 32, %v3378
        %v3380 = vshrl.u32 683565275, %v3379
        %v3381 = vshll.u32 683565275, %v3378
        %v3382 = vshrl.u32 2475754826, %v3379
        %v3383 = vor.u32 %v3381, %v3382
        %v3384 = vshll.u32 2475754826, %v3378
        %v3385 = vshrl.u32 2131351028, %v3379
        %v3386 = vor.u32 %v3384, %v3385
        %v3387 = vshll.u32 2131351028, %v3378
        %v3388 = vshrl.u32 2102212464, %v3379
        %v3389 = vor.u32 %v3387, %v3388
        %v3390 = vshll.u32 2102212464, %v3378
        %v3391 = vshrl.u32 920167782, %v3379
        %v3392 = vor.u32 %v3390, %v3391
        %v3393 = vshll.u32 920167782, %v3378
        %v3394 = vshrl.u32 1326507024, %v3379
        %v3395 = vor.u32 %v3393, %v3394
        %vm3396 = vcmp.lt.s32.totalorder %v3377, 1
        %vm3397 = vcmp.lt.s32.totalorder %v3377, 2
        %vm3398 = vcmp.lt.s32.totalorder %v3377, 3
        %vm3399 = vcmp.lt.s32.totalorder %v3377, 4
        %v3400 = vsel %vm3396, %v3380, %v3383
        %v3401 = vsel %vm3399, %v3389, 2102212464
        %v3402 = vsel %vm3398, %v3386, %v3401
        %v3403 = vsel %vm3397, %v3400, %v3402
        %v3404 = vsel %vm3396, %v3383, %v3386
        %v3405 = vsel %vm3399, %v3392, 920167782
        %v3406 = vsel %vm3398, %v3389, %v3405
        %v3407 = vsel %vm3397, %v3404, %v3406
        %v3408 = vsel %vm3396, %v3386, %v3389
        %v3409 = vsel %vm3399, %v3395, 1326507024
        %v3410 = vsel %vm3398, %v3392, %v3409
        %v3411 = vsel %vm3397, %v3408, %v3410
        %v3412 = vshll.u32 %v3372, 8
        %v3413 = vmul.u32.u64.compose %v3412, %v3411
        %v3414 = vextract.low.u32 %v3413
        %v3415 = vextract.high.u32 %v3413
        %v3416 = vmul.u32.u64.compose %v3412, %v3407
        %v3417 = vextract.low.u32 %v3416
        %v3418 = vextract.high.u32 %v3416
        %v3419 = vmul.u32 %v3412, %v3403
        %v3420 = vadd.s32 %v3415, %v3417
        %vm3421 = vc.u32 %v3415, %v3417
        %v3422 = vadd.s32 %v3418, 1
        %v3423 = vsel %vm3421, %v3422, %v3418
        %v3424 = vadd.s32 %v3419, %v3423
        %v3425 = vadd.s32 %v3424, 536870912
        %v3426 = vshrl.u32 %v3425, 30
        %v3427 = vshll.u32 %v3426, 30
        %v3428 = vsub.s32 %v3424, %v3427
        %vm3429 = vcmp.lt.s32.totalorder %v3428, 0
        %v3430 = vsub.s32 0, %v3428
        %v3431 = vsel %vm3429, %v3430, %v3428
        %v3432 = vclz %v3431
        %v3433 = vsub.s32 %v3432, 2
        %vm3434 = vcmp.gt.s32.totalorder 0, %v3433
        %v3435 = vsel %vm3434, 0, %v3433
        %v3436 = vsub.s32 32, %v3435
        %v3437 = vshll.u32 %v3428, %v3435
        %v3438 = vshrl.u32 %v3420, %v3436
        %v3439 = vor.u32 %v3437, %v3438
        %v3440 = vsub.s32 4294967266, %v3435
        %v3441 = vadd.s32 %v3440, 127
        %v3442 = vshll.u32 %v3441, 23
        %v3443 = vor.u32 4788187, %v3442
        %v3444 = vand.u32 2147483647, %v3443
        %v3446 = vcvt.s32.f32 %v3439
        %v3447 = vmul.f32 %v3446, %v3444
        %v3448 = vxor.u32 %v3447, 2147483648
        %v3449 = vsel %vm3366, %v3448, %v3447
        %v3450 = vsub.s32 4, %v3426
        %v3451 = vsel %vm3366, %v3450, %v3426
        %v3452 = vsel %vm3365, %v1581, %v3449
        %v3453 = vsel %vm3365, 0, %v3451
        %v3454 = vcosq.f32.pop %v3452
        %v3455 = vsinq.f32.pop %v3452
        %vm3456 = vweird.f32 %v1581
        %v3457 = vadd.s32 %v3453, 3
        %v3458 = vand.u32 %v3457, 3
        %vm3459 = vcmp.lt.s32.totalorder %v3458, 2
        %vm3460 = vcmp.eq.s32.totalorder %v3458, 0
        %v3461 = vxor.u32 %v3455, 2147483648
        %v3462 = vsel %vm3460, %v3454, %v3461
        %vm3463 = vcmp.eq.s32.totalorder %v3458, 2
        %v3464 = vxor.u32 %v3454, 2147483648
        %v3465 = vsel %vm3463, %v3464, %v3455
        %v3466 = vsel %vm3459, %v3462, %v3465
        %v3467 = vsel %vm3456, nan, %v3466
        %v3468 = vand.u32 2147483647, %v1582
        %vm3469 = vcmp.le.f32.partialorder %v3468, 0.7853982
        %vm3470 = vcmp.lt.s32.totalorder %v1582, 0
        %v3471 = vand.u32 %v1582, 2139095040
        %v3472 = vshrl.u32 %v3471, 23
        %v3473 = vsub.s32 %v3472, 127
        %v3474 = vand.u32 2147483647, %v1582
        %v3475 = vand.u32 %v3474, 8388607
        %v3476 = vor.u32 %v3475, 8388608
        %v3477 = vsub.s32 0, %v3476
        %v3478 = vadd.s32 %v3473, 1
        %vm3479 = vcmp.gt.s32.totalorder %v3478, 0
        %v3480 = vsel %vm3479, %v3478, 0
        %v3481 = vshrl.u32 %v3480, 5
        %v3482 = vand.u32 %v3480, 31
        %v3483 = vsub.s32 32, %v3482
        %v3484 = vshrl.u32 683565275, %v3483
        %v3485 = vshll.u32 683565275, %v3482
        %v3486 = vshrl.u32 2475754826, %v3483
        %v3487 = vor.u32 %v3485, %v3486
        %v3488 = vshll.u32 2475754826, %v3482
        %v3489 = vshrl.u32 2131351028, %v3483
        %v3490 = vor.u32 %v3488, %v3489
        %v3491 = vshll.u32 2131351028, %v3482
        %v3492 = vshrl.u32 2102212464, %v3483
        %v3493 = vor.u32 %v3491, %v3492
        %v3494 = vshll.u32 2102212464, %v3482
        %v3495 = vshrl.u32 920167782, %v3483
        %v3496 = vor.u32 %v3494, %v3495
        %v3497 = vshll.u32 920167782, %v3482
        %v3498 = vshrl.u32 1326507024, %v3483
        %v3499 = vor.u32 %v3497, %v3498
        %vm3500 = vcmp.lt.s32.totalorder %v3481, 1
        %vm3501 = vcmp.lt.s32.totalorder %v3481, 2
        %vm3502 = vcmp.lt.s32.totalorder %v3481, 3
        %vm3503 = vcmp.lt.s32.totalorder %v3481, 4
        %v3504 = vsel %vm3500, %v3484, %v3487
        %v3505 = vsel %vm3503, %v3493, 2102212464
        %v3506 = vsel %vm3502, %v3490, %v3505
        %v3507 = vsel %vm3501, %v3504, %v3506
        %v3508 = vsel %vm3500, %v3487, %v3490
        %v3509 = vsel %vm3503, %v3496, 920167782
        %v3510 = vsel %vm3502, %v3493, %v3509
        %v3511 = vsel %vm3501, %v3508, %v3510
        %v3512 = vsel %vm3500, %v3490, %v3493
        %v3513 = vsel %vm3503, %v3499, 1326507024
        %v3514 = vsel %vm3502, %v3496, %v3513
        %v3515 = vsel %vm3501, %v3512, %v3514
        %v3516 = vshll.u32 %v3476, 8
        %v3517 = vmul.u32.u64.compose %v3516, %v3515
        %v3518 = vextract.low.u32 %v3517
        %v3519 = vextract.high.u32 %v3517
        %v3520 = vmul.u32.u64.compose %v3516, %v3511
        %v3521 = vextract.low.u32 %v3520
        %v3522 = vextract.high.u32 %v3520
        %v3523 = vmul.u32 %v3516, %v3507
        %v3524 = vadd.s32 %v3519, %v3521
        %vm3525 = vc.u32 %v3519, %v3521
        %v3526 = vadd.s32 %v3522, 1
        %v3527 = vsel %vm3525, %v3526, %v3522
        %v3528 = vadd.s32 %v3523, %v3527
        %v3529 = vadd.s32 %v3528, 536870912
        %v3530 = vshrl.u32 %v3529, 30
        %v3531 = vshll.u32 %v3530, 30
        %v3532 = vsub.s32 %v3528, %v3531
        %vm3533 = vcmp.lt.s32.totalorder %v3532, 0
        %v3534 = vsub.s32 0, %v3532
        %v3535 = vsel %vm3533, %v3534, %v3532
        %v3536 = vclz %v3535
        %v3537 = vsub.s32 %v3536, 2
        %vm3538 = vcmp.gt.s32.totalorder 0, %v3537
        %v3539 = vsel %vm3538, 0, %v3537
        %v3540 = vsub.s32 32, %v3539
        %v3541 = vshll.u32 %v3532, %v3539
        %v3542 = vshrl.u32 %v3524, %v3540
        %v3543 = vor.u32 %v3541, %v3542
        %v3544 = vsub.s32 4294967266, %v3539
        %v3545 = vadd.s32 %v3544, 127
        %v3546 = vshll.u32 %v3545, 23
        %v3547 = vor.u32 4788187, %v3546
        %v3548 = vand.u32 2147483647, %v3547
        %v3550 = vcvt.s32.f32 %v3543
        %v3551 = vmul.f32 %v3550, %v3548
        %v3552 = vxor.u32 %v3551, 2147483648
        %v3553 = vsel %vm3470, %v3552, %v3551
        %v3554 = vsub.s32 4, %v3530
        %v3555 = vsel %vm3470, %v3554, %v3530
        %v3556 = vsel %vm3469, %v1582, %v3553
        %v3557 = vsel %vm3469, 0, %v3555
        %v3558 = vcosq.f32.pop %v3556
        %v3559 = vsinq.f32.pop %v3556
        %vm3560 = vweird.f32 %v1582
        %v3561 = vadd.s32 %v3557, 3
        %v3562 = vand.u32 %v3561, 3
        %vm3563 = vcmp.lt.s32.totalorder %v3562, 2
        %vm3564 = vcmp.eq.s32.totalorder %v3562, 0
        %v3565 = vxor.u32 %v3559, 2147483648
        %v3566 = vsel %vm3564, %v3558, %v3565
        %vm3567 = vcmp.eq.s32.totalorder %v3562, 2
        %v3568 = vxor.u32 %v3558, 2147483648
        %v3569 = vsel %vm3567, %v3568, %v3559
        %v3570 = vsel %vm3563, %v3566, %v3569
        %v3571 = vsel %vm3560, nan, %v3570
        %v3572 = vand.u32 2147483647, %v1583
        %vm3573 = vcmp.le.f32.partialorder %v3572, 0.7853982
        %vm3574 = vcmp.lt.s32.totalorder %v1583, 0
        %v3575 = vand.u32 %v1583, 2139095040
        %v3576 = vshrl.u32 %v3575, 23
        %v3577 = vsub.s32 %v3576, 127
        %v3578 = vand.u32 2147483647, %v1583
        %v3579 = vand.u32 %v3578, 8388607
        %v3580 = vor.u32 %v3579, 8388608
        %v3581 = vsub.s32 0, %v3580
        %v3582 = vadd.s32 %v3577, 1
        %vm3583 = vcmp.gt.s32.totalorder %v3582, 0
        %v3584 = vsel %vm3583, %v3582, 0
        %v3585 = vshrl.u32 %v3584, 5
        %v3586 = vand.u32 %v3584, 31
        %v3587 = vsub.s32 32, %v3586
        %v3588 = vshrl.u32 683565275, %v3587
        %v3589 = vshll.u32 683565275, %v3586
        %v3590 = vshrl.u32 2475754826, %v3587
        %v3591 = vor.u32 %v3589, %v3590
        %v3592 = vshll.u32 2475754826, %v3586
        %v3593 = vshrl.u32 2131351028, %v3587
        %v3594 = vor.u32 %v3592, %v3593
        %v3595 = vshll.u32 2131351028, %v3586
        %v3596 = vshrl.u32 2102212464, %v3587
        %v3597 = vor.u32 %v3595, %v3596
        %v3598 = vshll.u32 2102212464, %v3586
        %v3599 = vshrl.u32 920167782, %v3587
        %v3600 = vor.u32 %v3598, %v3599
        %v3601 = vshll.u32 920167782, %v3586
        %v3602 = vshrl.u32 1326507024, %v3587
        %v3603 = vor.u32 %v3601, %v3602
        %vm3604 = vcmp.lt.s32.totalorder %v3585, 1
        %vm3605 = vcmp.lt.s32.totalorder %v3585, 2
        %vm3606 = vcmp.lt.s32.totalorder %v3585, 3
        %vm3607 = vcmp.lt.s32.totalorder %v3585, 4
        %v3608 = vsel %vm3604, %v3588, %v3591
        %v3609 = vsel %vm3607, %v3597, 2102212464
        %v3610 = vsel %vm3606, %v3594, %v3609
        %v3611 = vsel %vm3605, %v3608, %v3610
        %v3612 = vsel %vm3604, %v3591, %v3594
        %v3613 = vsel %vm3607, %v3600, 920167782
        %v3614 = vsel %vm3606, %v3597, %v3613
        %v3615 = vsel %vm3605, %v3612, %v3614
        %v3616 = vsel %vm3604, %v3594, %v3597
        %v3617 = vsel %vm3607, %v3603, 1326507024
        %v3618 = vsel %vm3606, %v3600, %v3617
        %v3619 = vsel %vm3605, %v3616, %v3618
        %v3620 = vshll.u32 %v3580, 8
        %v3621 = vmul.u32.u64.compose %v3620, %v3619
        %v3622 = vextract.low.u32 %v3621
        %v3623 = vextract.high.u32 %v3621
        %v3624 = vmul.u32.u64.compose %v3620, %v3615
        %v3625 = vextract.low.u32 %v3624
        %v3626 = vextract.high.u32 %v3624
        %v3627 = vmul.u32 %v3620, %v3611
        %v3628 = vadd.s32 %v3623, %v3625
        %vm3629 = vc.u32 %v3623, %v3625
        %v3630 = vadd.s32 %v3626, 1
        %v3631 = vsel %vm3629, %v3630, %v3626
        %v3632 = vadd.s32 %v3627, %v3631
        %v3633 = vadd.s32 %v3632, 536870912
        %v3634 = vshrl.u32 %v3633, 30
        %v3635 = vshll.u32 %v3634, 30
        %v3636 = vsub.s32 %v3632, %v3635
        %vm3637 = vcmp.lt.s32.totalorder %v3636, 0
        %v3638 = vsub.s32 0, %v3636
        %v3639 = vsel %vm3637, %v3638, %v3636
        %v3640 = vclz %v3639
        %v3641 = vsub.s32 %v3640, 2
        %vm3642 = vcmp.gt.s32.totalorder 0, %v3641
        %v3643 = vsel %vm3642, 0, %v3641
        %v3644 = vsub.s32 32, %v3643
        %v3645 = vshll.u32 %v3636, %v3643
        %v3646 = vshrl.u32 %v3628, %v3644
        %v3647 = vor.u32 %v3645, %v3646
        %v3648 = vsub.s32 4294967266, %v3643
        %v3649 = vadd.s32 %v3648, 127
        %v3650 = vshll.u32 %v3649, 23
        %v3651 = vor.u32 4788187, %v3650
        %v3652 = vand.u32 2147483647, %v3651
        %v3654 = vcvt.s32.f32 %v3647
        %v3655 = vmul.f32 %v3654, %v3652
        %v3656 = vxor.u32 %v3655, 2147483648
        %v3657 = vsel %vm3574, %v3656, %v3655
        %v3658 = vsub.s32 4, %v3634
        %v3659 = vsel %vm3574, %v3658, %v3634
        %v3660 = vsel %vm3573, %v1583, %v3657
        %v3661 = vsel %vm3573, 0, %v3659
        %v3662 = vcosq.f32.pop %v3660
        %v3663 = vsinq.f32.pop %v3660
        %vm3664 = vweird.f32 %v1583
        %v3665 = vadd.s32 %v3661, 3
        %v3666 = vand.u32 %v3665, 3
        %vm3667 = vcmp.lt.s32.totalorder %v3666, 2
        %vm3668 = vcmp.eq.s32.totalorder %v3666, 0
        %v3669 = vxor.u32 %v3663, 2147483648
        %v3670 = vsel %vm3668, %v3662, %v3669
        %vm3671 = vcmp.eq.s32.totalorder %v3666, 2
        %v3672 = vxor.u32 %v3662, 2147483648
        %v3673 = vsel %vm3671, %v3672, %v3663
        %v3674 = vsel %vm3667, %v3670, %v3673
        %v3675 = vsel %vm3664, nan, %v3674
        %v3676 = vand.u32 2147483647, %v1584
        %vm3677 = vcmp.le.f32.partialorder %v3676, 0.7853982
        %vm3678 = vcmp.lt.s32.totalorder %v1584, 0
        %v3679 = vand.u32 %v1584, 2139095040
        %v3680 = vshrl.u32 %v3679, 23
        %v3681 = vsub.s32 %v3680, 127
        %v3682 = vand.u32 2147483647, %v1584
        %v3683 = vand.u32 %v3682, 8388607
        %v3684 = vor.u32 %v3683, 8388608
        %v3685 = vsub.s32 0, %v3684
        %v3686 = vadd.s32 %v3681, 1
        %vm3687 = vcmp.gt.s32.totalorder %v3686, 0
        %v3688 = vsel %vm3687, %v3686, 0
        %v3689 = vshrl.u32 %v3688, 5
        %v3690 = vand.u32 %v3688, 31
        %v3691 = vsub.s32 32, %v3690
        %v3692 = vshrl.u32 683565275, %v3691
        %v3693 = vshll.u32 683565275, %v3690
        %v3694 = vshrl.u32 2475754826, %v3691
        %v3695 = vor.u32 %v3693, %v3694
        %v3696 = vshll.u32 2475754826, %v3690
        %v3697 = vshrl.u32 2131351028, %v3691
        %v3698 = vor.u32 %v3696, %v3697
        %v3699 = vshll.u32 2131351028, %v3690
        %v3700 = vshrl.u32 2102212464, %v3691
        %v3701 = vor.u32 %v3699, %v3700
        %v3702 = vshll.u32 2102212464, %v3690
        %v3703 = vshrl.u32 920167782, %v3691
        %v3704 = vor.u32 %v3702, %v3703
        %v3705 = vshll.u32 920167782, %v3690
        %v3706 = vshrl.u32 1326507024, %v3691
        %v3707 = vor.u32 %v3705, %v3706
        %vm3708 = vcmp.lt.s32.totalorder %v3689, 1
        %vm3709 = vcmp.lt.s32.totalorder %v3689, 2
        %vm3710 = vcmp.lt.s32.totalorder %v3689, 3
        %vm3711 = vcmp.lt.s32.totalorder %v3689, 4
        %v3712 = vsel %vm3708, %v3692, %v3695
        %v3713 = vsel %vm3711, %v3701, 2102212464
        %v3714 = vsel %vm3710, %v3698, %v3713
        %v3715 = vsel %vm3709, %v3712, %v3714
        %v3716 = vsel %vm3708, %v3695, %v3698
        %v3717 = vsel %vm3711, %v3704, 920167782
        %v3718 = vsel %vm3710, %v3701, %v3717
        %v3719 = vsel %vm3709, %v3716, %v3718
        %v3720 = vsel %vm3708, %v3698, %v3701
        %v3721 = vsel %vm3711, %v3707, 1326507024
        %v3722 = vsel %vm3710, %v3704, %v3721
        %v3723 = vsel %vm3709, %v3720, %v3722
        %v3724 = vshll.u32 %v3684, 8
        %v3725 = vmul.u32.u64.compose %v3724, %v3723
        %v3726 = vextract.low.u32 %v3725
        %v3727 = vextract.high.u32 %v3725
        %v3728 = vmul.u32.u64.compose %v3724, %v3719
        %v3729 = vextract.low.u32 %v3728
        %v3730 = vextract.high.u32 %v3728
        %v3731 = vmul.u32 %v3724, %v3715
        %v3732 = vadd.s32 %v3727, %v3729
        %vm3733 = vc.u32 %v3727, %v3729
        %v3734 = vadd.s32 %v3730, 1
        %v3735 = vsel %vm3733, %v3734, %v3730
        %v3736 = vadd.s32 %v3731, %v3735
        %v3737 = vadd.s32 %v3736, 536870912
        %v3738 = vshrl.u32 %v3737, 30
        %v3739 = vshll.u32 %v3738, 30
        %v3740 = vsub.s32 %v3736, %v3739
        %vm3741 = vcmp.lt.s32.totalorder %v3740, 0
        %v3742 = vsub.s32 0, %v3740
        %v3743 = vsel %vm3741, %v3742, %v3740
        %v3744 = vclz %v3743
        %v3745 = vsub.s32 %v3744, 2
        %vm3746 = vcmp.gt.s32.totalorder 0, %v3745
        %v3747 = vsel %vm3746, 0, %v3745
        %v3748 = vsub.s32 32, %v3747
        %v3749 = vshll.u32 %v3740, %v3747
        %v3750 = vshrl.u32 %v3732, %v3748
        %v3751 = vor.u32 %v3749, %v3750
        %v3752 = vsub.s32 4294967266, %v3747
        %v3753 = vadd.s32 %v3752, 127
        %v3754 = vshll.u32 %v3753, 23
        %v3755 = vor.u32 4788187, %v3754
        %v3756 = vand.u32 2147483647, %v3755
        %v3758 = vcvt.s32.f32 %v3751
        %v3759 = vmul.f32 %v3758, %v3756
        %v3760 = vxor.u32 %v3759, 2147483648
        %v3761 = vsel %vm3678, %v3760, %v3759
        %v3762 = vsub.s32 4, %v3738
        %v3763 = vsel %vm3678, %v3762, %v3738
        %v3764 = vsel %vm3677, %v1584, %v3761
        %v3765 = vsel %vm3677, 0, %v3763
        %v3766 = vcosq.f32.pop %v3764
        %v3767 = vsinq.f32.pop %v3764
        %vm3768 = vweird.f32 %v1584
        %v3769 = vadd.s32 %v3765, 3
        %v3770 = vand.u32 %v3769, 3
        %vm3771 = vcmp.lt.s32.totalorder %v3770, 2
        %vm3772 = vcmp.eq.s32.totalorder %v3770, 0
        %v3773 = vxor.u32 %v3767, 2147483648
        %v3774 = vsel %vm3772, %v3766, %v3773
        %vm3775 = vcmp.eq.s32.totalorder %v3770, 2
        %v3776 = vxor.u32 %v3766, 2147483648
        %v3777 = vsel %vm3775, %v3776, %v3767
        %v3778 = vsel %vm3771, %v3774, %v3777
        %v3779 = vsel %vm3768, nan, %v3778
        %v3780 = vand.u32 2147483647, %v1585
        %vm3781 = vcmp.le.f32.partialorder %v3780, 0.7853982
        %vm3782 = vcmp.lt.s32.totalorder %v1585, 0
        %v3783 = vand.u32 %v1585, 2139095040
        %v3784 = vshrl.u32 %v3783, 23
        %v3785 = vsub.s32 %v3784, 127
        %v3786 = vand.u32 2147483647, %v1585
        %v3787 = vand.u32 %v3786, 8388607
        %v3788 = vor.u32 %v3787, 8388608
        %v3789 = vsub.s32 0, %v3788
        %v3790 = vadd.s32 %v3785, 1
        %vm3791 = vcmp.gt.s32.totalorder %v3790, 0
        %v3792 = vsel %vm3791, %v3790, 0
        %v3793 = vshrl.u32 %v3792, 5
        %v3794 = vand.u32 %v3792, 31
        %v3795 = vsub.s32 32, %v3794
        %v3796 = vshrl.u32 683565275, %v3795
        %v3797 = vshll.u32 683565275, %v3794
        %v3798 = vshrl.u32 2475754826, %v3795
        %v3799 = vor.u32 %v3797, %v3798
        %v3800 = vshll.u32 2475754826, %v3794
        %v3801 = vshrl.u32 2131351028, %v3795
        %v3802 = vor.u32 %v3800, %v3801
        %v3803 = vshll.u32 2131351028, %v3794
        %v3804 = vshrl.u32 2102212464, %v3795
        %v3805 = vor.u32 %v3803, %v3804
        %v3806 = vshll.u32 2102212464, %v3794
        %v3807 = vshrl.u32 920167782, %v3795
        %v3808 = vor.u32 %v3806, %v3807
        %v3809 = vshll.u32 920167782, %v3794
        %v3810 = vshrl.u32 1326507024, %v3795
        %v3811 = vor.u32 %v3809, %v3810
        %vm3812 = vcmp.lt.s32.totalorder %v3793, 1
        %vm3813 = vcmp.lt.s32.totalorder %v3793, 2
        %vm3814 = vcmp.lt.s32.totalorder %v3793, 3
        %vm3815 = vcmp.lt.s32.totalorder %v3793, 4
        %v3816 = vsel %vm3812, %v3796, %v3799
        %v3817 = vsel %vm3815, %v3805, 2102212464
        %v3818 = vsel %vm3814, %v3802, %v3817
        %v3819 = vsel %vm3813, %v3816, %v3818
        %v3820 = vsel %vm3812, %v3799, %v3802
        %v3821 = vsel %vm3815, %v3808, 920167782
        %v3822 = vsel %vm3814, %v3805, %v3821
        %v3823 = vsel %vm3813, %v3820, %v3822
        %v3824 = vsel %vm3812, %v3802, %v3805
        %v3825 = vsel %vm3815, %v3811, 1326507024
        %v3826 = vsel %vm3814, %v3808, %v3825
        %v3827 = vsel %vm3813, %v3824, %v3826
        %v3828 = vshll.u32 %v3788, 8
        %v3829 = vmul.u32.u64.compose %v3828, %v3827
        %v3830 = vextract.low.u32 %v3829
        %v3831 = vextract.high.u32 %v3829
        %v3832 = vmul.u32.u64.compose %v3828, %v3823
        %v3833 = vextract.low.u32 %v3832
        %v3834 = vextract.high.u32 %v3832
        %v3835 = vmul.u32 %v3828, %v3819
        %v3836 = vadd.s32 %v3831, %v3833
        %vm3837 = vc.u32 %v3831, %v3833
        %v3838 = vadd.s32 %v3834, 1
        %v3839 = vsel %vm3837, %v3838, %v3834
        %v3840 = vadd.s32 %v3835, %v3839
        %v3841 = vadd.s32 %v3840, 536870912
        %v3842 = vshrl.u32 %v3841, 30
        %v3843 = vshll.u32 %v3842, 30
        %v3844 = vsub.s32 %v3840, %v3843
        %vm3845 = vcmp.lt.s32.totalorder %v3844, 0
        %v3846 = vsub.s32 0, %v3844
        %v3847 = vsel %vm3845, %v3846, %v3844
        %v3848 = vclz %v3847
        %v3849 = vsub.s32 %v3848, 2
        %vm3850 = vcmp.gt.s32.totalorder 0, %v3849
        %v3851 = vsel %vm3850, 0, %v3849
        %v3852 = vsub.s32 32, %v3851
        %v3853 = vshll.u32 %v3844, %v3851
        %v3854 = vshrl.u32 %v3836, %v3852
        %v3855 = vor.u32 %v3853, %v3854
        %v3856 = vsub.s32 4294967266, %v3851
        %v3857 = vadd.s32 %v3856, 127
        %v3858 = vshll.u32 %v3857, 23
        %v3859 = vor.u32 4788187, %v3858
        %v3860 = vand.u32 2147483647, %v3859
        %v3862 = vcvt.s32.f32 %v3855
        %v3863 = vmul.f32 %v3862, %v3860
        %v3864 = vxor.u32 %v3863, 2147483648
        %v3865 = vsel %vm3782, %v3864, %v3863
        %v3866 = vsub.s32 4, %v3842
        %v3867 = vsel %vm3782, %v3866, %v3842
        %v3868 = vsel %vm3781, %v1585, %v3865
        %v3869 = vsel %vm3781, 0, %v3867
        %v3870 = vcosq.f32.pop %v3868
        %v3871 = vsinq.f32.pop %v3868
        %vm3872 = vweird.f32 %v1585
        %v3873 = vadd.s32 %v3869, 3
        %v3874 = vand.u32 %v3873, 3
        %vm3875 = vcmp.lt.s32.totalorder %v3874, 2
        %vm3876 = vcmp.eq.s32.totalorder %v3874, 0
        %v3877 = vxor.u32 %v3871, 2147483648
        %v3878 = vsel %vm3876, %v3870, %v3877
        %vm3879 = vcmp.eq.s32.totalorder %v3874, 2
        %v3880 = vxor.u32 %v3870, 2147483648
        %v3881 = vsel %vm3879, %v3880, %v3871
        %v3882 = vsel %vm3875, %v3878, %v3881
        %v3883 = vsel %vm3872, nan, %v3882
        %v3884 = vand.u32 2147483647, %v1586
        %vm3885 = vcmp.le.f32.partialorder %v3884, 0.7853982
        %vm3886 = vcmp.lt.s32.totalorder %v1586, 0
        %v3887 = vand.u32 %v1586, 2139095040
        %v3888 = vshrl.u32 %v3887, 23
        %v3889 = vsub.s32 %v3888, 127
        %v3890 = vand.u32 2147483647, %v1586
        %v3891 = vand.u32 %v3890, 8388607
        %v3892 = vor.u32 %v3891, 8388608
        %v3893 = vsub.s32 0, %v3892
        %v3894 = vadd.s32 %v3889, 1
        %vm3895 = vcmp.gt.s32.totalorder %v3894, 0
        %v3896 = vsel %vm3895, %v3894, 0
        %v3897 = vshrl.u32 %v3896, 5
        %v3898 = vand.u32 %v3896, 31
        %v3899 = vsub.s32 32, %v3898
        %v3900 = vshrl.u32 683565275, %v3899
        %v3901 = vshll.u32 683565275, %v3898
        %v3902 = vshrl.u32 2475754826, %v3899
        %v3903 = vor.u32 %v3901, %v3902
        %v3904 = vshll.u32 2475754826, %v3898
        %v3905 = vshrl.u32 2131351028, %v3899
        %v3906 = vor.u32 %v3904, %v3905
        %v3907 = vshll.u32 2131351028, %v3898
        %v3908 = vshrl.u32 2102212464, %v3899
        %v3909 = vor.u32 %v3907, %v3908
        %v3910 = vshll.u32 2102212464, %v3898
        %v3911 = vshrl.u32 920167782, %v3899
        %v3912 = vor.u32 %v3910, %v3911
        %v3913 = vshll.u32 920167782, %v3898
        %v3914 = vshrl.u32 1326507024, %v3899
        %v3915 = vor.u32 %v3913, %v3914
        %vm3916 = vcmp.lt.s32.totalorder %v3897, 1
        %vm3917 = vcmp.lt.s32.totalorder %v3897, 2
        %vm3918 = vcmp.lt.s32.totalorder %v3897, 3
        %vm3919 = vcmp.lt.s32.totalorder %v3897, 4
        %v3920 = vsel %vm3916, %v3900, %v3903
        %v3921 = vsel %vm3919, %v3909, 2102212464
        %v3922 = vsel %vm3918, %v3906, %v3921
        %v3923 = vsel %vm3917, %v3920, %v3922
        %v3924 = vsel %vm3916, %v3903, %v3906
        %v3925 = vsel %vm3919, %v3912, 920167782
        %v3926 = vsel %vm3918, %v3909, %v3925
        %v3927 = vsel %vm3917, %v3924, %v3926
        %v3928 = vsel %vm3916, %v3906, %v3909
        %v3929 = vsel %vm3919, %v3915, 1326507024
        %v3930 = vsel %vm3918, %v3912, %v3929
        %v3931 = vsel %vm3917, %v3928, %v3930
        %v3932 = vshll.u32 %v3892, 8
        %v3933 = vmul.u32.u64.compose %v3932, %v3931
        %v3934 = vextract.low.u32 %v3933
        %v3935 = vextract.high.u32 %v3933
        %v3936 = vmul.u32.u64.compose %v3932, %v3927
        %v3937 = vextract.low.u32 %v3936
        %v3938 = vextract.high.u32 %v3936
        %v3939 = vmul.u32 %v3932, %v3923
        %v3940 = vadd.s32 %v3935, %v3937
        %vm3941 = vc.u32 %v3935, %v3937
        %v3942 = vadd.s32 %v3938, 1
        %v3943 = vsel %vm3941, %v3942, %v3938
        %v3944 = vadd.s32 %v3939, %v3943
        %v3945 = vadd.s32 %v3944, 536870912
        %v3946 = vshrl.u32 %v3945, 30
        %v3947 = vshll.u32 %v3946, 30
        %v3948 = vsub.s32 %v3944, %v3947
        %vm3949 = vcmp.lt.s32.totalorder %v3948, 0
        %v3950 = vsub.s32 0, %v3948
        %v3951 = vsel %vm3949, %v3950, %v3948
        %v3952 = vclz %v3951
        %v3953 = vsub.s32 %v3952, 2
        %vm3954 = vcmp.gt.s32.totalorder 0, %v3953
        %v3955 = vsel %vm3954, 0, %v3953
        %v3956 = vsub.s32 32, %v3955
        %v3957 = vshll.u32 %v3948, %v3955
        %v3958 = vshrl.u32 %v3940, %v3956
        %v3959 = vor.u32 %v3957, %v3958
        %v3960 = vsub.s32 4294967266, %v3955
        %v3961 = vadd.s32 %v3960, 127
        %v3962 = vshll.u32 %v3961, 23
        %v3963 = vor.u32 4788187, %v3962
        %v3964 = vand.u32 2147483647, %v3963
        %v3966 = vcvt.s32.f32 %v3959
        %v3967 = vmul.f32 %v3966, %v3964
        %v3968 = vxor.u32 %v3967, 2147483648
        %v3969 = vsel %vm3886, %v3968, %v3967
        %v3970 = vsub.s32 4, %v3946
        %v3971 = vsel %vm3886, %v3970, %v3946
        %v3972 = vsel %vm3885, %v1586, %v3969
        %v3973 = vsel %vm3885, 0, %v3971
        %v3974 = vcosq.f32.pop %v3972
        %v3975 = vsinq.f32.pop %v3972
        %vm3976 = vweird.f32 %v1586
        %v3977 = vadd.s32 %v3973, 3
        %v3978 = vand.u32 %v3977, 3
        %vm3979 = vcmp.lt.s32.totalorder %v3978, 2
        %vm3980 = vcmp.eq.s32.totalorder %v3978, 0
        %v3981 = vxor.u32 %v3975, 2147483648
        %v3982 = vsel %vm3980, %v3974, %v3981
        %vm3983 = vcmp.eq.s32.totalorder %v3978, 2
        %v3984 = vxor.u32 %v3974, 2147483648
        %v3985 = vsel %vm3983, %v3984, %v3975
        %v3986 = vsel %vm3979, %v3982, %v3985
        %v3987 = vsel %vm3976, nan, %v3986
        %v3988 = vand.u32 2147483647, %v1587
        %vm3989 = vcmp.le.f32.partialorder %v3988, 0.7853982
        %vm3990 = vcmp.lt.s32.totalorder %v1587, 0
        %v3991 = vand.u32 %v1587, 2139095040
        %v3992 = vshrl.u32 %v3991, 23
        %v3993 = vsub.s32 %v3992, 127
        %v3994 = vand.u32 2147483647, %v1587
        %v3995 = vand.u32 %v3994, 8388607
        %v3996 = vor.u32 %v3995, 8388608
        %v3997 = vsub.s32 0, %v3996
        %v3998 = vadd.s32 %v3993, 1
        %vm3999 = vcmp.gt.s32.totalorder %v3998, 0
        %v4000 = vsel %vm3999, %v3998, 0
        %v4001 = vshrl.u32 %v4000, 5
        %v4002 = vand.u32 %v4000, 31
        %v4003 = vsub.s32 32, %v4002
        %v4004 = vshrl.u32 683565275, %v4003
        %v4005 = vshll.u32 683565275, %v4002
        %v4006 = vshrl.u32 2475754826, %v4003
        %v4007 = vor.u32 %v4005, %v4006
        %v4008 = vshll.u32 2475754826, %v4002
        %v4009 = vshrl.u32 2131351028, %v4003
        %v4010 = vor.u32 %v4008, %v4009
        %v4011 = vshll.u32 2131351028, %v4002
        %v4012 = vshrl.u32 2102212464, %v4003
        %v4013 = vor.u32 %v4011, %v4012
        %v4014 = vshll.u32 2102212464, %v4002
        %v4015 = vshrl.u32 920167782, %v4003
        %v4016 = vor.u32 %v4014, %v4015
        %v4017 = vshll.u32 920167782, %v4002
        %v4018 = vshrl.u32 1326507024, %v4003
        %v4019 = vor.u32 %v4017, %v4018
        %vm4020 = vcmp.lt.s32.totalorder %v4001, 1
        %vm4021 = vcmp.lt.s32.totalorder %v4001, 2
        %vm4022 = vcmp.lt.s32.totalorder %v4001, 3
        %vm4023 = vcmp.lt.s32.totalorder %v4001, 4
        %v4024 = vsel %vm4020, %v4004, %v4007
        %v4025 = vsel %vm4023, %v4013, 2102212464
        %v4026 = vsel %vm4022, %v4010, %v4025
        %v4027 = vsel %vm4021, %v4024, %v4026
        %v4028 = vsel %vm4020, %v4007, %v4010
        %v4029 = vsel %vm4023, %v4016, 920167782
        %v4030 = vsel %vm4022, %v4013, %v4029
        %v4031 = vsel %vm4021, %v4028, %v4030
        %v4032 = vsel %vm4020, %v4010, %v4013
        %v4033 = vsel %vm4023, %v4019, 1326507024
        %v4034 = vsel %vm4022, %v4016, %v4033
        %v4035 = vsel %vm4021, %v4032, %v4034
        %v4036 = vshll.u32 %v3996, 8
        %v4037 = vmul.u32.u64.compose %v4036, %v4035
        %v4038 = vextract.low.u32 %v4037
        %v4039 = vextract.high.u32 %v4037
        %v4040 = vmul.u32.u64.compose %v4036, %v4031
        %v4041 = vextract.low.u32 %v4040
        %v4042 = vextract.high.u32 %v4040
        %v4043 = vmul.u32 %v4036, %v4027
        %v4044 = vadd.s32 %v4039, %v4041
        %vm4045 = vc.u32 %v4039, %v4041
        %v4046 = vadd.s32 %v4042, 1
        %v4047 = vsel %vm4045, %v4046, %v4042
        %v4048 = vadd.s32 %v4043, %v4047
        %v4049 = vadd.s32 %v4048, 536870912
        %v4050 = vshrl.u32 %v4049, 30
        %v4051 = vshll.u32 %v4050, 30
        %v4052 = vsub.s32 %v4048, %v4051
        %vm4053 = vcmp.lt.s32.totalorder %v4052, 0
        %v4054 = vsub.s32 0, %v4052
        %v4055 = vsel %vm4053, %v4054, %v4052
        %v4056 = vclz %v4055
        %v4057 = vsub.s32 %v4056, 2
        %vm4058 = vcmp.gt.s32.totalorder 0, %v4057
        %v4059 = vsel %vm4058, 0, %v4057
        %v4060 = vsub.s32 32, %v4059
        %v4061 = vshll.u32 %v4052, %v4059
        %v4062 = vshrl.u32 %v4044, %v4060
        %v4063 = vor.u32 %v4061, %v4062
        %v4064 = vsub.s32 4294967266, %v4059
        %v4065 = vadd.s32 %v4064, 127
        %v4066 = vshll.u32 %v4065, 23
        %v4067 = vor.u32 4788187, %v4066
        %v4068 = vand.u32 2147483647, %v4067
        %v4070 = vcvt.s32.f32 %v4063
        %v4071 = vmul.f32 %v4070, %v4068
        %v4072 = vxor.u32 %v4071, 2147483648
        %v4073 = vsel %vm3990, %v4072, %v4071
        %v4074 = vsub.s32 4, %v4050
        %v4075 = vsel %vm3990, %v4074, %v4050
        %v4076 = vsel %vm3989, %v1587, %v4073
        %v4077 = vsel %vm3989, 0, %v4075
        %v4078 = vcosq.f32.pop %v4076
        %v4079 = vsinq.f32.pop %v4076
        %vm4080 = vweird.f32 %v1587
        %v4081 = vadd.s32 %v4077, 3
        %v4082 = vand.u32 %v4081, 3
        %vm4083 = vcmp.lt.s32.totalorder %v4082, 2
        %vm4084 = vcmp.eq.s32.totalorder %v4082, 0
        %v4085 = vxor.u32 %v4079, 2147483648
        %v4086 = vsel %vm4084, %v4078, %v4085
        %vm4087 = vcmp.eq.s32.totalorder %v4082, 2
        %v4088 = vxor.u32 %v4078, 2147483648
        %v4089 = vsel %vm4087, %v4088, %v4079
        %v4090 = vsel %vm4083, %v4086, %v4089
        %v4091 = vsel %vm4080, nan, %v4090
        %v4092 = vand.u32 2147483647, %v1588
        %vm4093 = vcmp.le.f32.partialorder %v4092, 0.7853982
        %vm4094 = vcmp.lt.s32.totalorder %v1588, 0
        %v4095 = vand.u32 %v1588, 2139095040
        %v4096 = vshrl.u32 %v4095, 23
        %v4097 = vsub.s32 %v4096, 127
        %v4098 = vand.u32 2147483647, %v1588
        %v4099 = vand.u32 %v4098, 8388607
        %v4100 = vor.u32 %v4099, 8388608
        %v4101 = vsub.s32 0, %v4100
        %v4102 = vadd.s32 %v4097, 1
        %vm4103 = vcmp.gt.s32.totalorder %v4102, 0
        %v4104 = vsel %vm4103, %v4102, 0
        %v4105 = vshrl.u32 %v4104, 5
        %v4106 = vand.u32 %v4104, 31
        %v4107 = vsub.s32 32, %v4106
        %v4108 = vshrl.u32 683565275, %v4107
        %v4109 = vshll.u32 683565275, %v4106
        %v4110 = vshrl.u32 2475754826, %v4107
        %v4111 = vor.u32 %v4109, %v4110
        %v4112 = vshll.u32 2475754826, %v4106
        %v4113 = vshrl.u32 2131351028, %v4107
        %v4114 = vor.u32 %v4112, %v4113
        %v4115 = vshll.u32 2131351028, %v4106
        %v4116 = vshrl.u32 2102212464, %v4107
        %v4117 = vor.u32 %v4115, %v4116
        %v4118 = vshll.u32 2102212464, %v4106
        %v4119 = vshrl.u32 920167782, %v4107
        %v4120 = vor.u32 %v4118, %v4119
        %v4121 = vshll.u32 920167782, %v4106
        %v4122 = vshrl.u32 1326507024, %v4107
        %v4123 = vor.u32 %v4121, %v4122
        %vm4124 = vcmp.lt.s32.totalorder %v4105, 1
        %vm4125 = vcmp.lt.s32.totalorder %v4105, 2
        %vm4126 = vcmp.lt.s32.totalorder %v4105, 3
        %vm4127 = vcmp.lt.s32.totalorder %v4105, 4
        %v4128 = vsel %vm4124, %v4108, %v4111
        %v4129 = vsel %vm4127, %v4117, 2102212464
        %v4130 = vsel %vm4126, %v4114, %v4129
        %v4131 = vsel %vm4125, %v4128, %v4130
        %v4132 = vsel %vm4124, %v4111, %v4114
        %v4133 = vsel %vm4127, %v4120, 920167782
        %v4134 = vsel %vm4126, %v4117, %v4133
        %v4135 = vsel %vm4125, %v4132, %v4134
        %v4136 = vsel %vm4124, %v4114, %v4117
        %v4137 = vsel %vm4127, %v4123, 1326507024
        %v4138 = vsel %vm4126, %v4120, %v4137
        %v4139 = vsel %vm4125, %v4136, %v4138
        %v4140 = vshll.u32 %v4100, 8
        %v4141 = vmul.u32.u64.compose %v4140, %v4139
        %v4142 = vextract.low.u32 %v4141
        %v4143 = vextract.high.u32 %v4141
        %v4144 = vmul.u32.u64.compose %v4140, %v4135
        %v4145 = vextract.low.u32 %v4144
        %v4146 = vextract.high.u32 %v4144
        %v4147 = vmul.u32 %v4140, %v4131
        %v4148 = vadd.s32 %v4143, %v4145
        %vm4149 = vc.u32 %v4143, %v4145
        %v4150 = vadd.s32 %v4146, 1
        %v4151 = vsel %vm4149, %v4150, %v4146
        %v4152 = vadd.s32 %v4147, %v4151
        %v4153 = vadd.s32 %v4152, 536870912
        %v4154 = vshrl.u32 %v4153, 30
        %v4155 = vshll.u32 %v4154, 30
        %v4156 = vsub.s32 %v4152, %v4155
        %vm4157 = vcmp.lt.s32.totalorder %v4156, 0
        %v4158 = vsub.s32 0, %v4156
        %v4159 = vsel %vm4157, %v4158, %v4156
        %v4160 = vclz %v4159
        %v4161 = vsub.s32 %v4160, 2
        %vm4162 = vcmp.gt.s32.totalorder 0, %v4161
        %v4163 = vsel %vm4162, 0, %v4161
        %v4164 = vsub.s32 32, %v4163
        %v4165 = vshll.u32 %v4156, %v4163
        %v4166 = vshrl.u32 %v4148, %v4164
        %v4167 = vor.u32 %v4165, %v4166
        %v4168 = vsub.s32 4294967266, %v4163
        %v4169 = vadd.s32 %v4168, 127
        %v4170 = vshll.u32 %v4169, 23
        %v4171 = vor.u32 4788187, %v4170
        %v4172 = vand.u32 2147483647, %v4171
        %v4174 = vcvt.s32.f32 %v4167
        %v4175 = vmul.f32 %v4174, %v4172
        %v4176 = vxor.u32 %v4175, 2147483648
        %v4177 = vsel %vm4094, %v4176, %v4175
        %v4178 = vsub.s32 4, %v4154
        %v4179 = vsel %vm4094, %v4178, %v4154
        %v4180 = vsel %vm4093, %v1588, %v4177
        %v4181 = vsel %vm4093, 0, %v4179
        %v4182 = vcosq.f32.pop %v4180
        %v4183 = vsinq.f32.pop %v4180
        %vm4184 = vweird.f32 %v1588
        %v4185 = vadd.s32 %v4181, 3
        %v4186 = vand.u32 %v4185, 3
        %vm4187 = vcmp.lt.s32.totalorder %v4186, 2
        %vm4188 = vcmp.eq.s32.totalorder %v4186, 0
        %v4189 = vxor.u32 %v4183, 2147483648
        %v4190 = vsel %vm4188, %v4182, %v4189
        %vm4191 = vcmp.eq.s32.totalorder %v4186, 2
        %v4192 = vxor.u32 %v4182, 2147483648
        %v4193 = vsel %vm4191, %v4192, %v4183
        %v4194 = vsel %vm4187, %v4190, %v4193
        %v4195 = vsel %vm4184, nan, %v4194
        %v4196 = vand.u32 2147483647, %v1589
        %vm4197 = vcmp.le.f32.partialorder %v4196, 0.7853982
        %vm4198 = vcmp.lt.s32.totalorder %v1589, 0
        %v4199 = vand.u32 %v1589, 2139095040
        %v4200 = vshrl.u32 %v4199, 23
        %v4201 = vsub.s32 %v4200, 127
        %v4202 = vand.u32 2147483647, %v1589
        %v4203 = vand.u32 %v4202, 8388607
        %v4204 = vor.u32 %v4203, 8388608
        %v4205 = vsub.s32 0, %v4204
        %v4206 = vadd.s32 %v4201, 1
        %vm4207 = vcmp.gt.s32.totalorder %v4206, 0
        %v4208 = vsel %vm4207, %v4206, 0
        %v4209 = vshrl.u32 %v4208, 5
        %v4210 = vand.u32 %v4208, 31
        %v4211 = vsub.s32 32, %v4210
        %v4212 = vshrl.u32 683565275, %v4211
        %v4213 = vshll.u32 683565275, %v4210
        %v4214 = vshrl.u32 2475754826, %v4211
        %v4215 = vor.u32 %v4213, %v4214
        %v4216 = vshll.u32 2475754826, %v4210
        %v4217 = vshrl.u32 2131351028, %v4211
        %v4218 = vor.u32 %v4216, %v4217
        %v4219 = vshll.u32 2131351028, %v4210
        %v4220 = vshrl.u32 2102212464, %v4211
        %v4221 = vor.u32 %v4219, %v4220
        %v4222 = vshll.u32 2102212464, %v4210
        %v4223 = vshrl.u32 920167782, %v4211
        %v4224 = vor.u32 %v4222, %v4223
        %v4225 = vshll.u32 920167782, %v4210
        %v4226 = vshrl.u32 1326507024, %v4211
        %v4227 = vor.u32 %v4225, %v4226
        %vm4228 = vcmp.lt.s32.totalorder %v4209, 1
        %vm4229 = vcmp.lt.s32.totalorder %v4209, 2
        %vm4230 = vcmp.lt.s32.totalorder %v4209, 3
        %vm4231 = vcmp.lt.s32.totalorder %v4209, 4
        %v4232 = vsel %vm4228, %v4212, %v4215
        %v4233 = vsel %vm4231, %v4221, 2102212464
        %v4234 = vsel %vm4230, %v4218, %v4233
        %v4235 = vsel %vm4229, %v4232, %v4234
        %v4236 = vsel %vm4228, %v4215, %v4218
        %v4237 = vsel %vm4231, %v4224, 920167782
        %v4238 = vsel %vm4230, %v4221, %v4237
        %v4239 = vsel %vm4229, %v4236, %v4238
        %v4240 = vsel %vm4228, %v4218, %v4221
        %v4241 = vsel %vm4231, %v4227, 1326507024
        %v4242 = vsel %vm4230, %v4224, %v4241
        %v4243 = vsel %vm4229, %v4240, %v4242
        %v4244 = vshll.u32 %v4204, 8
        %v4245 = vmul.u32.u64.compose %v4244, %v4243
        %v4246 = vextract.low.u32 %v4245
        %v4247 = vextract.high.u32 %v4245
        %v4248 = vmul.u32.u64.compose %v4244, %v4239
        %v4249 = vextract.low.u32 %v4248
        %v4250 = vextract.high.u32 %v4248
        %v4251 = vmul.u32 %v4244, %v4235
        %v4252 = vadd.s32 %v4247, %v4249
        %vm4253 = vc.u32 %v4247, %v4249
        %v4254 = vadd.s32 %v4250, 1
        %v4255 = vsel %vm4253, %v4254, %v4250
        %v4256 = vadd.s32 %v4251, %v4255
        %v4257 = vadd.s32 %v4256, 536870912
        %v4258 = vshrl.u32 %v4257, 30
        %v4259 = vshll.u32 %v4258, 30
        %v4260 = vsub.s32 %v4256, %v4259
        %vm4261 = vcmp.lt.s32.totalorder %v4260, 0
        %v4262 = vsub.s32 0, %v4260
        %v4263 = vsel %vm4261, %v4262, %v4260
        %v4264 = vclz %v4263
        %v4265 = vsub.s32 %v4264, 2
        %vm4266 = vcmp.gt.s32.totalorder 0, %v4265
        %v4267 = vsel %vm4266, 0, %v4265
        %v4268 = vsub.s32 32, %v4267
        %v4269 = vshll.u32 %v4260, %v4267
        %v4270 = vshrl.u32 %v4252, %v4268
        %v4271 = vor.u32 %v4269, %v4270
        %v4272 = vsub.s32 4294967266, %v4267
        %v4273 = vadd.s32 %v4272, 127
        %v4274 = vshll.u32 %v4273, 23
        %v4275 = vor.u32 4788187, %v4274
        %v4276 = vand.u32 2147483647, %v4275
        %v4278 = vcvt.s32.f32 %v4271
        %v4279 = vmul.f32 %v4278, %v4276
        %v4280 = vxor.u32 %v4279, 2147483648
        %v4281 = vsel %vm4198, %v4280, %v4279
        %v4282 = vsub.s32 4, %v4258
        %v4283 = vsel %vm4198, %v4282, %v4258
        %v4284 = vsel %vm4197, %v1589, %v4281
        %v4285 = vsel %vm4197, 0, %v4283
        %v4286 = vcosq.f32.pop %v4284
        %v4287 = vsinq.f32.pop %v4284
        %vm4288 = vweird.f32 %v1589
        %v4289 = vadd.s32 %v4285, 3
        %v4290 = vand.u32 %v4289, 3
        %vm4291 = vcmp.lt.s32.totalorder %v4290, 2
        %vm4292 = vcmp.eq.s32.totalorder %v4290, 0
        %v4293 = vxor.u32 %v4287, 2147483648
        %v4294 = vsel %vm4292, %v4286, %v4293
        %vm4295 = vcmp.eq.s32.totalorder %v4290, 2
        %v4296 = vxor.u32 %v4286, 2147483648
        %v4297 = vsel %vm4295, %v4296, %v4287
        %v4298 = vsel %vm4291, %v4294, %v4297
        %v4299 = vsel %vm4288, nan, %v4298
        %v4300 = vand.u32 2147483647, %v1590
        %vm4301 = vcmp.le.f32.partialorder %v4300, 0.7853982
        %vm4302 = vcmp.lt.s32.totalorder %v1590, 0
        %v4303 = vand.u32 %v1590, 2139095040
        %v4304 = vshrl.u32 %v4303, 23
        %v4305 = vsub.s32 %v4304, 127
        %v4306 = vand.u32 2147483647, %v1590
        %v4307 = vand.u32 %v4306, 8388607
        %v4308 = vor.u32 %v4307, 8388608
        %v4309 = vsub.s32 0, %v4308
        %v4310 = vadd.s32 %v4305, 1
        %vm4311 = vcmp.gt.s32.totalorder %v4310, 0
        %v4312 = vsel %vm4311, %v4310, 0
        %v4313 = vshrl.u32 %v4312, 5
        %v4314 = vand.u32 %v4312, 31
        %v4315 = vsub.s32 32, %v4314
        %v4316 = vshrl.u32 683565275, %v4315
        %v4317 = vshll.u32 683565275, %v4314
        %v4318 = vshrl.u32 2475754826, %v4315
        %v4319 = vor.u32 %v4317, %v4318
        %v4320 = vshll.u32 2475754826, %v4314
        %v4321 = vshrl.u32 2131351028, %v4315
        %v4322 = vor.u32 %v4320, %v4321
        %v4323 = vshll.u32 2131351028, %v4314
        %v4324 = vshrl.u32 2102212464, %v4315
        %v4325 = vor.u32 %v4323, %v4324
        %v4326 = vshll.u32 2102212464, %v4314
        %v4327 = vshrl.u32 920167782, %v4315
        %v4328 = vor.u32 %v4326, %v4327
        %v4329 = vshll.u32 920167782, %v4314
        %v4330 = vshrl.u32 1326507024, %v4315
        %v4331 = vor.u32 %v4329, %v4330
        %vm4332 = vcmp.lt.s32.totalorder %v4313, 1
        %vm4333 = vcmp.lt.s32.totalorder %v4313, 2
        %vm4334 = vcmp.lt.s32.totalorder %v4313, 3
        %vm4335 = vcmp.lt.s32.totalorder %v4313, 4
        %v4336 = vsel %vm4332, %v4316, %v4319
        %v4337 = vsel %vm4335, %v4325, 2102212464
        %v4338 = vsel %vm4334, %v4322, %v4337
        %v4339 = vsel %vm4333, %v4336, %v4338
        %v4340 = vsel %vm4332, %v4319, %v4322
        %v4341 = vsel %vm4335, %v4328, 920167782
        %v4342 = vsel %vm4334, %v4325, %v4341
        %v4343 = vsel %vm4333, %v4340, %v4342
        %v4344 = vsel %vm4332, %v4322, %v4325
        %v4345 = vsel %vm4335, %v4331, 1326507024
        %v4346 = vsel %vm4334, %v4328, %v4345
        %v4347 = vsel %vm4333, %v4344, %v4346
        %v4348 = vshll.u32 %v4308, 8
        %v4349 = vmul.u32.u64.compose %v4348, %v4347
        %v4350 = vextract.low.u32 %v4349
        %v4351 = vextract.high.u32 %v4349
        %v4352 = vmul.u32.u64.compose %v4348, %v4343
        %v4353 = vextract.low.u32 %v4352
        %v4354 = vextract.high.u32 %v4352
        %v4355 = vmul.u32 %v4348, %v4339
        %v4356 = vadd.s32 %v4351, %v4353
        %vm4357 = vc.u32 %v4351, %v4353
        %v4358 = vadd.s32 %v4354, 1
        %v4359 = vsel %vm4357, %v4358, %v4354
        %v4360 = vadd.s32 %v4355, %v4359
        %v4361 = vadd.s32 %v4360, 536870912
        %v4362 = vshrl.u32 %v4361, 30
        %v4363 = vshll.u32 %v4362, 30
        %v4364 = vsub.s32 %v4360, %v4363
        %vm4365 = vcmp.lt.s32.totalorder %v4364, 0
        %v4366 = vsub.s32 0, %v4364
        %v4367 = vsel %vm4365, %v4366, %v4364
        %v4368 = vclz %v4367
        %v4369 = vsub.s32 %v4368, 2
        %vm4370 = vcmp.gt.s32.totalorder 0, %v4369
        %v4371 = vsel %vm4370, 0, %v4369
        %v4372 = vsub.s32 32, %v4371
        %v4373 = vshll.u32 %v4364, %v4371
        %v4374 = vshrl.u32 %v4356, %v4372
        %v4375 = vor.u32 %v4373, %v4374
        %v4376 = vsub.s32 4294967266, %v4371
        %v4377 = vadd.s32 %v4376, 127
        %v4378 = vshll.u32 %v4377, 23
        %v4379 = vor.u32 4788187, %v4378
        %v4380 = vand.u32 2147483647, %v4379
        %v4382 = vcvt.s32.f32 %v4375
        %v4383 = vmul.f32 %v4382, %v4380
        %v4384 = vxor.u32 %v4383, 2147483648
        %v4385 = vsel %vm4302, %v4384, %v4383
        %v4386 = vsub.s32 4, %v4362
        %v4387 = vsel %vm4302, %v4386, %v4362
        %v4388 = vsel %vm4301, %v1590, %v4385
        %v4389 = vsel %vm4301, 0, %v4387
        %v4390 = vcosq.f32.pop %v4388
        %v4391 = vsinq.f32.pop %v4388
        %vm4392 = vweird.f32 %v1590
        %v4393 = vadd.s32 %v4389, 3
        %v4394 = vand.u32 %v4393, 3
        %vm4395 = vcmp.lt.s32.totalorder %v4394, 2
        %vm4396 = vcmp.eq.s32.totalorder %v4394, 0
        %v4397 = vxor.u32 %v4391, 2147483648
        %v4398 = vsel %vm4396, %v4390, %v4397
        %vm4399 = vcmp.eq.s32.totalorder %v4394, 2
        %v4400 = vxor.u32 %v4390, 2147483648
        %v4401 = vsel %vm4399, %v4400, %v4391
        %v4402 = vsel %vm4395, %v4398, %v4401
        %v4403 = vsel %vm4392, nan, %v4402
        %v4404 = vand.u32 2147483647, %v1591
        %vm4405 = vcmp.le.f32.partialorder %v4404, 0.7853982
        %vm4406 = vcmp.lt.s32.totalorder %v1591, 0
        %v4407 = vand.u32 %v1591, 2139095040
        %v4408 = vshrl.u32 %v4407, 23
        %v4409 = vsub.s32 %v4408, 127
        %v4410 = vand.u32 2147483647, %v1591
        %v4411 = vand.u32 %v4410, 8388607
        %v4412 = vor.u32 %v4411, 8388608
        %v4413 = vsub.s32 0, %v4412
        %v4414 = vadd.s32 %v4409, 1
        %vm4415 = vcmp.gt.s32.totalorder %v4414, 0
        %v4416 = vsel %vm4415, %v4414, 0
        %v4417 = vshrl.u32 %v4416, 5
        %v4418 = vand.u32 %v4416, 31
        %v4419 = vsub.s32 32, %v4418
        %v4420 = vshrl.u32 683565275, %v4419
        %v4421 = vshll.u32 683565275, %v4418
        %v4422 = vshrl.u32 2475754826, %v4419
        %v4423 = vor.u32 %v4421, %v4422
        %v4424 = vshll.u32 2475754826, %v4418
        %v4425 = vshrl.u32 2131351028, %v4419
        %v4426 = vor.u32 %v4424, %v4425
        %v4427 = vshll.u32 2131351028, %v4418
        %v4428 = vshrl.u32 2102212464, %v4419
        %v4429 = vor.u32 %v4427, %v4428
        %v4430 = vshll.u32 2102212464, %v4418
        %v4431 = vshrl.u32 920167782, %v4419
        %v4432 = vor.u32 %v4430, %v4431
        %v4433 = vshll.u32 920167782, %v4418
        %v4434 = vshrl.u32 1326507024, %v4419
        %v4435 = vor.u32 %v4433, %v4434
        %vm4436 = vcmp.lt.s32.totalorder %v4417, 1
        %vm4437 = vcmp.lt.s32.totalorder %v4417, 2
        %vm4438 = vcmp.lt.s32.totalorder %v4417, 3
        %vm4439 = vcmp.lt.s32.totalorder %v4417, 4
        %v4440 = vsel %vm4436, %v4420, %v4423
        %v4441 = vsel %vm4439, %v4429, 2102212464
        %v4442 = vsel %vm4438, %v4426, %v4441
        %v4443 = vsel %vm4437, %v4440, %v4442
        %v4444 = vsel %vm4436, %v4423, %v4426
        %v4445 = vsel %vm4439, %v4432, 920167782
        %v4446 = vsel %vm4438, %v4429, %v4445
        %v4447 = vsel %vm4437, %v4444, %v4446
        %v4448 = vsel %vm4436, %v4426, %v4429
        %v4449 = vsel %vm4439, %v4435, 1326507024
        %v4450 = vsel %vm4438, %v4432, %v4449
        %v4451 = vsel %vm4437, %v4448, %v4450
        %v4452 = vshll.u32 %v4412, 8
        %v4453 = vmul.u32.u64.compose %v4452, %v4451
        %v4454 = vextract.low.u32 %v4453
        %v4455 = vextract.high.u32 %v4453
        %v4456 = vmul.u32.u64.compose %v4452, %v4447
        %v4457 = vextract.low.u32 %v4456
        %v4458 = vextract.high.u32 %v4456
        %v4459 = vmul.u32 %v4452, %v4443
        %v4460 = vadd.s32 %v4455, %v4457
        %vm4461 = vc.u32 %v4455, %v4457
        %v4462 = vadd.s32 %v4458, 1
        %v4463 = vsel %vm4461, %v4462, %v4458
        %v4464 = vadd.s32 %v4459, %v4463
        %v4465 = vadd.s32 %v4464, 536870912
        %v4466 = vshrl.u32 %v4465, 30
        %v4467 = vshll.u32 %v4466, 30
        %v4468 = vsub.s32 %v4464, %v4467
        %vm4469 = vcmp.lt.s32.totalorder %v4468, 0
        %v4470 = vsub.s32 0, %v4468
        %v4471 = vsel %vm4469, %v4470, %v4468
        %v4472 = vclz %v4471
        %v4473 = vsub.s32 %v4472, 2
        %vm4474 = vcmp.gt.s32.totalorder 0, %v4473
        %v4475 = vsel %vm4474, 0, %v4473
        %v4476 = vsub.s32 32, %v4475
        %v4477 = vshll.u32 %v4468, %v4475
        %v4478 = vshrl.u32 %v4460, %v4476
        %v4479 = vor.u32 %v4477, %v4478
        %v4480 = vsub.s32 4294967266, %v4475
        %v4481 = vadd.s32 %v4480, 127
        %v4482 = vshll.u32 %v4481, 23
        %v4483 = vor.u32 4788187, %v4482
        %v4484 = vand.u32 2147483647, %v4483
        %v4486 = vcvt.s32.f32 %v4479
        %v4487 = vmul.f32 %v4486, %v4484
        %v4488 = vxor.u32 %v4487, 2147483648
        %v4489 = vsel %vm4406, %v4488, %v4487
        %v4490 = vsub.s32 4, %v4466
        %v4491 = vsel %vm4406, %v4490, %v4466
        %v4492 = vsel %vm4405, %v1591, %v4489
        %v4493 = vsel %vm4405, 0, %v4491
        %v4494 = vcosq.f32.pop %v4492
        %v4495 = vsinq.f32.pop %v4492
        %vm4496 = vweird.f32 %v1591
        %v4497 = vadd.s32 %v4493, 3
        %v4498 = vand.u32 %v4497, 3
        %vm4499 = vcmp.lt.s32.totalorder %v4498, 2
        %vm4500 = vcmp.eq.s32.totalorder %v4498, 0
        %v4501 = vxor.u32 %v4495, 2147483648
        %v4502 = vsel %vm4500, %v4494, %v4501
        %vm4503 = vcmp.eq.s32.totalorder %v4498, 2
        %v4504 = vxor.u32 %v4494, 2147483648
        %v4505 = vsel %vm4503, %v4504, %v4495
        %v4506 = vsel %vm4499, %v4502, %v4505
        %v4507 = vsel %vm4496, nan, %v4506
        %v4508 = vand.u32 2147483647, %v1592
        %vm4509 = vcmp.le.f32.partialorder %v4508, 0.7853982
        %vm4510 = vcmp.lt.s32.totalorder %v1592, 0
        %v4511 = vand.u32 %v1592, 2139095040
        %v4512 = vshrl.u32 %v4511, 23
        %v4513 = vsub.s32 %v4512, 127
        %v4514 = vand.u32 2147483647, %v1592
        %v4515 = vand.u32 %v4514, 8388607
        %v4516 = vor.u32 %v4515, 8388608
        %v4517 = vsub.s32 0, %v4516
        %v4518 = vadd.s32 %v4513, 1
        %vm4519 = vcmp.gt.s32.totalorder %v4518, 0
        %v4520 = vsel %vm4519, %v4518, 0
        %v4521 = vshrl.u32 %v4520, 5
        %v4522 = vand.u32 %v4520, 31
        %v4523 = vsub.s32 32, %v4522
        %v4524 = vshrl.u32 683565275, %v4523
        %v4525 = vshll.u32 683565275, %v4522
        %v4526 = vshrl.u32 2475754826, %v4523
        %v4527 = vor.u32 %v4525, %v4526
        %v4528 = vshll.u32 2475754826, %v4522
        %v4529 = vshrl.u32 2131351028, %v4523
        %v4530 = vor.u32 %v4528, %v4529
        %v4531 = vshll.u32 2131351028, %v4522
        %v4532 = vshrl.u32 2102212464, %v4523
        %v4533 = vor.u32 %v4531, %v4532
        %v4534 = vshll.u32 2102212464, %v4522
        %v4535 = vshrl.u32 920167782, %v4523
        %v4536 = vor.u32 %v4534, %v4535
        %v4537 = vshll.u32 920167782, %v4522
        %v4538 = vshrl.u32 1326507024, %v4523
        %v4539 = vor.u32 %v4537, %v4538
        %vm4540 = vcmp.lt.s32.totalorder %v4521, 1
        %vm4541 = vcmp.lt.s32.totalorder %v4521, 2
        %vm4542 = vcmp.lt.s32.totalorder %v4521, 3
        %vm4543 = vcmp.lt.s32.totalorder %v4521, 4
        %v4544 = vsel %vm4540, %v4524, %v4527
        %v4545 = vsel %vm4543, %v4533, 2102212464
        %v4546 = vsel %vm4542, %v4530, %v4545
        %v4547 = vsel %vm4541, %v4544, %v4546
        %v4548 = vsel %vm4540, %v4527, %v4530
        %v4549 = vsel %vm4543, %v4536, 920167782
        %v4550 = vsel %vm4542, %v4533, %v4549
        %v4551 = vsel %vm4541, %v4548, %v4550
        %v4552 = vsel %vm4540, %v4530, %v4533
        %v4553 = vsel %vm4543, %v4539, 1326507024
        %v4554 = vsel %vm4542, %v4536, %v4553
        %v4555 = vsel %vm4541, %v4552, %v4554
        %v4556 = vshll.u32 %v4516, 8
        %v4557 = vmul.u32.u64.compose %v4556, %v4555
        %v4558 = vextract.low.u32 %v4557
        %v4559 = vextract.high.u32 %v4557
        %v4560 = vmul.u32.u64.compose %v4556, %v4551
        %v4561 = vextract.low.u32 %v4560
        %v4562 = vextract.high.u32 %v4560
        %v4563 = vmul.u32 %v4556, %v4547
        %v4564 = vadd.s32 %v4559, %v4561
        %vm4565 = vc.u32 %v4559, %v4561
        %v4566 = vadd.s32 %v4562, 1
        %v4567 = vsel %vm4565, %v4566, %v4562
        %v4568 = vadd.s32 %v4563, %v4567
        %v4569 = vadd.s32 %v4568, 536870912
        %v4570 = vshrl.u32 %v4569, 30
        %v4571 = vshll.u32 %v4570, 30
        %v4572 = vsub.s32 %v4568, %v4571
        %vm4573 = vcmp.lt.s32.totalorder %v4572, 0
        %v4574 = vsub.s32 0, %v4572
        %v4575 = vsel %vm4573, %v4574, %v4572
        %v4576 = vclz %v4575
        %v4577 = vsub.s32 %v4576, 2
        %vm4578 = vcmp.gt.s32.totalorder 0, %v4577
        %v4579 = vsel %vm4578, 0, %v4577
        %v4580 = vsub.s32 32, %v4579
        %v4581 = vshll.u32 %v4572, %v4579
        %v4582 = vshrl.u32 %v4564, %v4580
        %v4583 = vor.u32 %v4581, %v4582
        %v4584 = vsub.s32 4294967266, %v4579
        %v4585 = vadd.s32 %v4584, 127
        %v4586 = vshll.u32 %v4585, 23
        %v4587 = vor.u32 4788187, %v4586
        %v4588 = vand.u32 2147483647, %v4587
        %v4590 = vcvt.s32.f32 %v4583
        %v4591 = vmul.f32 %v4590, %v4588
        %v4592 = vxor.u32 %v4591, 2147483648
        %v4593 = vsel %vm4510, %v4592, %v4591
        %v4594 = vsub.s32 4, %v4570
        %v4595 = vsel %vm4510, %v4594, %v4570
        %v4596 = vsel %vm4509, %v1592, %v4593
        %v4597 = vsel %vm4509, 0, %v4595
        %v4598 = vcosq.f32.pop %v4596
        %v4599 = vsinq.f32.pop %v4596
        %vm4600 = vweird.f32 %v1592
        %v4601 = vadd.s32 %v4597, 3
        %v4602 = vand.u32 %v4601, 3
        %vm4603 = vcmp.lt.s32.totalorder %v4602, 2
        %vm4604 = vcmp.eq.s32.totalorder %v4602, 0
        %v4605 = vxor.u32 %v4599, 2147483648
        %v4606 = vsel %vm4604, %v4598, %v4605
        %vm4607 = vcmp.eq.s32.totalorder %v4602, 2
        %v4608 = vxor.u32 %v4598, 2147483648
        %v4609 = vsel %vm4607, %v4608, %v4599
        %v4610 = vsel %vm4603, %v4606, %v4609
        %v4611 = vsel %vm4600, nan, %v4610
        %v4612 = vand.u32 2147483647, %v1593
        %vm4613 = vcmp.le.f32.partialorder %v4612, 0.7853982
        %vm4614 = vcmp.lt.s32.totalorder %v1593, 0
        %v4615 = vand.u32 %v1593, 2139095040
        %v4616 = vshrl.u32 %v4615, 23
        %v4617 = vsub.s32 %v4616, 127
        %v4618 = vand.u32 2147483647, %v1593
        %v4619 = vand.u32 %v4618, 8388607
        %v4620 = vor.u32 %v4619, 8388608
        %v4621 = vsub.s32 0, %v4620
        %v4622 = vadd.s32 %v4617, 1
        %vm4623 = vcmp.gt.s32.totalorder %v4622, 0
        %v4624 = vsel %vm4623, %v4622, 0
        %v4625 = vshrl.u32 %v4624, 5
        %v4626 = vand.u32 %v4624, 31
        %v4627 = vsub.s32 32, %v4626
        %v4628 = vshrl.u32 683565275, %v4627
        %v4629 = vshll.u32 683565275, %v4626
        %v4630 = vshrl.u32 2475754826, %v4627
        %v4631 = vor.u32 %v4629, %v4630
        %v4632 = vshll.u32 2475754826, %v4626
        %v4633 = vshrl.u32 2131351028, %v4627
        %v4634 = vor.u32 %v4632, %v4633
        %v4635 = vshll.u32 2131351028, %v4626
        %v4636 = vshrl.u32 2102212464, %v4627
        %v4637 = vor.u32 %v4635, %v4636
        %v4638 = vshll.u32 2102212464, %v4626
        %v4639 = vshrl.u32 920167782, %v4627
        %v4640 = vor.u32 %v4638, %v4639
        %v4641 = vshll.u32 920167782, %v4626
        %v4642 = vshrl.u32 1326507024, %v4627
        %v4643 = vor.u32 %v4641, %v4642
        %vm4644 = vcmp.lt.s32.totalorder %v4625, 1
        %vm4645 = vcmp.lt.s32.totalorder %v4625, 2
        %vm4646 = vcmp.lt.s32.totalorder %v4625, 3
        %vm4647 = vcmp.lt.s32.totalorder %v4625, 4
        %v4648 = vsel %vm4644, %v4628, %v4631
        %v4649 = vsel %vm4647, %v4637, 2102212464
        %v4650 = vsel %vm4646, %v4634, %v4649
        %v4651 = vsel %vm4645, %v4648, %v4650
        %v4652 = vsel %vm4644, %v4631, %v4634
        %v4653 = vsel %vm4647, %v4640, 920167782
        %v4654 = vsel %vm4646, %v4637, %v4653
        %v4655 = vsel %vm4645, %v4652, %v4654
        %v4656 = vsel %vm4644, %v4634, %v4637
        %v4657 = vsel %vm4647, %v4643, 1326507024
        %v4658 = vsel %vm4646, %v4640, %v4657
        %v4659 = vsel %vm4645, %v4656, %v4658
        %v4660 = vshll.u32 %v4620, 8
        %v4661 = vmul.u32.u64.compose %v4660, %v4659
        %v4662 = vextract.low.u32 %v4661
        %v4663 = vextract.high.u32 %v4661
        %v4664 = vmul.u32.u64.compose %v4660, %v4655
        %v4665 = vextract.low.u32 %v4664
        %v4666 = vextract.high.u32 %v4664
        %v4667 = vmul.u32 %v4660, %v4651
        %v4668 = vadd.s32 %v4663, %v4665
        %vm4669 = vc.u32 %v4663, %v4665
        %v4670 = vadd.s32 %v4666, 1
        %v4671 = vsel %vm4669, %v4670, %v4666
        %v4672 = vadd.s32 %v4667, %v4671
        %v4673 = vadd.s32 %v4672, 536870912
        %v4674 = vshrl.u32 %v4673, 30
        %v4675 = vshll.u32 %v4674, 30
        %v4676 = vsub.s32 %v4672, %v4675
        %vm4677 = vcmp.lt.s32.totalorder %v4676, 0
        %v4678 = vsub.s32 0, %v4676
        %v4679 = vsel %vm4677, %v4678, %v4676
        %v4680 = vclz %v4679
        %v4681 = vsub.s32 %v4680, 2
        %vm4682 = vcmp.gt.s32.totalorder 0, %v4681
        %v4683 = vsel %vm4682, 0, %v4681
        %v4684 = vsub.s32 32, %v4683
        %v4685 = vshll.u32 %v4676, %v4683
        %v4686 = vshrl.u32 %v4668, %v4684
        %v4687 = vor.u32 %v4685, %v4686
        %v4688 = vsub.s32 4294967266, %v4683
        %v4689 = vadd.s32 %v4688, 127
        %v4690 = vshll.u32 %v4689, 23
        %v4691 = vor.u32 4788187, %v4690
        %v4692 = vand.u32 2147483647, %v4691
        %v4694 = vcvt.s32.f32 %v4687
        %v4695 = vmul.f32 %v4694, %v4692
        %v4696 = vxor.u32 %v4695, 2147483648
        %v4697 = vsel %vm4614, %v4696, %v4695
        %v4698 = vsub.s32 4, %v4674
        %v4699 = vsel %vm4614, %v4698, %v4674
        %v4700 = vsel %vm4613, %v1593, %v4697
        %v4701 = vsel %vm4613, 0, %v4699
        %v4702 = vcosq.f32.pop %v4700
        %v4703 = vsinq.f32.pop %v4700
        %vm4704 = vweird.f32 %v1593
        %v4705 = vadd.s32 %v4701, 3
        %v4706 = vand.u32 %v4705, 3
        %vm4707 = vcmp.lt.s32.totalorder %v4706, 2
        %vm4708 = vcmp.eq.s32.totalorder %v4706, 0
        %v4709 = vxor.u32 %v4703, 2147483648
        %v4710 = vsel %vm4708, %v4702, %v4709
        %vm4711 = vcmp.eq.s32.totalorder %v4706, 2
        %v4712 = vxor.u32 %v4702, 2147483648
        %v4713 = vsel %vm4711, %v4712, %v4703
        %v4714 = vsel %vm4707, %v4710, %v4713
        %v4715 = vsel %vm4704, nan, %v4714
        %v4716 = vand.u32 2147483647, %v1594
        %vm4717 = vcmp.le.f32.partialorder %v4716, 0.7853982
        %vm4718 = vcmp.lt.s32.totalorder %v1594, 0
        %v4719 = vand.u32 %v1594, 2139095040
        %v4720 = vshrl.u32 %v4719, 23
        %v4721 = vsub.s32 %v4720, 127
        %v4722 = vand.u32 2147483647, %v1594
        %v4723 = vand.u32 %v4722, 8388607
        %v4724 = vor.u32 %v4723, 8388608
        %v4725 = vsub.s32 0, %v4724
        %v4726 = vadd.s32 %v4721, 1
        %vm4727 = vcmp.gt.s32.totalorder %v4726, 0
        %v4728 = vsel %vm4727, %v4726, 0
        %v4729 = vshrl.u32 %v4728, 5
        %v4730 = vand.u32 %v4728, 31
        %v4731 = vsub.s32 32, %v4730
        %v4732 = vshrl.u32 683565275, %v4731
        %v4733 = vshll.u32 683565275, %v4730
        %v4734 = vshrl.u32 2475754826, %v4731
        %v4735 = vor.u32 %v4733, %v4734
        %v4736 = vshll.u32 2475754826, %v4730
        %v4737 = vshrl.u32 2131351028, %v4731
        %v4738 = vor.u32 %v4736, %v4737
        %v4739 = vshll.u32 2131351028, %v4730
        %v4740 = vshrl.u32 2102212464, %v4731
        %v4741 = vor.u32 %v4739, %v4740
        %v4742 = vshll.u32 2102212464, %v4730
        %v4743 = vshrl.u32 920167782, %v4731
        %v4744 = vor.u32 %v4742, %v4743
        %v4745 = vshll.u32 920167782, %v4730
        %v4746 = vshrl.u32 1326507024, %v4731
        %v4747 = vor.u32 %v4745, %v4746
        %vm4748 = vcmp.lt.s32.totalorder %v4729, 1
        %vm4749 = vcmp.lt.s32.totalorder %v4729, 2
        %vm4750 = vcmp.lt.s32.totalorder %v4729, 3
        %vm4751 = vcmp.lt.s32.totalorder %v4729, 4
        %v4752 = vsel %vm4748, %v4732, %v4735
        %v4753 = vsel %vm4751, %v4741, 2102212464
        %v4754 = vsel %vm4750, %v4738, %v4753
        %v4755 = vsel %vm4749, %v4752, %v4754
        %v4756 = vsel %vm4748, %v4735, %v4738
        %v4757 = vsel %vm4751, %v4744, 920167782
        %v4758 = vsel %vm4750, %v4741, %v4757
        %v4759 = vsel %vm4749, %v4756, %v4758
        %v4760 = vsel %vm4748, %v4738, %v4741
        %v4761 = vsel %vm4751, %v4747, 1326507024
        %v4762 = vsel %vm4750, %v4744, %v4761
        %v4763 = vsel %vm4749, %v4760, %v4762
        %v4764 = vshll.u32 %v4724, 8
        %v4765 = vmul.u32.u64.compose %v4764, %v4763
        %v4766 = vextract.low.u32 %v4765
        %v4767 = vextract.high.u32 %v4765
        %v4768 = vmul.u32.u64.compose %v4764, %v4759
        %v4769 = vextract.low.u32 %v4768
        %v4770 = vextract.high.u32 %v4768
        %v4771 = vmul.u32 %v4764, %v4755
        %v4772 = vadd.s32 %v4767, %v4769
        %vm4773 = vc.u32 %v4767, %v4769
        %v4774 = vadd.s32 %v4770, 1
        %v4775 = vsel %vm4773, %v4774, %v4770
        %v4776 = vadd.s32 %v4771, %v4775
        %v4777 = vadd.s32 %v4776, 536870912
        %v4778 = vshrl.u32 %v4777, 30
        %v4779 = vshll.u32 %v4778, 30
        %v4780 = vsub.s32 %v4776, %v4779
        %vm4781 = vcmp.lt.s32.totalorder %v4780, 0
        %v4782 = vsub.s32 0, %v4780
        %v4783 = vsel %vm4781, %v4782, %v4780
        %v4784 = vclz %v4783
        %v4785 = vsub.s32 %v4784, 2
        %vm4786 = vcmp.gt.s32.totalorder 0, %v4785
        %v4787 = vsel %vm4786, 0, %v4785
        %v4788 = vsub.s32 32, %v4787
        %v4789 = vshll.u32 %v4780, %v4787
        %v4790 = vshrl.u32 %v4772, %v4788
        %v4791 = vor.u32 %v4789, %v4790
        %v4792 = vsub.s32 4294967266, %v4787
        %v4793 = vadd.s32 %v4792, 127
        %v4794 = vshll.u32 %v4793, 23
        %v4795 = vor.u32 4788187, %v4794
        %v4796 = vand.u32 2147483647, %v4795
        %v4798 = vcvt.s32.f32 %v4791
        %v4799 = vmul.f32 %v4798, %v4796
        %v4800 = vxor.u32 %v4799, 2147483648
        %v4801 = vsel %vm4718, %v4800, %v4799
        %v4802 = vsub.s32 4, %v4778
        %v4803 = vsel %vm4718, %v4802, %v4778
        %v4804 = vsel %vm4717, %v1594, %v4801
        %v4805 = vsel %vm4717, 0, %v4803
        %v4806 = vcosq.f32.pop %v4804
        %v4807 = vsinq.f32.pop %v4804
        %vm4808 = vweird.f32 %v1594
        %v4809 = vadd.s32 %v4805, 3
        %v4810 = vand.u32 %v4809, 3
        %vm4811 = vcmp.lt.s32.totalorder %v4810, 2
        %vm4812 = vcmp.eq.s32.totalorder %v4810, 0
        %v4813 = vxor.u32 %v4807, 2147483648
        %v4814 = vsel %vm4812, %v4806, %v4813
        %vm4815 = vcmp.eq.s32.totalorder %v4810, 2
        %v4816 = vxor.u32 %v4806, 2147483648
        %v4817 = vsel %vm4815, %v4816, %v4807
        %v4818 = vsel %vm4811, %v4814, %v4817
        %v4819 = vsel %vm4808, nan, %v4818
        %v4820 = vand.u32 2147483647, %v1595
        %vm4821 = vcmp.le.f32.partialorder %v4820, 0.7853982
        %vm4822 = vcmp.lt.s32.totalorder %v1595, 0
        %v4823 = vand.u32 %v1595, 2139095040
        %v4824 = vshrl.u32 %v4823, 23
        %v4825 = vsub.s32 %v4824, 127
        %v4826 = vand.u32 2147483647, %v1595
        %v4827 = vand.u32 %v4826, 8388607
        %v4828 = vor.u32 %v4827, 8388608
        %v4829 = vsub.s32 0, %v4828
        %v4830 = vadd.s32 %v4825, 1
        %vm4831 = vcmp.gt.s32.totalorder %v4830, 0
        %v4832 = vsel %vm4831, %v4830, 0
        %v4833 = vshrl.u32 %v4832, 5
        %v4834 = vand.u32 %v4832, 31
        %v4835 = vsub.s32 32, %v4834
        %v4836 = vshrl.u32 683565275, %v4835
        %v4837 = vshll.u32 683565275, %v4834
        %v4838 = vshrl.u32 2475754826, %v4835
        %v4839 = vor.u32 %v4837, %v4838
        %v4840 = vshll.u32 2475754826, %v4834
        %v4841 = vshrl.u32 2131351028, %v4835
        %v4842 = vor.u32 %v4840, %v4841
        %v4843 = vshll.u32 2131351028, %v4834
        %v4844 = vshrl.u32 2102212464, %v4835
        %v4845 = vor.u32 %v4843, %v4844
        %v4846 = vshll.u32 2102212464, %v4834
        %v4847 = vshrl.u32 920167782, %v4835
        %v4848 = vor.u32 %v4846, %v4847
        %v4849 = vshll.u32 920167782, %v4834
        %v4850 = vshrl.u32 1326507024, %v4835
        %v4851 = vor.u32 %v4849, %v4850
        %vm4852 = vcmp.lt.s32.totalorder %v4833, 1
        %vm4853 = vcmp.lt.s32.totalorder %v4833, 2
        %vm4854 = vcmp.lt.s32.totalorder %v4833, 3
        %vm4855 = vcmp.lt.s32.totalorder %v4833, 4
        %v4856 = vsel %vm4852, %v4836, %v4839
        %v4857 = vsel %vm4855, %v4845, 2102212464
        %v4858 = vsel %vm4854, %v4842, %v4857
        %v4859 = vsel %vm4853, %v4856, %v4858
        %v4860 = vsel %vm4852, %v4839, %v4842
        %v4861 = vsel %vm4855, %v4848, 920167782
        %v4862 = vsel %vm4854, %v4845, %v4861
        %v4863 = vsel %vm4853, %v4860, %v4862
        %v4864 = vsel %vm4852, %v4842, %v4845
        %v4865 = vsel %vm4855, %v4851, 1326507024
        %v4866 = vsel %vm4854, %v4848, %v4865
        %v4867 = vsel %vm4853, %v4864, %v4866
        %v4868 = vshll.u32 %v4828, 8
        %v4869 = vmul.u32.u64.compose %v4868, %v4867
        %v4870 = vextract.low.u32 %v4869
        %v4871 = vextract.high.u32 %v4869
        %v4872 = vmul.u32.u64.compose %v4868, %v4863
        %v4873 = vextract.low.u32 %v4872
        %v4874 = vextract.high.u32 %v4872
        %v4875 = vmul.u32 %v4868, %v4859
        %v4876 = vadd.s32 %v4871, %v4873
        %vm4877 = vc.u32 %v4871, %v4873
        %v4878 = vadd.s32 %v4874, 1
        %v4879 = vsel %vm4877, %v4878, %v4874
        %v4880 = vadd.s32 %v4875, %v4879
        %v4881 = vadd.s32 %v4880, 536870912
        %v4882 = vshrl.u32 %v4881, 30
        %v4883 = vshll.u32 %v4882, 30
        %v4884 = vsub.s32 %v4880, %v4883
        %vm4885 = vcmp.lt.s32.totalorder %v4884, 0
        %v4886 = vsub.s32 0, %v4884
        %v4887 = vsel %vm4885, %v4886, %v4884
        %v4888 = vclz %v4887
        %v4889 = vsub.s32 %v4888, 2
        %vm4890 = vcmp.gt.s32.totalorder 0, %v4889
        %v4891 = vsel %vm4890, 0, %v4889
        %v4892 = vsub.s32 32, %v4891
        %v4893 = vshll.u32 %v4884, %v4891
        %v4894 = vshrl.u32 %v4876, %v4892
        %v4895 = vor.u32 %v4893, %v4894
        %v4896 = vsub.s32 4294967266, %v4891
        %v4897 = vadd.s32 %v4896, 127
        %v4898 = vshll.u32 %v4897, 23
        %v4899 = vor.u32 4788187, %v4898
        %v4900 = vand.u32 2147483647, %v4899
        %v4902 = vcvt.s32.f32 %v4895
        %v4903 = vmul.f32 %v4902, %v4900
        %v4904 = vxor.u32 %v4903, 2147483648
        %v4905 = vsel %vm4822, %v4904, %v4903
        %v4906 = vsub.s32 4, %v4882
        %v4907 = vsel %vm4822, %v4906, %v4882
        %v4908 = vsel %vm4821, %v1595, %v4905
        %v4909 = vsel %vm4821, 0, %v4907
        %v4910 = vcosq.f32.pop %v4908
        %v4911 = vsinq.f32.pop %v4908
        %vm4912 = vweird.f32 %v1595
        %v4913 = vadd.s32 %v4909, 3
        %v4914 = vand.u32 %v4913, 3
        %vm4915 = vcmp.lt.s32.totalorder %v4914, 2
        %vm4916 = vcmp.eq.s32.totalorder %v4914, 0
        %v4917 = vxor.u32 %v4911, 2147483648
        %v4918 = vsel %vm4916, %v4910, %v4917
        %vm4919 = vcmp.eq.s32.totalorder %v4914, 2
        %v4920 = vxor.u32 %v4910, 2147483648
        %v4921 = vsel %vm4919, %v4920, %v4911
        %v4922 = vsel %vm4915, %v4918, %v4921
        %v4923 = vsel %vm4912, nan, %v4922
        %v4924 = vpack.c.bf16 %v1803, %v1699
        %v4925 = vpack.c.bf16 %v2011, %v1907
        %v4926 = vpack.c.bf16 %v2219, %v2115
        %v4927 = vpack.c.bf16 %v2427, %v2323
        %v4928 = vpack.c.bf16 %v2635, %v2531
        %v4929 = vpack.c.bf16 %v2843, %v2739
        %v4930 = vpack.c.bf16 %v3051, %v2947
        %v4931 = vpack.c.bf16 %v3259, %v3155
        %v4932 = vpack.c.bf16 %v3467, %v3363
        %v4933 = vpack.c.bf16 %v3675, %v3571
        %v4934 = vpack.c.bf16 %v3883, %v3779
        %v4935 = vpack.c.bf16 %v4091, %v3987
        %v4936 = vpack.c.bf16 %v4299, %v4195
        %v4937 = vpack.c.bf16 %v4507, %v4403
        %v4938 = vpack.c.bf16 %v4715, %v4611
        %v4939 = vpack.c.bf16 %v4923, %v4819
        %v4940 = vld [vmem:[%s3] sm:$0xf]
        %v4941 = vld [vmem:[%s3 + $0x4] sm:$0xf]
        %v4942 = vld [vmem:[%s3 + $0x8] sm:$0xf]
        %v4943 = vld [vmem:[%s3 + $0xc] sm:$0xf]
        %v4944 = vld [vmem:[%s3 + $0x10] sm:$0xf]
        %v4945 = vld [vmem:[%s3 + $0x14] sm:$0xf]
        %v4946 = vld [vmem:[%s3 + $0x18] sm:$0xf]
        %v4947 = vld [vmem:[%s3 + $0x1c] sm:$0xf]
        %v4948 = vld [vmem:[%s3 + $0x20] sm:$0xf]
        %v4949 = vld [vmem:[%s3 + $0x24] sm:$0xf]
        %v4950 = vld [vmem:[%s3 + $0x28] sm:$0xf]
        %v4951 = vld [vmem:[%s3 + $0x2c] sm:$0xf]
        %v4952 = vld [vmem:[%s3 + $0x30] sm:$0xf]
        %v4953 = vld [vmem:[%s3 + $0x34] sm:$0xf]
        %v4954 = vld [vmem:[%s3 + $0x38] sm:$0xf]
        %v4955 = vld [vmem:[%s3 + $0x3c] sm:$0xf]
        %v4956 = vld [vmem:[%s4] sm:$0x1]
        %v4958 = vlaneseq
        %v4959 = vshrl.u32 %v4958, 7
        %v4960 = vsub.s32 0, %v4959
        %v4961 = vrot.slane %v4956, %v4960
        %v4979 = vunpack.c.l.b16 %v4940
        %v4980 = vunpack.c.l.b16 %v4941
        %v4981 = vunpack.c.l.b16 %v4942
        %v4982 = vunpack.c.l.b16 %v4943
        %v4983 = vunpack.c.l.b16 %v4944
        %v4984 = vunpack.c.l.b16 %v4945
        %v4985 = vunpack.c.l.b16 %v4946
        %v4986 = vunpack.c.l.b16 %v4947
        %v4987 = vunpack.c.l.b16 %v4948
        %v4988 = vunpack.c.l.b16 %v4949
        %v4989 = vunpack.c.l.b16 %v4950
        %v4990 = vunpack.c.l.b16 %v4951
        %v4991 = vunpack.c.l.b16 %v4952
        %v4992 = vunpack.c.l.b16 %v4953
        %v4993 = vunpack.c.l.b16 %v4954
        %v4994 = vunpack.c.l.b16 %v4955
        %v4995 = vpack.c.b16 %v4980, %v4979
        %v4996 = vpack.c.b16 %v4982, %v4981
        %v4997 = vpack.c.b16 %v4984, %v4983
        %v4998 = vpack.c.b16 %v4986, %v4985
        %v4999 = vpack.c.b16 %v4988, %v4987
        %v5000 = vpack.c.b16 %v4990, %v4989
        %v5001 = vpack.c.b16 %v4992, %v4991
        %v5002 = vpack.c.b16 %v4994, %v4993
        %5011 = vmatprep.subr.bf16.mxu0 0
        %5012 = vmatpush1.bf16.msra.mxu0 %v4995
        %5013 = vmatprep.subr.bf16.mxu0 0
        %5014 = vmatpush1.bf16.msra.mxu0 %v4996
        %5015 = vmatprep.subr.bf16.mxu0 0
        %5016 = vmatpush1.bf16.msra.mxu0 %v4997
        %5017 = vmatprep.subr.bf16.mxu0 0
        %5018 = vmatpush1.bf16.msra.mxu0 %v4998
        %5019 = vmatprep.subr.bf16.mxu0 0
        %5020 = vmatpush1.bf16.msra.mxu0 %v4999
        %5021 = vmatprep.subr.bf16.mxu0 0
        %5022 = vmatpush1.bf16.msra.mxu0 %v5000
        %5023 = vmatprep.subr.bf16.mxu0 0
        %5024 = vmatpush1.bf16.msra.mxu0 %v5001
        %5025 = vmatprep.subr.bf16.mxu0 0
        %5026 = vmatpush1.bf16.msra.mxu0 %v5002
        %5027 = vmatprep.subr.bf16.mxu0 0
        %5028 = vmatpush1.bf16.msra.mxu0 0
        %5029 = vmatprep.subr.bf16.mxu0 0
        %5030 = vmatpush1.bf16.msra.mxu0 0
        %5031 = vmatprep.subr.bf16.mxu0 0
        %5032 = vmatpush1.bf16.msra.mxu0 0
        %5033 = vmatprep.subr.bf16.mxu0 0
        %5034 = vmatpush1.bf16.msra.mxu0 0
        %5035 = vmatprep.subr.bf16.mxu0 0
        %5036 = vmatpush1.bf16.msra.mxu0 0
        %5037 = vmatprep.subr.bf16.mxu0 0
        %5038 = vmatpush1.bf16.msra.mxu0 0
        %5039 = vmatprep.subr.bf16.mxu0 0
        %5040 = vmatpush1.bf16.msra.mxu0 0
        %5041 = vmatprep.subr.bf16.mxu0 0
        %5042 = vmatpush1.bf16.msra.mxu0 0
        %5043 = vmatprep.mubr.bf16.mxu0 0
        %5044 = vmatmul.mubr.bf16.gmra.mrb[0].mxu0 %v4924
        %v5045 = vpop.f32.mrb[0].mxu0
        %v5046 = vadd.f32 %v4961, %v5045
        %v5047 = vpop.f32.mrb[0].mxu0
        %v5048 = vpop.f32.mrb[0].mxu0
        %v5049 = vadd.f32 %v4961, %v5048
        %v5050 = vpop.f32.mrb[0].mxu0
        %5051 = vmatprep.mubr.bf16.mxu0 0
        %5052 = vmatmul.mubr.bf16.gmra.mrb[0].mxu0 %v4925
        %v5053 = vpop.f32.mrb[0].mxu0
        %v5054 = vadd.f32 %v4961, %v5053
        %v5055 = vpop.f32.mrb[0].mxu0
        %v5056 = vpop.f32.mrb[0].mxu0
        %v5057 = vadd.f32 %v4961, %v5056
        %v5058 = vpop.f32.mrb[0].mxu0
        %5059 = vmatprep.mubr.bf16.mxu0 0
        %5060 = vmatmul.mubr.bf16.gmra.mrb[0].mxu0 %v4926
        %v5061 = vpop.f32.mrb[0].mxu0
        %v5062 = vadd.f32 %v4961, %v5061
        %v5063 = vpop.f32.mrb[0].mxu0
        %v5064 = vpop.f32.mrb[0].mxu0
        %v5065 = vadd.f32 %v4961, %v5064
        %v5066 = vpop.f32.mrb[0].mxu0
        %5067 = vmatprep.mubr.bf16.mxu0 0
        %5068 = vmatmul.mubr.bf16.gmra.mrb[0].mxu0 %v4927
        %v5069 = vpop.f32.mrb[0].mxu0
        %v5070 = vadd.f32 %v4961, %v5069
        %v5071 = vpop.f32.mrb[0].mxu0
        %v5072 = vpop.f32.mrb[0].mxu0
        %v5073 = vadd.f32 %v4961, %v5072
        %v5074 = vpop.f32.mrb[0].mxu0
        %5075 = vmatprep.mubr.bf16.mxu0 0
        %5076 = vmatmul.mubr.bf16.gmra.mrb[0].mxu0 %v4928
        %v5077 = vpop.f32.mrb[0].mxu0
        %v5078 = vadd.f32 %v4961, %v5077
        %v5079 = vpop.f32.mrb[0].mxu0
        %v5080 = vpop.f32.mrb[0].mxu0
        %v5081 = vadd.f32 %v4961, %v5080
        %v5082 = vpop.f32.mrb[0].mxu0
        %5083 = vmatprep.mubr.bf16.mxu0 0
        %5084 = vmatmul.mubr.bf16.gmra.mrb[0].mxu0 %v4929
        %v5085 = vpop.f32.mrb[0].mxu0
        %v5086 = vadd.f32 %v4961, %v5085
        %v5087 = vpop.f32.mrb[0].mxu0
        %v5088 = vpop.f32.mrb[0].mxu0
        %v5089 = vadd.f32 %v4961, %v5088
        %v5090 = vpop.f32.mrb[0].mxu0
        %5091 = vmatprep.mubr.bf16.mxu0 0
        %5092 = vmatmul.mubr.bf16.gmra.mrb[0].mxu0 %v4930
        %v5093 = vpop.f32.mrb[0].mxu0
        %v5094 = vadd.f32 %v4961, %v5093
        %v5095 = vpop.f32.mrb[0].mxu0
        %v5096 = vpop.f32.mrb[0].mxu0
        %v5097 = vadd.f32 %v4961, %v5096
        %v5098 = vpop.f32.mrb[0].mxu0
        %5099 = vmatprep.mubr.bf16.mxu0 0
        %5100 = vmatmul.mubr.bf16.gmra.mrb[0].mxu0 %v4931
        %v5101 = vpop.f32.mrb[0].mxu0
        %v5102 = vadd.f32 %v4961, %v5101
        %v5103 = vpop.f32.mrb[0].mxu0
        %v5104 = vpop.f32.mrb[0].mxu0
        %v5105 = vadd.f32 %v4961, %v5104
        %v5106 = vpop.f32.mrb[0].mxu0
        %5107 = vmatprep.mubr.bf16.mxu0 0
        %5108 = vmatmul.mubr.bf16.gmra.mrb[0].mxu0 %v4932
        %v5109 = vpop.f32.mrb[0].mxu0
        %v5110 = vadd.f32 %v4961, %v5109
        %v5111 = vpop.f32.mrb[0].mxu0
        %v5112 = vpop.f32.mrb[0].mxu0
        %v5113 = vadd.f32 %v4961, %v5112
        %v5114 = vpop.f32.mrb[0].mxu0
        %5115 = vmatprep.mubr.bf16.mxu0 0
        %5116 = vmatmul.mubr.bf16.gmra.mrb[0].mxu0 %v4933
        %v5117 = vpop.f32.mrb[0].mxu0
        %v5118 = vadd.f32 %v4961, %v5117
        %v5119 = vpop.f32.mrb[0].mxu0
        %v5120 = vpop.f32.mrb[0].mxu0
        %v5121 = vadd.f32 %v4961, %v5120
        %v5122 = vpop.f32.mrb[0].mxu0
        %5123 = vmatprep.mubr.bf16.mxu0 0
        %5124 = vmatmul.mubr.bf16.gmra.mrb[0].mxu0 %v4934
        %v5125 = vpop.f32.mrb[0].mxu0
        %v5126 = vadd.f32 %v4961, %v5125
        %v5127 = vpop.f32.mrb[0].mxu0
        %v5128 = vpop.f32.mrb[0].mxu0
        %v5129 = vadd.f32 %v4961, %v5128
        %v5130 = vpop.f32.mrb[0].mxu0
        %5131 = vmatprep.mubr.bf16.mxu0 0
        %5132 = vmatmul.mubr.bf16.gmra.mrb[0].mxu0 %v4935
        %v5133 = vpop.f32.mrb[0].mxu0
        %v5134 = vadd.f32 %v4961, %v5133
        %v5135 = vpop.f32.mrb[0].mxu0
        %v5136 = vpop.f32.mrb[0].mxu0
        %v5137 = vadd.f32 %v4961, %v5136
        %v5138 = vpop.f32.mrb[0].mxu0
        %5139 = vmatprep.mubr.bf16.mxu0 0
        %5140 = vmatmul.mubr.bf16.gmra.mrb[0].mxu0 %v4936
        %v5141 = vpop.f32.mrb[0].mxu0
        %v5142 = vadd.f32 %v4961, %v5141
        %v5143 = vpop.f32.mrb[0].mxu0
        %v5144 = vpop.f32.mrb[0].mxu0
        %v5145 = vadd.f32 %v4961, %v5144
        %v5146 = vpop.f32.mrb[0].mxu0
        %5147 = vmatprep.mubr.bf16.mxu0 0
        %5148 = vmatmul.mubr.bf16.gmra.mrb[0].mxu0 %v4937
        %v5149 = vpop.f32.mrb[0].mxu0
        %v5150 = vadd.f32 %v4961, %v5149
        %v5151 = vpop.f32.mrb[0].mxu0
        %v5152 = vpop.f32.mrb[0].mxu0
        %v5153 = vadd.f32 %v4961, %v5152
        %v5154 = vpop.f32.mrb[0].mxu0
        %5155 = vmatprep.mubr.bf16.mxu0 0
        %5156 = vmatmul.mubr.bf16.gmra.mrb[0].mxu0 %v4938
        %v5157 = vpop.f32.mrb[0].mxu0
        %v5158 = vadd.f32 %v4961, %v5157
        %v5159 = vpop.f32.mrb[0].mxu0
        %v5160 = vpop.f32.mrb[0].mxu0
        %v5161 = vadd.f32 %v4961, %v5160
        %v5162 = vpop.f32.mrb[0].mxu0
        %5163 = vmatprep.mubr.bf16.mxu0 0
        %5164 = vmatmul.mubr.bf16.gmra.mrb[0].mxu0 %v4939
        %v5165 = vpop.f32.mrb[0].mxu0
        %v5166 = vadd.f32 %v4961, %v5165
        %v5167 = vpop.f32.mrb[0].mxu0
        %v5168 = vpop.f32.mrb[0].mxu0
        %v5169 = vadd.f32 %v4961, %v5168
        %v5170 = vpop.f32.mrb[0].mxu0
        %5171 = vdwg.mxu0
        %v5172 = vmax.f32 %v5046, 0.0
        %v5173 = vmax.f32 %v5049, 0.0
        %v5174 = vmax.f32 %v5054, 0.0
        %v5175 = vmax.f32 %v5057, 0.0
        %v5176 = vmax.f32 %v5062, 0.0
        %v5177 = vmax.f32 %v5065, 0.0
        %v5178 = vmax.f32 %v5070, 0.0
        %v5179 = vmax.f32 %v5073, 0.0
        %v5180 = vmax.f32 %v5078, 0.0
        %v5181 = vmax.f32 %v5081, 0.0
        %v5182 = vmax.f32 %v5086, 0.0
        %v5183 = vmax.f32 %v5089, 0.0
        %v5184 = vmax.f32 %v5094, 0.0
        %v5185 = vmax.f32 %v5097, 0.0
        %v5186 = vmax.f32 %v5102, 0.0
        %v5187 = vmax.f32 %v5105, 0.0
        %v5188 = vmax.f32 %v5110, 0.0
        %v5189 = vmax.f32 %v5113, 0.0
        %v5190 = vmax.f32 %v5118, 0.0
        %v5191 = vmax.f32 %v5121, 0.0
        %v5192 = vmax.f32 %v5126, 0.0
        %v5193 = vmax.f32 %v5129, 0.0
        %v5194 = vmax.f32 %v5134, 0.0
        %v5195 = vmax.f32 %v5137, 0.0
        %v5196 = vmax.f32 %v5142, 0.0
        %v5197 = vmax.f32 %v5145, 0.0
        %v5198 = vmax.f32 %v5150, 0.0
        %v5199 = vmax.f32 %v5153, 0.0
        %v5200 = vmax.f32 %v5158, 0.0
        %v5201 = vmax.f32 %v5161, 0.0
        %v5202 = vmax.f32 %v5166, 0.0
        %v5203 = vmax.f32 %v5169, 0.0
        %v5204 = vpack.c.bf16 %v5173, %v5172
        %v5205 = vpack.c.bf16 %v5175, %v5174
        %v5206 = vpack.c.bf16 %v5177, %v5176
        %v5207 = vpack.c.bf16 %v5179, %v5178
        %v5208 = vpack.c.bf16 %v5181, %v5180
        %v5209 = vpack.c.bf16 %v5183, %v5182
        %v5210 = vpack.c.bf16 %v5185, %v5184
        %v5211 = vpack.c.bf16 %v5187, %v5186
        %v5212 = vpack.c.bf16 %v5189, %v5188
        %v5213 = vpack.c.bf16 %v5191, %v5190
        %v5214 = vpack.c.bf16 %v5193, %v5192
        %v5215 = vpack.c.bf16 %v5195, %v5194
        %v5216 = vpack.c.bf16 %v5197, %v5196
        %v5217 = vpack.c.bf16 %v5199, %v5198
        %v5218 = vpack.c.bf16 %v5201, %v5200
        %v5219 = vpack.c.bf16 %v5203, %v5202
        %v5220 = vld [vmem:[%s5] sm:$0xf]
        %v5221 = vld [vmem:[%s5 + $0x4] sm:$0xf]
        %v5222 = vld [vmem:[%s5 + $0x8] sm:$0xf]
        %v5223 = vld [vmem:[%s5 + $0xc] sm:$0xf]
        %v5224 = vld [vmem:[%s5 + $0x10] sm:$0xf]
        %v5225 = vld [vmem:[%s5 + $0x14] sm:$0xf]
        %v5226 = vld [vmem:[%s5 + $0x18] sm:$0xf]
        %v5227 = vld [vmem:[%s5 + $0x1c] sm:$0xf]
        %v5228 = vld [vmem:[%s5 + $0x20] sm:$0xf]
        %v5229 = vld [vmem:[%s5 + $0x24] sm:$0xf]
        %v5230 = vld [vmem:[%s5 + $0x28] sm:$0xf]
        %v5231 = vld [vmem:[%s5 + $0x2c] sm:$0xf]
        %v5232 = vld [vmem:[%s5 + $0x30] sm:$0xf]
        %v5233 = vld [vmem:[%s5 + $0x34] sm:$0xf]
        %v5234 = vld [vmem:[%s5 + $0x38] sm:$0xf]
        %v5235 = vld [vmem:[%s5 + $0x3c] sm:$0xf]
        %v5236 = vld [vmem:[%s6] sm:$0x1]
        %v5238 = vlaneseq
        %v5239 = vshrl.u32 %v5238, 7
        %v5240 = vsub.s32 0, %v5239
        %v5241 = vrot.slane %v5236, %v5240
        %v5259 = vunpack.c.l.b16 %v5220
        %v5260 = vunpack.c.l.b16 %v5221
        %v5261 = vunpack.c.l.b16 %v5222
        %v5262 = vunpack.c.l.b16 %v5223
        %v5263 = vunpack.c.l.b16 %v5224
        %v5264 = vunpack.c.l.b16 %v5225
        %v5265 = vunpack.c.l.b16 %v5226
        %v5266 = vunpack.c.l.b16 %v5227
        %v5267 = vunpack.c.l.b16 %v5228
        %v5268 = vunpack.c.l.b16 %v5229
        %v5269 = vunpack.c.l.b16 %v5230
        %v5270 = vunpack.c.l.b16 %v5231
        %v5271 = vunpack.c.l.b16 %v5232
        %v5272 = vunpack.c.l.b16 %v5233
        %v5273 = vunpack.c.l.b16 %v5234
        %v5274 = vunpack.c.l.b16 %v5235
        %v5275 = vpack.c.b16 %v5260, %v5259
        %v5276 = vpack.c.b16 %v5262, %v5261
        %v5277 = vpack.c.b16 %v5264, %v5263
        %v5278 = vpack.c.b16 %v5266, %v5265
        %v5279 = vpack.c.b16 %v5268, %v5267
        %v5280 = vpack.c.b16 %v5270, %v5269
        %v5281 = vpack.c.b16 %v5272, %v5271
        %v5282 = vpack.c.b16 %v5274, %v5273
        %5291 = vmatprep.subr.bf16.mxu0 0
        %5292 = vmatpush1.bf16.msra.mxu0 %v5275
        %5293 = vmatprep.subr.bf16.mxu0 0
        %5294 = vmatpush1.bf16.msra.mxu0 %v5276
        %5295 = vmatprep.subr.bf16.mxu0 0
        %5296 = vmatpush1.bf16.msra.mxu0 %v5277
        %5297 = vmatprep.subr.bf16.mxu0 0
        %5298 = vmatpush1.bf16.msra.mxu0 %v5278
        %5299 = vmatprep.subr.bf16.mxu0 0
        %5300 = vmatpush1.bf16.msra.mxu0 %v5279
        %5301 = vmatprep.subr.bf16.mxu0 0
        %5302 = vmatpush1.bf16.msra.mxu0 %v5280
        %5303 = vmatprep.subr.bf16.mxu0 0
        %5304 = vmatpush1.bf16.msra.mxu0 %v5281
        %5305 = vmatprep.subr.bf16.mxu0 0
        %5306 = vmatpush1.bf16.msra.mxu0 %v5282
        %5307 = vmatprep.subr.bf16.mxu0 0
        %5308 = vmatpush1.bf16.msra.mxu0 0
        %5309 = vmatprep.subr.bf16.mxu0 0
        %5310 = vmatpush1.bf16.msra.mxu0 0
        %5311 = vmatprep.subr.bf16.mxu0 0
        %5312 = vmatpush1.bf16.msra.mxu0 0
        %5313 = vmatprep.subr.bf16.mxu0 0
        %5314 = vmatpush1.bf16.msra.mxu0 0
        %5315 = vmatprep.subr.bf16.mxu0 0
        %5316 = vmatpush1.bf16.msra.mxu0 0
        %5317 = vmatprep.subr.bf16.mxu0 0
        %5318 = vmatpush1.bf16.msra.mxu0 0
        %5319 = vmatprep.subr.bf16.mxu0 0
        %5320 = vmatpush1.bf16.msra.mxu0 0
        %5321 = vmatprep.subr.bf16.mxu0 0
        %5322 = vmatpush1.bf16.msra.mxu0 0
        %5323 = vmatprep.mubr.bf16.mxu0 0
        %5324 = vmatmul.mubr.bf16.gmra.mrb[0].mxu0 %v5204
        %v5325 = vpop.f32.mrb[0].mxu0
        %v5326 = vadd.f32 %v5241, %v5325
        %v5327 = vpop.f32.mrb[0].mxu0
        %v5328 = vpop.f32.mrb[0].mxu0
        %v5329 = vadd.f32 %v5241, %v5328
        %v5330 = vpop.f32.mrb[0].mxu0
        %5331 = vmatprep.mubr.bf16.mxu0 0
        %5332 = vmatmul.mubr.bf16.gmra.mrb[0].mxu0 %v5205
        %v5333 = vpop.f32.mrb[0].mxu0
        %v5334 = vadd.f32 %v5241, %v5333
        %v5335 = vpop.f32.mrb[0].mxu0
        %v5336 = vpop.f32.mrb[0].mxu0
        %v5337 = vadd.f32 %v5241, %v5336
        %v5338 = vpop.f32.mrb[0].mxu0
        %5339 = vmatprep.mubr.bf16.mxu0 0
        %5340 = vmatmul.mubr.bf16.gmra.mrb[0].mxu0 %v5206
        %v5341 = vpop.f32.mrb[0].mxu0
        %v5342 = vadd.f32 %v5241, %v5341
        %v5343 = vpop.f32.mrb[0].mxu0
        %v5344 = vpop.f32.mrb[0].mxu0
        %v5345 = vadd.f32 %v5241, %v5344
        %v5346 = vpop.f32.mrb[0].mxu0
        %5347 = vmatprep.mubr.bf16.mxu0 0
        %5348 = vmatmul.mubr.bf16.gmra.mrb[0].mxu0 %v5207
        %v5349 = vpop.f32.mrb[0].mxu0
        %v5350 = vadd.f32 %v5241, %v5349
        %v5351 = vpop.f32.mrb[0].mxu0
        %v5352 = vpop.f32.mrb[0].mxu0
        %v5353 = vadd.f32 %v5241, %v5352
        %v5354 = vpop.f32.mrb[0].mxu0
        %5355 = vmatprep.mubr.bf16.mxu0 0
        %5356 = vmatmul.mubr.bf16.gmra.mrb[0].mxu0 %v5208
        %v5357 = vpop.f32.mrb[0].mxu0
        %v5358 = vadd.f32 %v5241, %v5357
        %v5359 = vpop.f32.mrb[0].mxu0
        %v5360 = vpop.f32.mrb[0].mxu0
        %v5361 = vadd.f32 %v5241, %v5360
        %v5362 = vpop.f32.mrb[0].mxu0
        %5363 = vmatprep.mubr.bf16.mxu0 0
        %5364 = vmatmul.mubr.bf16.gmra.mrb[0].mxu0 %v5209
        %v5365 = vpop.f32.mrb[0].mxu0
        %v5366 = vadd.f32 %v5241, %v5365
        %v5367 = vpop.f32.mrb[0].mxu0
        %v5368 = vpop.f32.mrb[0].mxu0
        %v5369 = vadd.f32 %v5241, %v5368
        %v5370 = vpop.f32.mrb[0].mxu0
        %5371 = vmatprep.mubr.bf16.mxu0 0
        %5372 = vmatmul.mubr.bf16.gmra.mrb[0].mxu0 %v5210
        %v5373 = vpop.f32.mrb[0].mxu0
        %v5374 = vadd.f32 %v5241, %v5373
        %v5375 = vpop.f32.mrb[0].mxu0
        %v5376 = vpop.f32.mrb[0].mxu0
        %v5377 = vadd.f32 %v5241, %v5376
        %v5378 = vpop.f32.mrb[0].mxu0
        %5379 = vmatprep.mubr.bf16.mxu0 0
        %5380 = vmatmul.mubr.bf16.gmra.mrb[0].mxu0 %v5211
        %v5381 = vpop.f32.mrb[0].mxu0
        %v5382 = vadd.f32 %v5241, %v5381
        %v5383 = vpop.f32.mrb[0].mxu0
        %v5384 = vpop.f32.mrb[0].mxu0
        %v5385 = vadd.f32 %v5241, %v5384
        %v5386 = vpop.f32.mrb[0].mxu0
        %5387 = vmatprep.mubr.bf16.mxu0 0
        %5388 = vmatmul.mubr.bf16.gmra.mrb[0].mxu0 %v5212
        %v5389 = vpop.f32.mrb[0].mxu0
        %v5390 = vadd.f32 %v5241, %v5389
        %v5391 = vpop.f32.mrb[0].mxu0
        %v5392 = vpop.f32.mrb[0].mxu0
        %v5393 = vadd.f32 %v5241, %v5392
        %v5394 = vpop.f32.mrb[0].mxu0
        %5395 = vmatprep.mubr.bf16.mxu0 0
        %5396 = vmatmul.mubr.bf16.gmra.mrb[0].mxu0 %v5213
        %v5397 = vpop.f32.mrb[0].mxu0
        %v5398 = vadd.f32 %v5241, %v5397
        %v5399 = vpop.f32.mrb[0].mxu0
        %v5400 = vpop.f32.mrb[0].mxu0
        %v5401 = vadd.f32 %v5241, %v5400
        %v5402 = vpop.f32.mrb[0].mxu0
        %5403 = vmatprep.mubr.bf16.mxu0 0
        %5404 = vmatmul.mubr.bf16.gmra.mrb[0].mxu0 %v5214
        %v5405 = vpop.f32.mrb[0].mxu0
        %v5406 = vadd.f32 %v5241, %v5405
        %v5407 = vpop.f32.mrb[0].mxu0
        %v5408 = vpop.f32.mrb[0].mxu0
        %v5409 = vadd.f32 %v5241, %v5408
        %v5410 = vpop.f32.mrb[0].mxu0
        %5411 = vmatprep.mubr.bf16.mxu0 0
        %5412 = vmatmul.mubr.bf16.gmra.mrb[0].mxu0 %v5215
        %v5413 = vpop.f32.mrb[0].mxu0
        %v5414 = vadd.f32 %v5241, %v5413
        %v5415 = vpop.f32.mrb[0].mxu0
        %v5416 = vpop.f32.mrb[0].mxu0
        %v5417 = vadd.f32 %v5241, %v5416
        %v5418 = vpop.f32.mrb[0].mxu0
        %5419 = vmatprep.mubr.bf16.mxu0 0
        %5420 = vmatmul.mubr.bf16.gmra.mrb[0].mxu0 %v5216
        %v5421 = vpop.f32.mrb[0].mxu0
        %v5422 = vadd.f32 %v5241, %v5421
        %v5423 = vpop.f32.mrb[0].mxu0
        %v5424 = vpop.f32.mrb[0].mxu0
        %v5425 = vadd.f32 %v5241, %v5424
        %v5426 = vpop.f32.mrb[0].mxu0
        %5427 = vmatprep.mubr.bf16.mxu0 0
        %5428 = vmatmul.mubr.bf16.gmra.mrb[0].mxu0 %v5217
        %v5429 = vpop.f32.mrb[0].mxu0
        %v5430 = vadd.f32 %v5241, %v5429
        %v5431 = vpop.f32.mrb[0].mxu0
        %v5432 = vpop.f32.mrb[0].mxu0
        %v5433 = vadd.f32 %v5241, %v5432
        %v5434 = vpop.f32.mrb[0].mxu0
        %5435 = vmatprep.mubr.bf16.mxu0 0
        %5436 = vmatmul.mubr.bf16.gmra.mrb[0].mxu0 %v5218
        %v5437 = vpop.f32.mrb[0].mxu0
        %v5438 = vadd.f32 %v5241, %v5437
        %v5439 = vpop.f32.mrb[0].mxu0
        %v5440 = vpop.f32.mrb[0].mxu0
        %v5441 = vadd.f32 %v5241, %v5440
        %v5442 = vpop.f32.mrb[0].mxu0
        %5443 = vmatprep.mubr.bf16.mxu0 0
        %5444 = vmatmul.mubr.bf16.gmra.mrb[0].mxu0 %v5219
        %v5445 = vpop.f32.mrb[0].mxu0
        %v5446 = vadd.f32 %v5241, %v5445
        %v5447 = vpop.f32.mrb[0].mxu0
        %v5448 = vpop.f32.mrb[0].mxu0
        %v5449 = vadd.f32 %v5241, %v5448
        %v5450 = vpop.f32.mrb[0].mxu0
        %5451 = vdwg.mxu0
        %v5452 = vmax.f32 %v5326, 0.0
        %v5453 = vmax.f32 %v5329, 0.0
        %v5454 = vmax.f32 %v5334, 0.0
        %v5455 = vmax.f32 %v5337, 0.0
        %v5456 = vmax.f32 %v5342, 0.0
        %v5457 = vmax.f32 %v5345, 0.0
        %v5458 = vmax.f32 %v5350, 0.0
        %v5459 = vmax.f32 %v5353, 0.0
        %v5460 = vmax.f32 %v5358, 0.0
        %v5461 = vmax.f32 %v5361, 0.0
        %v5462 = vmax.f32 %v5366, 0.0
        %v5463 = vmax.f32 %v5369, 0.0
        %v5464 = vmax.f32 %v5374, 0.0
        %v5465 = vmax.f32 %v5377, 0.0
        %v5466 = vmax.f32 %v5382, 0.0
        %v5467 = vmax.f32 %v5385, 0.0
        %v5468 = vmax.f32 %v5390, 0.0
        %v5469 = vmax.f32 %v5393, 0.0
        %v5470 = vmax.f32 %v5398, 0.0
        %v5471 = vmax.f32 %v5401, 0.0
        %v5472 = vmax.f32 %v5406, 0.0
        %v5473 = vmax.f32 %v5409, 0.0
        %v5474 = vmax.f32 %v5414, 0.0
        %v5475 = vmax.f32 %v5417, 0.0
        %v5476 = vmax.f32 %v5422, 0.0
        %v5477 = vmax.f32 %v5425, 0.0
        %v5478 = vmax.f32 %v5430, 0.0
        %v5479 = vmax.f32 %v5433, 0.0
        %v5480 = vmax.f32 %v5438, 0.0
        %v5481 = vmax.f32 %v5441, 0.0
        %v5482 = vmax.f32 %v5446, 0.0
        %v5483 = vmax.f32 %v5449, 0.0
        %v5484 = vpack.c.bf16 %v5453, %v5452
        %v5485 = vpack.c.bf16 %v5455, %v5454
        %v5486 = vpack.c.bf16 %v5457, %v5456
        %v5487 = vpack.c.bf16 %v5459, %v5458
        %v5488 = vpack.c.bf16 %v5461, %v5460
        %v5489 = vpack.c.bf16 %v5463, %v5462
        %v5490 = vpack.c.bf16 %v5465, %v5464
        %v5491 = vpack.c.bf16 %v5467, %v5466
        %v5492 = vpack.c.bf16 %v5469, %v5468
        %v5493 = vpack.c.bf16 %v5471, %v5470
        %v5494 = vpack.c.bf16 %v5473, %v5472
        %v5495 = vpack.c.bf16 %v5475, %v5474
        %v5496 = vpack.c.bf16 %v5477, %v5476
        %v5497 = vpack.c.bf16 %v5479, %v5478
        %v5498 = vpack.c.bf16 %v5481, %v5480
        %v5499 = vpack.c.bf16 %v5483, %v5482
        %v5500 = vld [vmem:[%s7] sm:$0xf]
        %v5501 = vld [vmem:[%s7 + $0x4] sm:$0xf]
        %v5502 = vld [vmem:[%s7 + $0x8] sm:$0xf]
        %v5503 = vld [vmem:[%s7 + $0xc] sm:$0xf]
        %v5504 = vld [vmem:[%s7 + $0x10] sm:$0xf]
        %v5505 = vld [vmem:[%s7 + $0x14] sm:$0xf]
        %v5506 = vld [vmem:[%s7 + $0x18] sm:$0xf]
        %v5507 = vld [vmem:[%s7 + $0x1c] sm:$0xf]
        %v5508 = vld [vmem:[%s7 + $0x20] sm:$0xf]
        %v5509 = vld [vmem:[%s7 + $0x24] sm:$0xf]
        %v5510 = vld [vmem:[%s7 + $0x28] sm:$0xf]
        %v5511 = vld [vmem:[%s7 + $0x2c] sm:$0xf]
        %v5512 = vld [vmem:[%s7 + $0x30] sm:$0xf]
        %v5513 = vld [vmem:[%s7 + $0x34] sm:$0xf]
        %v5514 = vld [vmem:[%s7 + $0x38] sm:$0xf]
        %v5515 = vld [vmem:[%s7 + $0x3c] sm:$0xf]
        %v5516 = vld [vmem:[%s8] sm:$0xf]
        %v5517 = vld [vmem:[%s8 + $0x4] sm:$0xf]
        %v5518 = vld [vmem:[%s8 + $0x8] sm:$0xf]
        %v5519 = vld [vmem:[%s8 + $0xc] sm:$0xf]
        %v5520 = vld [vmem:[%s8 + $0x10] sm:$0xf]
        %v5521 = vld [vmem:[%s8 + $0x14] sm:$0xf]
        %v5522 = vld [vmem:[%s8 + $0x18] sm:$0xf]
        %v5523 = vld [vmem:[%s8 + $0x1c] sm:$0xf]
        %v5524 = vld [vmem:[%s8 + $0x20] sm:$0xf]
        %v5525 = vld [vmem:[%s8 + $0x24] sm:$0xf]
        %v5526 = vld [vmem:[%s8 + $0x28] sm:$0xf]
        %v5527 = vld [vmem:[%s8 + $0x2c] sm:$0xf]
        %v5528 = vld [vmem:[%s8 + $0x30] sm:$0xf]
        %v5529 = vld [vmem:[%s8 + $0x34] sm:$0xf]
        %v5530 = vld [vmem:[%s8 + $0x38] sm:$0xf]
        %v5531 = vld [vmem:[%s8 + $0x3c] sm:$0xf]
        %v5548 = vunpack.c.l.b16 %v5516
        %v5549 = vunpack.c.l.b16 %v5517
        %v5550 = vunpack.c.l.b16 %v5518
        %v5551 = vunpack.c.l.b16 %v5519
        %v5552 = vunpack.c.l.b16 %v5520
        %v5553 = vunpack.c.l.b16 %v5521
        %v5554 = vunpack.c.l.b16 %v5522
        %v5555 = vunpack.c.l.b16 %v5523
        %v5556 = vunpack.c.l.b16 %v5524
        %v5557 = vunpack.c.l.b16 %v5525
        %v5558 = vunpack.c.l.b16 %v5526
        %v5559 = vunpack.c.l.b16 %v5527
        %v5560 = vunpack.c.l.b16 %v5528
        %v5561 = vunpack.c.l.b16 %v5529
        %v5562 = vunpack.c.l.b16 %v5530
        %v5563 = vunpack.c.l.b16 %v5531
        %v5564 = vpack.c.b16 %v5549, %v5548
        %v5565 = vpack.c.b16 %v5551, %v5550
        %v5566 = vpack.c.b16 %v5553, %v5552
        %v5567 = vpack.c.b16 %v5555, %v5554
        %v5568 = vpack.c.b16 %v5557, %v5556
        %v5569 = vpack.c.b16 %v5559, %v5558
        %v5570 = vpack.c.b16 %v5561, %v5560
        %v5571 = vpack.c.b16 %v5563, %v5562
        %5580 = vmatprep.subr.bf16.mxu0 0
        %5581 = vmatpush1.bf16.msra.mxu0 %v5564
        %5582 = vmatprep.subr.bf16.mxu0 0
        %5583 = vmatpush1.bf16.msra.mxu0 %v5565
        %5584 = vmatprep.subr.bf16.mxu0 0
        %5585 = vmatpush1.bf16.msra.mxu0 %v5566
        %5586 = vmatprep.subr.bf16.mxu0 0
        %5587 = vmatpush1.bf16.msra.mxu0 %v5567
        %5588 = vmatprep.subr.bf16.mxu0 0
        %5589 = vmatpush1.bf16.msra.mxu0 %v5568
        %5590 = vmatprep.subr.bf16.mxu0 0
        %5591 = vmatpush1.bf16.msra.mxu0 %v5569
        %5592 = vmatprep.subr.bf16.mxu0 0
        %5593 = vmatpush1.bf16.msra.mxu0 %v5570
        %5594 = vmatprep.subr.bf16.mxu0 0
        %5595 = vmatpush1.bf16.msra.mxu0 %v5571
        %5596 = vmatprep.subr.bf16.mxu0 0
        %5597 = vmatpush1.bf16.msra.mxu0 0
        %5598 = vmatprep.subr.bf16.mxu0 0
        %5599 = vmatpush1.bf16.msra.mxu0 0
        %5600 = vmatprep.subr.bf16.mxu0 0
        %5601 = vmatpush1.bf16.msra.mxu0 0
        %5602 = vmatprep.subr.bf16.mxu0 0
        %5603 = vmatpush1.bf16.msra.mxu0 0
        %5604 = vmatprep.subr.bf16.mxu0 0
        %5605 = vmatpush1.bf16.msra.mxu0 0
        %5606 = vmatprep.subr.bf16.mxu0 0
        %5607 = vmatpush1.bf16.msra.mxu0 0
        %5608 = vmatprep.subr.bf16.mxu0 0
        %5609 = vmatpush1.bf16.msra.mxu0 0
        %5610 = vmatprep.subr.bf16.mxu0 0
        %5611 = vmatpush1.bf16.msra.mxu0 0
        %5612 = vmatprep.mubr.bf16.mxu0 0
        %5613 = vmatmul.mubr.bf16.gmra.mrb[0].mxu0 %v4924
        %v5614 = vpop.f32.mrb[0].mxu0
        %v5615 = vadd.f32 0.0, %v5614
        %v5616 = vpop.f32.mrb[0].mxu0
        %v5617 = vpop.f32.mrb[0].mxu0
        %v5618 = vadd.f32 0.0, %v5617
        %v5619 = vpop.f32.mrb[0].mxu0
        %5620 = vmatprep.mubr.bf16.mxu0 0
        %5621 = vmatmul.mubr.bf16.gmra.mrb[0].mxu0 %v4925
        %v5622 = vpop.f32.mrb[0].mxu0
        %v5623 = vadd.f32 0.0, %v5622
        %v5624 = vpop.f32.mrb[0].mxu0
        %v5625 = vpop.f32.mrb[0].mxu0
        %v5626 = vadd.f32 0.0, %v5625
        %v5627 = vpop.f32.mrb[0].mxu0
        %5628 = vmatprep.mubr.bf16.mxu0 0
        %5629 = vmatmul.mubr.bf16.gmra.mrb[0].mxu0 %v4926
        %v5630 = vpop.f32.mrb[0].mxu0
        %v5631 = vadd.f32 0.0, %v5630
        %v5632 = vpop.f32.mrb[0].mxu0
        %v5633 = vpop.f32.mrb[0].mxu0
        %v5634 = vadd.f32 0.0, %v5633
        %v5635 = vpop.f32.mrb[0].mxu0
        %5636 = vmatprep.mubr.bf16.mxu0 0
        %5637 = vmatmul.mubr.bf16.gmra.mrb[0].mxu0 %v4927
        %v5638 = vpop.f32.mrb[0].mxu0
        %v5639 = vadd.f32 0.0, %v5638
        %v5640 = vpop.f32.mrb[0].mxu0
        %v5641 = vpop.f32.mrb[0].mxu0
        %v5642 = vadd.f32 0.0, %v5641
        %v5643 = vpop.f32.mrb[0].mxu0
        %5644 = vmatprep.mubr.bf16.mxu0 0
        %5645 = vmatmul.mubr.bf16.gmra.mrb[0].mxu0 %v4928
        %v5646 = vpop.f32.mrb[0].mxu0
        %v5647 = vadd.f32 0.0, %v5646
        %v5648 = vpop.f32.mrb[0].mxu0
        %v5649 = vpop.f32.mrb[0].mxu0
        %v5650 = vadd.f32 0.0, %v5649
        %v5651 = vpop.f32.mrb[0].mxu0
        %5652 = vmatprep.mubr.bf16.mxu0 0
        %5653 = vmatmul.mubr.bf16.gmra.mrb[0].mxu0 %v4929
        %v5654 = vpop.f32.mrb[0].mxu0
        %v5655 = vadd.f32 0.0, %v5654
        %v5656 = vpop.f32.mrb[0].mxu0
        %v5657 = vpop.f32.mrb[0].mxu0
        %v5658 = vadd.f32 0.0, %v5657
        %v5659 = vpop.f32.mrb[0].mxu0
        %5660 = vmatprep.mubr.bf16.mxu0 0
        %5661 = vmatmul.mubr.bf16.gmra.mrb[0].mxu0 %v4930
        %v5662 = vpop.f32.mrb[0].mxu0
        %v5663 = vadd.f32 0.0, %v5662
        %v5664 = vpop.f32.mrb[0].mxu0
        %v5665 = vpop.f32.mrb[0].mxu0
        %v5666 = vadd.f32 0.0, %v5665
        %v5667 = vpop.f32.mrb[0].mxu0
        %5668 = vmatprep.mubr.bf16.mxu0 0
        %5669 = vmatmul.mubr.bf16.gmra.mrb[0].mxu0 %v4931
        %v5670 = vpop.f32.mrb[0].mxu0
        %v5671 = vadd.f32 0.0, %v5670
        %v5672 = vpop.f32.mrb[0].mxu0
        %v5673 = vpop.f32.mrb[0].mxu0
        %v5674 = vadd.f32 0.0, %v5673
        %v5675 = vpop.f32.mrb[0].mxu0
        %5676 = vmatprep.mubr.bf16.mxu0 0
        %5677 = vmatmul.mubr.bf16.gmra.mrb[0].mxu0 %v4932
        %v5678 = vpop.f32.mrb[0].mxu0
        %v5679 = vadd.f32 0.0, %v5678
        %v5680 = vpop.f32.mrb[0].mxu0
        %v5681 = vpop.f32.mrb[0].mxu0
        %v5682 = vadd.f32 0.0, %v5681
        %v5683 = vpop.f32.mrb[0].mxu0
        %5684 = vmatprep.mubr.bf16.mxu0 0
        %5685 = vmatmul.mubr.bf16.gmra.mrb[0].mxu0 %v4933
        %v5686 = vpop.f32.mrb[0].mxu0
        %v5687 = vadd.f32 0.0, %v5686
        %v5688 = vpop.f32.mrb[0].mxu0
        %v5689 = vpop.f32.mrb[0].mxu0
        %v5690 = vadd.f32 0.0, %v5689
        %v5691 = vpop.f32.mrb[0].mxu0
        %5692 = vmatprep.mubr.bf16.mxu0 0
        %5693 = vmatmul.mubr.bf16.gmra.mrb[0].mxu0 %v4934
        %v5694 = vpop.f32.mrb[0].mxu0
        %v5695 = vadd.f32 0.0, %v5694
        %v5696 = vpop.f32.mrb[0].mxu0
        %v5697 = vpop.f32.mrb[0].mxu0
        %v5698 = vadd.f32 0.0, %v5697
        %v5699 = vpop.f32.mrb[0].mxu0
        %5700 = vmatprep.mubr.bf16.mxu0 0
        %5701 = vmatmul.mubr.bf16.gmra.mrb[0].mxu0 %v4935
        %v5702 = vpop.f32.mrb[0].mxu0
        %v5703 = vadd.f32 0.0, %v5702
        %v5704 = vpop.f32.mrb[0].mxu0
        %v5705 = vpop.f32.mrb[0].mxu0
        %v5706 = vadd.f32 0.0, %v5705
        %v5707 = vpop.f32.mrb[0].mxu0
        %5708 = vmatprep.mubr.bf16.mxu0 0
        %5709 = vmatmul.mubr.bf16.gmra.mrb[0].mxu0 %v4936
        %v5710 = vpop.f32.mrb[0].mxu0
        %v5711 = vadd.f32 0.0, %v5710
        %v5712 = vpop.f32.mrb[0].mxu0
        %v5713 = vpop.f32.mrb[0].mxu0
        %v5714 = vadd.f32 0.0, %v5713
        %v5715 = vpop.f32.mrb[0].mxu0
        %5716 = vmatprep.mubr.bf16.mxu0 0
        %5717 = vmatmul.mubr.bf16.gmra.mrb[0].mxu0 %v4937
        %v5718 = vpop.f32.mrb[0].mxu0
        %v5719 = vadd.f32 0.0, %v5718
        %v5720 = vpop.f32.mrb[0].mxu0
        %v5721 = vpop.f32.mrb[0].mxu0
        %v5722 = vadd.f32 0.0, %v5721
        %v5723 = vpop.f32.mrb[0].mxu0
        %5724 = vmatprep.mubr.bf16.mxu0 0
        %5725 = vmatmul.mubr.bf16.gmra.mrb[0].mxu0 %v4938
        %v5726 = vpop.f32.mrb[0].mxu0
        %v5727 = vadd.f32 0.0, %v5726
        %v5728 = vpop.f32.mrb[0].mxu0
        %v5729 = vpop.f32.mrb[0].mxu0
        %v5730 = vadd.f32 0.0, %v5729
        %v5731 = vpop.f32.mrb[0].mxu0
        %5732 = vmatprep.mubr.bf16.mxu0 0
        %5733 = vmatmul.mubr.bf16.gmra.mrb[0].mxu0 %v4939
        %v5734 = vpop.f32.mrb[0].mxu0
        %v5735 = vadd.f32 0.0, %v5734
        %v5736 = vpop.f32.mrb[0].mxu0
        %v5737 = vpop.f32.mrb[0].mxu0
        %v5738 = vadd.f32 0.0, %v5737
        %v5739 = vpop.f32.mrb[0].mxu0
        %5740 = vdwg.mxu0
        %v5757 = vunpack.c.l.b16 %v5500
        %v5758 = vunpack.c.l.b16 %v5501
        %v5759 = vunpack.c.l.b16 %v5502
        %v5760 = vunpack.c.l.b16 %v5503
        %v5761 = vunpack.c.l.b16 %v5504
        %v5762 = vunpack.c.l.b16 %v5505
        %v5763 = vunpack.c.l.b16 %v5506
        %v5764 = vunpack.c.l.b16 %v5507
        %v5765 = vunpack.c.l.b16 %v5508
        %v5766 = vunpack.c.l.b16 %v5509
        %v5767 = vunpack.c.l.b16 %v5510
        %v5768 = vunpack.c.l.b16 %v5511
        %v5769 = vunpack.c.l.b16 %v5512
        %v5770 = vunpack.c.l.b16 %v5513
        %v5771 = vunpack.c.l.b16 %v5514
        %v5772 = vunpack.c.l.b16 %v5515
        %v5773 = vpack.c.b16 %v5758, %v5757
        %v5774 = vpack.c.b16 %v5760, %v5759
        %v5775 = vpack.c.b16 %v5762, %v5761
        %v5776 = vpack.c.b16 %v5764, %v5763
        %v5777 = vpack.c.b16 %v5766, %v5765
        %v5778 = vpack.c.b16 %v5768, %v5767
        %v5779 = vpack.c.b16 %v5770, %v5769
        %v5780 = vpack.c.b16 %v5772, %v5771
        %5789 = vmatprep.subr.bf16.mxu0 0
        %5790 = vmatpush1.bf16.msra.mxu0 %v5773
        %5791 = vmatprep.subr.bf16.mxu0 0
        %5792 = vmatpush1.bf16.msra.mxu0 %v5774
        %5793 = vmatprep.subr.bf16.mxu0 0
        %5794 = vmatpush1.bf16.msra.mxu0 %v5775
        %5795 = vmatprep.subr.bf16.mxu0 0
        %5796 = vmatpush1.bf16.msra.mxu0 %v5776
        %5797 = vmatprep.subr.bf16.mxu0 0
        %5798 = vmatpush1.bf16.msra.mxu0 %v5777
        %5799 = vmatprep.subr.bf16.mxu0 0
        %5800 = vmatpush1.bf16.msra.mxu0 %v5778
        %5801 = vmatprep.subr.bf16.mxu0 0
        %5802 = vmatpush1.bf16.msra.mxu0 %v5779
        %5803 = vmatprep.subr.bf16.mxu0 0
        %5804 = vmatpush1.bf16.msra.mxu0 %v5780
        %5805 = vmatprep.subr.bf16.mxu0 0
        %5806 = vmatpush1.bf16.msra.mxu0 0
        %5807 = vmatprep.subr.bf16.mxu0 0
        %5808 = vmatpush1.bf16.msra.mxu0 0
        %5809 = vmatprep.subr.bf16.mxu0 0
        %5810 = vmatpush1.bf16.msra.mxu0 0
        %5811 = vmatprep.subr.bf16.mxu0 0
        %5812 = vmatpush1.bf16.msra.mxu0 0
        %5813 = vmatprep.subr.bf16.mxu0 0
        %5814 = vmatpush1.bf16.msra.mxu0 0
        %5815 = vmatprep.subr.bf16.mxu0 0
        %5816 = vmatpush1.bf16.msra.mxu0 0
        %5817 = vmatprep.subr.bf16.mxu0 0
        %5818 = vmatpush1.bf16.msra.mxu0 0
        %5819 = vmatprep.subr.bf16.mxu0 0
        %5820 = vmatpush1.bf16.msra.mxu0 0
        %5821 = vmatprep.mubr.bf16.mxu0 0
        %5822 = vmatmul.mubr.bf16.gmra.mrb[0].mxu0 %v5484
        %v5823 = vpop.f32.mrb[0].mxu0
        %v5824 = vadd.f32 %v5615, %v5823
        %v5825 = vpop.f32.mrb[0].mxu0
        %v5826 = vpop.f32.mrb[0].mxu0
        %v5827 = vadd.f32 %v5618, %v5826
        %v5828 = vpop.f32.mrb[0].mxu0
        %5829 = vmatprep.mubr.bf16.mxu0 0
        %5830 = vmatmul.mubr.bf16.gmra.mrb[0].mxu0 %v5485
        %v5831 = vpop.f32.mrb[0].mxu0
        %v5832 = vadd.f32 %v5623, %v5831
        %v5833 = vpop.f32.mrb[0].mxu0
        %v5834 = vpop.f32.mrb[0].mxu0
        %v5835 = vadd.f32 %v5626, %v5834
        %v5836 = vpop.f32.mrb[0].mxu0
        %5837 = vmatprep.mubr.bf16.mxu0 0
        %5838 = vmatmul.mubr.bf16.gmra.mrb[0].mxu0 %v5486
        %v5839 = vpop.f32.mrb[0].mxu0
        %v5840 = vadd.f32 %v5631, %v5839
        %v5841 = vpop.f32.mrb[0].mxu0
        %v5842 = vpop.f32.mrb[0].mxu0
        %v5843 = vadd.f32 %v5634, %v5842
        %v5844 = vpop.f32.mrb[0].mxu0
        %5845 = vmatprep.mubr.bf16.mxu0 0
        %5846 = vmatmul.mubr.bf16.gmra.mrb[0].mxu0 %v5487
        %v5847 = vpop.f32.mrb[0].mxu0
        %v5848 = vadd.f32 %v5639, %v5847
        %v5849 = vpop.f32.mrb[0].mxu0
        %v5850 = vpop.f32.mrb[0].mxu0
        %v5851 = vadd.f32 %v5642, %v5850
        %v5852 = vpop.f32.mrb[0].mxu0
        %5853 = vmatprep.mubr.bf16.mxu0 0
        %5854 = vmatmul.mubr.bf16.gmra.mrb[0].mxu0 %v5488
        %v5855 = vpop.f32.mrb[0].mxu0
        %v5856 = vadd.f32 %v5647, %v5855
        %v5857 = vpop.f32.mrb[0].mxu0
        %v5858 = vpop.f32.mrb[0].mxu0
        %v5859 = vadd.f32 %v5650, %v5858
        %v5860 = vpop.f32.mrb[0].mxu0
        %5861 = vmatprep.mubr.bf16.mxu0 0
        %5862 = vmatmul.mubr.bf16.gmra.mrb[0].mxu0 %v5489
        %v5863 = vpop.f32.mrb[0].mxu0
        %v5864 = vadd.f32 %v5655, %v5863
        %v5865 = vpop.f32.mrb[0].mxu0
        %v5866 = vpop.f32.mrb[0].mxu0
        %v5867 = vadd.f32 %v5658, %v5866
        %v5868 = vpop.f32.mrb[0].mxu0
        %5869 = vmatprep.mubr.bf16.mxu0 0
        %5870 = vmatmul.mubr.bf16.gmra.mrb[0].mxu0 %v5490
        %v5871 = vpop.f32.mrb[0].mxu0
        %v5872 = vadd.f32 %v5663, %v5871
        %v5873 = vpop.f32.mrb[0].mxu0
        %v5874 = vpop.f32.mrb[0].mxu0
        %v5875 = vadd.f32 %v5666, %v5874
        %v5876 = vpop.f32.mrb[0].mxu0
        %5877 = vmatprep.mubr.bf16.mxu0 0
        %5878 = vmatmul.mubr.bf16.gmra.mrb[0].mxu0 %v5491
        %v5879 = vpop.f32.mrb[0].mxu0
        %v5880 = vadd.f32 %v5671, %v5879
        %v5881 = vpop.f32.mrb[0].mxu0
        %v5882 = vpop.f32.mrb[0].mxu0
        %v5883 = vadd.f32 %v5674, %v5882
        %v5884 = vpop.f32.mrb[0].mxu0
        %5885 = vmatprep.mubr.bf16.mxu0 0
        %5886 = vmatmul.mubr.bf16.gmra.mrb[0].mxu0 %v5492
        %v5887 = vpop.f32.mrb[0].mxu0
        %v5888 = vadd.f32 %v5679, %v5887
        %v5889 = vpop.f32.mrb[0].mxu0
        %v5890 = vpop.f32.mrb[0].mxu0
        %v5891 = vadd.f32 %v5682, %v5890
        %v5892 = vpop.f32.mrb[0].mxu0
        %5893 = vmatprep.mubr.bf16.mxu0 0
        %5894 = vmatmul.mubr.bf16.gmra.mrb[0].mxu0 %v5493
        %v5895 = vpop.f32.mrb[0].mxu0
        %v5896 = vadd.f32 %v5687, %v5895
        %v5897 = vpop.f32.mrb[0].mxu0
        %v5898 = vpop.f32.mrb[0].mxu0
        %v5899 = vadd.f32 %v5690, %v5898
        %v5900 = vpop.f32.mrb[0].mxu0
        %5901 = vmatprep.mubr.bf16.mxu0 0
        %5902 = vmatmul.mubr.bf16.gmra.mrb[0].mxu0 %v5494
        %v5903 = vpop.f32.mrb[0].mxu0
        %v5904 = vadd.f32 %v5695, %v5903
        %v5905 = vpop.f32.mrb[0].mxu0
        %v5906 = vpop.f32.mrb[0].mxu0
        %v5907 = vadd.f32 %v5698, %v5906
        %v5908 = vpop.f32.mrb[0].mxu0
        %5909 = vmatprep.mubr.bf16.mxu0 0
        %5910 = vmatmul.mubr.bf16.gmra.mrb[0].mxu0 %v5495
        %v5911 = vpop.f32.mrb[0].mxu0
        %v5912 = vadd.f32 %v5703, %v5911
        %v5913 = vpop.f32.mrb[0].mxu0
        %v5914 = vpop.f32.mrb[0].mxu0
        %v5915 = vadd.f32 %v5706, %v5914
        %v5916 = vpop.f32.mrb[0].mxu0
        %5917 = vmatprep.mubr.bf16.mxu0 0
        %5918 = vmatmul.mubr.bf16.gmra.mrb[0].mxu0 %v5496
        %v5919 = vpop.f32.mrb[0].mxu0
        %v5920 = vadd.f32 %v5711, %v5919
        %v5921 = vpop.f32.mrb[0].mxu0
        %v5922 = vpop.f32.mrb[0].mxu0
        %v5923 = vadd.f32 %v5714, %v5922
        %v5924 = vpop.f32.mrb[0].mxu0
        %5925 = vmatprep.mubr.bf16.mxu0 0
        %5926 = vmatmul.mubr.bf16.gmra.mrb[0].mxu0 %v5497
        %v5927 = vpop.f32.mrb[0].mxu0
        %v5928 = vadd.f32 %v5719, %v5927
        %v5929 = vpop.f32.mrb[0].mxu0
        %v5930 = vpop.f32.mrb[0].mxu0
        %v5931 = vadd.f32 %v5722, %v5930
        %v5932 = vpop.f32.mrb[0].mxu0
        %5933 = vmatprep.mubr.bf16.mxu0 0
        %5934 = vmatmul.mubr.bf16.gmra.mrb[0].mxu0 %v5498
        %v5935 = vpop.f32.mrb[0].mxu0
        %v5936 = vadd.f32 %v5727, %v5935
        %v5937 = vpop.f32.mrb[0].mxu0
        %v5938 = vpop.f32.mrb[0].mxu0
        %v5939 = vadd.f32 %v5730, %v5938
        %v5940 = vpop.f32.mrb[0].mxu0
        %5941 = vmatprep.mubr.bf16.mxu0 0
        %5942 = vmatmul.mubr.bf16.gmra.mrb[0].mxu0 %v5499
        %v5943 = vpop.f32.mrb[0].mxu0
        %v5944 = vadd.f32 %v5735, %v5943
        %v5945 = vpop.f32.mrb[0].mxu0
        %v5946 = vpop.f32.mrb[0].mxu0
        %v5947 = vadd.f32 %v5738, %v5946
        %v5948 = vpop.f32.mrb[0].mxu0
        %5949 = vdwg.mxu0
        %v5950 = vld [vmem:[%s9] sm:$0x1]
        %v5952 = vlaneseq
        %v5953 = vshrl.u32 %v5952, 7
        %v5954 = vsub.s32 0, %v5953
        %v5955 = vrot.slane %v5950, %v5954
        %v5957 = vadd.f32 %v5824, %v5955
        %v5958 = vadd.f32 %v5827, %v5955
        %v5959 = vadd.f32 %v5832, %v5955
        %v5960 = vadd.f32 %v5835, %v5955
        %v5961 = vadd.f32 %v5840, %v5955
        %v5962 = vadd.f32 %v5843, %v5955
        %v5963 = vadd.f32 %v5848, %v5955
        %v5964 = vadd.f32 %v5851, %v5955
        %v5965 = vadd.f32 %v5856, %v5955
        %v5966 = vadd.f32 %v5859, %v5955
        %v5967 = vadd.f32 %v5864, %v5955
        %v5968 = vadd.f32 %v5867, %v5955
        %v5969 = vadd.f32 %v5872, %v5955
        %v5970 = vadd.f32 %v5875, %v5955
        %v5971 = vadd.f32 %v5880, %v5955
        %v5972 = vadd.f32 %v5883, %v5955
        %v5973 = vadd.f32 %v5888, %v5955
        %v5974 = vadd.f32 %v5891, %v5955
        %v5975 = vadd.f32 %v5896, %v5955
        %v5976 = vadd.f32 %v5899, %v5955
        %v5977 = vadd.f32 %v5904, %v5955
        %v5978 = vadd.f32 %v5907, %v5955
        %v5979 = vadd.f32 %v5912, %v5955
        %v5980 = vadd.f32 %v5915, %v5955
        %v5981 = vadd.f32 %v5920, %v5955
        %v5982 = vadd.f32 %v5923, %v5955
        %v5983 = vadd.f32 %v5928, %v5955
        %v5984 = vadd.f32 %v5931, %v5955
        %v5985 = vadd.f32 %v5936, %v5955
        %v5986 = vadd.f32 %v5939, %v5955
        %v5987 = vadd.f32 %v5944, %v5955
        %v5988 = vadd.f32 %v5947, %v5955
        %v5989 = vmax.f32 %v5957, 0.0
        %v5990 = vmax.f32 %v5958, 0.0
        %v5991 = vmax.f32 %v5959, 0.0
        %v5992 = vmax.f32 %v5960, 0.0
        %v5993 = vmax.f32 %v5961, 0.0
        %v5994 = vmax.f32 %v5962, 0.0
        %v5995 = vmax.f32 %v5963, 0.0
        %v5996 = vmax.f32 %v5964, 0.0
        %v5997 = vmax.f32 %v5965, 0.0
        %v5998 = vmax.f32 %v5966, 0.0
        %v5999 = vmax.f32 %v5967, 0.0
        %v6000 = vmax.f32 %v5968, 0.0
        %v6001 = vmax.f32 %v5969, 0.0
        %v6002 = vmax.f32 %v5970, 0.0
        %v6003 = vmax.f32 %v5971, 0.0
        %v6004 = vmax.f32 %v5972, 0.0
        %v6005 = vmax.f32 %v5973, 0.0
        %v6006 = vmax.f32 %v5974, 0.0
        %v6007 = vmax.f32 %v5975, 0.0
        %v6008 = vmax.f32 %v5976, 0.0
        %v6009 = vmax.f32 %v5977, 0.0
        %v6010 = vmax.f32 %v5978, 0.0
        %v6011 = vmax.f32 %v5979, 0.0
        %v6012 = vmax.f32 %v5980, 0.0
        %v6013 = vmax.f32 %v5981, 0.0
        %v6014 = vmax.f32 %v5982, 0.0
        %v6015 = vmax.f32 %v5983, 0.0
        %v6016 = vmax.f32 %v5984, 0.0
        %v6017 = vmax.f32 %v5985, 0.0
        %v6018 = vmax.f32 %v5986, 0.0
        %v6019 = vmax.f32 %v5987, 0.0
        %v6020 = vmax.f32 %v5988, 0.0
        %v6021 = vpack.c.bf16 %v5990, %v5989
        %v6022 = vpack.c.bf16 %v5992, %v5991
        %v6023 = vpack.c.bf16 %v5994, %v5993
        %v6024 = vpack.c.bf16 %v5996, %v5995
        %v6025 = vpack.c.bf16 %v5998, %v5997
        %v6026 = vpack.c.bf16 %v6000, %v5999
        %v6027 = vpack.c.bf16 %v6002, %v6001
        %v6028 = vpack.c.bf16 %v6004, %v6003
        %v6029 = vpack.c.bf16 %v6006, %v6005
        %v6030 = vpack.c.bf16 %v6008, %v6007
        %v6031 = vpack.c.bf16 %v6010, %v6009
        %v6032 = vpack.c.bf16 %v6012, %v6011
        %v6033 = vpack.c.bf16 %v6014, %v6013
        %v6034 = vpack.c.bf16 %v6016, %v6015
        %v6035 = vpack.c.bf16 %v6018, %v6017
        %v6036 = vpack.c.bf16 %v6020, %v6019
        %v6037 = vld [vmem:[%s10] sm:$0xf]
        %v6038 = vld [vmem:[%s10 + $0x4] sm:$0xf]
        %v6039 = vld [vmem:[%s10 + $0x8] sm:$0xf]
        %v6040 = vld [vmem:[%s10 + $0xc] sm:$0xf]
        %v6041 = vld [vmem:[%s10 + $0x10] sm:$0xf]
        %v6042 = vld [vmem:[%s10 + $0x14] sm:$0xf]
        %v6043 = vld [vmem:[%s10 + $0x18] sm:$0xf]
        %v6044 = vld [vmem:[%s10 + $0x1c] sm:$0xf]
        %v6045 = vld [vmem:[%s10 + $0x20] sm:$0xf]
        %v6046 = vld [vmem:[%s10 + $0x24] sm:$0xf]
        %v6047 = vld [vmem:[%s10 + $0x28] sm:$0xf]
        %v6048 = vld [vmem:[%s10 + $0x2c] sm:$0xf]
        %v6049 = vld [vmem:[%s10 + $0x30] sm:$0xf]
        %v6050 = vld [vmem:[%s10 + $0x34] sm:$0xf]
        %v6051 = vld [vmem:[%s10 + $0x38] sm:$0xf]
        %v6052 = vld [vmem:[%s10 + $0x3c] sm:$0xf]
        %v6053 = vld [vmem:[%s11] sm:$0x1]
        %v6055 = vlaneseq
        %v6056 = vshrl.u32 %v6055, 7
        %v6057 = vsub.s32 0, %v6056
        %v6058 = vrot.slane %v6053, %v6057
        %v6076 = vunpack.c.l.b16 %v6037
        %v6077 = vunpack.c.l.b16 %v6038
        %v6078 = vunpack.c.l.b16 %v6039
        %v6079 = vunpack.c.l.b16 %v6040
        %v6080 = vunpack.c.l.b16 %v6041
        %v6081 = vunpack.c.l.b16 %v6042
        %v6082 = vunpack.c.l.b16 %v6043
        %v6083 = vunpack.c.l.b16 %v6044
        %v6084 = vunpack.c.l.b16 %v6045
        %v6085 = vunpack.c.l.b16 %v6046
        %v6086 = vunpack.c.l.b16 %v6047
        %v6087 = vunpack.c.l.b16 %v6048
        %v6088 = vunpack.c.l.b16 %v6049
        %v6089 = vunpack.c.l.b16 %v6050
        %v6090 = vunpack.c.l.b16 %v6051
        %v6091 = vunpack.c.l.b16 %v6052
        %v6092 = vpack.c.b16 %v6077, %v6076
        %v6093 = vpack.c.b16 %v6079, %v6078
        %v6094 = vpack.c.b16 %v6081, %v6080
        %v6095 = vpack.c.b16 %v6083, %v6082
        %v6096 = vpack.c.b16 %v6085, %v6084
        %v6097 = vpack.c.b16 %v6087, %v6086
        %v6098 = vpack.c.b16 %v6089, %v6088
        %v6099 = vpack.c.b16 %v6091, %v6090
        %6108 = vmatprep.subr.bf16.mxu0 0
        %6109 = vmatpush1.bf16.msra.mxu0 %v6092
        %6110 = vmatprep.subr.bf16.mxu0 0
        %6111 = vmatpush1.bf16.msra.mxu0 %v6093
        %6112 = vmatprep.subr.bf16.mxu0 0
        %6113 = vmatpush1.bf16.msra.mxu0 %v6094
        %6114 = vmatprep.subr.bf16.mxu0 0
        %6115 = vmatpush1.bf16.msra.mxu0 %v6095
        %6116 = vmatprep.subr.bf16.mxu0 0
        %6117 = vmatpush1.bf16.msra.mxu0 %v6096
        %6118 = vmatprep.subr.bf16.mxu0 0
        %6119 = vmatpush1.bf16.msra.mxu0 %v6097
        %6120 = vmatprep.subr.bf16.mxu0 0
        %6121 = vmatpush1.bf16.msra.mxu0 %v6098
        %6122 = vmatprep.subr.bf16.mxu0 0
        %6123 = vmatpush1.bf16.msra.mxu0 %v6099
        %6124 = vmatprep.subr.bf16.mxu0 0
        %6125 = vmatpush1.bf16.msra.mxu0 0
        %6126 = vmatprep.subr.bf16.mxu0 0
        %6127 = vmatpush1.bf16.msra.mxu0 0
        %6128 = vmatprep.subr.bf16.mxu0 0
        %6129 = vmatpush1.bf16.msra.mxu0 0
        %6130 = vmatprep.subr.bf16.mxu0 0
        %6131 = vmatpush1.bf16.msra.mxu0 0
        %6132 = vmatprep.subr.bf16.mxu0 0
        %6133 = vmatpush1.bf16.msra.mxu0 0
        %6134 = vmatprep.subr.bf16.mxu0 0
        %6135 = vmatpush1.bf16.msra.mxu0 0
        %6136 = vmatprep.subr.bf16.mxu0 0
        %6137 = vmatpush1.bf16.msra.mxu0 0
        %6138 = vmatprep.subr.bf16.mxu0 0
        %6139 = vmatpush1.bf16.msra.mxu0 0
        %6140 = vmatprep.mubr.bf16.mxu0 0
        %6141 = vmatmul.mubr.bf16.gmra.mrb[0].mxu0 %v6021
        %v6142 = vpop.f32.mrb[0].mxu0
        %v6143 = vadd.f32 %v6058, %v6142
        %v6144 = vpop.f32.mrb[0].mxu0
        %v6145 = vpop.f32.mrb[0].mxu0
        %v6146 = vadd.f32 %v6058, %v6145
        %v6147 = vpop.f32.mrb[0].mxu0
        %6148 = vmatprep.mubr.bf16.mxu0 0
        %6149 = vmatmul.mubr.bf16.gmra.mrb[0].mxu0 %v6022
        %v6150 = vpop.f32.mrb[0].mxu0
        %v6151 = vadd.f32 %v6058, %v6150
        %v6152 = vpop.f32.mrb[0].mxu0
        %v6153 = vpop.f32.mrb[0].mxu0
        %v6154 = vadd.f32 %v6058, %v6153
        %v6155 = vpop.f32.mrb[0].mxu0
        %6156 = vmatprep.mubr.bf16.mxu0 0
        %6157 = vmatmul.mubr.bf16.gmra.mrb[0].mxu0 %v6023
        %v6158 = vpop.f32.mrb[0].mxu0
        %v6159 = vadd.f32 %v6058, %v6158
        %v6160 = vpop.f32.mrb[0].mxu0
        %v6161 = vpop.f32.mrb[0].mxu0
        %v6162 = vadd.f32 %v6058, %v6161
        %v6163 = vpop.f32.mrb[0].mxu0
        %6164 = vmatprep.mubr.bf16.mxu0 0
        %6165 = vmatmul.mubr.bf16.gmra.mrb[0].mxu0 %v6024
        %v6166 = vpop.f32.mrb[0].mxu0
        %v6167 = vadd.f32 %v6058, %v6166
        %v6168 = vpop.f32.mrb[0].mxu0
        %v6169 = vpop.f32.mrb[0].mxu0
        %v6170 = vadd.f32 %v6058, %v6169
        %v6171 = vpop.f32.mrb[0].mxu0
        %6172 = vmatprep.mubr.bf16.mxu0 0
        %6173 = vmatmul.mubr.bf16.gmra.mrb[0].mxu0 %v6025
        %v6174 = vpop.f32.mrb[0].mxu0
        %v6175 = vadd.f32 %v6058, %v6174
        %v6176 = vpop.f32.mrb[0].mxu0
        %v6177 = vpop.f32.mrb[0].mxu0
        %v6178 = vadd.f32 %v6058, %v6177
        %v6179 = vpop.f32.mrb[0].mxu0
        %6180 = vmatprep.mubr.bf16.mxu0 0
        %6181 = vmatmul.mubr.bf16.gmra.mrb[0].mxu0 %v6026
        %v6182 = vpop.f32.mrb[0].mxu0
        %v6183 = vadd.f32 %v6058, %v6182
        %v6184 = vpop.f32.mrb[0].mxu0
        %v6185 = vpop.f32.mrb[0].mxu0
        %v6186 = vadd.f32 %v6058, %v6185
        %v6187 = vpop.f32.mrb[0].mxu0
        %6188 = vmatprep.mubr.bf16.mxu0 0
        %6189 = vmatmul.mubr.bf16.gmra.mrb[0].mxu0 %v6027
        %v6190 = vpop.f32.mrb[0].mxu0
        %v6191 = vadd.f32 %v6058, %v6190
        %v6192 = vpop.f32.mrb[0].mxu0
        %v6193 = vpop.f32.mrb[0].mxu0
        %v6194 = vadd.f32 %v6058, %v6193
        %v6195 = vpop.f32.mrb[0].mxu0
        %6196 = vmatprep.mubr.bf16.mxu0 0
        %6197 = vmatmul.mubr.bf16.gmra.mrb[0].mxu0 %v6028
        %v6198 = vpop.f32.mrb[0].mxu0
        %v6199 = vadd.f32 %v6058, %v6198
        %v6200 = vpop.f32.mrb[0].mxu0
        %v6201 = vpop.f32.mrb[0].mxu0
        %v6202 = vadd.f32 %v6058, %v6201
        %v6203 = vpop.f32.mrb[0].mxu0
        %6204 = vmatprep.mubr.bf16.mxu0 0
        %6205 = vmatmul.mubr.bf16.gmra.mrb[0].mxu0 %v6029
        %v6206 = vpop.f32.mrb[0].mxu0
        %v6207 = vadd.f32 %v6058, %v6206
        %v6208 = vpop.f32.mrb[0].mxu0
        %v6209 = vpop.f32.mrb[0].mxu0
        %v6210 = vadd.f32 %v6058, %v6209
        %v6211 = vpop.f32.mrb[0].mxu0
        %6212 = vmatprep.mubr.bf16.mxu0 0
        %6213 = vmatmul.mubr.bf16.gmra.mrb[0].mxu0 %v6030
        %v6214 = vpop.f32.mrb[0].mxu0
        %v6215 = vadd.f32 %v6058, %v6214
        %v6216 = vpop.f32.mrb[0].mxu0
        %v6217 = vpop.f32.mrb[0].mxu0
        %v6218 = vadd.f32 %v6058, %v6217
        %v6219 = vpop.f32.mrb[0].mxu0
        %6220 = vmatprep.mubr.bf16.mxu0 0
        %6221 = vmatmul.mubr.bf16.gmra.mrb[0].mxu0 %v6031
        %v6222 = vpop.f32.mrb[0].mxu0
        %v6223 = vadd.f32 %v6058, %v6222
        %v6224 = vpop.f32.mrb[0].mxu0
        %v6225 = vpop.f32.mrb[0].mxu0
        %v6226 = vadd.f32 %v6058, %v6225
        %v6227 = vpop.f32.mrb[0].mxu0
        %6228 = vmatprep.mubr.bf16.mxu0 0
        %6229 = vmatmul.mubr.bf16.gmra.mrb[0].mxu0 %v6032
        %v6230 = vpop.f32.mrb[0].mxu0
        %v6231 = vadd.f32 %v6058, %v6230
        %v6232 = vpop.f32.mrb[0].mxu0
        %v6233 = vpop.f32.mrb[0].mxu0
        %v6234 = vadd.f32 %v6058, %v6233
        %v6235 = vpop.f32.mrb[0].mxu0
        %6236 = vmatprep.mubr.bf16.mxu0 0
        %6237 = vmatmul.mubr.bf16.gmra.mrb[0].mxu0 %v6033
        %v6238 = vpop.f32.mrb[0].mxu0
        %v6239 = vadd.f32 %v6058, %v6238
        %v6240 = vpop.f32.mrb[0].mxu0
        %v6241 = vpop.f32.mrb[0].mxu0
        %v6242 = vadd.f32 %v6058, %v6241
        %v6243 = vpop.f32.mrb[0].mxu0
        %6244 = vmatprep.mubr.bf16.mxu0 0
        %6245 = vmatmul.mubr.bf16.gmra.mrb[0].mxu0 %v6034
        %v6246 = vpop.f32.mrb[0].mxu0
        %v6247 = vadd.f32 %v6058, %v6246
        %v6248 = vpop.f32.mrb[0].mxu0
        %v6249 = vpop.f32.mrb[0].mxu0
        %v6250 = vadd.f32 %v6058, %v6249
        %v6251 = vpop.f32.mrb[0].mxu0
        %6252 = vmatprep.mubr.bf16.mxu0 0
        %6253 = vmatmul.mubr.bf16.gmra.mrb[0].mxu0 %v6035
        %v6254 = vpop.f32.mrb[0].mxu0
        %v6255 = vadd.f32 %v6058, %v6254
        %v6256 = vpop.f32.mrb[0].mxu0
        %v6257 = vpop.f32.mrb[0].mxu0
        %v6258 = vadd.f32 %v6058, %v6257
        %v6259 = vpop.f32.mrb[0].mxu0
        %6260 = vmatprep.mubr.bf16.mxu0 0
        %6261 = vmatmul.mubr.bf16.gmra.mrb[0].mxu0 %v6036
        %v6262 = vpop.f32.mrb[0].mxu0
        %v6263 = vadd.f32 %v6058, %v6262
        %v6264 = vpop.f32.mrb[0].mxu0
        %v6265 = vpop.f32.mrb[0].mxu0
        %v6266 = vadd.f32 %v6058, %v6265
        %v6267 = vpop.f32.mrb[0].mxu0
        %6268 = vdwg.mxu0
        %v6269 = vpack.c.bf16 %v6146, %v6143
        %v6270 = vpack.c.bf16 %v6154, %v6151
        %v6271 = vpack.c.bf16 %v6162, %v6159
        %v6272 = vpack.c.bf16 %v6170, %v6167
        %v6273 = vpack.c.bf16 %v6178, %v6175
        %v6274 = vpack.c.bf16 %v6186, %v6183
        %v6275 = vpack.c.bf16 %v6194, %v6191
        %v6276 = vpack.c.bf16 %v6202, %v6199
        %v6277 = vpack.c.bf16 %v6210, %v6207
        %v6278 = vpack.c.bf16 %v6218, %v6215
        %v6279 = vpack.c.bf16 %v6226, %v6223
        %v6280 = vpack.c.bf16 %v6234, %v6231
        %v6281 = vpack.c.bf16 %v6242, %v6239
        %v6282 = vpack.c.bf16 %v6250, %v6247
        %v6283 = vpack.c.bf16 %v6258, %v6255
        %v6284 = vpack.c.bf16 %v6266, %v6263
        %v6285 = vld [vmem:[%s12] sm:$0xf]
        %v6286 = vld [vmem:[%s12 + $0x4] sm:$0xf]
        %v6287 = vld [vmem:[%s12 + $0x8] sm:$0xf]
        %v6288 = vld [vmem:[%s12 + $0xc] sm:$0xf]
        %v6289 = vld [vmem:[%s12 + $0x10] sm:$0xf]
        %v6290 = vld [vmem:[%s12 + $0x14] sm:$0xf]
        %v6291 = vld [vmem:[%s12 + $0x18] sm:$0xf]
        %v6292 = vld [vmem:[%s12 + $0x1c] sm:$0xf]
        %v6293 = vld [vmem:[%s12 + $0x20] sm:$0xf]
        %v6294 = vld [vmem:[%s12 + $0x24] sm:$0xf]
        %v6295 = vld [vmem:[%s12 + $0x28] sm:$0xf]
        %v6296 = vld [vmem:[%s12 + $0x2c] sm:$0xf]
        %v6297 = vld [vmem:[%s12 + $0x30] sm:$0xf]
        %v6298 = vld [vmem:[%s12 + $0x34] sm:$0xf]
        %v6299 = vld [vmem:[%s12 + $0x38] sm:$0xf]
        %v6300 = vld [vmem:[%s12 + $0x3c] sm:$0xf]
        %v6301 = vld [vmem:[%s13] sm:$0xf]
        %v6302 = vld [vmem:[%s13 + $0x4] sm:$0xf]
        %v6303 = vld [vmem:[%s13 + $0x8] sm:$0xf]
        %v6304 = vld [vmem:[%s13 + $0xc] sm:$0xf]
        %v6305 = vld [vmem:[%s13 + $0x10] sm:$0xf]
        %v6306 = vld [vmem:[%s13 + $0x14] sm:$0xf]
        %v6307 = vld [vmem:[%s13 + $0x18] sm:$0xf]
        %v6308 = vld [vmem:[%s13 + $0x1c] sm:$0xf]
        %v6309 = vld [vmem:[%s13 + $0x20] sm:$0xf]
        %v6310 = vld [vmem:[%s13 + $0x24] sm:$0xf]
        %v6311 = vld [vmem:[%s13 + $0x28] sm:$0xf]
        %v6312 = vld [vmem:[%s13 + $0x2c] sm:$0xf]
        %v6313 = vld [vmem:[%s13 + $0x30] sm:$0xf]
        %v6314 = vld [vmem:[%s13 + $0x34] sm:$0xf]
        %v6315 = vld [vmem:[%s13 + $0x38] sm:$0xf]
        %v6316 = vld [vmem:[%s13 + $0x3c] sm:$0xf]
        %v6333 = vunpack.c.l.b16 %v6301
        %v6334 = vunpack.c.l.b16 %v6302
        %v6335 = vunpack.c.l.b16 %v6303
        %v6336 = vunpack.c.l.b16 %v6304
        %v6337 = vunpack.c.l.b16 %v6305
        %v6338 = vunpack.c.l.b16 %v6306
        %v6339 = vunpack.c.l.b16 %v6307
        %v6340 = vunpack.c.l.b16 %v6308
        %v6341 = vunpack.c.l.b16 %v6309
        %v6342 = vunpack.c.l.b16 %v6310
        %v6343 = vunpack.c.l.b16 %v6311
        %v6344 = vunpack.c.l.b16 %v6312
        %v6345 = vunpack.c.l.b16 %v6313
        %v6346 = vunpack.c.l.b16 %v6314
        %v6347 = vunpack.c.l.b16 %v6315
        %v6348 = vunpack.c.l.b16 %v6316
        %v6349 = vpack.c.b16 %v6334, %v6333
        %v6350 = vpack.c.b16 %v6336, %v6335
        %v6351 = vpack.c.b16 %v6338, %v6337
        %v6352 = vpack.c.b16 %v6340, %v6339
        %v6353 = vpack.c.b16 %v6342, %v6341
        %v6354 = vpack.c.b16 %v6344, %v6343
        %v6355 = vpack.c.b16 %v6346, %v6345
        %v6356 = vpack.c.b16 %v6348, %v6347
        %6365 = vmatprep.subr.bf16.mxu0 0
        %6366 = vmatpush1.bf16.msra.mxu0 %v6349
        %6367 = vmatprep.subr.bf16.mxu0 0
        %6368 = vmatpush1.bf16.msra.mxu0 %v6350
        %6369 = vmatprep.subr.bf16.mxu0 0
        %6370 = vmatpush1.bf16.msra.mxu0 %v6351
        %6371 = vmatprep.subr.bf16.mxu0 0
        %6372 = vmatpush1.bf16.msra.mxu0 %v6352
        %6373 = vmatprep.subr.bf16.mxu0 0
        %6374 = vmatpush1.bf16.msra.mxu0 %v6353
        %6375 = vmatprep.subr.bf16.mxu0 0
        %6376 = vmatpush1.bf16.msra.mxu0 %v6354
        %6377 = vmatprep.subr.bf16.mxu0 0
        %6378 = vmatpush1.bf16.msra.mxu0 %v6355
        %6379 = vmatprep.subr.bf16.mxu0 0
        %6380 = vmatpush1.bf16.msra.mxu0 %v6356
        %6381 = vmatprep.subr.bf16.mxu0 0
        %6382 = vmatpush1.bf16.msra.mxu0 0
        %6383 = vmatprep.subr.bf16.mxu0 0
        %6384 = vmatpush1.bf16.msra.mxu0 0
        %6385 = vmatprep.subr.bf16.mxu0 0
        %6386 = vmatpush1.bf16.msra.mxu0 0
        %6387 = vmatprep.subr.bf16.mxu0 0
        %6388 = vmatpush1.bf16.msra.mxu0 0
        %6389 = vmatprep.subr.bf16.mxu0 0
        %6390 = vmatpush1.bf16.msra.mxu0 0
        %6391 = vmatprep.subr.bf16.mxu0 0
        %6392 = vmatpush1.bf16.msra.mxu0 0
        %6393 = vmatprep.subr.bf16.mxu0 0
        %6394 = vmatpush1.bf16.msra.mxu0 0
        %6395 = vmatprep.subr.bf16.mxu0 0
        %6396 = vmatpush1.bf16.msra.mxu0 0
        %6397 = vmatprep.mubr.bf16.mxu0 0
        %6398 = vmatmul.mubr.bf16.gmra.mrb[0].mxu0 %v4924
        %v6399 = vpop.f32.mrb[0].mxu0
        %v6400 = vadd.f32 0.0, %v6399
        %v6401 = vpop.f32.mrb[0].mxu0
        %v6402 = vpop.f32.mrb[0].mxu0
        %v6403 = vadd.f32 0.0, %v6402
        %v6404 = vpop.f32.mrb[0].mxu0
        %6405 = vmatprep.mubr.bf16.mxu0 0
        %6406 = vmatmul.mubr.bf16.gmra.mrb[0].mxu0 %v4925
        %v6407 = vpop.f32.mrb[0].mxu0
        %v6408 = vadd.f32 0.0, %v6407
        %v6409 = vpop.f32.mrb[0].mxu0
        %v6410 = vpop.f32.mrb[0].mxu0
        %v6411 = vadd.f32 0.0, %v6410
        %v6412 = vpop.f32.mrb[0].mxu0
        %6413 = vmatprep.mubr.bf16.mxu0 0
        %6414 = vmatmul.mubr.bf16.gmra.mrb[0].mxu0 %v4926
        %v6415 = vpop.f32.mrb[0].mxu0
        %v6416 = vadd.f32 0.0, %v6415
        %v6417 = vpop.f32.mrb[0].mxu0
        %v6418 = vpop.f32.mrb[0].mxu0
        %v6419 = vadd.f32 0.0, %v6418
        %v6420 = vpop.f32.mrb[0].mxu0
        %6421 = vmatprep.mubr.bf16.mxu0 0
        %6422 = vmatmul.mubr.bf16.gmra.mrb[0].mxu0 %v4927
        %v6423 = vpop.f32.mrb[0].mxu0
        %v6424 = vadd.f32 0.0, %v6423
        %v6425 = vpop.f32.mrb[0].mxu0
        %v6426 = vpop.f32.mrb[0].mxu0
        %v6427 = vadd.f32 0.0, %v6426
        %v6428 = vpop.f32.mrb[0].mxu0
        %6429 = vmatprep.mubr.bf16.mxu0 0
        %6430 = vmatmul.mubr.bf16.gmra.mrb[0].mxu0 %v4928
        %v6431 = vpop.f32.mrb[0].mxu0
        %v6432 = vadd.f32 0.0, %v6431
        %v6433 = vpop.f32.mrb[0].mxu0
        %v6434 = vpop.f32.mrb[0].mxu0
        %v6435 = vadd.f32 0.0, %v6434
        %v6436 = vpop.f32.mrb[0].mxu0
        %6437 = vmatprep.mubr.bf16.mxu0 0
        %6438 = vmatmul.mubr.bf16.gmra.mrb[0].mxu0 %v4929
        %v6439 = vpop.f32.mrb[0].mxu0
        %v6440 = vadd.f32 0.0, %v6439
        %v6441 = vpop.f32.mrb[0].mxu0
        %v6442 = vpop.f32.mrb[0].mxu0
        %v6443 = vadd.f32 0.0, %v6442
        %v6444 = vpop.f32.mrb[0].mxu0
        %6445 = vmatprep.mubr.bf16.mxu0 0
        %6446 = vmatmul.mubr.bf16.gmra.mrb[0].mxu0 %v4930
        %v6447 = vpop.f32.mrb[0].mxu0
        %v6448 = vadd.f32 0.0, %v6447
        %v6449 = vpop.f32.mrb[0].mxu0
        %v6450 = vpop.f32.mrb[0].mxu0
        %v6451 = vadd.f32 0.0, %v6450
        %v6452 = vpop.f32.mrb[0].mxu0
        %6453 = vmatprep.mubr.bf16.mxu0 0
        %6454 = vmatmul.mubr.bf16.gmra.mrb[0].mxu0 %v4931
        %v6455 = vpop.f32.mrb[0].mxu0
        %v6456 = vadd.f32 0.0, %v6455
        %v6457 = vpop.f32.mrb[0].mxu0
        %v6458 = vpop.f32.mrb[0].mxu0
        %v6459 = vadd.f32 0.0, %v6458
        %v6460 = vpop.f32.mrb[0].mxu0
        %6461 = vmatprep.mubr.bf16.mxu0 0
        %6462 = vmatmul.mubr.bf16.gmra.mrb[0].mxu0 %v4932
        %v6463 = vpop.f32.mrb[0].mxu0
        %v6464 = vadd.f32 0.0, %v6463
        %v6465 = vpop.f32.mrb[0].mxu0
        %v6466 = vpop.f32.mrb[0].mxu0
        %v6467 = vadd.f32 0.0, %v6466
        %v6468 = vpop.f32.mrb[0].mxu0
        %6469 = vmatprep.mubr.bf16.mxu0 0
        %6470 = vmatmul.mubr.bf16.gmra.mrb[0].mxu0 %v4933
        %v6471 = vpop.f32.mrb[0].mxu0
        %v6472 = vadd.f32 0.0, %v6471
        %v6473 = vpop.f32.mrb[0].mxu0
        %v6474 = vpop.f32.mrb[0].mxu0
        %v6475 = vadd.f32 0.0, %v6474
        %v6476 = vpop.f32.mrb[0].mxu0
        %6477 = vmatprep.mubr.bf16.mxu0 0
        %6478 = vmatmul.mubr.bf16.gmra.mrb[0].mxu0 %v4934
        %v6479 = vpop.f32.mrb[0].mxu0
        %v6480 = vadd.f32 0.0, %v6479
        %v6481 = vpop.f32.mrb[0].mxu0
        %v6482 = vpop.f32.mrb[0].mxu0
        %v6483 = vadd.f32 0.0, %v6482
        %v6484 = vpop.f32.mrb[0].mxu0
        %6485 = vmatprep.mubr.bf16.mxu0 0
        %6486 = vmatmul.mubr.bf16.gmra.mrb[0].mxu0 %v4935
        %v6487 = vpop.f32.mrb[0].mxu0
        %v6488 = vadd.f32 0.0, %v6487
        %v6489 = vpop.f32.mrb[0].mxu0
        %v6490 = vpop.f32.mrb[0].mxu0
        %v6491 = vadd.f32 0.0, %v6490
        %v6492 = vpop.f32.mrb[0].mxu0
        %6493 = vmatprep.mubr.bf16.mxu0 0
        %6494 = vmatmul.mubr.bf16.gmra.mrb[0].mxu0 %v4936
        %v6495 = vpop.f32.mrb[0].mxu0
        %v6496 = vadd.f32 0.0, %v6495
        %v6497 = vpop.f32.mrb[0].mxu0
        %v6498 = vpop.f32.mrb[0].mxu0
        %v6499 = vadd.f32 0.0, %v6498
        %v6500 = vpop.f32.mrb[0].mxu0
        %6501 = vmatprep.mubr.bf16.mxu0 0
        %6502 = vmatmul.mubr.bf16.gmra.mrb[0].mxu0 %v4937
        %v6503 = vpop.f32.mrb[0].mxu0
        %v6504 = vadd.f32 0.0, %v6503
        %v6505 = vpop.f32.mrb[0].mxu0
        %v6506 = vpop.f32.mrb[0].mxu0
        %v6507 = vadd.f32 0.0, %v6506
        %v6508 = vpop.f32.mrb[0].mxu0
        %6509 = vmatprep.mubr.bf16.mxu0 0
        %6510 = vmatmul.mubr.bf16.gmra.mrb[0].mxu0 %v4938
        %v6511 = vpop.f32.mrb[0].mxu0
        %v6512 = vadd.f32 0.0, %v6511
        %v6513 = vpop.f32.mrb[0].mxu0
        %v6514 = vpop.f32.mrb[0].mxu0
        %v6515 = vadd.f32 0.0, %v6514
        %v6516 = vpop.f32.mrb[0].mxu0
        %6517 = vmatprep.mubr.bf16.mxu0 0
        %6518 = vmatmul.mubr.bf16.gmra.mrb[0].mxu0 %v4939
        %v6519 = vpop.f32.mrb[0].mxu0
        %v6520 = vadd.f32 0.0, %v6519
        %v6521 = vpop.f32.mrb[0].mxu0
        %v6522 = vpop.f32.mrb[0].mxu0
        %v6523 = vadd.f32 0.0, %v6522
        %v6524 = vpop.f32.mrb[0].mxu0
        %6525 = vdwg.mxu0
        %v6542 = vunpack.c.l.b16 %v6285
        %v6543 = vunpack.c.l.b16 %v6286
        %v6544 = vunpack.c.l.b16 %v6287
        %v6545 = vunpack.c.l.b16 %v6288
        %v6546 = vunpack.c.l.b16 %v6289
        %v6547 = vunpack.c.l.b16 %v6290
        %v6548 = vunpack.c.l.b16 %v6291
        %v6549 = vunpack.c.l.b16 %v6292
        %v6550 = vunpack.c.l.b16 %v6293
        %v6551 = vunpack.c.l.b16 %v6294
        %v6552 = vunpack.c.l.b16 %v6295
        %v6553 = vunpack.c.l.b16 %v6296
        %v6554 = vunpack.c.l.b16 %v6297
        %v6555 = vunpack.c.l.b16 %v6298
        %v6556 = vunpack.c.l.b16 %v6299
        %v6557 = vunpack.c.l.b16 %v6300
        %v6558 = vpack.c.b16 %v6543, %v6542
        %v6559 = vpack.c.b16 %v6545, %v6544
        %v6560 = vpack.c.b16 %v6547, %v6546
        %v6561 = vpack.c.b16 %v6549, %v6548
        %v6562 = vpack.c.b16 %v6551, %v6550
        %v6563 = vpack.c.b16 %v6553, %v6552
        %v6564 = vpack.c.b16 %v6555, %v6554
        %v6565 = vpack.c.b16 %v6557, %v6556
        %6574 = vmatprep.subr.bf16.mxu0 0
        %6575 = vmatpush1.bf16.msra.mxu0 %v6558
        %6576 = vmatprep.subr.bf16.mxu0 0
        %6577 = vmatpush1.bf16.msra.mxu0 %v6559
        %6578 = vmatprep.subr.bf16.mxu0 0
        %6579 = vmatpush1.bf16.msra.mxu0 %v6560
        %6580 = vmatprep.subr.bf16.mxu0 0
        %6581 = vmatpush1.bf16.msra.mxu0 %v6561
        %6582 = vmatprep.subr.bf16.mxu0 0
        %6583 = vmatpush1.bf16.msra.mxu0 %v6562
        %6584 = vmatprep.subr.bf16.mxu0 0
        %6585 = vmatpush1.bf16.msra.mxu0 %v6563
        %6586 = vmatprep.subr.bf16.mxu0 0
        %6587 = vmatpush1.bf16.msra.mxu0 %v6564
        %6588 = vmatprep.subr.bf16.mxu0 0
        %6589 = vmatpush1.bf16.msra.mxu0 %v6565
        %6590 = vmatprep.subr.bf16.mxu0 0
        %6591 = vmatpush1.bf16.msra.mxu0 0
        %6592 = vmatprep.subr.bf16.mxu0 0
        %6593 = vmatpush1.bf16.msra.mxu0 0
        %6594 = vmatprep.subr.bf16.mxu0 0
        %6595 = vmatpush1.bf16.msra.mxu0 0
        %6596 = vmatprep.subr.bf16.mxu0 0
        %6597 = vmatpush1.bf16.msra.mxu0 0
        %6598 = vmatprep.subr.bf16.mxu0 0
        %6599 = vmatpush1.bf16.msra.mxu0 0
        %6600 = vmatprep.subr.bf16.mxu0 0
        %6601 = vmatpush1.bf16.msra.mxu0 0
        %6602 = vmatprep.subr.bf16.mxu0 0
        %6603 = vmatpush1.bf16.msra.mxu0 0
        %6604 = vmatprep.subr.bf16.mxu0 0
        %6605 = vmatpush1.bf16.msra.mxu0 0
        %6606 = vmatprep.mubr.bf16.mxu0 0
        %6607 = vmatmul.mubr.bf16.gmra.mrb[0].mxu0 %v6269
        %v6608 = vpop.f32.mrb[0].mxu0
        %v6609 = vadd.f32 %v6400, %v6608
        %v6610 = vpop.f32.mrb[0].mxu0
        %v6611 = vpop.f32.mrb[0].mxu0
        %v6612 = vadd.f32 %v6403, %v6611
        %v6613 = vpop.f32.mrb[0].mxu0
        %6614 = vmatprep.mubr.bf16.mxu0 0
        %6615 = vmatmul.mubr.bf16.gmra.mrb[0].mxu0 %v6270
        %v6616 = vpop.f32.mrb[0].mxu0
        %v6617 = vadd.f32 %v6408, %v6616
        %v6618 = vpop.f32.mrb[0].mxu0
        %v6619 = vpop.f32.mrb[0].mxu0
        %v6620 = vadd.f32 %v6411, %v6619
        %v6621 = vpop.f32.mrb[0].mxu0
        %6622 = vmatprep.mubr.bf16.mxu0 0
        %6623 = vmatmul.mubr.bf16.gmra.mrb[0].mxu0 %v6271
        %v6624 = vpop.f32.mrb[0].mxu0
        %v6625 = vadd.f32 %v6416, %v6624
        %v6626 = vpop.f32.mrb[0].mxu0
        %v6627 = vpop.f32.mrb[0].mxu0
        %v6628 = vadd.f32 %v6419, %v6627
        %v6629 = vpop.f32.mrb[0].mxu0
        %6630 = vmatprep.mubr.bf16.mxu0 0
        %6631 = vmatmul.mubr.bf16.gmra.mrb[0].mxu0 %v6272
        %v6632 = vpop.f32.mrb[0].mxu0
        %v6633 = vadd.f32 %v6424, %v6632
        %v6634 = vpop.f32.mrb[0].mxu0
        %v6635 = vpop.f32.mrb[0].mxu0
        %v6636 = vadd.f32 %v6427, %v6635
        %v6637 = vpop.f32.mrb[0].mxu0
        %6638 = vmatprep.mubr.bf16.mxu0 0
        %6639 = vmatmul.mubr.bf16.gmra.mrb[0].mxu0 %v6273
        %v6640 = vpop.f32.mrb[0].mxu0
        %v6641 = vadd.f32 %v6432, %v6640
        %v6642 = vpop.f32.mrb[0].mxu0
        %v6643 = vpop.f32.mrb[0].mxu0
        %v6644 = vadd.f32 %v6435, %v6643
        %v6645 = vpop.f32.mrb[0].mxu0
        %6646 = vmatprep.mubr.bf16.mxu0 0
        %6647 = vmatmul.mubr.bf16.gmra.mrb[0].mxu0 %v6274
        %v6648 = vpop.f32.mrb[0].mxu0
        %v6649 = vadd.f32 %v6440, %v6648
        %v6650 = vpop.f32.mrb[0].mxu0
        %v6651 = vpop.f32.mrb[0].mxu0
        %v6652 = vadd.f32 %v6443, %v6651
        %v6653 = vpop.f32.mrb[0].mxu0
        %6654 = vmatprep.mubr.bf16.mxu0 0
        %6655 = vmatmul.mubr.bf16.gmra.mrb[0].mxu0 %v6275
        %v6656 = vpop.f32.mrb[0].mxu0
        %v6657 = vadd.f32 %v6448, %v6656
        %v6658 = vpop.f32.mrb[0].mxu0
        %v6659 = vpop.f32.mrb[0].mxu0
        %v6660 = vadd.f32 %v6451, %v6659
        %v6661 = vpop.f32.mrb[0].mxu0
        %6662 = vmatprep.mubr.bf16.mxu0 0
        %6663 = vmatmul.mubr.bf16.gmra.mrb[0].mxu0 %v6276
        %v6664 = vpop.f32.mrb[0].mxu0
        %v6665 = vadd.f32 %v6456, %v6664
        %v6666 = vpop.f32.mrb[0].mxu0
        %v6667 = vpop.f32.mrb[0].mxu0
        %v6668 = vadd.f32 %v6459, %v6667
        %v6669 = vpop.f32.mrb[0].mxu0
        %6670 = vmatprep.mubr.bf16.mxu0 0
        %6671 = vmatmul.mubr.bf16.gmra.mrb[0].mxu0 %v6277
        %v6672 = vpop.f32.mrb[0].mxu0
        %v6673 = vadd.f32 %v6464, %v6672
        %v6674 = vpop.f32.mrb[0].mxu0
        %v6675 = vpop.f32.mrb[0].mxu0
        %v6676 = vadd.f32 %v6467, %v6675
        %v6677 = vpop.f32.mrb[0].mxu0
        %6678 = vmatprep.mubr.bf16.mxu0 0
        %6679 = vmatmul.mubr.bf16.gmra.mrb[0].mxu0 %v6278
        %v6680 = vpop.f32.mrb[0].mxu0
        %v6681 = vadd.f32 %v6472, %v6680
        %v6682 = vpop.f32.mrb[0].mxu0
        %v6683 = vpop.f32.mrb[0].mxu0
        %v6684 = vadd.f32 %v6475, %v6683
        %v6685 = vpop.f32.mrb[0].mxu0
        %6686 = vmatprep.mubr.bf16.mxu0 0
        %6687 = vmatmul.mubr.bf16.gmra.mrb[0].mxu0 %v6279
        %v6688 = vpop.f32.mrb[0].mxu0
        %v6689 = vadd.f32 %v6480, %v6688
        %v6690 = vpop.f32.mrb[0].mxu0
        %v6691 = vpop.f32.mrb[0].mxu0
        %v6692 = vadd.f32 %v6483, %v6691
        %v6693 = vpop.f32.mrb[0].mxu0
        %6694 = vmatprep.mubr.bf16.mxu0 0
        %6695 = vmatmul.mubr.bf16.gmra.mrb[0].mxu0 %v6280
        %v6696 = vpop.f32.mrb[0].mxu0
        %v6697 = vadd.f32 %v6488, %v6696
        %v6698 = vpop.f32.mrb[0].mxu0
        %v6699 = vpop.f32.mrb[0].mxu0
        %v6700 = vadd.f32 %v6491, %v6699
        %v6701 = vpop.f32.mrb[0].mxu0
        %6702 = vmatprep.mubr.bf16.mxu0 0
        %6703 = vmatmul.mubr.bf16.gmra.mrb[0].mxu0 %v6281
        %v6704 = vpop.f32.mrb[0].mxu0
        %v6705 = vadd.f32 %v6496, %v6704
        %v6706 = vpop.f32.mrb[0].mxu0
        %v6707 = vpop.f32.mrb[0].mxu0
        %v6708 = vadd.f32 %v6499, %v6707
        %v6709 = vpop.f32.mrb[0].mxu0
        %6710 = vmatprep.mubr.bf16.mxu0 0
        %6711 = vmatmul.mubr.bf16.gmra.mrb[0].mxu0 %v6282
        %v6712 = vpop.f32.mrb[0].mxu0
        %v6713 = vadd.f32 %v6504, %v6712
        %v6714 = vpop.f32.mrb[0].mxu0
        %v6715 = vpop.f32.mrb[0].mxu0
        %v6716 = vadd.f32 %v6507, %v6715
        %v6717 = vpop.f32.mrb[0].mxu0
        %6718 = vmatprep.mubr.bf16.mxu0 0
        %6719 = vmatmul.mubr.bf16.gmra.mrb[0].mxu0 %v6283
        %v6720 = vpop.f32.mrb[0].mxu0
        %v6721 = vadd.f32 %v6512, %v6720
        %v6722 = vpop.f32.mrb[0].mxu0
        %v6723 = vpop.f32.mrb[0].mxu0
        %v6724 = vadd.f32 %v6515, %v6723
        %v6725 = vpop.f32.mrb[0].mxu0
        %6726 = vmatprep.mubr.bf16.mxu0 0
        %6727 = vmatmul.mubr.bf16.gmra.mrb[0].mxu0 %v6284
        %v6728 = vpop.f32.mrb[0].mxu0
        %v6729 = vadd.f32 %v6520, %v6728
        %v6730 = vpop.f32.mrb[0].mxu0
        %v6731 = vpop.f32.mrb[0].mxu0
        %v6732 = vadd.f32 %v6523, %v6731
        %v6733 = vpop.f32.mrb[0].mxu0
        %6734 = vdwg.mxu0
        %v6735 = vld [vmem:[%s14] sm:$0x1]
        %v6737 = vlaneseq
        %v6738 = vshrl.u32 %v6737, 7
        %v6739 = vsub.s32 0, %v6738
        %v6740 = vrot.slane %v6735, %v6739
        %v6742 = vadd.f32 %v6609, %v6740
        %v6743 = vadd.f32 %v6612, %v6740
        %v6744 = vadd.f32 %v6617, %v6740
        %v6745 = vadd.f32 %v6620, %v6740
        %v6746 = vadd.f32 %v6625, %v6740
        %v6747 = vadd.f32 %v6628, %v6740
        %v6748 = vadd.f32 %v6633, %v6740
        %v6749 = vadd.f32 %v6636, %v6740
        %v6750 = vadd.f32 %v6641, %v6740
        %v6751 = vadd.f32 %v6644, %v6740
        %v6752 = vadd.f32 %v6649, %v6740
        %v6753 = vadd.f32 %v6652, %v6740
        %v6754 = vadd.f32 %v6657, %v6740
        %v6755 = vadd.f32 %v6660, %v6740
        %v6756 = vadd.f32 %v6665, %v6740
        %v6757 = vadd.f32 %v6668, %v6740
        %v6758 = vadd.f32 %v6673, %v6740
        %v6759 = vadd.f32 %v6676, %v6740
        %v6760 = vadd.f32 %v6681, %v6740
        %v6761 = vadd.f32 %v6684, %v6740
        %v6762 = vadd.f32 %v6689, %v6740
        %v6763 = vadd.f32 %v6692, %v6740
        %v6764 = vadd.f32 %v6697, %v6740
        %v6765 = vadd.f32 %v6700, %v6740
        %v6766 = vadd.f32 %v6705, %v6740
        %v6767 = vadd.f32 %v6708, %v6740
        %v6768 = vadd.f32 %v6713, %v6740
        %v6769 = vadd.f32 %v6716, %v6740
        %v6770 = vadd.f32 %v6721, %v6740
        %v6771 = vadd.f32 %v6724, %v6740
        %v6772 = vadd.f32 %v6729, %v6740
        %v6773 = vadd.f32 %v6732, %v6740
        %v6774 = vmax.f32 %v6742, 0.0
        %v6775 = vmax.f32 %v6743, 0.0
        %v6776 = vmax.f32 %v6744, 0.0
        %v6777 = vmax.f32 %v6745, 0.0
        %v6778 = vmax.f32 %v6746, 0.0
        %v6779 = vmax.f32 %v6747, 0.0
        %v6780 = vmax.f32 %v6748, 0.0
        %v6781 = vmax.f32 %v6749, 0.0
        %v6782 = vmax.f32 %v6750, 0.0
        %v6783 = vmax.f32 %v6751, 0.0
        %v6784 = vmax.f32 %v6752, 0.0
        %v6785 = vmax.f32 %v6753, 0.0
        %v6786 = vmax.f32 %v6754, 0.0
        %v6787 = vmax.f32 %v6755, 0.0
        %v6788 = vmax.f32 %v6756, 0.0
        %v6789 = vmax.f32 %v6757, 0.0
        %v6790 = vmax.f32 %v6758, 0.0
        %v6791 = vmax.f32 %v6759, 0.0
        %v6792 = vmax.f32 %v6760, 0.0
        %v6793 = vmax.f32 %v6761, 0.0
        %v6794 = vmax.f32 %v6762, 0.0
        %v6795 = vmax.f32 %v6763, 0.0
        %v6796 = vmax.f32 %v6764, 0.0
        %v6797 = vmax.f32 %v6765, 0.0
        %v6798 = vmax.f32 %v6766, 0.0
        %v6799 = vmax.f32 %v6767, 0.0
        %v6800 = vmax.f32 %v6768, 0.0
        %v6801 = vmax.f32 %v6769, 0.0
        %v6802 = vmax.f32 %v6770, 0.0
        %v6803 = vmax.f32 %v6771, 0.0
        %v6804 = vmax.f32 %v6772, 0.0
        %v6805 = vmax.f32 %v6773, 0.0
        %v6806 = vpack.c.bf16 %v6775, %v6774
        %v6807 = vpack.c.bf16 %v6777, %v6776
        %v6808 = vpack.c.bf16 %v6779, %v6778
        %v6809 = vpack.c.bf16 %v6781, %v6780
        %v6810 = vpack.c.bf16 %v6783, %v6782
        %v6811 = vpack.c.bf16 %v6785, %v6784
        %v6812 = vpack.c.bf16 %v6787, %v6786
        %v6813 = vpack.c.bf16 %v6789, %v6788
        %v6814 = vpack.c.bf16 %v6791, %v6790
        %v6815 = vpack.c.bf16 %v6793, %v6792
        %v6816 = vpack.c.bf16 %v6795, %v6794
        %v6817 = vpack.c.bf16 %v6797, %v6796
        %v6818 = vpack.c.bf16 %v6799, %v6798
        %v6819 = vpack.c.bf16 %v6801, %v6800
        %v6820 = vpack.c.bf16 %v6803, %v6802
        %v6821 = vpack.c.bf16 %v6805, %v6804
        %v6822 = vld [vmem:[%s15] sm:$0xf]
        %v6823 = vld [vmem:[%s15 + $0x4] sm:$0xf]
        %v6824 = vld [vmem:[%s15 + $0x8] sm:$0xf]
        %v6825 = vld [vmem:[%s15 + $0xc] sm:$0xf]
        %v6826 = vld [vmem:[%s15 + $0x10] sm:$0xf]
        %v6827 = vld [vmem:[%s15 + $0x14] sm:$0xf]
        %v6828 = vld [vmem:[%s15 + $0x18] sm:$0xf]
        %v6829 = vld [vmem:[%s15 + $0x1c] sm:$0xf]
        %v6830 = vld [vmem:[%s16] sm:$0x1]
        %v6832 = vlaneseq
        %v6833 = vshrl.u32 %v6832, 7
        %v6834 = vsub.s32 0, %v6833
        %v6835 = vrot.slane %v6830, %v6834
        %v6845 = vunpack.c.l.b16 %v6822
        %v6846 = vunpack.c.l.b16 %v6823
        %v6847 = vunpack.c.l.b16 %v6824
        %v6848 = vunpack.c.l.b16 %v6825
        %v6849 = vunpack.c.l.b16 %v6826
        %v6850 = vunpack.c.l.b16 %v6827
        %v6851 = vunpack.c.l.b16 %v6828
        %v6852 = vunpack.c.l.b16 %v6829
        %v6853 = vpack.c.b16 %v6846, %v6845
        %v6854 = vpack.c.b16 %v6848, %v6847
        %v6855 = vpack.c.b16 %v6850, %v6849
        %v6856 = vpack.c.b16 %v6852, %v6851
        %v6862 = vsel %vm1386, %v6806, 0
        %v6865 = vsel %vm1386, %v6807, 0
        %v6868 = vsel %vm1386, %v6808, 0
        %v6871 = vsel %vm1386, %v6809, 0
        %v6874 = vsel %vm1386, %v6810, 0
        %v6877 = vsel %vm1386, %v6811, 0
        %v6880 = vsel %vm1386, %v6812, 0
        %v6883 = vsel %vm1386, %v6813, 0
        %v6886 = vsel %vm1386, %v6814, 0
        %v6889 = vsel %vm1386, %v6815, 0
        %v6892 = vsel %vm1386, %v6816, 0
        %v6895 = vsel %vm1386, %v6817, 0
        %v6898 = vsel %vm1386, %v6818, 0
        %v6901 = vsel %vm1386, %v6819, 0
        %v6904 = vsel %vm1386, %v6820, 0
        %v6907 = vsel %vm1386, %v6821, 0
        %6909 = vmatprep.subr.bf16.mxu0 0
        %6910 = vmatpush1.bf16.msra.mxu0 %v6853
        %6911 = vmatprep.subr.bf16.mxu0 0
        %6912 = vmatpush1.bf16.msra.mxu0 %v6854
        %6913 = vmatprep.subr.bf16.mxu0 0
        %6914 = vmatpush1.bf16.msra.mxu0 %v6855
        %6915 = vmatprep.subr.bf16.mxu0 0
        %6916 = vmatpush1.bf16.msra.mxu0 %v6856
        %6917 = vmatprep.subr.bf16.mxu0 0
        %6918 = vmatpush1.bf16.msra.mxu0 0
        %6919 = vmatprep.subr.bf16.mxu0 0
        %6920 = vmatpush1.bf16.msra.mxu0 0
        %6921 = vmatprep.subr.bf16.mxu0 0
        %6922 = vmatpush1.bf16.msra.mxu0 0
        %6923 = vmatprep.subr.bf16.mxu0 0
        %6924 = vmatpush1.bf16.msra.mxu0 0
        %6925 = vmatprep.subr.bf16.mxu0 0
        %6926 = vmatpush1.bf16.msra.mxu0 0
        %6927 = vmatprep.subr.bf16.mxu0 0
        %6928 = vmatpush1.bf16.msra.mxu0 0
        %6929 = vmatprep.subr.bf16.mxu0 0
        %6930 = vmatpush1.bf16.msra.mxu0 0
        %6931 = vmatprep.subr.bf16.mxu0 0
        %6932 = vmatpush1.bf16.msra.mxu0 0
        %6933 = vmatprep.subr.bf16.mxu0 0
        %6934 = vmatpush1.bf16.msra.mxu0 0
        %6935 = vmatprep.subr.bf16.mxu0 0
        %6936 = vmatpush1.bf16.msra.mxu0 0
        %6937 = vmatprep.subr.bf16.mxu0 0
        %6938 = vmatpush1.bf16.msra.mxu0 0
        %6939 = vmatprep.subr.bf16.mxu0 0
        %6940 = vmatpush1.bf16.msra.mxu0 0
        %6941 = vmatprep.mubr.bf16.mxu0 0
        %6942 = vmatmul.mubr.bf16.gmra.mrb[0].mxu0 %v6862
        %v6943 = vpop.f32.mrb[0].mxu0
        %v6944 = vadd.f32 %v6835, %v6943
        %v6945 = vpop.f32.mrb[0].mxu0
        %v6946 = vpop.f32.mrb[0].mxu0
        %v6947 = vadd.f32 %v6835, %v6946
        %v6948 = vpop.f32.mrb[0].mxu0
        %6949 = vmatprep.mubr.bf16.mxu0 0
        %6950 = vmatmul.mubr.bf16.gmra.mrb[0].mxu0 %v6865
        %v6951 = vpop.f32.mrb[0].mxu0
        %v6952 = vadd.f32 %v6835, %v6951
        %v6953 = vpop.f32.mrb[0].mxu0
        %v6954 = vpop.f32.mrb[0].mxu0
        %v6955 = vadd.f32 %v6835, %v6954
        %v6956 = vpop.f32.mrb[0].mxu0
        %6957 = vmatprep.mubr.bf16.mxu0 0
        %6958 = vmatmul.mubr.bf16.gmra.mrb[0].mxu0 %v6868
        %v6959 = vpop.f32.mrb[0].mxu0
        %v6960 = vadd.f32 %v6835, %v6959
        %v6961 = vpop.f32.mrb[0].mxu0
        %v6962 = vpop.f32.mrb[0].mxu0
        %v6963 = vadd.f32 %v6835, %v6962
        %v6964 = vpop.f32.mrb[0].mxu0
        %6965 = vmatprep.mubr.bf16.mxu0 0
        %6966 = vmatmul.mubr.bf16.gmra.mrb[0].mxu0 %v6871
        %v6967 = vpop.f32.mrb[0].mxu0
        %v6968 = vadd.f32 %v6835, %v6967
        %v6969 = vpop.f32.mrb[0].mxu0
        %v6970 = vpop.f32.mrb[0].mxu0
        %v6971 = vadd.f32 %v6835, %v6970
        %v6972 = vpop.f32.mrb[0].mxu0
        %6973 = vmatprep.mubr.bf16.mxu0 0
        %6974 = vmatmul.mubr.bf16.gmra.mrb[0].mxu0 %v6874
        %v6975 = vpop.f32.mrb[0].mxu0
        %v6976 = vadd.f32 %v6835, %v6975
        %v6977 = vpop.f32.mrb[0].mxu0
        %v6978 = vpop.f32.mrb[0].mxu0
        %v6979 = vadd.f32 %v6835, %v6978
        %v6980 = vpop.f32.mrb[0].mxu0
        %6981 = vmatprep.mubr.bf16.mxu0 0
        %6982 = vmatmul.mubr.bf16.gmra.mrb[0].mxu0 %v6877
        %v6983 = vpop.f32.mrb[0].mxu0
        %v6984 = vadd.f32 %v6835, %v6983
        %v6985 = vpop.f32.mrb[0].mxu0
        %v6986 = vpop.f32.mrb[0].mxu0
        %v6987 = vadd.f32 %v6835, %v6986
        %v6988 = vpop.f32.mrb[0].mxu0
        %6989 = vmatprep.mubr.bf16.mxu0 0
        %6990 = vmatmul.mubr.bf16.gmra.mrb[0].mxu0 %v6880
        %v6991 = vpop.f32.mrb[0].mxu0
        %v6992 = vadd.f32 %v6835, %v6991
        %v6993 = vpop.f32.mrb[0].mxu0
        %v6994 = vpop.f32.mrb[0].mxu0
        %v6995 = vadd.f32 %v6835, %v6994
        %v6996 = vpop.f32.mrb[0].mxu0
        %6997 = vmatprep.mubr.bf16.mxu0 0
        %6998 = vmatmul.mubr.bf16.gmra.mrb[0].mxu0 %v6883
        %v6999 = vpop.f32.mrb[0].mxu0
        %v7000 = vadd.f32 %v6835, %v6999
        %v7001 = vpop.f32.mrb[0].mxu0
        %v7002 = vpop.f32.mrb[0].mxu0
        %v7003 = vadd.f32 %v6835, %v7002
        %v7004 = vpop.f32.mrb[0].mxu0
        %7005 = vmatprep.mubr.bf16.mxu0 0
        %7006 = vmatmul.mubr.bf16.gmra.mrb[0].mxu0 %v6886
        %v7007 = vpop.f32.mrb[0].mxu0
        %v7008 = vadd.f32 %v6835, %v7007
        %v7009 = vpop.f32.mrb[0].mxu0
        %v7010 = vpop.f32.mrb[0].mxu0
        %v7011 = vadd.f32 %v6835, %v7010
        %v7012 = vpop.f32.mrb[0].mxu0
        %7013 = vmatprep.mubr.bf16.mxu0 0
        %7014 = vmatmul.mubr.bf16.gmra.mrb[0].mxu0 %v6889
        %v7015 = vpop.f32.mrb[0].mxu0
        %v7016 = vadd.f32 %v6835, %v7015
        %v7017 = vpop.f32.mrb[0].mxu0
        %v7018 = vpop.f32.mrb[0].mxu0
        %v7019 = vadd.f32 %v6835, %v7018
        %v7020 = vpop.f32.mrb[0].mxu0
        %7021 = vmatprep.mubr.bf16.mxu0 0
        %7022 = vmatmul.mubr.bf16.gmra.mrb[0].mxu0 %v6892
        %v7023 = vpop.f32.mrb[0].mxu0
        %v7024 = vadd.f32 %v6835, %v7023
        %v7025 = vpop.f32.mrb[0].mxu0
        %v7026 = vpop.f32.mrb[0].mxu0
        %v7027 = vadd.f32 %v6835, %v7026
        %v7028 = vpop.f32.mrb[0].mxu0
        %7029 = vmatprep.mubr.bf16.mxu0 0
        %7030 = vmatmul.mubr.bf16.gmra.mrb[0].mxu0 %v6895
        %v7031 = vpop.f32.mrb[0].mxu0
        %v7032 = vadd.f32 %v6835, %v7031
        %v7033 = vpop.f32.mrb[0].mxu0
        %v7034 = vpop.f32.mrb[0].mxu0
        %v7035 = vadd.f32 %v6835, %v7034
        %v7036 = vpop.f32.mrb[0].mxu0
        %7037 = vmatprep.mubr.bf16.mxu0 0
        %7038 = vmatmul.mubr.bf16.gmra.mrb[0].mxu0 %v6898
        %v7039 = vpop.f32.mrb[0].mxu0
        %v7040 = vadd.f32 %v6835, %v7039
        %v7041 = vpop.f32.mrb[0].mxu0
        %v7042 = vpop.f32.mrb[0].mxu0
        %v7043 = vadd.f32 %v6835, %v7042
        %v7044 = vpop.f32.mrb[0].mxu0
        %7045 = vmatprep.mubr.bf16.mxu0 0
        %7046 = vmatmul.mubr.bf16.gmra.mrb[0].mxu0 %v6901
        %v7047 = vpop.f32.mrb[0].mxu0
        %v7048 = vadd.f32 %v6835, %v7047
        %v7049 = vpop.f32.mrb[0].mxu0
        %v7050 = vpop.f32.mrb[0].mxu0
        %v7051 = vadd.f32 %v6835, %v7050
        %v7052 = vpop.f32.mrb[0].mxu0
        %7053 = vmatprep.mubr.bf16.mxu0 0
        %7054 = vmatmul.mubr.bf16.gmra.mrb[0].mxu0 %v6904
        %v7055 = vpop.f32.mrb[0].mxu0
        %v7056 = vadd.f32 %v6835, %v7055
        %v7057 = vpop.f32.mrb[0].mxu0
        %v7058 = vpop.f32.mrb[0].mxu0
        %v7059 = vadd.f32 %v6835, %v7058
        %v7060 = vpop.f32.mrb[0].mxu0
        %7061 = vmatprep.mubr.bf16.mxu0 0
        %7062 = vmatmul.mubr.bf16.gmra.mrb[0].mxu0 %v6907
        %v7063 = vpop.f32.mrb[0].mxu0
        %v7064 = vadd.f32 %v6835, %v7063
        %v7065 = vpop.f32.mrb[0].mxu0
        %v7066 = vpop.f32.mrb[0].mxu0
        %v7067 = vadd.f32 %v6835, %v7066
        %v7068 = vpop.f32.mrb[0].mxu0
        %7069 = vdwg.mxu0
        %v7070 = vxor.u32 %v6944, 2147483648
        %v7071 = vxor.u32 %v6947, 2147483648
        %v7072 = vxor.u32 %v6952, 2147483648
        %v7073 = vxor.u32 %v6955, 2147483648
        %v7074 = vxor.u32 %v6960, 2147483648
        %v7075 = vxor.u32 %v6963, 2147483648
        %v7076 = vxor.u32 %v6968, 2147483648
        %v7077 = vxor.u32 %v6971, 2147483648
        %v7078 = vxor.u32 %v6976, 2147483648
        %v7079 = vxor.u32 %v6979, 2147483648
        %v7080 = vxor.u32 %v6984, 2147483648
        %v7081 = vxor.u32 %v6987, 2147483648
        %v7082 = vxor.u32 %v6992, 2147483648
        %v7083 = vxor.u32 %v6995, 2147483648
        %v7084 = vxor.u32 %v7000, 2147483648
        %v7085 = vxor.u32 %v7003, 2147483648
        %v7086 = vxor.u32 %v7008, 2147483648
        %v7087 = vxor.u32 %v7011, 2147483648
        %v7088 = vxor.u32 %v7016, 2147483648
        %v7089 = vxor.u32 %v7019, 2147483648
        %v7090 = vxor.u32 %v7024, 2147483648
        %v7091 = vxor.u32 %v7027, 2147483648
        %v7092 = vxor.u32 %v7032, 2147483648
        %v7093 = vxor.u32 %v7035, 2147483648
        %v7094 = vxor.u32 %v7040, 2147483648
        %v7095 = vxor.u32 %v7043, 2147483648
        %v7096 = vxor.u32 %v7048, 2147483648
        %v7097 = vxor.u32 %v7051, 2147483648
        %v7098 = vxor.u32 %v7056, 2147483648
        %v7099 = vxor.u32 %v7059, 2147483648
        %v7100 = vxor.u32 %v7064, 2147483648
        %v7101 = vxor.u32 %v7067, 2147483648
        %v7102 = vmul.f32 %v7070, 1.442695
        %v7103 = vpow.pop %v7102
        %v7104 = vmul.f32 %v7071, 1.442695
        %v7105 = vpow.pop %v7104
        %v7106 = vmul.f32 %v7072, 1.442695
        %v7107 = vpow.pop %v7106
        %v7108 = vmul.f32 %v7073, 1.442695
        %v7109 = vpow.pop %v7108
        %v7110 = vmul.f32 %v7074, 1.442695
        %v7111 = vpow.pop %v7110
        %v7112 = vmul.f32 %v7075, 1.442695
        %v7113 = vpow.pop %v7112
        %v7114 = vmul.f32 %v7076, 1.442695
        %v7115 = vpow.pop %v7114
        %v7116 = vmul.f32 %v7077, 1.442695
        %v7117 = vpow.pop %v7116
        %v7118 = vmul.f32 %v7078, 1.442695
        %v7119 = vpow.pop %v7118
        %v7120 = vmul.f32 %v7079, 1.442695
        %v7121 = vpow.pop %v7120
        %v7122 = vmul.f32 %v7080, 1.442695
        %v7123 = vpow.pop %v7122
        %v7124 = vmul.f32 %v7081, 1.442695
        %v7125 = vpow.pop %v7124
        %v7126 = vmul.f32 %v7082, 1.442695
        %v7127 = vpow.pop %v7126
        %v7128 = vmul.f32 %v7083, 1.442695
        %v7129 = vpow.pop %v7128
        %v7130 = vmul.f32 %v7084, 1.442695
        %v7131 = vpow.pop %v7130
        %v7132 = vmul.f32 %v7085, 1.442695
        %v7133 = vpow.pop %v7132
        %v7134 = vmul.f32 %v7086, 1.442695
        %v7135 = vpow.pop %v7134
        %v7136 = vmul.f32 %v7087, 1.442695
        %v7137 = vpow.pop %v7136
        %v7138 = vmul.f32 %v7088, 1.442695
        %v7139 = vpow.pop %v7138
        %v7140 = vmul.f32 %v7089, 1.442695
        %v7141 = vpow.pop %v7140
        %v7142 = vmul.f32 %v7090, 1.442695
        %v7143 = vpow.pop %v7142
        %v7144 = vmul.f32 %v7091, 1.442695
        %v7145 = vpow.pop %v7144
        %v7146 = vmul.f32 %v7092, 1.442695
        %v7147 = vpow.pop %v7146
        %v7148 = vmul.f32 %v7093, 1.442695
        %v7149 = vpow.pop %v7148
        %v7150 = vmul.f32 %v7094, 1.442695
        %v7151 = vpow.pop %v7150
        %v7152 = vmul.f32 %v7095, 1.442695
        %v7153 = vpow.pop %v7152
        %v7154 = vmul.f32 %v7096, 1.442695
        %v7155 = vpow.pop %v7154
        %v7156 = vmul.f32 %v7097, 1.442695
        %v7157 = vpow.pop %v7156
        %v7158 = vmul.f32 %v7098, 1.442695
        %v7159 = vpow.pop %v7158
        %v7160 = vmul.f32 %v7099, 1.442695
        %v7161 = vpow.pop %v7160
        %v7162 = vmul.f32 %v7100, 1.442695
        %v7163 = vpow.pop %v7162
        %v7164 = vmul.f32 %v7101, 1.442695
        %v7165 = vpow.pop %v7164
        %v7166 = vadd.f32 %v7103, 1.0
        %v7167 = vadd.f32 %v7105, 1.0
        %v7168 = vadd.f32 %v7107, 1.0
        %v7169 = vadd.f32 %v7109, 1.0
        %v7170 = vadd.f32 %v7111, 1.0
        %v7171 = vadd.f32 %v7113, 1.0
        %v7172 = vadd.f32 %v7115, 1.0
        %v7173 = vadd.f32 %v7117, 1.0
        %v7174 = vadd.f32 %v7119, 1.0
        %v7175 = vadd.f32 %v7121, 1.0
        %v7176 = vadd.f32 %v7123, 1.0
        %v7177 = vadd.f32 %v7125, 1.0
        %v7178 = vadd.f32 %v7127, 1.0
        %v7179 = vadd.f32 %v7129, 1.0
        %v7180 = vadd.f32 %v7131, 1.0
        %v7181 = vadd.f32 %v7133, 1.0
        %v7182 = vadd.f32 %v7135, 1.0
        %v7183 = vadd.f32 %v7137, 1.0
        %v7184 = vadd.f32 %v7139, 1.0
        %v7185 = vadd.f32 %v7141, 1.0
        %v7186 = vadd.f32 %v7143, 1.0
        %v7187 = vadd.f32 %v7145, 1.0
        %v7188 = vadd.f32 %v7147, 1.0
        %v7189 = vadd.f32 %v7149, 1.0
        %v7190 = vadd.f32 %v7151, 1.0
        %v7191 = vadd.f32 %v7153, 1.0
        %v7192 = vadd.f32 %v7155, 1.0
        %v7193 = vadd.f32 %v7157, 1.0
        %v7194 = vadd.f32 %v7159, 1.0
        %v7195 = vadd.f32 %v7161, 1.0
        %v7196 = vadd.f32 %v7163, 1.0
        %v7197 = vadd.f32 %v7165, 1.0
        %v7198 = vrcp.pop %v7166
        %v7199 = vmul.f32 1.0, %v7198
        %v7200 = vrcp.pop %v7167
        %v7201 = vmul.f32 1.0, %v7200
        %v7202 = vrcp.pop %v7168
        %v7203 = vmul.f32 1.0, %v7202
        %v7204 = vrcp.pop %v7169
        %v7205 = vmul.f32 1.0, %v7204
        %v7206 = vrcp.pop %v7170
        %v7207 = vmul.f32 1.0, %v7206
        %v7208 = vrcp.pop %v7171
        %v7209 = vmul.f32 1.0, %v7208
        %v7210 = vrcp.pop %v7172
        %v7211 = vmul.f32 1.0, %v7210
        %v7212 = vrcp.pop %v7173
        %v7213 = vmul.f32 1.0, %v7212
        %v7214 = vrcp.pop %v7174
        %v7215 = vmul.f32 1.0, %v7214
        %v7216 = vrcp.pop %v7175
        %v7217 = vmul.f32 1.0, %v7216
        %v7218 = vrcp.pop %v7176
        %v7219 = vmul.f32 1.0, %v7218
        %v7220 = vrcp.pop %v7177
        %v7221 = vmul.f32 1.0, %v7220
        %v7222 = vrcp.pop %v7178
        %v7223 = vmul.f32 1.0, %v7222
        %v7224 = vrcp.pop %v7179
        %v7225 = vmul.f32 1.0, %v7224
        %v7226 = vrcp.pop %v7180
        %v7227 = vmul.f32 1.0, %v7226
        %v7228 = vrcp.pop %v7181
        %v7229 = vmul.f32 1.0, %v7228
        %v7230 = vrcp.pop %v7182
        %v7231 = vmul.f32 1.0, %v7230
        %v7232 = vrcp.pop %v7183
        %v7233 = vmul.f32 1.0, %v7232
        %v7234 = vrcp.pop %v7184
        %v7235 = vmul.f32 1.0, %v7234
        %v7236 = vrcp.pop %v7185
        %v7237 = vmul.f32 1.0, %v7236
        %v7238 = vrcp.pop %v7186
        %v7239 = vmul.f32 1.0, %v7238
        %v7240 = vrcp.pop %v7187
        %v7241 = vmul.f32 1.0, %v7240
        %v7242 = vrcp.pop %v7188
        %v7243 = vmul.f32 1.0, %v7242
        %v7244 = vrcp.pop %v7189
        %v7245 = vmul.f32 1.0, %v7244
        %v7246 = vrcp.pop %v7190
        %v7247 = vmul.f32 1.0, %v7246
        %v7248 = vrcp.pop %v7191
        %v7249 = vmul.f32 1.0, %v7248
        %v7250 = vrcp.pop %v7192
        %v7251 = vmul.f32 1.0, %v7250
        %v7252 = vrcp.pop %v7193
        %v7253 = vmul.f32 1.0, %v7252
        %v7254 = vrcp.pop %v7194
        %v7255 = vmul.f32 1.0, %v7254
        %v7256 = vrcp.pop %v7195
        %v7257 = vmul.f32 1.0, %v7256
        %v7258 = vrcp.pop %v7196
        %v7259 = vmul.f32 1.0, %v7258
        %v7260 = vrcp.pop %v7197
        %v7261 = vmul.f32 1.0, %v7260
        %7294 = vrot.lane.b32.xlu0 %v6774, 64
        %v7295 = vpop.permute.xlu0 %7294
        %7296 = vrot.lane.b32.xlu0 %v6775, 64
        %v7297 = vpop.permute.xlu0 %7296
        %7298 = vrot.lane.b32.xlu0 %v6776, 64
        %v7299 = vpop.permute.xlu0 %7298
        %7300 = vrot.lane.b32.xlu0 %v6777, 64
        %v7301 = vpop.permute.xlu0 %7300
        %7302 = vrot.lane.b32.xlu0 %v6778, 64
        %v7303 = vpop.permute.xlu0 %7302
        %7304 = vrot.lane.b32.xlu0 %v6779, 64
        %v7305 = vpop.permute.xlu0 %7304
        %7306 = vrot.lane.b32.xlu0 %v6780, 64
        %v7307 = vpop.permute.xlu0 %7306
        %7308 = vrot.lane.b32.xlu0 %v6781, 64
        %v7309 = vpop.permute.xlu0 %7308
        %7310 = vrot.lane.b32.xlu0 %v6782, 64
        %v7311 = vpop.permute.xlu0 %7310
        %7312 = vrot.lane.b32.xlu0 %v6783, 64
        %v7313 = vpop.permute.xlu0 %7312
        %7314 = vrot.lane.b32.xlu0 %v6784, 64
        %v7315 = vpop.permute.xlu0 %7314
        %7316 = vrot.lane.b32.xlu0 %v6785, 64
        %v7317 = vpop.permute.xlu0 %7316
        %7318 = vrot.lane.b32.xlu0 %v6786, 64
        %v7319 = vpop.permute.xlu0 %7318
        %7320 = vrot.lane.b32.xlu0 %v6787, 64
        %v7321 = vpop.permute.xlu0 %7320
        %7322 = vrot.lane.b32.xlu0 %v6788, 64
        %v7323 = vpop.permute.xlu0 %7322
        %7324 = vrot.lane.b32.xlu0 %v6789, 64
        %v7325 = vpop.permute.xlu0 %7324
        %7326 = vrot.lane.b32.xlu0 %v6790, 64
        %v7327 = vpop.permute.xlu0 %7326
        %7328 = vrot.lane.b32.xlu0 %v6791, 64
        %v7329 = vpop.permute.xlu0 %7328
        %7330 = vrot.lane.b32.xlu0 %v6792, 64
        %v7331 = vpop.permute.xlu0 %7330
        %7332 = vrot.lane.b32.xlu0 %v6793, 64
        %v7333 = vpop.permute.xlu0 %7332
        %7334 = vrot.lane.b32.xlu0 %v6794, 64
        %v7335 = vpop.permute.xlu0 %7334
        %7336 = vrot.lane.b32.xlu0 %v6795, 64
        %v7337 = vpop.permute.xlu0 %7336
        %7338 = vrot.lane.b32.xlu0 %v6796, 64
        %v7339 = vpop.permute.xlu0 %7338
        %7340 = vrot.lane.b32.xlu0 %v6797, 64
        %v7341 = vpop.permute.xlu0 %7340
        %7342 = vrot.lane.b32.xlu0 %v6798, 64
        %v7343 = vpop.permute.xlu0 %7342
        %7344 = vrot.lane.b32.xlu0 %v6799, 64
        %v7345 = vpop.permute.xlu0 %7344
        %7346 = vrot.lane.b32.xlu0 %v6800, 64
        %v7347 = vpop.permute.xlu0 %7346
        %7348 = vrot.lane.b32.xlu0 %v6801, 64
        %v7349 = vpop.permute.xlu0 %7348
        %7350 = vrot.lane.b32.xlu0 %v6802, 64
        %v7351 = vpop.permute.xlu0 %7350
        %7352 = vrot.lane.b32.xlu0 %v6803, 64
        %v7353 = vpop.permute.xlu0 %7352
        %7354 = vrot.lane.b32.xlu0 %v6804, 64
        %v7355 = vpop.permute.xlu0 %7354
        %7356 = vrot.lane.b32.xlu0 %v6805, 64
        %v7357 = vpop.permute.xlu0 %7356
        %7422 = vrot.lane.b32.xlu0 %v7199, 2
        %v7423 = vpop.permute.xlu0 %7422
        %7424 = vrot.lane.b32.xlu0 %v7201, 2
        %v7425 = vpop.permute.xlu0 %7424
        %7426 = vrot.lane.b32.xlu0 %v7203, 2
        %v7427 = vpop.permute.xlu0 %7426
        %7428 = vrot.lane.b32.xlu0 %v7205, 2
        %v7429 = vpop.permute.xlu0 %7428
        %7430 = vrot.lane.b32.xlu0 %v7207, 2
        %v7431 = vpop.permute.xlu0 %7430
        %7432 = vrot.lane.b32.xlu0 %v7209, 2
        %v7433 = vpop.permute.xlu0 %7432
        %7434 = vrot.lane.b32.xlu0 %v7211, 2
        %v7435 = vpop.permute.xlu0 %7434
        %7436 = vrot.lane.b32.xlu0 %v7213, 2
        %v7437 = vpop.permute.xlu0 %7436
        %7438 = vrot.lane.b32.xlu0 %v7215, 2
        %v7439 = vpop.permute.xlu0 %7438
        %7440 = vrot.lane.b32.xlu0 %v7217, 2
        %v7441 = vpop.permute.xlu0 %7440
        %7442 = vrot.lane.b32.xlu0 %v7219, 2
        %v7443 = vpop.permute.xlu0 %7442
        %7444 = vrot.lane.b32.xlu0 %v7221, 2
        %v7445 = vpop.permute.xlu0 %7444
        %7446 = vrot.lane.b32.xlu0 %v7223, 2
        %v7447 = vpop.permute.xlu0 %7446
        %7448 = vrot.lane.b32.xlu0 %v7225, 2
        %v7449 = vpop.permute.xlu0 %7448
        %7450 = vrot.lane.b32.xlu0 %v7227, 2
        %v7451 = vpop.permute.xlu0 %7450
        %7452 = vrot.lane.b32.xlu0 %v7229, 2
        %v7453 = vpop.permute.xlu0 %7452
        %7454 = vrot.lane.b32.xlu0 %v7231, 2
        %v7455 = vpop.permute.xlu0 %7454
        %7456 = vrot.lane.b32.xlu0 %v7233, 2
        %v7457 = vpop.permute.xlu0 %7456
        %7458 = vrot.lane.b32.xlu0 %v7235, 2
        %v7459 = vpop.permute.xlu0 %7458
        %7460 = vrot.lane.b32.xlu0 %v7237, 2
        %v7461 = vpop.permute.xlu0 %7460
        %7462 = vrot.lane.b32.xlu0 %v7239, 2
        %v7463 = vpop.permute.xlu0 %7462
        %7464 = vrot.lane.b32.xlu0 %v7241, 2
        %v7465 = vpop.permute.xlu0 %7464
        %7466 = vrot.lane.b32.xlu0 %v7243, 2
        %v7467 = vpop.permute.xlu0 %7466
        %7468 = vrot.lane.b32.xlu0 %v7245, 2
        %v7469 = vpop.permute.xlu0 %7468
        %7470 = vrot.lane.b32.xlu0 %v7247, 2
        %v7471 = vpop.permute.xlu0 %7470
        %7472 = vrot.lane.b32.xlu0 %v7249, 2
        %v7473 = vpop.permute.xlu0 %7472
        %7474 = vrot.lane.b32.xlu0 %v7251, 2
        %v7475 = vpop.permute.xlu0 %7474
        %7476 = vrot.lane.b32.xlu0 %v7253, 2
        %v7477 = vpop.permute.xlu0 %7476
        %7478 = vrot.lane.b32.xlu0 %v7255, 2
        %v7479 = vpop.permute.xlu0 %7478
        %7480 = vrot.lane.b32.xlu0 %v7257, 2
        %v7481 = vpop.permute.xlu0 %7480
        %7482 = vrot.lane.b32.xlu0 %v7259, 2
        %v7483 = vpop.permute.xlu0 %7482
        %7484 = vrot.lane.b32.xlu0 %v7261, 2
        %v7485 = vpop.permute.xlu0 %7484
        %vm7518 = vcmask 15360
        %v7519 = vsel %vm7518, %v7295, %v7423
        %v7520 = vsel %vm7518, %v7297, %v7425
        %v7521 = vsel %vm7518, %v7299, %v7427
        %v7522 = vsel %vm7518, %v7301, %v7429
        %v7523 = vsel %vm7518, %v7303, %v7431
        %v7524 = vsel %vm7518, %v7305, %v7433
        %v7525 = vsel %vm7518, %v7307, %v7435
        %v7526 = vsel %vm7518, %v7309, %v7437
        %v7527 = vsel %vm7518, %v7311, %v7439
        %v7528 = vsel %vm7518, %v7313, %v7441
        %v7529 = vsel %vm7518, %v7315, %v7443
        %v7530 = vsel %vm7518, %v7317, %v7445
        %v7531 = vsel %vm7518, %v7319, %v7447
        %v7532 = vsel %vm7518, %v7321, %v7449
        %v7533 = vsel %vm7518, %v7323, %v7451
        %v7534 = vsel %vm7518, %v7325, %v7453
        %v7535 = vsel %vm7518, %v7327, %v7455
        %v7536 = vsel %vm7518, %v7329, %v7457
        %v7537 = vsel %vm7518, %v7331, %v7459
        %v7538 = vsel %vm7518, %v7333, %v7461
        %v7539 = vsel %vm7518, %v7335, %v7463
        %v7540 = vsel %vm7518, %v7337, %v7465
        %v7541 = vsel %vm7518, %v7339, %v7467
        %v7542 = vsel %vm7518, %v7341, %v7469
        %v7543 = vsel %vm7518, %v7343, %v7471
        %v7544 = vsel %vm7518, %v7345, %v7473
        %v7545 = vsel %vm7518, %v7347, %v7475
        %v7546 = vsel %vm7518, %v7349, %v7477
        %v7547 = vsel %vm7518, %v7351, %v7479
        %v7548 = vsel %vm7518, %v7353, %v7481
        %v7549 = vsel %vm7518, %v7355, %v7483
        %v7550 = vsel %vm7518, %v7357, %v7485
        %7551 = vxpose.xlu0.b32.start [1/16] %v7519, 128
        %7552 = vxpose.xlu0.b32.cont [2/16] %v7520, 128
        %7553 = vxpose.xlu0.b32.cont [3/16] %v7521, 128
        %7554 = vxpose.xlu0.b32.cont [4/16] %v7522, 128
        %7555 = vxpose.xlu0.b32.cont [5/16] %v7523, 128
        %7556 = vxpose.xlu0.b32.cont [6/16] %v7524, 128
        %7557 = vxpose.xlu0.b32.cont [7/16] %v7525, 128
        %7558 = vxpose.xlu0.b32.cont [8/16] %v7526, 128
        %7559 = vxpose.xlu0.b32.cont [9/16] %v7527, 128
        %7560 = vxpose.xlu0.b32.cont [10/16] %v7528, 128
        %7561 = vxpose.xlu0.b32.cont [11/16] %v7529, 128
        %7562 = vxpose.xlu0.b32.cont [12/16] %v7530, 128
        %7563 = vxpose.xlu0.b32.cont [13/16] %v7531, 128
        %7564 = vxpose.xlu0.b32.cont [14/16] %v7532, 128
        %7565 = vxpose.xlu0.b32.cont [15/16] %v7533, 128
        %7566 = vxpose.xlu0.b32.end [16/16] %v7534, 128
        %v7567 = vpop.trf.xlu0
        %v7568 = vpop.trf.xlu0
        %v7569 = vpop.trf.xlu0
        %v7570 = vpop.trf.xlu0
        %v7571 = vpop.trf.xlu0
        %v7572 = vpop.trf.xlu0
        %v7573 = vpop.trf.xlu0
        %v7574 = vpop.trf.xlu0
        %v7575 = vpop.trf.xlu0
        %v7576 = vpop.trf.xlu0
        %v7577 = vpop.trf.xlu0
        %v7578 = vpop.trf.xlu0
        %v7579 = vpop.trf.xlu0
        %v7580 = vpop.trf.xlu0
        %v7581 = vpop.trf.xlu0
        %v7582 = vpop.trf.xlu0
        %7583 = vxpose.xlu0.b32.start [1/16] %v7535, 128
        %7584 = vxpose.xlu0.b32.cont [2/16] %v7536, 128
        %7585 = vxpose.xlu0.b32.cont [3/16] %v7537, 128
        %7586 = vxpose.xlu0.b32.cont [4/16] %v7538, 128
        %7587 = vxpose.xlu0.b32.cont [5/16] %v7539, 128
        %7588 = vxpose.xlu0.b32.cont [6/16] %v7540, 128
        %7589 = vxpose.xlu0.b32.cont [7/16] %v7541, 128
        %7590 = vxpose.xlu0.b32.cont [8/16] %v7542, 128
        %7591 = vxpose.xlu0.b32.cont [9/16] %v7543, 128
        %7592 = vxpose.xlu0.b32.cont [10/16] %v7544, 128
        %7593 = vxpose.xlu0.b32.cont [11/16] %v7545, 128
        %7594 = vxpose.xlu0.b32.cont [12/16] %v7546, 128
        %7595 = vxpose.xlu0.b32.cont [13/16] %v7547, 128
        %7596 = vxpose.xlu0.b32.cont [14/16] %v7548, 128
        %7597 = vxpose.xlu0.b32.cont [15/16] %v7549, 128
        %7598 = vxpose.xlu0.b32.end [16/16] %v7550, 128
        %v7599 = vpop.trf.xlu0
        %v7600 = vpop.trf.xlu0
        %v7601 = vpop.trf.xlu0
        %v7602 = vpop.trf.xlu0
        %v7603 = vpop.trf.xlu0
        %v7604 = vpop.trf.xlu0
        %v7605 = vpop.trf.xlu0
        %v7606 = vpop.trf.xlu0
        %v7607 = vpop.trf.xlu0
        %v7608 = vpop.trf.xlu0
        %v7609 = vpop.trf.xlu0
        %v7610 = vpop.trf.xlu0
        %v7611 = vpop.trf.xlu0
        %v7612 = vpop.trf.xlu0
        %v7613 = vpop.trf.xlu0
        %v7614 = vpop.trf.xlu0
        %7615 = vst [vmem:[%s542] sm:$0xff] %v7567
        %7616 = vst [vmem:[%s542 + $0x8] sm:$0xff] %v7599
        %s7617 = sand.u32 %s401, 1
        %s7618 = scalar_lea.sflag [#allocation3], %s7617
        %s7619 = sand.u32 %s401, 1
        %s7620 = smul.addr %s7619, 16
        %s7621 = scalar_lea.vmem [#allocation2], %s7620
        // Predicated region
        $region89: #{tpu_custom_call.1} parent=87 // pred_check
          %p7622 = pneg %p411
        $region90: #{tpu_custom_call.1} parent=87 // pred_check_branch
          %7624 = sbr.rel (%p7622) target = $region92
        $region91: #{tpu_custom_call.1} parent=87 // pred_region
          %s7625 = smul.u32 2, %s31
          %s7627 = ssub.s32 256, 256
          %7628 = vsyncadd %s7618, %s7627
          %s7629 = smul.addr %s7625, 128
          %s7630 = scalar_lea.hbm %s17, %s7629
          %s7632 = sshll.u32 %s7621, 4
          %s7633 = int_to_ptr.vmem [resolvable:$true] %s7632
          %7635 = dma.vmem_to_hbm [thread:$0]  %s7633, 256, %s7630, %s7618
        $region92: #{tpu_custom_call.1} parent=87 // pred_fallthru
          _
      $region88: #{tpu_custom_call.1} parent=5 // pred_fallthru
        _
      %p7636 = scmp.le.s32.totalorder 2, %s26
      // Predicated region
      $region93: #{tpu_custom_call.1} parent=5 // pred_check
        %p7637 = pneg %p7636
      $region94: #{tpu_custom_call.1} parent=5 // pred_check_branch
        %7639 = sbr.rel (%p7637) target = $region96
      $region95: #{tpu_custom_call.1} parent=5 // pred_region
        %s7640 = ssub.s32 %s26, 2
        // Predicated region
        $region97: #{tpu_custom_call.1} parent=95 // pred_check
          %p7641 = pneg %p417
        $region98: #{tpu_custom_call.1} parent=95 // pred_check_branch
          %7643 = sbr.rel (%p7641) target = $region100
        $region99: #{tpu_custom_call.1} parent=95 // pred_region
          %s7644 = sand.u32 %s402, 1
          %s7645 = scalar_lea.sflag [#allocation3], %s7644
          %s7646 = sand.u32 %s402, 1
          %s7647 = smul.addr %s7646, 16
          %s7648 = scalar_lea.vmem [#allocation2], %s7647
          %7649 = dma.done %s7645, 256
        $region100: #{tpu_custom_call.1} parent=95 // pred_fallthru
          _
      $region96: #{tpu_custom_call.1} parent=5 // pred_fallthru
        _
    $region6: #{tpu_custom_call.1} parent=1 // loop_footer
      %s30 = sadd.s32 1, %s26
    $region7: #{tpu_custom_call.1} parent=1 // loop_footer_branch
      %25 = sbr.rel target = $region3
    $region8: #{tpu_custom_call.1} parent=1 // loop_exit
      _
    %7650 = vsyncpa [#allocation3], 1
    %s7651 = scalar_lea.sflag [#allocation3], 1
    %7652 = vsyncpa %s7651, 1

</llo_original>
